<compile_context>
chip_gen: v7x
topology: tpu7x:2x2x1
jax: 0.10.0
libtpu: 0.0.40
codegen_flags: <defaults>
</compile_context>

<pallas_src>
import numpy as np
import jax
import jax.numpy as jnp
from jax.experimental import pallas as pl
from jax.experimental.pallas import tpu as pltpu

C_IN, C_CONV = 512, 128
H_IN, W_IN = 14, 14
HW_IN = H_IN * W_IN                     # 196
POOL_K, POOL_S = 5, 3
H_P, W_P = 4, 4                         # floor((14 - 5) / 3) + 1 = 4
N_POOL = H_P * W_P                      # 16
FC_IN, FC_OUT = C_CONV * N_POOL, 1024   # 2048 -> 1024
XYZ_DIM, WPQR_DIM = 3, 4
HEAD_DIM = 8                            # xyz(3) + wpqr(4) + 1 zero pad (fused heads)


def _pooling_matrix():
    """(16, 196): row p averages the 5x5 window p over the 196 spatial positions."""
    p = np.zeros((N_POOL, HW_IN), np.float32)
    inv = 1.0 / float(POOL_K * POOL_K)
    for i in range(H_P):
        for j in range(W_P):
            for r in range(POOL_S * i, POOL_S * i + POOL_K):
                for c in range(POOL_S * j, POOL_S * j + POOL_K):
                    p[i * W_P + j, r * W_IN + c] = inv
    return p


_POOL_MAT = _pooling_matrix()


def loss_header1_kernel(x_ref, p_ref, wc_ref, bc_ref, wf_ref, bf_ref,
                        wh_ref, bh_ref, out_ref):
    """Whole batch in one invocation; all weights resident in VMEM."""
    n_batch = out_ref.shape[0]

    # --- AvgPool2d(5, 3) as one MXU matmul per sample: (16,196) @ (196,512) ---
    pooled = jnp.concatenate(
        [jnp.dot(p_ref[...], x_ref[n], preferred_element_type=jnp.float32)
         for n in range(n_batch)], axis=0)                  # (N*16, 512)
    pooled = jnp.maximum(pooled, 0.0)                       # ReLU

    # --- Conv2d(512, 128, k=1): one channel matmul for the whole batch ---
    conv = jnp.dot(pooled, wc_ref[...],
                   preferred_element_type=jnp.float32) + bc_ref[...]
    conv = jnp.maximum(conv, 0.0)                           # (N*16, 128)

    # --- Flatten (hw-major; FC weight columns pre-permuted to match PyTorch) ---
    flat = jnp.concatenate(
        [conv[n * N_POOL:(n + 1) * N_POOL, :].reshape(1, FC_IN)
         for n in range(n_batch)], axis=0)                  # (N, 2048)

    # --- Linear(2048, 1024); Dropout(p=0.7) is identity in eval mode ---
    h = jnp.dot(flat, wf_ref[...],
                preferred_element_type=jnp.float32) + bf_ref[...]   # (N, 1024)

    # --- Fused regression heads: columns [0:3]=xyz, [3:7]=wpqr, [7]=pad ---
    out_ref[...] = jnp.dot(h, wh_ref[...],
                           preferred_element_type=jnp.float32) + bh_ref[...]


@jax.jit
def loss_header1_forward(x_nchw, p_mat, wc_k, bc_k, wf_k, bf_k, wh_k, bh_k):
    """x_nchw: (N, 512, 14, 14) float32. Returns (xyz (N,3), wpqr (N,4))."""
    n = x_nchw.shape[0]
    # NHWC with the spatial dims pre-flattened: (N, 196, 512). One cheap XLA copy.
    x_k = jnp.transpose(x_nchw, (0, 2, 3, 1)).reshape(n, HW_IN, C_IN)

    full = lambda shape: pl.BlockSpec(shape, lambda i: (0,) * len(shape))

    out = pl.pallas_call(
        loss_header1_kernel,
        out_shape=jax.ShapeDtypeStruct((n, HEAD_DIM), jnp.float32),
        grid=(1,),
        in_specs=[
            full((n, HW_IN, C_IN)),     # x (NHWC, spatial flattened)
            full((N_POOL, HW_IN)),      # pooling matrix (16, 196)
            full((C_IN, C_CONV)),       # conv weight   (512, 128)
            full((1, C_CONV)),          # conv bias
            full((FC_IN, FC_OUT)),      # fc weight     (2048, 1024), hw-major cols
            full((1, FC_OUT)),          # fc bias
            full((FC_OUT, HEAD_DIM)),   # fused head weight (1024, 8)
            full((1, HEAD_DIM)),        # fused head bias
        ],
        out_specs=full((n, HEAD_DIM)),
        compiler_params=pltpu.CompilerParams(
            dimension_semantics=("arbitrary",),
            vmem_limit_bytes=40 * 1024 * 1024),
    )(x_k, p_mat, wc_k, bc_k, wf_k, bf_k, wh_k, bh_k)

    return out[:, :XYZ_DIM], out[:, XYZ_DIM:XYZ_DIM + WPQR_DIM]


def ref_forward(x, wc_pt, bc, wf_pt, bf, wl_pt, bl, wr_pt, br):
    """Pure-JAX reference in PyTorch (NCHW, C-major flatten) conventions."""
    n = x.shape[0]
    pooled = jnp.stack([
        jnp.stack([jnp.mean(x[:, :, 3 * i:3 * i + 5, 3 * j:3 * j + 5],
                            axis=(2, 3)) for j in range(W_P)], axis=-1)
        for i in range(H_P)], axis=-2)                      # (N, 512, 4, 4)
    pooled = jnp.maximum(pooled, 0.0)
    conv = jnp.einsum('nchw,oc->nohw', pooled, wc_pt[:, :, 0, 0]) \
        + bc[None, :, None, None]
    conv = jnp.maximum(conv, 0.0)                           # (N, 128, 4, 4)
    flat = conv.reshape(n, -1)                              # C-major flatten
    h = flat @ wf_pt.T + bf
    return h @ wl_pt.T + bl, h @ wr_pt.T + br


if __name__ == "__main__":
    key = jax.random.PRNGKey(0)
    ks = jax.random.split(key, 10)
    N = 2

    x = jax.random.normal(ks[0], (N, C_IN, H_IN, W_IN), dtype=jnp.float32)

    # Deterministic synthetic parameters, stored in PyTorch shapes.
    wc_pt = 0.02 * jax.random.normal(ks[1], (C_CONV, C_IN, 1, 1), jnp.float32)
    bc = 0.02 * jax.random.normal(ks[2], (C_CONV,), jnp.float32)
    wf_pt = 0.02 * jax.random.normal(ks[3], (FC_OUT, FC_IN), jnp.float32)
    bf = 0.02 * jax.random.normal(ks[4], (FC_OUT,), jnp.float32)
    wl_pt = 0.02 * jax.random.normal(ks[5], (XYZ_DIM, FC_OUT), jnp.float32)
    bl = 0.02 * jax.random.normal(ks[6], (XYZ_DIM,), jnp.float32)
    wr_pt = 0.02 * jax.random.normal(ks[7], (WPQR_DIM, FC_OUT), jnp.float32)
    br = 0.02 * jax.random.normal(ks[8], (WPQR_DIM,), jnp.float32)

    # Kernel-layout parameters (channel-last matmul form); one-time prep.
    p_mat = jnp.asarray(_POOL_MAT)                                   # (16, 196)
    wc_k = jnp.transpose(wc_pt[:, :, 0, 0], (1, 0))                  # (512, 128)
    bc_k = bc.reshape(1, C_CONV)
    # Permute FC columns: PyTorch flatten index = c*16 + hw; kernel uses hw*128 + c.
    wf_k = jnp.transpose(
        wf_pt.reshape(FC_OUT, C_CONV, N_POOL).transpose(0, 2, 1)
             .reshape(FC_OUT, FC_IN), (1, 0))                        # (2048, 1024)
    bf_k = bf.reshape(1, FC_OUT)
    # Fused heads: rows [xyz(3); wpqr(4); zero pad(1)] -> (1024, 8) weight.
    wh_k = jnp.transpose(
        jnp.concatenate([wl_pt, wr_pt, jnp.zeros((1, FC_OUT), jnp.float32)],
                        axis=0), (1, 0))                             # (1024, 8)
    bh_k = jnp.concatenate([bl, br, jnp.zeros((1,), jnp.float32)]
                           ).reshape(1, HEAD_DIM)

    xyz, wpqr = loss_header1_forward(x, p_mat, wc_k, bc_k, wf_k, bf_k,
                                     wh_k, bh_k)
    jax.block_until_ready((xyz, wpqr))

    xyz_ref, wpqr_ref = ref_forward(x, wc_pt, bc, wf_pt, bf,
                                    wl_pt, bl, wr_pt, br)
    assert xyz.shape == (N, XYZ_DIM) and wpqr.shape == (N, WPQR_DIM)
    assert jnp.allclose(xyz, xyz_ref, rtol=1e-3, atol=1e-3)
    assert jnp.allclose(wpqr, wpqr_ref, rtol=1e-3, atol=1e-3)
    print("KERNEL_OK")
</pallas_src>

<mosaic_0001>
module attributes {stable_mosaic.version = 11 : i64} {
  func.func @loss_header1_kernel(%arg0: i32, %arg1: memref<2x196x512xf32, #tpu.memory_space<vmem>>, %arg2: memref<16x196xf32, #tpu.memory_space<vmem>>, %arg3: memref<512x128xf32, #tpu.memory_space<vmem>>, %arg4: memref<1x128xf32, #tpu.memory_space<vmem>>, %arg5: memref<2048x1024xf32, #tpu.memory_space<vmem>>, %arg6: memref<1x1024xf32, #tpu.memory_space<vmem>>, %arg7: memref<1024x8xf32, #tpu.memory_space<vmem>>, %arg8: memref<1x8xf32, #tpu.memory_space<vmem>>, %arg9: memref<2x8xf32, #tpu.memory_space<vmem>>) attributes {dimension_semantics = [#tpu.dimension_semantics<arbitrary>], iteration_bounds = array<i64: 1>, scalar_prefetch = 0 : i64, scratch_operands = 0 : i64, tpu.core_type = #tpu.core_type<tc>, window_params = [{pipeline_mode = #tpu.pipeline_mode<synchronous>, transform_indices = @transform_0, window_bounds = array<i64: 2, 196, 512>}, {pipeline_mode = #tpu.pipeline_mode<synchronous>, transform_indices = @transform_1, window_bounds = array<i64: 16, 196>}, {pipeline_mode = #tpu.pipeline_mode<synchronous>, transform_indices = @transform_2, window_bounds = array<i64: 512, 128>}, {pipeline_mode = #tpu.pipeline_mode<synchronous>, transform_indices = @transform_3, window_bounds = array<i64: 1, 128>}, {pipeline_mode = #tpu.pipeline_mode<synchronous>, transform_indices = @transform_4, window_bounds = array<i64: 2048, 1024>}, {pipeline_mode = #tpu.pipeline_mode<synchronous>, transform_indices = @transform_5, window_bounds = array<i64: 1, 1024>}, {pipeline_mode = #tpu.pipeline_mode<synchronous>, transform_indices = @transform_6, window_bounds = array<i64: 1024, 8>}, {pipeline_mode = #tpu.pipeline_mode<synchronous>, transform_indices = @transform_7, window_bounds = array<i64: 1, 8>}, {pipeline_mode = #tpu.pipeline_mode<synchronous>, transform_indices = @transform_8, window_bounds = array<i64: 2, 8>}]} {
    %c0 = arith.constant 0 : index
    %c0_0 = arith.constant 0 : index
    %0 = vector.load %arg2[%c0, %c0_0] : memref<16x196xf32, #tpu.memory_space<vmem>>, vector<16x196xf32>
    %c0_1 = arith.constant 0 : index
    %c0_2 = arith.constant 0 : index
    %c0_3 = arith.constant 0 : index
    %1 = vector.load %arg1[%c0_1, %c0_2, %c0_3] : memref<2x196x512xf32, #tpu.memory_space<vmem>>, vector<1x196x512xf32>
    %2 = vector.shape_cast %1 : vector<1x196x512xf32> to vector<196x512xf32>
    %cst = arith.constant dense<0.000000e+00> : vector<16x512xf32>
    %3 = tpu.matmul %0, %2, %cst {dimension_numbers = #tpu.dot_dimension_numbers<[1], [0], [0], [1], [0, 0, 1, 1], [], []>} : vector<16x196xf32>, vector<196x512xf32>, vector<16x512xf32> -> vector<16x512xf32>
    %c0_4 = arith.constant 0 : index
    %c0_5 = arith.constant 0 : index
    %4 = vector.load %arg2[%c0_4, %c0_5] : memref<16x196xf32, #tpu.memory_space<vmem>>, vector<16x196xf32>
    %c1 = arith.constant 1 : index
    %c0_6 = arith.constant 0 : index
    %c0_7 = arith.constant 0 : index
    %5 = vector.load %arg1[%c1, %c0_6, %c0_7] : memref<2x196x512xf32, #tpu.memory_space<vmem>>, vector<1x196x512xf32>
    %6 = vector.shape_cast %5 : vector<1x196x512xf32> to vector<196x512xf32>
    %cst_8 = arith.constant dense<0.000000e+00> : vector<16x512xf32>
    %7 = tpu.matmul %4, %6, %cst_8 {dimension_numbers = #tpu.dot_dimension_numbers<[1], [0], [0], [1], [0, 0, 1, 1], [], []>} : vector<16x196xf32>, vector<196x512xf32>, vector<16x512xf32> -> vector<16x512xf32>
    %8 = tpu.concatenate %3, %7 in 0 : vector<16x512xf32>, vector<16x512xf32> -> vector<32x512xf32>
    %cst_9 = arith.constant 0.000000e+00 : f32
    %9 = vector.broadcast %cst_9 : f32 to vector<32x512xf32>
    %10 = arith.maximumf %8, %9 : vector<32x512xf32>
    %c0_10 = arith.constant 0 : index
    %c0_11 = arith.constant 0 : index
    %11 = vector.load %arg3[%c0_10, %c0_11] : memref<512x128xf32, #tpu.memory_space<vmem>>, vector<512x128xf32>
    %cst_12 = arith.constant dense<0.000000e+00> : vector<32x128xf32>
    %12 = tpu.matmul %10, %11, %cst_12 {dimension_numbers = #tpu.dot_dimension_numbers<[1], [0], [0], [1], [0, 0, 1, 1], [], []>} : vector<32x512xf32>, vector<512x128xf32>, vector<32x128xf32> -> vector<32x128xf32>
    %c0_13 = arith.constant 0 : index
    %c0_14 = arith.constant 0 : index
    %13 = vector.load %arg4[%c0_13, %c0_14] : memref<1x128xf32, #tpu.memory_space<vmem>>, vector<1x128xf32>
    %14 = vector.broadcast %13 : vector<1x128xf32> to vector<32x128xf32>
    %15 = arith.addf %12, %14 : vector<32x128xf32>
    %cst_15 = arith.constant 0.000000e+00 : f32
    %16 = vector.broadcast %cst_15 : f32 to vector<32x128xf32>
    %17 = arith.maximumf %15, %16 : vector<32x128xf32>
    %18 = vector.extract_strided_slice %17 {offsets = [0, 0], sizes = [16, 128], strides = [1, 1]} : vector<32x128xf32> to vector<16x128xf32>
    %19 = vector.shape_cast %18 : vector<16x128xf32> to vector<1x2048xf32>
    %20 = vector.extract_strided_slice %17 {offsets = [16, 0], sizes = [16, 128], strides = [1, 1]} : vector<32x128xf32> to vector<16x128xf32>
    %21 = vector.shape_cast %20 : vector<16x128xf32> to vector<1x2048xf32>
    %22 = tpu.concatenate %19, %21 in 0 : vector<1x2048xf32>, vector<1x2048xf32> -> vector<2x2048xf32>
    %c0_16 = arith.constant 0 : index
    %c0_17 = arith.constant 0 : index
    %23 = vector.load %arg5[%c0_16, %c0_17] : memref<2048x1024xf32, #tpu.memory_space<vmem>>, vector<2048x1024xf32>
    %cst_18 = arith.constant dense<0.000000e+00> : vector<2x1024xf32>
    %24 = tpu.matmul %22, %23, %cst_18 {dimension_numbers = #tpu.dot_dimension_numbers<[1], [0], [0], [1], [0, 0, 1, 1], [], []>} : vector<2x2048xf32>, vector<2048x1024xf32>, vector<2x1024xf32> -> vector<2x1024xf32>
    %c0_19 = arith.constant 0 : index
    %c0_20 = arith.constant 0 : index
    %25 = vector.load %arg6[%c0_19, %c0_20] : memref<1x1024xf32, #tpu.memory_space<vmem>>, vector<1x1024xf32>
    %26 = vector.broadcast %25 : vector<1x1024xf32> to vector<2x1024xf32>
    %27 = arith.addf %24, %26 : vector<2x1024xf32>
    %c0_21 = arith.constant 0 : index
    %c0_22 = arith.constant 0 : index
    %28 = vector.load %arg7[%c0_21, %c0_22] : memref<1024x8xf32, #tpu.memory_space<vmem>>, vector<1024x8xf32>
    %cst_23 = arith.constant dense<0.000000e+00> : vector<2x8xf32>
    %29 = tpu.matmul %27, %28, %cst_23 {dimension_numbers = #tpu.dot_dimension_numbers<[1], [0], [0], [1], [0, 0, 1, 1], [], []>} : vector<2x1024xf32>, vector<1024x8xf32>, vector<2x8xf32> -> vector<2x8xf32>
    %c0_24 = arith.constant 0 : index
    %c0_25 = arith.constant 0 : index
    %30 = vector.load %arg8[%c0_24, %c0_25] : memref<1x8xf32, #tpu.memory_space<vmem>>, vector<1x8xf32>
    %31 = vector.broadcast %30 : vector<1x8xf32> to vector<2x8xf32>
    %32 = arith.addf %29, %31 : vector<2x8xf32>
    %c0_26 = arith.constant 0 : index
    %c0_27 = arith.constant 0 : index
    %33 = vector.load %arg9[%c0_26, %c0_27] : memref<2x8xf32, #tpu.memory_space<vmem>>, vector<2x8xf32>
    tpu.vector_store %arg9[%c0_26, %c0_27], %32 {strides = array<i32>} : memref<2x8xf32, #tpu.memory_space<vmem>>, vector<2x8xf32>,
    return
  }
  func.func @transform_0(%arg0: i32) -> (i32, i32, i32) {
    %c0_i32 = arith.constant 0 : i32
    %c0_i32_0 = arith.constant 0 : i32
    %c0_i32_1 = arith.constant 0 : i32
    %c0_i32_2 = arith.constant 0 : i32
    return %c0_i32, %c0_i32_0, %c0_i32_1 : i32, i32, i32
  }
  func.func @transform_1(%arg0: i32) -> (i32, i32) {
    %c0_i32 = arith.constant 0 : i32
    %c0_i32_0 = arith.constant 0 : i32
    %c0_i32_1 = arith.constant 0 : i32
    return %c0_i32, %c0_i32_0 : i32, i32
  }
  func.func @transform_2(%arg0: i32) -> (i32, i32) {
    %c0_i32 = arith.constant 0 : i32
    %c0_i32_0 = arith.constant 0 : i32
    %c0_i32_1 = arith.constant 0 : i32
    return %c0_i32, %c0_i32_0 : i32, i32
  }
  func.func @transform_3(%arg0: i32) -> (i32, i32) {
    %c0_i32 = arith.constant 0 : i32
    %c0_i32_0 = arith.constant 0 : i32
    %c0_i32_1 = arith.constant 0 : i32
    return %c0_i32, %c0_i32_0 : i32, i32
  }
  func.func @transform_4(%arg0: i32) -> (i32, i32) {
    %c0_i32 = arith.constant 0 : i32
    %c0_i32_0 = arith.constant 0 : i32
    %c0_i32_1 = arith.constant 0 : i32
    return %c0_i32, %c0_i32_0 : i32, i32
  }
  func.func @transform_5(%arg0: i32) -> (i32, i32) {
    %c0_i32 = arith.constant 0 : i32
    %c0_i32_0 = arith.constant 0 : i32
    %c0_i32_1 = arith.constant 0 : i32
    return %c0_i32, %c0_i32_0 : i32, i32
  }
  func.func @transform_6(%arg0: i32) -> (i32, i32) {
    %c0_i32 = arith.constant 0 : i32
    %c0_i32_0 = arith.constant 0 : i32
    %c0_i32_1 = arith.constant 0 : i32
    return %c0_i32, %c0_i32_0 : i32, i32
  }
  func.func @transform_7(%arg0: i32) -> (i32, i32) {
    %c0_i32 = arith.constant 0 : i32
    %c0_i32_0 = arith.constant 0 : i32
    %c0_i32_1 = arith.constant 0 : i32
    return %c0_i32, %c0_i32_0 : i32, i32
  }
  func.func @transform_8(%arg0: i32) -> (i32, i32) {
    %c0_i32 = arith.constant 0 : i32
    %c0_i32_0 = arith.constant 0 : i32
    %c0_i32_1 = arith.constant 0 : i32
    return %c0_i32, %c0_i32_0 : i32, i32
  }
}

</mosaic_0001>

<llo_original>
// kernel: loss_header1_forward.1
$region0: #{loss_header1_forward.1}
  #allocation0 [shape = 'u32[]', space=smem, size = 0x4, offset = 0x4, fixed_abs, tag = 'smem constant byte address 0x4 - core index']
  #allocation1 [shape = 'u32[144,128]{1,0:T(1,128)}', space=vmem, size = 0x12000, scoped, tag = 'internal scratch']
  %s0 = inlined_call_operand.vmem [shape: f32[2,196,512], index: 0, kind: input, shape index: {}]
  %s1 = inlined_call_operand.hbm [shape: f32[16,196], index: 1, kind: input, shape index: {}]
  %s2 = inlined_call_operand.hbm [shape: f32[512,128], index: 2, kind: input, shape index: {}]
  %s3 = inlined_call_operand.hbm [shape: f32[1,128], index: 3, kind: input, shape index: {}]
  %s4 = inlined_call_operand.hbm [shape: f32[2048,1024], index: 4, kind: input, shape index: {}]
  %s5 = inlined_call_operand.hbm [shape: f32[1,1024], index: 5, kind: input, shape index: {}]
  %s6 = inlined_call_operand.vmem [shape: f32[1024,8], index: 6, kind: input, shape index: {}]
  %s7 = inlined_call_operand.hbm [shape: f32[1,8], index: 7, kind: input, shape index: {}]
  %s8 = inlined_call_operand.vmem [shape: f32[2,8], index: 8, kind: output, shape index: {}]
  %s9 = sld [smem:[#allocation0]]
  $region66: #{loss_header1_forward.1} parent=0
    _
  %s11 = ssub.s32 1, %s9
  %s12 = scalar_select 0, %s11, %s9
  $region1: #{loss_header1_forward.1} parent=0
    #allocation2 [shape = 'u8[16384]{0}', space=vmem, size = 0x4000, scoped, tag = 'input window, operand 1, single buffered']
    #allocation3 [shape = 's32[1]{0}', space=sflag, size = 0x4, scoped, tag = 'scoped memory for loss_header1_forward.1']
    #allocation4 [shape = 'u8[262144]{0}', space=vmem, size = 0x40000, scoped, tag = 'input window, operand 2, single buffered']
    #allocation5 [shape = 's32[1]{0}', space=sflag, size = 0x4, scoped, tag = 'scoped memory for loss_header1_forward.1']
    #allocation6 [shape = 'u8[512]{0}', space=vmem, size = 0x400, scoped, tag = 'input window, operand 3, single buffered']
    #allocation7 [shape = 'u8[8388608]{0}', space=vmem, size = 0x800000, scoped, tag = 'input window, operand 4, single buffered']
    #allocation8 [shape = 's32[1]{0}', space=sflag, size = 0x4, scoped, tag = 'scoped memory for loss_header1_forward.1']
    #allocation9 [shape = 'u8[4096]{0}', space=vmem, size = 0x1000, scoped, tag = 'input window, operand 5, single buffered']
    #allocation10 [shape = 'u8[512]{0}', space=vmem, size = 0x400, scoped, tag = 'input window, operand 7, single buffered']
    #allocation11 [shape = 's32[1]{0}', space=sflag, size = 0x4, scoped, tag = 'scoped memory for loss_header1_forward.1']
    %13 = vsyncpa [#allocation3], 0
    %14 = vsyncpa [#allocation5], 0
    %15 = vsyncpa [#allocation8], 0
    %16 = vsyncpa [#allocation11], 0
    // Predicated region
    $region2: #{loss_header1_forward.1} parent=1 // pred_check
      _
    $region3: #{loss_header1_forward.1} parent=1 // pred_check_branch
      %18 = sbr.rel (0) target = $region5
    $region4: #{loss_header1_forward.1} parent=1 // pred_region
      _
    $region5: #{loss_header1_forward.1} parent=1 // pred_fallthru
      _
    // Predicated region
    $region6: #{loss_header1_forward.1} parent=1 // pred_check
      _
    $region7: #{loss_header1_forward.1} parent=1 // pred_check_branch
      %20 = sbr.rel (0) target = $region9
    $region8: #{loss_header1_forward.1} parent=1 // pred_region
      %s22 = ssub.s32 512, 512
      %23 = vsyncadd [#allocation3], %s22
      %s24 = sshll.u32 [#allocation2], 4
      %s25 = int_to_ptr.vmem [resolvable:$true] %s24
      %30 = dma.hbm_to_vmem [thread:$0]  %s1, 512, %s25, [#allocation3], 256, 256, 16
    $region9: #{loss_header1_forward.1} parent=1 // pred_fallthru
      _
    // Predicated region
    $region10: #{loss_header1_forward.1} parent=1 // pred_check
      _
    $region11: #{loss_header1_forward.1} parent=1 // pred_check_branch
      %32 = sbr.rel (0) target = $region13
    $region12: #{loss_header1_forward.1} parent=1 // pred_region
      %s34 = ssub.s32 8192, 8192
      %35 = vsyncadd [#allocation5], %s34
      %s36 = sshll.u32 [#allocation4], 4
      %s37 = int_to_ptr.vmem [resolvable:$true] %s36
      %42 = dma.hbm_to_vmem [thread:$0]  %s2, 8192, %s37, [#allocation5], 128, 128, 8
    $region13: #{loss_header1_forward.1} parent=1 // pred_fallthru
      _
    // Predicated region
    $region14: #{loss_header1_forward.1} parent=1 // pred_check
      _
    $region15: #{loss_header1_forward.1} parent=1 // pred_check_branch
      %44 = sbr.rel (0) target = $region17
    $region16: #{loss_header1_forward.1} parent=1 // pred_region
      %s46 = ssub.s32 16, 16
      %47 = vsyncadd [#allocation5], %s46
      %s49 = sshll.u32 [#allocation6], 4
      %s50 = int_to_ptr.vmem [resolvable:$true] %s49
      %52 = dma.hbm_to_vmem [thread:$0]  %s3, 16, %s50, [#allocation5]
    $region17: #{loss_header1_forward.1} parent=1 // pred_fallthru
      _
    // Predicated region
    $region18: #{loss_header1_forward.1} parent=1 // pred_check
      _
    $region19: #{loss_header1_forward.1} parent=1 // pred_check_branch
      %54 = sbr.rel (0) target = $region21
    $region20: #{loss_header1_forward.1} parent=1 // pred_region
      %s56 = ssub.s32 262144, 262144
      %57 = vsyncadd [#allocation8], %s56
      %s58 = sshll.u32 [#allocation7], 4
      %s59 = int_to_ptr.vmem [resolvable:$true] %s58
      %64 = dma.hbm_to_vmem [thread:$0]  %s4, 262144, %s59, [#allocation8], 1024, 1024, 64
    $region21: #{loss_header1_forward.1} parent=1 // pred_fallthru
      _
    // Predicated region
    $region22: #{loss_header1_forward.1} parent=1 // pred_check
      _
    $region23: #{loss_header1_forward.1} parent=1 // pred_check_branch
      %66 = sbr.rel (0) target = $region25
    $region24: #{loss_header1_forward.1} parent=1 // pred_region
      %s68 = ssub.s32 128, 128
      %69 = vsyncadd [#allocation8], %s68
      %s71 = sshll.u32 [#allocation9], 4
      %s72 = int_to_ptr.vmem [resolvable:$true] %s71
      %74 = dma.hbm_to_vmem [thread:$0]  %s5, 128, %s72, [#allocation8]
    $region25: #{loss_header1_forward.1} parent=1 // pred_fallthru
      _
    // Predicated region
    $region26: #{loss_header1_forward.1} parent=1 // pred_check
      _
    $region27: #{loss_header1_forward.1} parent=1 // pred_check_branch
      %76 = sbr.rel (0) target = $region29
    $region28: #{loss_header1_forward.1} parent=1 // pred_region
      _
    $region29: #{loss_header1_forward.1} parent=1 // pred_fallthru
      _
    // Predicated region
    $region30: #{loss_header1_forward.1} parent=1 // pred_check
      _
    $region31: #{loss_header1_forward.1} parent=1 // pred_check_branch
      %78 = sbr.rel (0) target = $region33
    $region32: #{loss_header1_forward.1} parent=1 // pred_region
      %s80 = ssub.s32 16, 16
      %81 = vsyncadd [#allocation11], %s80
      %s83 = sshll.u32 [#allocation10], 4
      %s84 = int_to_ptr.vmem [resolvable:$true] %s83
      %86 = dma.hbm_to_vmem [thread:$0]  %s7, 16, %s84, [#allocation11]
    $region33: #{loss_header1_forward.1} parent=1 // pred_fallthru
      _
    // Predicated region
    $region34: #{loss_header1_forward.1} parent=1 // pred_check
      _
    $region35: #{loss_header1_forward.1} parent=1 // pred_check_branch
      %88 = sbr.rel (0) target = $region37
    $region36: #{loss_header1_forward.1} parent=1 // pred_region
      %89 = dma.done [#allocation3], 512
    $region37: #{loss_header1_forward.1} parent=1 // pred_fallthru
      _
    // Predicated region
    $region38: #{loss_header1_forward.1} parent=1 // pred_check
      _
    $region39: #{loss_header1_forward.1} parent=1 // pred_check_branch
      %91 = sbr.rel (0) target = $region41
    $region40: #{loss_header1_forward.1} parent=1 // pred_region
      %92 = dma.done [#allocation5], 8192
    $region41: #{loss_header1_forward.1} parent=1 // pred_fallthru
      _
    // Predicated region
    $region42: #{loss_header1_forward.1} parent=1 // pred_check
      _
    $region43: #{loss_header1_forward.1} parent=1 // pred_check_branch
      %94 = sbr.rel (0) target = $region45
    $region44: #{loss_header1_forward.1} parent=1 // pred_region
      %95 = dma.done [#allocation5], 16
    $region45: #{loss_header1_forward.1} parent=1 // pred_fallthru
      _
    // Predicated region
    $region46: #{loss_header1_forward.1} parent=1 // pred_check
      _
    $region47: #{loss_header1_forward.1} parent=1 // pred_check_branch
      %97 = sbr.rel (0) target = $region49
    $region48: #{loss_header1_forward.1} parent=1 // pred_region
      %98 = dma.done [#allocation8], 262144
    $region49: #{loss_header1_forward.1} parent=1 // pred_fallthru
      _
    // Predicated region
    $region50: #{loss_header1_forward.1} parent=1 // pred_check
      _
    $region51: #{loss_header1_forward.1} parent=1 // pred_check_branch
      %100 = sbr.rel (0) target = $region53
    $region52: #{loss_header1_forward.1} parent=1 // pred_region
      %101 = dma.done [#allocation8], 128
    $region53: #{loss_header1_forward.1} parent=1 // pred_fallthru
      _
    // Predicated region
    $region54: #{loss_header1_forward.1} parent=1 // pred_check
      _
    $region55: #{loss_header1_forward.1} parent=1 // pred_check_branch
      %103 = sbr.rel (0) target = $region57
    $region56: #{loss_header1_forward.1} parent=1 // pred_region
      %104 = dma.done [#allocation11], 16
    $region57: #{loss_header1_forward.1} parent=1 // pred_fallthru
      _
    %v105 = vld [vmem:[#allocation2] sm:$0xff]
    %v106 = vld [vmem:[#allocation2 + $0x8] sm:$0xff]
    %v107 = vld [vmem:[#allocation2 + $0x10] sm:$0xff]
    %v108 = vld [vmem:[#allocation2 + $0x18] sm:$0xff]
    %v109 = vld [vmem:[%s0] sm:$0xff]
    %v110 = vld [vmem:[%s0 + $0x8] sm:$0xff]
    %v111 = vld [vmem:[%s0 + $0x10] sm:$0xff]
    %v112 = vld [vmem:[%s0 + $0x18] sm:$0xff]
    %v113 = vld [vmem:[%s0 + $0x20] sm:$0xff]
    %v114 = vld [vmem:[%s0 + $0x28] sm:$0xff]
    %v115 = vld [vmem:[%s0 + $0x30] sm:$0xff]
    %v116 = vld [vmem:[%s0 + $0x38] sm:$0xff]
    %v117 = vld [vmem:[%s0 + $0x40] sm:$0xff]
    %v118 = vld [vmem:[%s0 + $0x48] sm:$0xff]
    %v119 = vld [vmem:[%s0 + $0x50] sm:$0xff]
    %v120 = vld [vmem:[%s0 + $0x58] sm:$0xff]
    %v121 = vld [vmem:[%s0 + $0x60] sm:$0xff]
    %v122 = vld [vmem:[%s0 + $0x68] sm:$0xff]
    %v123 = vld [vmem:[%s0 + $0x70] sm:$0xff]
    %v124 = vld [vmem:[%s0 + $0x78] sm:$0xff]
    %v125 = vld [vmem:[%s0 + $0x80] sm:$0xff]
    %v126 = vld [vmem:[%s0 + $0x88] sm:$0xff]
    %v127 = vld [vmem:[%s0 + $0x90] sm:$0xff]
    %v128 = vld [vmem:[%s0 + $0x98] sm:$0xff]
    %v129 = vld [vmem:[%s0 + $0xa0] sm:$0xff]
    %v130 = vld [vmem:[%s0 + $0xa8] sm:$0xff]
    %v131 = vld [vmem:[%s0 + $0xb0] sm:$0xff]
    %v132 = vld [vmem:[%s0 + $0xb8] sm:$0xff]
    %v133 = vld [vmem:[%s0 + $0xc0] sm:$0xff]
    %v134 = vld [vmem:[%s0 + $0xc8] sm:$0xff]
    %v135 = vld [vmem:[%s0 + $0xd0] sm:$0xff]
    %v136 = vld [vmem:[%s0 + $0xd8] sm:$0xff]
    %v137 = vld [vmem:[%s0 + $0xe0] sm:$0xff]
    %v138 = vld [vmem:[%s0 + $0xe8] sm:$0xff]
    %v139 = vld [vmem:[%s0 + $0xf0] sm:$0xff]
    %v140 = vld [vmem:[%s0 + $0xf8] sm:$0xff]
    %v141 = vld [vmem:[%s0 + $0x100] sm:$0xff]
    %v142 = vld [vmem:[%s0 + $0x108] sm:$0xff]
    %v143 = vld [vmem:[%s0 + $0x110] sm:$0xff]
    %v144 = vld [vmem:[%s0 + $0x118] sm:$0xff]
    %v145 = vld [vmem:[%s0 + $0x120] sm:$0xff]
    %v146 = vld [vmem:[%s0 + $0x128] sm:$0xff]
    %v147 = vld [vmem:[%s0 + $0x130] sm:$0xff]
    %v148 = vld [vmem:[%s0 + $0x138] sm:$0xff]
    %v149 = vld [vmem:[%s0 + $0x140] sm:$0xff]
    %v150 = vld [vmem:[%s0 + $0x148] sm:$0xff]
    %v151 = vld [vmem:[%s0 + $0x150] sm:$0xff]
    %v152 = vld [vmem:[%s0 + $0x158] sm:$0xff]
    %v153 = vld [vmem:[%s0 + $0x160] sm:$0xff]
    %v154 = vld [vmem:[%s0 + $0x168] sm:$0xff]
    %v155 = vld [vmem:[%s0 + $0x170] sm:$0xff]
    %v156 = vld [vmem:[%s0 + $0x178] sm:$0xff]
    %v157 = vld [vmem:[%s0 + $0x180] sm:$0xff]
    %v158 = vld [vmem:[%s0 + $0x188] sm:$0xff]
    %v159 = vld [vmem:[%s0 + $0x190] sm:$0xff]
    %v160 = vld [vmem:[%s0 + $0x198] sm:$0xff]
    %v161 = vld [vmem:[%s0 + $0x1a0] sm:$0xff]
    %v162 = vld [vmem:[%s0 + $0x1a8] sm:$0xff]
    %v163 = vld [vmem:[%s0 + $0x1b0] sm:$0xff]
    %v164 = vld [vmem:[%s0 + $0x1b8] sm:$0xff]
    %v165 = vld [vmem:[%s0 + $0x1c0] sm:$0xff]
    %v166 = vld [vmem:[%s0 + $0x1c8] sm:$0xff]
    %v167 = vld [vmem:[%s0 + $0x1d0] sm:$0xff]
    %v168 = vld [vmem:[%s0 + $0x1d8] sm:$0xff]
    %v169 = vld [vmem:[%s0 + $0x1e0] sm:$0xff]
    %v170 = vld [vmem:[%s0 + $0x1e8] sm:$0xff]
    %v171 = vld [vmem:[%s0 + $0x1f0] sm:$0xff]
    %v172 = vld [vmem:[%s0 + $0x1f8] sm:$0xff]
    %v173 = vld [vmem:[%s0 + $0x200] sm:$0xff]
    %v174 = vld [vmem:[%s0 + $0x208] sm:$0xff]
    %v175 = vld [vmem:[%s0 + $0x210] sm:$0xff]
    %v176 = vld [vmem:[%s0 + $0x218] sm:$0xff]
    %v177 = vld [vmem:[%s0 + $0x220] sm:$0xff]
    %v178 = vld [vmem:[%s0 + $0x228] sm:$0xff]
    %v179 = vld [vmem:[%s0 + $0x230] sm:$0xff]
    %v180 = vld [vmem:[%s0 + $0x238] sm:$0xff]
    %v181 = vld [vmem:[%s0 + $0x240] sm:$0xff]
    %v182 = vld [vmem:[%s0 + $0x248] sm:$0xff]
    %v183 = vld [vmem:[%s0 + $0x250] sm:$0xff]
    %v184 = vld [vmem:[%s0 + $0x258] sm:$0xff]
    %v185 = vld [vmem:[%s0 + $0x260] sm:$0xff]
    %v186 = vld [vmem:[%s0 + $0x268] sm:$0xff]
    %v187 = vld [vmem:[%s0 + $0x270] sm:$0xff]
    %v188 = vld [vmem:[%s0 + $0x278] sm:$0xff]
    %v189 = vld [vmem:[%s0 + $0x280] sm:$0xff]
    %v190 = vld [vmem:[%s0 + $0x288] sm:$0xff]
    %v191 = vld [vmem:[%s0 + $0x290] sm:$0xff]
    %v192 = vld [vmem:[%s0 + $0x298] sm:$0xff]
    %v193 = vld [vmem:[%s0 + $0x2a0] sm:$0xff]
    %v194 = vld [vmem:[%s0 + $0x2a8] sm:$0xff]
    %v195 = vld [vmem:[%s0 + $0x2b0] sm:$0xff]
    %v196 = vld [vmem:[%s0 + $0x2b8] sm:$0xff]
    %v197 = vld [vmem:[%s0 + $0x2c0] sm:$0xff]
    %v198 = vld [vmem:[%s0 + $0x2c8] sm:$0xff]
    %v199 = vld [vmem:[%s0 + $0x2d0] sm:$0xff]
    %v200 = vld [vmem:[%s0 + $0x2d8] sm:$0xff]
    %v201 = vld [vmem:[%s0 + $0x2e0] sm:$0xff]
    %v202 = vld [vmem:[%s0 + $0x2e8] sm:$0xff]
    %v203 = vld [vmem:[%s0 + $0x2f0] sm:$0xff]
    %v204 = vld [vmem:[%s0 + $0x2f8] sm:$0xff]
    %v205 = vld [vmem:[%s0 + $0x300] sm:$0xf]
    %v206 = vld [vmem:[%s0 + $0x308] sm:$0xf]
    %v207 = vld [vmem:[%s0 + $0x310] sm:$0xf]
    %v208 = vld [vmem:[%s0 + $0x318] sm:$0xf]
    %vm209 = vcmask 556032
    %v211 = vsel %vm209, %v106, 0
    %v214 = vsel %vm209, %v108, 0
    %vm216 = vcmask 1043456
    %v218 = vsel %vm216, %v205, 0
    %v221 = vsel %vm216, %v206, 0
    %v224 = vsel %vm216, %v207, 0
    %v227 = vsel %vm216, %v208, 0
    %229 = vmatprep.subr.mxu0 %v110
    %230 = vmatpush1.msra.mxu0 %v109
    %231 = vmatprep.subr.mxu0 %v114
    %232 = vmatpush1.msra.mxu0 %v113
    %233 = vmatprep.subr.mxu0 %v118
    %234 = vmatpush1.msra.mxu0 %v117
    %235 = vmatprep.subr.mxu0 %v122
    %236 = vmatpush1.msra.mxu0 %v121
    %237 = vmatprep.subr.mxu0 %v126
    %238 = vmatpush1.msra.mxu0 %v125
    %239 = vmatprep.subr.mxu0 %v130
    %240 = vmatpush1.msra.mxu0 %v129
    %241 = vmatprep.subr.mxu0 %v134
    %242 = vmatpush1.msra.mxu0 %v133
    %243 = vmatprep.subr.mxu0 %v138
    %244 = vmatpush1.msra.mxu0 %v137
    %245 = vmatprep.subr.mxu0 %v142
    %246 = vmatpush1.msra.mxu0 %v141
    %247 = vmatprep.subr.mxu0 %v146
    %248 = vmatpush1.msra.mxu0 %v145
    %249 = vmatprep.subr.mxu0 %v150
    %250 = vmatpush1.msra.mxu0 %v149
    %251 = vmatprep.subr.mxu0 %v154
    %252 = vmatpush1.msra.mxu0 %v153
    %253 = vmatprep.subr.mxu0 %v158
    %254 = vmatpush1.msra.mxu0 %v157
    %255 = vmatprep.subr.mxu0 %v162
    %256 = vmatpush1.msra.mxu0 %v161
    %257 = vmatprep.subr.mxu0 %v166
    %258 = vmatpush1.msra.mxu0 %v165
    %259 = vmatprep.subr.mxu0 %v170
    %260 = vmatpush1.msra.mxu0 %v169
    %261 = vmatprep.subr.mxu0 %v174
    %262 = vmatpush1.msra.mxu0 %v173
    %263 = vmatprep.subr.mxu0 %v178
    %264 = vmatpush1.msra.mxu0 %v177
    %265 = vmatprep.subr.mxu0 %v182
    %266 = vmatpush1.msra.mxu0 %v181
    %267 = vmatprep.subr.mxu0 %v186
    %268 = vmatpush1.msra.mxu0 %v185
    %269 = vmatprep.subr.mxu0 %v190
    %270 = vmatpush1.msra.mxu0 %v189
    %271 = vmatprep.subr.mxu0 %v194
    %272 = vmatpush1.msra.mxu0 %v193
    %273 = vmatprep.subr.mxu0 %v198
    %274 = vmatpush1.msra.mxu0 %v197
    %275 = vmatprep.subr.mxu0 %v202
    %276 = vmatpush1.msra.mxu0 %v201
    %277 = vmatprep.subr.mxu0 %v221
    %278 = vmatpush1.msra.mxu0 %v218
    %279 = vmatprep.subr.mxu0 0.0
    %280 = vmatpush1.msra.mxu0 0.0
    %281 = vmatprep.subr.mxu0 0.0
    %282 = vmatpush1.msra.mxu0 0.0
    %283 = vmatprep.subr.mxu0 0.0
    %284 = vmatpush1.msra.mxu0 0.0
    %285 = vmatprep.subr.mxu0 0.0
    %286 = vmatpush1.msra.mxu0 0.0
    %287 = vmatprep.subr.mxu0 0.0
    %288 = vmatpush1.msra.mxu0 0.0
    %289 = vmatprep.subr.mxu0 0.0
    %290 = vmatpush1.msra.mxu0 0.0
    %291 = vmatprep.subr.mxu0 0.0
    %292 = vmatpush1.msra.mxu0 0.0
    %293 = vmatprep.mubr.f32.mxu0 %v211
    %294 = vmatmul.mubr.f32.gmra.mrb[0].mxu0 %v105
    %v295 = vpop.f32.mrb[0].mxu0
    %v296 = vadd.f32 0.0, %v295
    %v297 = vpop.f32.mrb[0].mxu0
    %v298 = vadd.f32 0.0, %v297
    %299 = vmatprep.mubr.f32.mxu0 %v214
    %300 = vmatmul.mubr.f32.gmra.mrb[0].mxu0 %v107
    %v301 = vpop.f32.mrb[0].mxu0
    %v302 = vadd.f32 0.0, %v301
    %v303 = vpop.f32.mrb[0].mxu0
    %v304 = vadd.f32 0.0, %v303
    %305 = vdwg.mxu0
    %306 = vmatprep.subr.mxu0 %v112
    %307 = vmatpush1.msra.mxu0 %v111
    %308 = vmatprep.subr.mxu0 %v116
    %309 = vmatpush1.msra.mxu0 %v115
    %310 = vmatprep.subr.mxu0 %v120
    %311 = vmatpush1.msra.mxu0 %v119
    %312 = vmatprep.subr.mxu0 %v124
    %313 = vmatpush1.msra.mxu0 %v123
    %314 = vmatprep.subr.mxu0 %v128
    %315 = vmatpush1.msra.mxu0 %v127
    %316 = vmatprep.subr.mxu0 %v132
    %317 = vmatpush1.msra.mxu0 %v131
    %318 = vmatprep.subr.mxu0 %v136
    %319 = vmatpush1.msra.mxu0 %v135
    %320 = vmatprep.subr.mxu0 %v140
    %321 = vmatpush1.msra.mxu0 %v139
    %322 = vmatprep.subr.mxu0 %v144
    %323 = vmatpush1.msra.mxu0 %v143
    %324 = vmatprep.subr.mxu0 %v148
    %325 = vmatpush1.msra.mxu0 %v147
    %326 = vmatprep.subr.mxu0 %v152
    %327 = vmatpush1.msra.mxu0 %v151
    %328 = vmatprep.subr.mxu0 %v156
    %329 = vmatpush1.msra.mxu0 %v155
    %330 = vmatprep.subr.mxu0 %v160
    %331 = vmatpush1.msra.mxu0 %v159
    %332 = vmatprep.subr.mxu0 %v164
    %333 = vmatpush1.msra.mxu0 %v163
    %334 = vmatprep.subr.mxu0 %v168
    %335 = vmatpush1.msra.mxu0 %v167
    %336 = vmatprep.subr.mxu0 %v172
    %337 = vmatpush1.msra.mxu0 %v171
    %338 = vmatprep.subr.mxu0 %v176
    %339 = vmatpush1.msra.mxu0 %v175
    %340 = vmatprep.subr.mxu0 %v180
    %341 = vmatpush1.msra.mxu0 %v179
    %342 = vmatprep.subr.mxu0 %v184
    %343 = vmatpush1.msra.mxu0 %v183
    %344 = vmatprep.subr.mxu0 %v188
    %345 = vmatpush1.msra.mxu0 %v187
    %346 = vmatprep.subr.mxu0 %v192
    %347 = vmatpush1.msra.mxu0 %v191
    %348 = vmatprep.subr.mxu0 %v196
    %349 = vmatpush1.msra.mxu0 %v195
    %350 = vmatprep.subr.mxu0 %v200
    %351 = vmatpush1.msra.mxu0 %v199
    %352 = vmatprep.subr.mxu0 %v204
    %353 = vmatpush1.msra.mxu0 %v203
    %354 = vmatprep.subr.mxu0 %v227
    %355 = vmatpush1.msra.mxu0 %v224
    %356 = vmatprep.subr.mxu0 0.0
    %357 = vmatpush1.msra.mxu0 0.0
    %358 = vmatprep.subr.mxu0 0.0
    %359 = vmatpush1.msra.mxu0 0.0
    %360 = vmatprep.subr.mxu0 0.0
    %361 = vmatpush1.msra.mxu0 0.0
    %362 = vmatprep.subr.mxu0 0.0
    %363 = vmatpush1.msra.mxu0 0.0
    %364 = vmatprep.subr.mxu0 0.0
    %365 = vmatpush1.msra.mxu0 0.0
    %366 = vmatprep.subr.mxu0 0.0
    %367 = vmatpush1.msra.mxu0 0.0
    %368 = vmatprep.subr.mxu0 0.0
    %369 = vmatpush1.msra.mxu0 0.0
    %370 = vmatprep.mubr.f32.mxu0 %v211
    %371 = vmatmul.mubr.f32.gmra.mrb[0].mxu0 %v105
    %v372 = vpop.f32.mrb[0].mxu0
    %v373 = vadd.f32 0.0, %v372
    %v374 = vpop.f32.mrb[0].mxu0
    %v375 = vadd.f32 0.0, %v374
    %376 = vmatprep.mubr.f32.mxu0 %v214
    %377 = vmatmul.mubr.f32.gmra.mrb[0].mxu0 %v107
    %v378 = vpop.f32.mrb[0].mxu0
    %v379 = vadd.f32 0.0, %v378
    %v380 = vpop.f32.mrb[0].mxu0
    %v381 = vadd.f32 0.0, %v380
    %382 = vdwg.mxu0
    %s383 = scalar_lea.vmem %s0, 800
    %v384 = vld [vmem:[%s383] sm:$0xff]
    %v385 = vld [vmem:[%s383 + $0x8] sm:$0xff]
    %v386 = vld [vmem:[%s383 + $0x10] sm:$0xff]
    %v387 = vld [vmem:[%s383 + $0x18] sm:$0xff]
    %v388 = vld [vmem:[%s383 + $0x20] sm:$0xff]
    %v389 = vld [vmem:[%s383 + $0x28] sm:$0xff]
    %v390 = vld [vmem:[%s383 + $0x30] sm:$0xff]
    %v391 = vld [vmem:[%s383 + $0x38] sm:$0xff]
    %v392 = vld [vmem:[%s383 + $0x40] sm:$0xff]
    %v393 = vld [vmem:[%s383 + $0x48] sm:$0xff]
    %v394 = vld [vmem:[%s383 + $0x50] sm:$0xff]
    %v395 = vld [vmem:[%s383 + $0x58] sm:$0xff]
    %v396 = vld [vmem:[%s383 + $0x60] sm:$0xff]
    %v397 = vld [vmem:[%s383 + $0x68] sm:$0xff]
    %v398 = vld [vmem:[%s383 + $0x70] sm:$0xff]
    %v399 = vld [vmem:[%s383 + $0x78] sm:$0xff]
    %v400 = vld [vmem:[%s383 + $0x80] sm:$0xff]
    %v401 = vld [vmem:[%s383 + $0x88] sm:$0xff]
    %v402 = vld [vmem:[%s383 + $0x90] sm:$0xff]
    %v403 = vld [vmem:[%s383 + $0x98] sm:$0xff]
    %v404 = vld [vmem:[%s383 + $0xa0] sm:$0xff]
    %v405 = vld [vmem:[%s383 + $0xa8] sm:$0xff]
    %v406 = vld [vmem:[%s383 + $0xb0] sm:$0xff]
    %v407 = vld [vmem:[%s383 + $0xb8] sm:$0xff]
    %v408 = vld [vmem:[%s383 + $0xc0] sm:$0xff]
    %v409 = vld [vmem:[%s383 + $0xc8] sm:$0xff]
    %v410 = vld [vmem:[%s383 + $0xd0] sm:$0xff]
    %v411 = vld [vmem:[%s383 + $0xd8] sm:$0xff]
    %v412 = vld [vmem:[%s383 + $0xe0] sm:$0xff]
    %v413 = vld [vmem:[%s383 + $0xe8] sm:$0xff]
    %v414 = vld [vmem:[%s383 + $0xf0] sm:$0xff]
    %v415 = vld [vmem:[%s383 + $0xf8] sm:$0xff]
    %v416 = vld [vmem:[%s383 + $0x100] sm:$0xff]
    %v417 = vld [vmem:[%s383 + $0x108] sm:$0xff]
    %v418 = vld [vmem:[%s383 + $0x110] sm:$0xff]
    %v419 = vld [vmem:[%s383 + $0x118] sm:$0xff]
    %v420 = vld [vmem:[%s383 + $0x120] sm:$0xff]
    %v421 = vld [vmem:[%s383 + $0x128] sm:$0xff]
    %v422 = vld [vmem:[%s383 + $0x130] sm:$0xff]
    %v423 = vld [vmem:[%s383 + $0x138] sm:$0xff]
    %v424 = vld [vmem:[%s383 + $0x140] sm:$0xff]
    %v425 = vld [vmem:[%s383 + $0x148] sm:$0xff]
    %v426 = vld [vmem:[%s383 + $0x150] sm:$0xff]
    %v427 = vld [vmem:[%s383 + $0x158] sm:$0xff]
    %v428 = vld [vmem:[%s383 + $0x160] sm:$0xff]
    %v429 = vld [vmem:[%s383 + $0x168] sm:$0xff]
    %v430 = vld [vmem:[%s383 + $0x170] sm:$0xff]
    %v431 = vld [vmem:[%s383 + $0x178] sm:$0xff]
    %v432 = vld [vmem:[%s383 + $0x180] sm:$0xff]
    %v433 = vld [vmem:[%s383 + $0x188] sm:$0xff]
    %v434 = vld [vmem:[%s383 + $0x190] sm:$0xff]
    %v435 = vld [vmem:[%s383 + $0x198] sm:$0xff]
    %v436 = vld [vmem:[%s383 + $0x1a0] sm:$0xff]
    %v437 = vld [vmem:[%s383 + $0x1a8] sm:$0xff]
    %v438 = vld [vmem:[%s383 + $0x1b0] sm:$0xff]
    %v439 = vld [vmem:[%s383 + $0x1b8] sm:$0xff]
    %v440 = vld [vmem:[%s383 + $0x1c0] sm:$0xff]
    %v441 = vld [vmem:[%s383 + $0x1c8] sm:$0xff]
    %v442 = vld [vmem:[%s383 + $0x1d0] sm:$0xff]
    %v443 = vld [vmem:[%s383 + $0x1d8] sm:$0xff]
    %v444 = vld [vmem:[%s383 + $0x1e0] sm:$0xff]
    %v445 = vld [vmem:[%s383 + $0x1e8] sm:$0xff]
    %v446 = vld [vmem:[%s383 + $0x1f0] sm:$0xff]
    %v447 = vld [vmem:[%s383 + $0x1f8] sm:$0xff]
    %v448 = vld [vmem:[%s383 + $0x200] sm:$0xff]
    %v449 = vld [vmem:[%s383 + $0x208] sm:$0xff]
    %v450 = vld [vmem:[%s383 + $0x210] sm:$0xff]
    %v451 = vld [vmem:[%s383 + $0x218] sm:$0xff]
    %v452 = vld [vmem:[%s383 + $0x220] sm:$0xff]
    %v453 = vld [vmem:[%s383 + $0x228] sm:$0xff]
    %v454 = vld [vmem:[%s383 + $0x230] sm:$0xff]
    %v455 = vld [vmem:[%s383 + $0x238] sm:$0xff]
    %v456 = vld [vmem:[%s383 + $0x240] sm:$0xff]
    %v457 = vld [vmem:[%s383 + $0x248] sm:$0xff]
    %v458 = vld [vmem:[%s383 + $0x250] sm:$0xff]
    %v459 = vld [vmem:[%s383 + $0x258] sm:$0xff]
    %v460 = vld [vmem:[%s383 + $0x260] sm:$0xff]
    %v461 = vld [vmem:[%s383 + $0x268] sm:$0xff]
    %v462 = vld [vmem:[%s383 + $0x270] sm:$0xff]
    %v463 = vld [vmem:[%s383 + $0x278] sm:$0xff]
    %v464 = vld [vmem:[%s383 + $0x280] sm:$0xff]
    %v465 = vld [vmem:[%s383 + $0x288] sm:$0xff]
    %v466 = vld [vmem:[%s383 + $0x290] sm:$0xff]
    %v467 = vld [vmem:[%s383 + $0x298] sm:$0xff]
    %v468 = vld [vmem:[%s383 + $0x2a0] sm:$0xff]
    %v469 = vld [vmem:[%s383 + $0x2a8] sm:$0xff]
    %v470 = vld [vmem:[%s383 + $0x2b0] sm:$0xff]
    %v471 = vld [vmem:[%s383 + $0x2b8] sm:$0xff]
    %v472 = vld [vmem:[%s383 + $0x2c0] sm:$0xff]
    %v473 = vld [vmem:[%s383 + $0x2c8] sm:$0xff]
    %v474 = vld [vmem:[%s383 + $0x2d0] sm:$0xff]
    %v475 = vld [vmem:[%s383 + $0x2d8] sm:$0xff]
    %v476 = vld [vmem:[%s383 + $0x2e0] sm:$0xff]
    %v477 = vld [vmem:[%s383 + $0x2e8] sm:$0xff]
    %v478 = vld [vmem:[%s383 + $0x2f0] sm:$0xff]
    %v479 = vld [vmem:[%s383 + $0x2f8] sm:$0xff]
    %v480 = vld [vmem:[%s383 + $0x300] sm:$0xf]
    %v481 = vld [vmem:[%s383 + $0x308] sm:$0xf]
    %v482 = vld [vmem:[%s383 + $0x310] sm:$0xf]
    %v483 = vld [vmem:[%s383 + $0x318] sm:$0xf]
    %v485 = vsel %vm216, %v480, 0
    %v488 = vsel %vm216, %v481, 0
    %v491 = vsel %vm216, %v482, 0
    %v494 = vsel %vm216, %v483, 0
    %496 = vmatprep.subr.mxu0 %v385
    %497 = vmatpush1.msra.mxu0 %v384
    %498 = vmatprep.subr.mxu0 %v389
    %499 = vmatpush1.msra.mxu0 %v388
    %500 = vmatprep.subr.mxu0 %v393
    %501 = vmatpush1.msra.mxu0 %v392
    %502 = vmatprep.subr.mxu0 %v397
    %503 = vmatpush1.msra.mxu0 %v396
    %504 = vmatprep.subr.mxu0 %v401
    %505 = vmatpush1.msra.mxu0 %v400
    %506 = vmatprep.subr.mxu0 %v405
    %507 = vmatpush1.msra.mxu0 %v404
    %508 = vmatprep.subr.mxu0 %v409
    %509 = vmatpush1.msra.mxu0 %v408
    %510 = vmatprep.subr.mxu0 %v413
    %511 = vmatpush1.msra.mxu0 %v412
    %512 = vmatprep.subr.mxu0 %v417
    %513 = vmatpush1.msra.mxu0 %v416
    %514 = vmatprep.subr.mxu0 %v421
    %515 = vmatpush1.msra.mxu0 %v420
    %516 = vmatprep.subr.mxu0 %v425
    %517 = vmatpush1.msra.mxu0 %v424
    %518 = vmatprep.subr.mxu0 %v429
    %519 = vmatpush1.msra.mxu0 %v428
    %520 = vmatprep.subr.mxu0 %v433
    %521 = vmatpush1.msra.mxu0 %v432
    %522 = vmatprep.subr.mxu0 %v437
    %523 = vmatpush1.msra.mxu0 %v436
    %524 = vmatprep.subr.mxu0 %v441
    %525 = vmatpush1.msra.mxu0 %v440
    %526 = vmatprep.subr.mxu0 %v445
    %527 = vmatpush1.msra.mxu0 %v444
    %528 = vmatprep.subr.mxu0 %v449
    %529 = vmatpush1.msra.mxu0 %v448
    %530 = vmatprep.subr.mxu0 %v453
    %531 = vmatpush1.msra.mxu0 %v452
    %532 = vmatprep.subr.mxu0 %v457
    %533 = vmatpush1.msra.mxu0 %v456
    %534 = vmatprep.subr.mxu0 %v461
    %535 = vmatpush1.msra.mxu0 %v460
    %536 = vmatprep.subr.mxu0 %v465
    %537 = vmatpush1.msra.mxu0 %v464
    %538 = vmatprep.subr.mxu0 %v469
    %539 = vmatpush1.msra.mxu0 %v468
    %540 = vmatprep.subr.mxu0 %v473
    %541 = vmatpush1.msra.mxu0 %v472
    %542 = vmatprep.subr.mxu0 %v477
    %543 = vmatpush1.msra.mxu0 %v476
    %544 = vmatprep.subr.mxu0 %v488
    %545 = vmatpush1.msra.mxu0 %v485
    %546 = vmatprep.subr.mxu0 0.0
    %547 = vmatpush1.msra.mxu0 0.0
    %548 = vmatprep.subr.mxu0 0.0
    %549 = vmatpush1.msra.mxu0 0.0
    %550 = vmatprep.subr.mxu0 0.0
    %551 = vmatpush1.msra.mxu0 0.0
    %552 = vmatprep.subr.mxu0 0.0
    %553 = vmatpush1.msra.mxu0 0.0
    %554 = vmatprep.subr.mxu0 0.0
    %555 = vmatpush1.msra.mxu0 0.0
    %556 = vmatprep.subr.mxu0 0.0
    %557 = vmatpush1.msra.mxu0 0.0
    %558 = vmatprep.subr.mxu0 0.0
    %559 = vmatpush1.msra.mxu0 0.0
    %560 = vmatprep.mubr.f32.mxu0 %v211
    %561 = vmatmul.mubr.f32.gmra.mrb[0].mxu0 %v105
    %v562 = vpop.f32.mrb[0].mxu0
    %v563 = vadd.f32 0.0, %v562
    %v564 = vpop.f32.mrb[0].mxu0
    %v565 = vadd.f32 0.0, %v564
    %566 = vmatprep.mubr.f32.mxu0 %v214
    %567 = vmatmul.mubr.f32.gmra.mrb[0].mxu0 %v107
    %v568 = vpop.f32.mrb[0].mxu0
    %v569 = vadd.f32 0.0, %v568
    %v570 = vpop.f32.mrb[0].mxu0
    %v571 = vadd.f32 0.0, %v570
    %572 = vdwg.mxu0
    %573 = vmatprep.subr.mxu0 %v387
    %574 = vmatpush1.msra.mxu0 %v386
    %575 = vmatprep.subr.mxu0 %v391
    %576 = vmatpush1.msra.mxu0 %v390
    %577 = vmatprep.subr.mxu0 %v395
    %578 = vmatpush1.msra.mxu0 %v394
    %579 = vmatprep.subr.mxu0 %v399
    %580 = vmatpush1.msra.mxu0 %v398
    %581 = vmatprep.subr.mxu0 %v403
    %582 = vmatpush1.msra.mxu0 %v402
    %583 = vmatprep.subr.mxu0 %v407
    %584 = vmatpush1.msra.mxu0 %v406
    %585 = vmatprep.subr.mxu0 %v411
    %586 = vmatpush1.msra.mxu0 %v410
    %587 = vmatprep.subr.mxu0 %v415
    %588 = vmatpush1.msra.mxu0 %v414
    %589 = vmatprep.subr.mxu0 %v419
    %590 = vmatpush1.msra.mxu0 %v418
    %591 = vmatprep.subr.mxu0 %v423
    %592 = vmatpush1.msra.mxu0 %v422
    %593 = vmatprep.subr.mxu0 %v427
    %594 = vmatpush1.msra.mxu0 %v426
    %595 = vmatprep.subr.mxu0 %v431
    %596 = vmatpush1.msra.mxu0 %v430
    %597 = vmatprep.subr.mxu0 %v435
    %598 = vmatpush1.msra.mxu0 %v434
    %599 = vmatprep.subr.mxu0 %v439
    %600 = vmatpush1.msra.mxu0 %v438
    %601 = vmatprep.subr.mxu0 %v443
    %602 = vmatpush1.msra.mxu0 %v442
    %603 = vmatprep.subr.mxu0 %v447
    %604 = vmatpush1.msra.mxu0 %v446
    %605 = vmatprep.subr.mxu0 %v451
    %606 = vmatpush1.msra.mxu0 %v450
    %607 = vmatprep.subr.mxu0 %v455
    %608 = vmatpush1.msra.mxu0 %v454
    %609 = vmatprep.subr.mxu0 %v459
    %610 = vmatpush1.msra.mxu0 %v458
    %611 = vmatprep.subr.mxu0 %v463
    %612 = vmatpush1.msra.mxu0 %v462
    %613 = vmatprep.subr.mxu0 %v467
    %614 = vmatpush1.msra.mxu0 %v466
    %615 = vmatprep.subr.mxu0 %v471
    %616 = vmatpush1.msra.mxu0 %v470
    %617 = vmatprep.subr.mxu0 %v475
    %618 = vmatpush1.msra.mxu0 %v474
    %619 = vmatprep.subr.mxu0 %v479
    %620 = vmatpush1.msra.mxu0 %v478
    %621 = vmatprep.subr.mxu0 %v494
    %622 = vmatpush1.msra.mxu0 %v491
    %623 = vmatprep.subr.mxu0 0.0
    %624 = vmatpush1.msra.mxu0 0.0
    %625 = vmatprep.subr.mxu0 0.0
    %626 = vmatpush1.msra.mxu0 0.0
    %627 = vmatprep.subr.mxu0 0.0
    %628 = vmatpush1.msra.mxu0 0.0
    %629 = vmatprep.subr.mxu0 0.0
    %630 = vmatpush1.msra.mxu0 0.0
    %631 = vmatprep.subr.mxu0 0.0
    %632 = vmatpush1.msra.mxu0 0.0
    %633 = vmatprep.subr.mxu0 0.0
    %634 = vmatpush1.msra.mxu0 0.0
    %635 = vmatprep.subr.mxu0 0.0
    %636 = vmatpush1.msra.mxu0 0.0
    %637 = vmatprep.mubr.f32.mxu0 %v211
    %638 = vmatmul.mubr.f32.gmra.mrb[0].mxu0 %v105
    %v639 = vpop.f32.mrb[0].mxu0
    %v640 = vadd.f32 0.0, %v639
    %v641 = vpop.f32.mrb[0].mxu0
    %v642 = vadd.f32 0.0, %v641
    %643 = vmatprep.mubr.f32.mxu0 %v214
    %644 = vmatmul.mubr.f32.gmra.mrb[0].mxu0 %v107
    %v645 = vpop.f32.mrb[0].mxu0
    %v646 = vadd.f32 0.0, %v645
    %v647 = vpop.f32.mrb[0].mxu0
    %v648 = vadd.f32 0.0, %v647
    %649 = vdwg.mxu0
    %v650 = vmax.f32 %v296, 0.0
    %v651 = vmax.f32 %v298, 0.0
    %v652 = vmax.f32 %v373, 0.0
    %v653 = vmax.f32 %v375, 0.0
    %v654 = vmax.f32 %v302, 0.0
    %v655 = vmax.f32 %v304, 0.0
    %v656 = vmax.f32 %v379, 0.0
    %v657 = vmax.f32 %v381, 0.0
    %v658 = vmax.f32 %v563, 0.0
    %v659 = vmax.f32 %v565, 0.0
    %v660 = vmax.f32 %v640, 0.0
    %v661 = vmax.f32 %v642, 0.0
    %v662 = vmax.f32 %v569, 0.0
    %v663 = vmax.f32 %v571, 0.0
    %v664 = vmax.f32 %v646, 0.0
    %v665 = vmax.f32 %v648, 0.0
    %v666 = vld [vmem:[#allocation4] sm:$0xff]
    %v667 = vld [vmem:[#allocation4 + $0x8] sm:$0xff]
    %v668 = vld [vmem:[#allocation4 + $0x10] sm:$0xff]
    %v669 = vld [vmem:[#allocation4 + $0x18] sm:$0xff]
    %v670 = vld [vmem:[#allocation4 + $0x20] sm:$0xff]
    %v671 = vld [vmem:[#allocation4 + $0x28] sm:$0xff]
    %v672 = vld [vmem:[#allocation4 + $0x30] sm:$0xff]
    %v673 = vld [vmem:[#allocation4 + $0x38] sm:$0xff]
    %v674 = vld [vmem:[#allocation4 + $0x40] sm:$0xff]
    %v675 = vld [vmem:[#allocation4 + $0x48] sm:$0xff]
    %v676 = vld [vmem:[#allocation4 + $0x50] sm:$0xff]
    %v677 = vld [vmem:[#allocation4 + $0x58] sm:$0xff]
    %v678 = vld [vmem:[#allocation4 + $0x60] sm:$0xff]
    %v679 = vld [vmem:[#allocation4 + $0x68] sm:$0xff]
    %v680 = vld [vmem:[#allocation4 + $0x70] sm:$0xff]
    %v681 = vld [vmem:[#allocation4 + $0x78] sm:$0xff]
    %v682 = vld [vmem:[#allocation4 + $0x80] sm:$0xff]
    %v683 = vld [vmem:[#allocation4 + $0x88] sm:$0xff]
    %v684 = vld [vmem:[#allocation4 + $0x90] sm:$0xff]
    %v685 = vld [vmem:[#allocation4 + $0x98] sm:$0xff]
    %v686 = vld [vmem:[#allocation4 + $0xa0] sm:$0xff]
    %v687 = vld [vmem:[#allocation4 + $0xa8] sm:$0xff]
    %v688 = vld [vmem:[#allocation4 + $0xb0] sm:$0xff]
    %v689 = vld [vmem:[#allocation4 + $0xb8] sm:$0xff]
    %v690 = vld [vmem:[#allocation4 + $0xc0] sm:$0xff]
    %v691 = vld [vmem:[#allocation4 + $0xc8] sm:$0xff]
    %v692 = vld [vmem:[#allocation4 + $0xd0] sm:$0xff]
    %v693 = vld [vmem:[#allocation4 + $0xd8] sm:$0xff]
    %v694 = vld [vmem:[#allocation4 + $0xe0] sm:$0xff]
    %v695 = vld [vmem:[#allocation4 + $0xe8] sm:$0xff]
    %v696 = vld [vmem:[#allocation4 + $0xf0] sm:$0xff]
    %v697 = vld [vmem:[#allocation4 + $0xf8] sm:$0xff]
    %v698 = vld [vmem:[#allocation4 + $0x100] sm:$0xff]
    %v699 = vld [vmem:[#allocation4 + $0x108] sm:$0xff]
    %v700 = vld [vmem:[#allocation4 + $0x110] sm:$0xff]
    %v701 = vld [vmem:[#allocation4 + $0x118] sm:$0xff]
    %v702 = vld [vmem:[#allocation4 + $0x120] sm:$0xff]
    %v703 = vld [vmem:[#allocation4 + $0x128] sm:$0xff]
    %v704 = vld [vmem:[#allocation4 + $0x130] sm:$0xff]
    %v705 = vld [vmem:[#allocation4 + $0x138] sm:$0xff]
    %v706 = vld [vmem:[#allocation4 + $0x140] sm:$0xff]
    %v707 = vld [vmem:[#allocation4 + $0x148] sm:$0xff]
    %v708 = vld [vmem:[#allocation4 + $0x150] sm:$0xff]
    %v709 = vld [vmem:[#allocation4 + $0x158] sm:$0xff]
    %v710 = vld [vmem:[#allocation4 + $0x160] sm:$0xff]
    %v711 = vld [vmem:[#allocation4 + $0x168] sm:$0xff]
    %v712 = vld [vmem:[#allocation4 + $0x170] sm:$0xff]
    %v713 = vld [vmem:[#allocation4 + $0x178] sm:$0xff]
    %v714 = vld [vmem:[#allocation4 + $0x180] sm:$0xff]
    %v715 = vld [vmem:[#allocation4 + $0x188] sm:$0xff]
    %v716 = vld [vmem:[#allocation4 + $0x190] sm:$0xff]
    %v717 = vld [vmem:[#allocation4 + $0x198] sm:$0xff]
    %v718 = vld [vmem:[#allocation4 + $0x1a0] sm:$0xff]
    %v719 = vld [vmem:[#allocation4 + $0x1a8] sm:$0xff]
    %v720 = vld [vmem:[#allocation4 + $0x1b0] sm:$0xff]
    %v721 = vld [vmem:[#allocation4 + $0x1b8] sm:$0xff]
    %v722 = vld [vmem:[#allocation4 + $0x1c0] sm:$0xff]
    %v723 = vld [vmem:[#allocation4 + $0x1c8] sm:$0xff]
    %v724 = vld [vmem:[#allocation4 + $0x1d0] sm:$0xff]
    %v725 = vld [vmem:[#allocation4 + $0x1d8] sm:$0xff]
    %v726 = vld [vmem:[#allocation4 + $0x1e0] sm:$0xff]
    %v727 = vld [vmem:[#allocation4 + $0x1e8] sm:$0xff]
    %v728 = vld [vmem:[#allocation4 + $0x1f0] sm:$0xff]
    %v729 = vld [vmem:[#allocation4 + $0x1f8] sm:$0xff]
    %v730 = vld [vmem:[#allocation6] sm:$0x1]
    %v732 = vlaneseq
    %v733 = vshrl.u32 %v732, 7
    %v734 = vsub.s32 0, %v733
    %v735 = vrot.slane %v730, %v734
    %737 = vmatprep.subr.mxu0 0.0
    %738 = vmatpush1.msra.mxu0 %v666
    %739 = vmatprep.subr.mxu0 0.0
    %740 = vmatpush1.msra.mxu0 %v667
    %741 = vmatprep.subr.mxu0 0.0
    %742 = vmatpush1.msra.mxu0 %v668
    %743 = vmatprep.subr.mxu0 0.0
    %744 = vmatpush1.msra.mxu0 %v669
    %745 = vmatprep.subr.mxu0 0.0
    %746 = vmatpush1.msra.mxu0 %v670
    %747 = vmatprep.subr.mxu0 0.0
    %748 = vmatpush1.msra.mxu0 %v671
    %749 = vmatprep.subr.mxu0 0.0
    %750 = vmatpush1.msra.mxu0 %v672
    %751 = vmatprep.subr.mxu0 0.0
    %752 = vmatpush1.msra.mxu0 %v673
    %753 = vmatprep.subr.mxu0 0.0
    %754 = vmatpush1.msra.mxu0 %v674
    %755 = vmatprep.subr.mxu0 0.0
    %756 = vmatpush1.msra.mxu0 %v675
    %757 = vmatprep.subr.mxu0 0.0
    %758 = vmatpush1.msra.mxu0 %v676
    %759 = vmatprep.subr.mxu0 0.0
    %760 = vmatpush1.msra.mxu0 %v677
    %761 = vmatprep.subr.mxu0 0.0
    %762 = vmatpush1.msra.mxu0 %v678
    %763 = vmatprep.subr.mxu0 0.0
    %764 = vmatpush1.msra.mxu0 %v679
    %765 = vmatprep.subr.mxu0 0.0
    %766 = vmatpush1.msra.mxu0 %v680
    %767 = vmatprep.subr.mxu0 0.0
    %768 = vmatpush1.msra.mxu0 %v681
    %769 = vmatprep.subr.mxu0 0.0
    %770 = vmatpush1.msra.mxu0 %v682
    %771 = vmatprep.subr.mxu0 0.0
    %772 = vmatpush1.msra.mxu0 %v683
    %773 = vmatprep.subr.mxu0 0.0
    %774 = vmatpush1.msra.mxu0 %v684
    %775 = vmatprep.subr.mxu0 0.0
    %776 = vmatpush1.msra.mxu0 %v685
    %777 = vmatprep.subr.mxu0 0.0
    %778 = vmatpush1.msra.mxu0 %v686
    %779 = vmatprep.subr.mxu0 0.0
    %780 = vmatpush1.msra.mxu0 %v687
    %781 = vmatprep.subr.mxu0 0.0
    %782 = vmatpush1.msra.mxu0 %v688
    %783 = vmatprep.subr.mxu0 0.0
    %784 = vmatpush1.msra.mxu0 %v689
    %785 = vmatprep.subr.mxu0 0.0
    %786 = vmatpush1.msra.mxu0 %v690
    %787 = vmatprep.subr.mxu0 0.0
    %788 = vmatpush1.msra.mxu0 %v691
    %789 = vmatprep.subr.mxu0 0.0
    %790 = vmatpush1.msra.mxu0 %v692
    %791 = vmatprep.subr.mxu0 0.0
    %792 = vmatpush1.msra.mxu0 %v693
    %793 = vmatprep.subr.mxu0 0.0
    %794 = vmatpush1.msra.mxu0 %v694
    %795 = vmatprep.subr.mxu0 0.0
    %796 = vmatpush1.msra.mxu0 %v695
    %797 = vmatprep.subr.mxu0 0.0
    %798 = vmatpush1.msra.mxu0 %v696
    %799 = vmatprep.subr.mxu0 0.0
    %800 = vmatpush1.msra.mxu0 %v697
    %801 = vmatprep.mubr.f32.mxu0 %v651
    %802 = vmatmul.mubr.f32.gmra.mrb[0].mxu0 %v650
    %v803 = vpop.f32.mrb[0].mxu0
    %v804 = vadd.f32 %v735, %v803
    %v805 = vpop.f32.mrb[0].mxu0
    %806 = vmatprep.mubr.f32.mxu0 %v655
    %807 = vmatmul.mubr.f32.gmra.mrb[0].mxu0 %v654
    %v808 = vpop.f32.mrb[0].mxu0
    %v809 = vadd.f32 %v735, %v808
    %v810 = vpop.f32.mrb[0].mxu0
    %811 = vmatprep.mubr.f32.mxu0 %v659
    %812 = vmatmul.mubr.f32.gmra.mrb[0].mxu0 %v658
    %v813 = vpop.f32.mrb[0].mxu0
    %v814 = vadd.f32 %v735, %v813
    %v815 = vpop.f32.mrb[0].mxu0
    %816 = vmatprep.mubr.f32.mxu0 %v663
    %817 = vmatmul.mubr.f32.gmra.mrb[0].mxu0 %v662
    %v818 = vpop.f32.mrb[0].mxu0
    %v819 = vadd.f32 %v735, %v818
    %v820 = vpop.f32.mrb[0].mxu0
    %821 = vdwg.mxu0
    %822 = vmatprep.subr.mxu0 0.0
    %823 = vmatpush1.msra.mxu0 %v698
    %824 = vmatprep.subr.mxu0 0.0
    %825 = vmatpush1.msra.mxu0 %v699
    %826 = vmatprep.subr.mxu0 0.0
    %827 = vmatpush1.msra.mxu0 %v700
    %828 = vmatprep.subr.mxu0 0.0
    %829 = vmatpush1.msra.mxu0 %v701
    %830 = vmatprep.subr.mxu0 0.0
    %831 = vmatpush1.msra.mxu0 %v702
    %832 = vmatprep.subr.mxu0 0.0
    %833 = vmatpush1.msra.mxu0 %v703
    %834 = vmatprep.subr.mxu0 0.0
    %835 = vmatpush1.msra.mxu0 %v704
    %836 = vmatprep.subr.mxu0 0.0
    %837 = vmatpush1.msra.mxu0 %v705
    %838 = vmatprep.subr.mxu0 0.0
    %839 = vmatpush1.msra.mxu0 %v706
    %840 = vmatprep.subr.mxu0 0.0
    %841 = vmatpush1.msra.mxu0 %v707
    %842 = vmatprep.subr.mxu0 0.0
    %843 = vmatpush1.msra.mxu0 %v708
    %844 = vmatprep.subr.mxu0 0.0
    %845 = vmatpush1.msra.mxu0 %v709
    %846 = vmatprep.subr.mxu0 0.0
    %847 = vmatpush1.msra.mxu0 %v710
    %848 = vmatprep.subr.mxu0 0.0
    %849 = vmatpush1.msra.mxu0 %v711
    %850 = vmatprep.subr.mxu0 0.0
    %851 = vmatpush1.msra.mxu0 %v712
    %852 = vmatprep.subr.mxu0 0.0
    %853 = vmatpush1.msra.mxu0 %v713
    %854 = vmatprep.subr.mxu0 0.0
    %855 = vmatpush1.msra.mxu0 %v714
    %856 = vmatprep.subr.mxu0 0.0
    %857 = vmatpush1.msra.mxu0 %v715
    %858 = vmatprep.subr.mxu0 0.0
    %859 = vmatpush1.msra.mxu0 %v716
    %860 = vmatprep.subr.mxu0 0.0
    %861 = vmatpush1.msra.mxu0 %v717
    %862 = vmatprep.subr.mxu0 0.0
    %863 = vmatpush1.msra.mxu0 %v718
    %864 = vmatprep.subr.mxu0 0.0
    %865 = vmatpush1.msra.mxu0 %v719
    %866 = vmatprep.subr.mxu0 0.0
    %867 = vmatpush1.msra.mxu0 %v720
    %868 = vmatprep.subr.mxu0 0.0
    %869 = vmatpush1.msra.mxu0 %v721
    %870 = vmatprep.subr.mxu0 0.0
    %871 = vmatpush1.msra.mxu0 %v722
    %872 = vmatprep.subr.mxu0 0.0
    %873 = vmatpush1.msra.mxu0 %v723
    %874 = vmatprep.subr.mxu0 0.0
    %875 = vmatpush1.msra.mxu0 %v724
    %876 = vmatprep.subr.mxu0 0.0
    %877 = vmatpush1.msra.mxu0 %v725
    %878 = vmatprep.subr.mxu0 0.0
    %879 = vmatpush1.msra.mxu0 %v726
    %880 = vmatprep.subr.mxu0 0.0
    %881 = vmatpush1.msra.mxu0 %v727
    %882 = vmatprep.subr.mxu0 0.0
    %883 = vmatpush1.msra.mxu0 %v728
    %884 = vmatprep.subr.mxu0 0.0
    %885 = vmatpush1.msra.mxu0 %v729
    %886 = vmatprep.mubr.f32.mxu0 %v653
    %887 = vmatmul.mubr.f32.gmra.mrb[0].mxu0 %v652
    %v888 = vpop.f32.mrb[0].mxu0
    %v889 = vadd.f32 %v804, %v888
    %v890 = vpop.f32.mrb[0].mxu0
    %891 = vmatprep.mubr.f32.mxu0 %v657
    %892 = vmatmul.mubr.f32.gmra.mrb[0].mxu0 %v656
    %v893 = vpop.f32.mrb[0].mxu0
    %v894 = vadd.f32 %v809, %v893
    %v895 = vpop.f32.mrb[0].mxu0
    %896 = vmatprep.mubr.f32.mxu0 %v661
    %897 = vmatmul.mubr.f32.gmra.mrb[0].mxu0 %v660
    %v898 = vpop.f32.mrb[0].mxu0
    %v899 = vadd.f32 %v814, %v898
    %v900 = vpop.f32.mrb[0].mxu0
    %901 = vmatprep.mubr.f32.mxu0 %v665
    %902 = vmatmul.mubr.f32.gmra.mrb[0].mxu0 %v664
    %v903 = vpop.f32.mrb[0].mxu0
    %v904 = vadd.f32 %v819, %v903
    %v905 = vpop.f32.mrb[0].mxu0
    %906 = vdwg.mxu0
    %v907 = vmax.f32 %v889, 0.0
    %v908 = vmax.f32 %v894, 0.0
    %v909 = vmax.f32 %v899, 0.0
    %v910 = vmax.f32 %v904, 0.0
    %v913 = vlaneseq
    %v914 = vshrl.u32 %v913, 7
    %v915 = vsub.s32 0, %v914
    %v916 = vrot.slane %v907, %v915
    %v917 = vlaneseq
    %v918 = vshrl.u32 %v917, 7
    %v919 = vsub.s32 1, %v918
    %v920 = vrot.slane %v907, %v919
    %v921 = vlaneseq
    %v922 = vshrl.u32 %v921, 7
    %v923 = vsub.s32 2, %v922
    %v924 = vrot.slane %v907, %v923
    %v925 = vlaneseq
    %v926 = vshrl.u32 %v925, 7
    %v927 = vsub.s32 3, %v926
    %v928 = vrot.slane %v907, %v927
    %v929 = vlaneseq
    %v930 = vshrl.u32 %v929, 7
    %v931 = vsub.s32 4, %v930
    %v932 = vrot.slane %v907, %v931
    %v933 = vlaneseq
    %v934 = vshrl.u32 %v933, 7
    %v935 = vsub.s32 5, %v934
    %v936 = vrot.slane %v907, %v935
    %v937 = vlaneseq
    %v938 = vshrl.u32 %v937, 7
    %v939 = vsub.s32 6, %v938
    %v940 = vrot.slane %v907, %v939
    %v941 = vlaneseq
    %v942 = vshrl.u32 %v941, 7
    %v943 = vsub.s32 7, %v942
    %v944 = vrot.slane %v907, %v943
    %v945 = vlaneseq
    %v946 = vshrl.u32 %v945, 7
    %v947 = vsub.s32 0, %v946
    %v948 = vrot.slane %v908, %v947
    %v949 = vlaneseq
    %v950 = vshrl.u32 %v949, 7
    %v951 = vsub.s32 1, %v950
    %v952 = vrot.slane %v908, %v951
    %v953 = vlaneseq
    %v954 = vshrl.u32 %v953, 7
    %v955 = vsub.s32 2, %v954
    %v956 = vrot.slane %v908, %v955
    %v957 = vlaneseq
    %v958 = vshrl.u32 %v957, 7
    %v959 = vsub.s32 3, %v958
    %v960 = vrot.slane %v908, %v959
    %v961 = vlaneseq
    %v962 = vshrl.u32 %v961, 7
    %v963 = vsub.s32 4, %v962
    %v964 = vrot.slane %v908, %v963
    %v965 = vlaneseq
    %v966 = vshrl.u32 %v965, 7
    %v967 = vsub.s32 5, %v966
    %v968 = vrot.slane %v908, %v967
    %v969 = vlaneseq
    %v970 = vshrl.u32 %v969, 7
    %v971 = vsub.s32 6, %v970
    %v972 = vrot.slane %v908, %v971
    %v973 = vlaneseq
    %v974 = vshrl.u32 %v973, 7
    %v975 = vsub.s32 7, %v974
    %v976 = vrot.slane %v908, %v975
    %v995 = vlaneseq
    %v996 = vshrl.u32 %v995, 7
    %v997 = vsub.s32 0, %v996
    %v998 = vrot.slane %v909, %v997
    %v999 = vlaneseq
    %v1000 = vshrl.u32 %v999, 7
    %v1001 = vsub.s32 1, %v1000
    %v1002 = vrot.slane %v909, %v1001
    %v1003 = vlaneseq
    %v1004 = vshrl.u32 %v1003, 7
    %v1005 = vsub.s32 2, %v1004
    %v1006 = vrot.slane %v909, %v1005
    %v1007 = vlaneseq
    %v1008 = vshrl.u32 %v1007, 7
    %v1009 = vsub.s32 3, %v1008
    %v1010 = vrot.slane %v909, %v1009
    %v1011 = vlaneseq
    %v1012 = vshrl.u32 %v1011, 7
    %v1013 = vsub.s32 4, %v1012
    %v1014 = vrot.slane %v909, %v1013
    %v1015 = vlaneseq
    %v1016 = vshrl.u32 %v1015, 7
    %v1017 = vsub.s32 5, %v1016
    %v1018 = vrot.slane %v909, %v1017
    %v1019 = vlaneseq
    %v1020 = vshrl.u32 %v1019, 7
    %v1021 = vsub.s32 6, %v1020
    %v1022 = vrot.slane %v909, %v1021
    %v1023 = vlaneseq
    %v1024 = vshrl.u32 %v1023, 7
    %v1025 = vsub.s32 7, %v1024
    %v1026 = vrot.slane %v909, %v1025
    %v1027 = vlaneseq
    %v1028 = vshrl.u32 %v1027, 7
    %v1029 = vsub.s32 0, %v1028
    %v1030 = vrot.slane %v910, %v1029
    %v1031 = vlaneseq
    %v1032 = vshrl.u32 %v1031, 7
    %v1033 = vsub.s32 1, %v1032
    %v1034 = vrot.slane %v910, %v1033
    %v1035 = vlaneseq
    %v1036 = vshrl.u32 %v1035, 7
    %v1037 = vsub.s32 2, %v1036
    %v1038 = vrot.slane %v910, %v1037
    %v1039 = vlaneseq
    %v1040 = vshrl.u32 %v1039, 7
    %v1041 = vsub.s32 3, %v1040
    %v1042 = vrot.slane %v910, %v1041
    %v1043 = vlaneseq
    %v1044 = vshrl.u32 %v1043, 7
    %v1045 = vsub.s32 4, %v1044
    %v1046 = vrot.slane %v910, %v1045
    %v1047 = vlaneseq
    %v1048 = vshrl.u32 %v1047, 7
    %v1049 = vsub.s32 5, %v1048
    %v1050 = vrot.slane %v910, %v1049
    %v1051 = vlaneseq
    %v1052 = vshrl.u32 %v1051, 7
    %v1053 = vsub.s32 6, %v1052
    %v1054 = vrot.slane %v910, %v1053
    %v1055 = vlaneseq
    %v1056 = vshrl.u32 %v1055, 7
    %v1057 = vsub.s32 7, %v1056
    %v1058 = vrot.slane %v910, %v1057
    %vm1075 = vcmask 1040384
    %v1076 = vsel %vm1075, %v916, %v998
    %v1077 = vsel %vm1075, %v920, %v1002
    %v1078 = vsel %vm1075, %v924, %v1006
    %v1079 = vsel %vm1075, %v928, %v1010
    %v1080 = vsel %vm1075, %v932, %v1014
    %v1081 = vsel %vm1075, %v936, %v1018
    %v1082 = vsel %vm1075, %v940, %v1022
    %v1083 = vsel %vm1075, %v944, %v1026
    %v1084 = vsel %vm1075, %v948, %v1030
    %v1085 = vsel %vm1075, %v952, %v1034
    %v1086 = vsel %vm1075, %v956, %v1038
    %v1087 = vsel %vm1075, %v960, %v1042
    %v1088 = vsel %vm1075, %v964, %v1046
    %v1089 = vsel %vm1075, %v968, %v1050
    %v1090 = vsel %vm1075, %v972, %v1054
    %v1091 = vsel %vm1075, %v976, %v1058
    %v1092 = vld [vmem:[#allocation7] sm:$0xff]
    %v1093 = vld [vmem:[#allocation7 + $0x8] sm:$0xff]
    %v1094 = vld [vmem:[#allocation7 + $0x10] sm:$0xff]
    %v1095 = vld [vmem:[#allocation7 + $0x18] sm:$0xff]
    %v1096 = vld [vmem:[#allocation7 + $0x20] sm:$0xff]
    %v1097 = vld [vmem:[#allocation7 + $0x28] sm:$0xff]
    %v1098 = vld [vmem:[#allocation7 + $0x30] sm:$0xff]
    %v1099 = vld [vmem:[#allocation7 + $0x38] sm:$0xff]
    %v1100 = vld [vmem:[#allocation7 + $0x40] sm:$0xff]
    %v1101 = vld [vmem:[#allocation7 + $0x48] sm:$0xff]
    %v1102 = vld [vmem:[#allocation7 + $0x50] sm:$0xff]
    %v1103 = vld [vmem:[#allocation7 + $0x58] sm:$0xff]
    %v1104 = vld [vmem:[#allocation7 + $0x60] sm:$0xff]
    %v1105 = vld [vmem:[#allocation7 + $0x68] sm:$0xff]
    %v1106 = vld [vmem:[#allocation7 + $0x70] sm:$0xff]
    %v1107 = vld [vmem:[#allocation7 + $0x78] sm:$0xff]
    %v1108 = vld [vmem:[#allocation7 + $0x80] sm:$0xff]
    %v1109 = vld [vmem:[#allocation7 + $0x88] sm:$0xff]
    %v1110 = vld [vmem:[#allocation7 + $0x90] sm:$0xff]
    %v1111 = vld [vmem:[#allocation7 + $0x98] sm:$0xff]
    %v1112 = vld [vmem:[#allocation7 + $0xa0] sm:$0xff]
    %v1113 = vld [vmem:[#allocation7 + $0xa8] sm:$0xff]
    %v1114 = vld [vmem:[#allocation7 + $0xb0] sm:$0xff]
    %v1115 = vld [vmem:[#allocation7 + $0xb8] sm:$0xff]
    %v1116 = vld [vmem:[#allocation7 + $0xc0] sm:$0xff]
    %v1117 = vld [vmem:[#allocation7 + $0xc8] sm:$0xff]
    %v1118 = vld [vmem:[#allocation7 + $0xd0] sm:$0xff]
    %v1119 = vld [vmem:[#allocation7 + $0xd8] sm:$0xff]
    %v1120 = vld [vmem:[#allocation7 + $0xe0] sm:$0xff]
    %v1121 = vld [vmem:[#allocation7 + $0xe8] sm:$0xff]
    %v1122 = vld [vmem:[#allocation7 + $0xf0] sm:$0xff]
    %v1123 = vld [vmem:[#allocation7 + $0xf8] sm:$0xff]
    %v1124 = vld [vmem:[#allocation7 + $0x100] sm:$0xff]
    %v1125 = vld [vmem:[#allocation7 + $0x108] sm:$0xff]
    %v1126 = vld [vmem:[#allocation7 + $0x110] sm:$0xff]
    %v1127 = vld [vmem:[#allocation7 + $0x118] sm:$0xff]
    %v1128 = vld [vmem:[#allocation7 + $0x120] sm:$0xff]
    %v1129 = vld [vmem:[#allocation7 + $0x128] sm:$0xff]
    %v1130 = vld [vmem:[#allocation7 + $0x130] sm:$0xff]
    %v1131 = vld [vmem:[#allocation7 + $0x138] sm:$0xff]
    %v1132 = vld [vmem:[#allocation7 + $0x140] sm:$0xff]
    %v1133 = vld [vmem:[#allocation7 + $0x148] sm:$0xff]
    %v1134 = vld [vmem:[#allocation7 + $0x150] sm:$0xff]
    %v1135 = vld [vmem:[#allocation7 + $0x158] sm:$0xff]
    %v1136 = vld [vmem:[#allocation7 + $0x160] sm:$0xff]
    %v1137 = vld [vmem:[#allocation7 + $0x168] sm:$0xff]
    %v1138 = vld [vmem:[#allocation7 + $0x170] sm:$0xff]
    %v1139 = vld [vmem:[#allocation7 + $0x178] sm:$0xff]
    %v1140 = vld [vmem:[#allocation7 + $0x180] sm:$0xff]
    %v1141 = vld [vmem:[#allocation7 + $0x188] sm:$0xff]
    %v1142 = vld [vmem:[#allocation7 + $0x190] sm:$0xff]
    %v1143 = vld [vmem:[#allocation7 + $0x198] sm:$0xff]
    %v1144 = vld [vmem:[#allocation7 + $0x1a0] sm:$0xff]
    %v1145 = vld [vmem:[#allocation7 + $0x1a8] sm:$0xff]
    %v1146 = vld [vmem:[#allocation7 + $0x1b0] sm:$0xff]
    %v1147 = vld [vmem:[#allocation7 + $0x1b8] sm:$0xff]
    %v1148 = vld [vmem:[#allocation7 + $0x1c0] sm:$0xff]
    %v1149 = vld [vmem:[#allocation7 + $0x1c8] sm:$0xff]
    %v1150 = vld [vmem:[#allocation7 + $0x1d0] sm:$0xff]
    %v1151 = vld [vmem:[#allocation7 + $0x1d8] sm:$0xff]
    %v1152 = vld [vmem:[#allocation7 + $0x1e0] sm:$0xff]
    %v1153 = vld [vmem:[#allocation7 + $0x1e8] sm:$0xff]
    %v1154 = vld [vmem:[#allocation7 + $0x1f0] sm:$0xff]
    %v1155 = vld [vmem:[#allocation7 + $0x1f8] sm:$0xff]
    %v1156 = vld [vmem:[#allocation7 + $0x200] sm:$0xff]
    %v1157 = vld [vmem:[#allocation7 + $0x208] sm:$0xff]
    %v1158 = vld [vmem:[#allocation7 + $0x210] sm:$0xff]
    %v1159 = vld [vmem:[#allocation7 + $0x218] sm:$0xff]
    %v1160 = vld [vmem:[#allocation7 + $0x220] sm:$0xff]
    %v1161 = vld [vmem:[#allocation7 + $0x228] sm:$0xff]
    %v1162 = vld [vmem:[#allocation7 + $0x230] sm:$0xff]
    %v1163 = vld [vmem:[#allocation7 + $0x238] sm:$0xff]
    %v1164 = vld [vmem:[#allocation7 + $0x240] sm:$0xff]
    %v1165 = vld [vmem:[#allocation7 + $0x248] sm:$0xff]
    %v1166 = vld [vmem:[#allocation7 + $0x250] sm:$0xff]
    %v1167 = vld [vmem:[#allocation7 + $0x258] sm:$0xff]
    %v1168 = vld [vmem:[#allocation7 + $0x260] sm:$0xff]
    %v1169 = vld [vmem:[#allocation7 + $0x268] sm:$0xff]
    %v1170 = vld [vmem:[#allocation7 + $0x270] sm:$0xff]
    %v1171 = vld [vmem:[#allocation7 + $0x278] sm:$0xff]
    %v1172 = vld [vmem:[#allocation7 + $0x280] sm:$0xff]
    %v1173 = vld [vmem:[#allocation7 + $0x288] sm:$0xff]
    %v1174 = vld [vmem:[#allocation7 + $0x290] sm:$0xff]
    %v1175 = vld [vmem:[#allocation7 + $0x298] sm:$0xff]
    %v1176 = vld [vmem:[#allocation7 + $0x2a0] sm:$0xff]
    %v1177 = vld [vmem:[#allocation7 + $0x2a8] sm:$0xff]
    %v1178 = vld [vmem:[#allocation7 + $0x2b0] sm:$0xff]
    %v1179 = vld [vmem:[#allocation7 + $0x2b8] sm:$0xff]
    %v1180 = vld [vmem:[#allocation7 + $0x2c0] sm:$0xff]
    %v1181 = vld [vmem:[#allocation7 + $0x2c8] sm:$0xff]
    %v1182 = vld [vmem:[#allocation7 + $0x2d0] sm:$0xff]
    %v1183 = vld [vmem:[#allocation7 + $0x2d8] sm:$0xff]
    %v1184 = vld [vmem:[#allocation7 + $0x2e0] sm:$0xff]
    %v1185 = vld [vmem:[#allocation7 + $0x2e8] sm:$0xff]
    %v1186 = vld [vmem:[#allocation7 + $0x2f0] sm:$0xff]
    %v1187 = vld [vmem:[#allocation7 + $0x2f8] sm:$0xff]
    %v1188 = vld [vmem:[#allocation7 + $0x300] sm:$0xff]
    %v1189 = vld [vmem:[#allocation7 + $0x308] sm:$0xff]
    %v1190 = vld [vmem:[#allocation7 + $0x310] sm:$0xff]
    %v1191 = vld [vmem:[#allocation7 + $0x318] sm:$0xff]
    %v1192 = vld [vmem:[#allocation7 + $0x320] sm:$0xff]
    %v1193 = vld [vmem:[#allocation7 + $0x328] sm:$0xff]
    %v1194 = vld [vmem:[#allocation7 + $0x330] sm:$0xff]
    %v1195 = vld [vmem:[#allocation7 + $0x338] sm:$0xff]
    %v1196 = vld [vmem:[#allocation7 + $0x340] sm:$0xff]
    %v1197 = vld [vmem:[#allocation7 + $0x348] sm:$0xff]
    %v1198 = vld [vmem:[#allocation7 + $0x350] sm:$0xff]
    %v1199 = vld [vmem:[#allocation7 + $0x358] sm:$0xff]
    %v1200 = vld [vmem:[#allocation7 + $0x360] sm:$0xff]
    %v1201 = vld [vmem:[#allocation7 + $0x368] sm:$0xff]
    %v1202 = vld [vmem:[#allocation7 + $0x370] sm:$0xff]
    %v1203 = vld [vmem:[#allocation7 + $0x378] sm:$0xff]
    %v1204 = vld [vmem:[#allocation7 + $0x380] sm:$0xff]
    %v1205 = vld [vmem:[#allocation7 + $0x388] sm:$0xff]
    %v1206 = vld [vmem:[#allocation7 + $0x390] sm:$0xff]
    %v1207 = vld [vmem:[#allocation7 + $0x398] sm:$0xff]
    %v1208 = vld [vmem:[#allocation7 + $0x3a0] sm:$0xff]
    %v1209 = vld [vmem:[#allocation7 + $0x3a8] sm:$0xff]
    %v1210 = vld [vmem:[#allocation7 + $0x3b0] sm:$0xff]
    %v1211 = vld [vmem:[#allocation7 + $0x3b8] sm:$0xff]
    %v1212 = vld [vmem:[#allocation7 + $0x3c0] sm:$0xff]
    %v1213 = vld [vmem:[#allocation7 + $0x3c8] sm:$0xff]
    %v1214 = vld [vmem:[#allocation7 + $0x3d0] sm:$0xff]
    %v1215 = vld [vmem:[#allocation7 + $0x3d8] sm:$0xff]
    %v1216 = vld [vmem:[#allocation7 + $0x3e0] sm:$0xff]
    %v1217 = vld [vmem:[#allocation7 + $0x3e8] sm:$0xff]
    %v1218 = vld [vmem:[#allocation7 + $0x3f0] sm:$0xff]
    %v1219 = vld [vmem:[#allocation7 + $0x3f8] sm:$0xff]
    %v1220 = vld [vmem:[#allocation7 + $0x400] sm:$0xff]
    %v1221 = vld [vmem:[#allocation7 + $0x408] sm:$0xff]
    %v1222 = vld [vmem:[#allocation7 + $0x410] sm:$0xff]
    %v1223 = vld [vmem:[#allocation7 + $0x418] sm:$0xff]
    %v1224 = vld [vmem:[#allocation7 + $0x420] sm:$0xff]
    %v1225 = vld [vmem:[#allocation7 + $0x428] sm:$0xff]
    %v1226 = vld [vmem:[#allocation7 + $0x430] sm:$0xff]
    %v1227 = vld [vmem:[#allocation7 + $0x438] sm:$0xff]
    %v1228 = vld [vmem:[#allocation7 + $0x440] sm:$0xff]
    %v1229 = vld [vmem:[#allocation7 + $0x448] sm:$0xff]
    %v1230 = vld [vmem:[#allocation7 + $0x450] sm:$0xff]
    %v1231 = vld [vmem:[#allocation7 + $0x458] sm:$0xff]
    %v1232 = vld [vmem:[#allocation7 + $0x460] sm:$0xff]
    %v1233 = vld [vmem:[#allocation7 + $0x468] sm:$0xff]
    %v1234 = vld [vmem:[#allocation7 + $0x470] sm:$0xff]
    %v1235 = vld [vmem:[#allocation7 + $0x478] sm:$0xff]
    %v1236 = vld [vmem:[#allocation7 + $0x480] sm:$0xff]
    %v1237 = vld [vmem:[#allocation7 + $0x488] sm:$0xff]
    %v1238 = vld [vmem:[#allocation7 + $0x490] sm:$0xff]
    %v1239 = vld [vmem:[#allocation7 + $0x498] sm:$0xff]
    %v1240 = vld [vmem:[#allocation7 + $0x4a0] sm:$0xff]
    %v1241 = vld [vmem:[#allocation7 + $0x4a8] sm:$0xff]
    %v1242 = vld [vmem:[#allocation7 + $0x4b0] sm:$0xff]
    %v1243 = vld [vmem:[#allocation7 + $0x4b8] sm:$0xff]
    %v1244 = vld [vmem:[#allocation7 + $0x4c0] sm:$0xff]
    %v1245 = vld [vmem:[#allocation7 + $0x4c8] sm:$0xff]
    %v1246 = vld [vmem:[#allocation7 + $0x4d0] sm:$0xff]
    %v1247 = vld [vmem:[#allocation7 + $0x4d8] sm:$0xff]
    %v1248 = vld [vmem:[#allocation7 + $0x4e0] sm:$0xff]
    %v1249 = vld [vmem:[#allocation7 + $0x4e8] sm:$0xff]
    %v1250 = vld [vmem:[#allocation7 + $0x4f0] sm:$0xff]
    %v1251 = vld [vmem:[#allocation7 + $0x4f8] sm:$0xff]
    %v1252 = vld [vmem:[#allocation7 + $0x500] sm:$0xff]
    %v1253 = vld [vmem:[#allocation7 + $0x508] sm:$0xff]
    %v1254 = vld [vmem:[#allocation7 + $0x510] sm:$0xff]
    %v1255 = vld [vmem:[#allocation7 + $0x518] sm:$0xff]
    %v1256 = vld [vmem:[#allocation7 + $0x520] sm:$0xff]
    %v1257 = vld [vmem:[#allocation7 + $0x528] sm:$0xff]
    %v1258 = vld [vmem:[#allocation7 + $0x530] sm:$0xff]
    %v1259 = vld [vmem:[#allocation7 + $0x538] sm:$0xff]
    %v1260 = vld [vmem:[#allocation7 + $0x540] sm:$0xff]
    %v1261 = vld [vmem:[#allocation7 + $0x548] sm:$0xff]
    %v1262 = vld [vmem:[#allocation7 + $0x550] sm:$0xff]
    %v1263 = vld [vmem:[#allocation7 + $0x558] sm:$0xff]
    %v1264 = vld [vmem:[#allocation7 + $0x560] sm:$0xff]
    %v1265 = vld [vmem:[#allocation7 + $0x568] sm:$0xff]
    %v1266 = vld [vmem:[#allocation7 + $0x570] sm:$0xff]
    %v1267 = vld [vmem:[#allocation7 + $0x578] sm:$0xff]
    %v1268 = vld [vmem:[#allocation7 + $0x580] sm:$0xff]
    %v1269 = vld [vmem:[#allocation7 + $0x588] sm:$0xff]
    %v1270 = vld [vmem:[#allocation7 + $0x590] sm:$0xff]
    %v1271 = vld [vmem:[#allocation7 + $0x598] sm:$0xff]
    %v1272 = vld [vmem:[#allocation7 + $0x5a0] sm:$0xff]
    %v1273 = vld [vmem:[#allocation7 + $0x5a8] sm:$0xff]
    %v1274 = vld [vmem:[#allocation7 + $0x5b0] sm:$0xff]
    %v1275 = vld [vmem:[#allocation7 + $0x5b8] sm:$0xff]
    %v1276 = vld [vmem:[#allocation7 + $0x5c0] sm:$0xff]
    %v1277 = vld [vmem:[#allocation7 + $0x5c8] sm:$0xff]
    %v1278 = vld [vmem:[#allocation7 + $0x5d0] sm:$0xff]
    %v1279 = vld [vmem:[#allocation7 + $0x5d8] sm:$0xff]
    %v1280 = vld [vmem:[#allocation7 + $0x5e0] sm:$0xff]
    %v1281 = vld [vmem:[#allocation7 + $0x5e8] sm:$0xff]
    %v1282 = vld [vmem:[#allocation7 + $0x5f0] sm:$0xff]
    %v1283 = vld [vmem:[#allocation7 + $0x5f8] sm:$0xff]
    %v1284 = vld [vmem:[#allocation7 + $0x600] sm:$0xff]
    %v1285 = vld [vmem:[#allocation7 + $0x608] sm:$0xff]
    %v1286 = vld [vmem:[#allocation7 + $0x610] sm:$0xff]
    %v1287 = vld [vmem:[#allocation7 + $0x618] sm:$0xff]
    %v1288 = vld [vmem:[#allocation7 + $0x620] sm:$0xff]
    %v1289 = vld [vmem:[#allocation7 + $0x628] sm:$0xff]
    %v1290 = vld [vmem:[#allocation7 + $0x630] sm:$0xff]
    %v1291 = vld [vmem:[#allocation7 + $0x638] sm:$0xff]
    %v1292 = vld [vmem:[#allocation7 + $0x640] sm:$0xff]
    %v1293 = vld [vmem:[#allocation7 + $0x648] sm:$0xff]
    %v1294 = vld [vmem:[#allocation7 + $0x650] sm:$0xff]
    %v1295 = vld [vmem:[#allocation7 + $0x658] sm:$0xff]
    %v1296 = vld [vmem:[#allocation7 + $0x660] sm:$0xff]
    %v1297 = vld [vmem:[#allocation7 + $0x668] sm:$0xff]
    %v1298 = vld [vmem:[#allocation7 + $0x670] sm:$0xff]
    %v1299 = vld [vmem:[#allocation7 + $0x678] sm:$0xff]
    %v1300 = vld [vmem:[#allocation7 + $0x680] sm:$0xff]
    %v1301 = vld [vmem:[#allocation7 + $0x688] sm:$0xff]
    %v1302 = vld [vmem:[#allocation7 + $0x690] sm:$0xff]
    %v1303 = vld [vmem:[#allocation7 + $0x698] sm:$0xff]
    %v1304 = vld [vmem:[#allocation7 + $0x6a0] sm:$0xff]
    %v1305 = vld [vmem:[#allocation7 + $0x6a8] sm:$0xff]
    %v1306 = vld [vmem:[#allocation7 + $0x6b0] sm:$0xff]
    %v1307 = vld [vmem:[#allocation7 + $0x6b8] sm:$0xff]
    %v1308 = vld [vmem:[#allocation7 + $0x6c0] sm:$0xff]
    %v1309 = vld [vmem:[#allocation7 + $0x6c8] sm:$0xff]
    %v1310 = vld [vmem:[#allocation7 + $0x6d0] sm:$0xff]
    %v1311 = vld [vmem:[#allocation7 + $0x6d8] sm:$0xff]
    %v1312 = vld [vmem:[#allocation7 + $0x6e0] sm:$0xff]
    %v1313 = vld [vmem:[#allocation7 + $0x6e8] sm:$0xff]
    %v1314 = vld [vmem:[#allocation7 + $0x6f0] sm:$0xff]
    %v1315 = vld [vmem:[#allocation7 + $0x6f8] sm:$0xff]
    %v1316 = vld [vmem:[#allocation7 + $0x700] sm:$0xff]
    %v1317 = vld [vmem:[#allocation7 + $0x708] sm:$0xff]
    %v1318 = vld [vmem:[#allocation7 + $0x710] sm:$0xff]
    %v1319 = vld [vmem:[#allocation7 + $0x718] sm:$0xff]
    %v1320 = vld [vmem:[#allocation7 + $0x720] sm:$0xff]
    %v1321 = vld [vmem:[#allocation7 + $0x728] sm:$0xff]
    %v1322 = vld [vmem:[#allocation7 + $0x730] sm:$0xff]
    %v1323 = vld [vmem:[#allocation7 + $0x738] sm:$0xff]
    %v1324 = vld [vmem:[#allocation7 + $0x740] sm:$0xff]
    %v1325 = vld [vmem:[#allocation7 + $0x748] sm:$0xff]
    %v1326 = vld [vmem:[#allocation7 + $0x750] sm:$0xff]
    %v1327 = vld [vmem:[#allocation7 + $0x758] sm:$0xff]
    %v1328 = vld [vmem:[#allocation7 + $0x760] sm:$0xff]
    %v1329 = vld [vmem:[#allocation7 + $0x768] sm:$0xff]
    %v1330 = vld [vmem:[#allocation7 + $0x770] sm:$0xff]
    %v1331 = vld [vmem:[#allocation7 + $0x778] sm:$0xff]
    %v1332 = vld [vmem:[#allocation7 + $0x780] sm:$0xff]
    %v1333 = vld [vmem:[#allocation7 + $0x788] sm:$0xff]
    %v1334 = vld [vmem:[#allocation7 + $0x790] sm:$0xff]
    %v1335 = vld [vmem:[#allocation7 + $0x798] sm:$0xff]
    %v1336 = vld [vmem:[#allocation7 + $0x7a0] sm:$0xff]
    %v1337 = vld [vmem:[#allocation7 + $0x7a8] sm:$0xff]
    %v1338 = vld [vmem:[#allocation7 + $0x7b0] sm:$0xff]
    %v1339 = vld [vmem:[#allocation7 + $0x7b8] sm:$0xff]
    %v1340 = vld [vmem:[#allocation7 + $0x7c0] sm:$0xff]
    %v1341 = vld [vmem:[#allocation7 + $0x7c8] sm:$0xff]
    %v1342 = vld [vmem:[#allocation7 + $0x7d0] sm:$0xff]
    %v1343 = vld [vmem:[#allocation7 + $0x7d8] sm:$0xff]
    %v1344 = vld [vmem:[#allocation7 + $0x7e0] sm:$0xff]
    %v1345 = vld [vmem:[#allocation7 + $0x7e8] sm:$0xff]
    %v1346 = vld [vmem:[#allocation7 + $0x7f0] sm:$0xff]
    %v1347 = vld [vmem:[#allocation7 + $0x7f8] sm:$0xff]
    %v1348 = vld [vmem:[#allocation7 + $0x800] sm:$0xff]
    %v1349 = vld [vmem:[#allocation7 + $0x808] sm:$0xff]
    %v1350 = vld [vmem:[#allocation7 + $0x810] sm:$0xff]
    %v1351 = vld [vmem:[#allocation7 + $0x818] sm:$0xff]
    %v1352 = vld [vmem:[#allocation7 + $0x820] sm:$0xff]
    %v1353 = vld [vmem:[#allocation7 + $0x828] sm:$0xff]
    %v1354 = vld [vmem:[#allocation7 + $0x830] sm:$0xff]
    %v1355 = vld [vmem:[#allocation7 + $0x838] sm:$0xff]
    %v1356 = vld [vmem:[#allocation7 + $0x840] sm:$0xff]
    %v1357 = vld [vmem:[#allocation7 + $0x848] sm:$0xff]
    %v1358 = vld [vmem:[#allocation7 + $0x850] sm:$0xff]
    %v1359 = vld [vmem:[#allocation7 + $0x858] sm:$0xff]
    %v1360 = vld [vmem:[#allocation7 + $0x860] sm:$0xff]
    %v1361 = vld [vmem:[#allocation7 + $0x868] sm:$0xff]
    %v1362 = vld [vmem:[#allocation7 + $0x870] sm:$0xff]
    %v1363 = vld [vmem:[#allocation7 + $0x878] sm:$0xff]
    %v1364 = vld [vmem:[#allocation7 + $0x880] sm:$0xff]
    %v1365 = vld [vmem:[#allocation7 + $0x888] sm:$0xff]
    %v1366 = vld [vmem:[#allocation7 + $0x890] sm:$0xff]
    %v1367 = vld [vmem:[#allocation7 + $0x898] sm:$0xff]
    %v1368 = vld [vmem:[#allocation7 + $0x8a0] sm:$0xff]
    %v1369 = vld [vmem:[#allocation7 + $0x8a8] sm:$0xff]
    %v1370 = vld [vmem:[#allocation7 + $0x8b0] sm:$0xff]
    %v1371 = vld [vmem:[#allocation7 + $0x8b8] sm:$0xff]
    %v1372 = vld [vmem:[#allocation7 + $0x8c0] sm:$0xff]
    %v1373 = vld [vmem:[#allocation7 + $0x8c8] sm:$0xff]
    %v1374 = vld [vmem:[#allocation7 + $0x8d0] sm:$0xff]
    %v1375 = vld [vmem:[#allocation7 + $0x8d8] sm:$0xff]
    %v1376 = vld [vmem:[#allocation7 + $0x8e0] sm:$0xff]
    %v1377 = vld [vmem:[#allocation7 + $0x8e8] sm:$0xff]
    %v1378 = vld [vmem:[#allocation7 + $0x8f0] sm:$0xff]
    %v1379 = vld [vmem:[#allocation7 + $0x8f8] sm:$0xff]
    %v1380 = vld [vmem:[#allocation7 + $0x900] sm:$0xff]
    %v1381 = vld [vmem:[#allocation7 + $0x908] sm:$0xff]
    %v1382 = vld [vmem:[#allocation7 + $0x910] sm:$0xff]
    %v1383 = vld [vmem:[#allocation7 + $0x918] sm:$0xff]
    %v1384 = vld [vmem:[#allocation7 + $0x920] sm:$0xff]
    %v1385 = vld [vmem:[#allocation7 + $0x928] sm:$0xff]
    %v1386 = vld [vmem:[#allocation7 + $0x930] sm:$0xff]
    %v1387 = vld [vmem:[#allocation7 + $0x938] sm:$0xff]
    %v1388 = vld [vmem:[#allocation7 + $0x940] sm:$0xff]
    %v1389 = vld [vmem:[#allocation7 + $0x948] sm:$0xff]
    %v1390 = vld [vmem:[#allocation7 + $0x950] sm:$0xff]
    %v1391 = vld [vmem:[#allocation7 + $0x958] sm:$0xff]
    %v1392 = vld [vmem:[#allocation7 + $0x960] sm:$0xff]
    %v1393 = vld [vmem:[#allocation7 + $0x968] sm:$0xff]
    %v1394 = vld [vmem:[#allocation7 + $0x970] sm:$0xff]
    %v1395 = vld [vmem:[#allocation7 + $0x978] sm:$0xff]
    %v1396 = vld [vmem:[#allocation7 + $0x980] sm:$0xff]
    %v1397 = vld [vmem:[#allocation7 + $0x988] sm:$0xff]
    %v1398 = vld [vmem:[#allocation7 + $0x990] sm:$0xff]
    %v1399 = vld [vmem:[#allocation7 + $0x998] sm:$0xff]
    %v1400 = vld [vmem:[#allocation7 + $0x9a0] sm:$0xff]
    %v1401 = vld [vmem:[#allocation7 + $0x9a8] sm:$0xff]
    %v1402 = vld [vmem:[#allocation7 + $0x9b0] sm:$0xff]
    %v1403 = vld [vmem:[#allocation7 + $0x9b8] sm:$0xff]
    %v1404 = vld [vmem:[#allocation7 + $0x9c0] sm:$0xff]
    %v1405 = vld [vmem:[#allocation7 + $0x9c8] sm:$0xff]
    %v1406 = vld [vmem:[#allocation7 + $0x9d0] sm:$0xff]
    %v1407 = vld [vmem:[#allocation7 + $0x9d8] sm:$0xff]
    %v1408 = vld [vmem:[#allocation7 + $0x9e0] sm:$0xff]
    %v1409 = vld [vmem:[#allocation7 + $0x9e8] sm:$0xff]
    %v1410 = vld [vmem:[#allocation7 + $0x9f0] sm:$0xff]
    %v1411 = vld [vmem:[#allocation7 + $0x9f8] sm:$0xff]
    %v1412 = vld [vmem:[#allocation7 + $0xa00] sm:$0xff]
    %v1413 = vld [vmem:[#allocation7 + $0xa08] sm:$0xff]
    %v1414 = vld [vmem:[#allocation7 + $0xa10] sm:$0xff]
    %v1415 = vld [vmem:[#allocation7 + $0xa18] sm:$0xff]
    %v1416 = vld [vmem:[#allocation7 + $0xa20] sm:$0xff]
    %v1417 = vld [vmem:[#allocation7 + $0xa28] sm:$0xff]
    %v1418 = vld [vmem:[#allocation7 + $0xa30] sm:$0xff]
    %v1419 = vld [vmem:[#allocation7 + $0xa38] sm:$0xff]
    %v1420 = vld [vmem:[#allocation7 + $0xa40] sm:$0xff]
    %v1421 = vld [vmem:[#allocation7 + $0xa48] sm:$0xff]
    %v1422 = vld [vmem:[#allocation7 + $0xa50] sm:$0xff]
    %v1423 = vld [vmem:[#allocation7 + $0xa58] sm:$0xff]
    %v1424 = vld [vmem:[#allocation7 + $0xa60] sm:$0xff]
    %v1425 = vld [vmem:[#allocation7 + $0xa68] sm:$0xff]
    %v1426 = vld [vmem:[#allocation7 + $0xa70] sm:$0xff]
    %v1427 = vld [vmem:[#allocation7 + $0xa78] sm:$0xff]
    %v1428 = vld [vmem:[#allocation7 + $0xa80] sm:$0xff]
    %v1429 = vld [vmem:[#allocation7 + $0xa88] sm:$0xff]
    %v1430 = vld [vmem:[#allocation7 + $0xa90] sm:$0xff]
    %v1431 = vld [vmem:[#allocation7 + $0xa98] sm:$0xff]
    %v1432 = vld [vmem:[#allocation7 + $0xaa0] sm:$0xff]
    %v1433 = vld [vmem:[#allocation7 + $0xaa8] sm:$0xff]
    %v1434 = vld [vmem:[#allocation7 + $0xab0] sm:$0xff]
    %v1435 = vld [vmem:[#allocation7 + $0xab8] sm:$0xff]
    %v1436 = vld [vmem:[#allocation7 + $0xac0] sm:$0xff]
    %v1437 = vld [vmem:[#allocation7 + $0xac8] sm:$0xff]
    %v1438 = vld [vmem:[#allocation7 + $0xad0] sm:$0xff]
    %v1439 = vld [vmem:[#allocation7 + $0xad8] sm:$0xff]
    %v1440 = vld [vmem:[#allocation7 + $0xae0] sm:$0xff]
    %v1441 = vld [vmem:[#allocation7 + $0xae8] sm:$0xff]
    %v1442 = vld [vmem:[#allocation7 + $0xaf0] sm:$0xff]
    %v1443 = vld [vmem:[#allocation7 + $0xaf8] sm:$0xff]
    %v1444 = vld [vmem:[#allocation7 + $0xb00] sm:$0xff]
    %v1445 = vld [vmem:[#allocation7 + $0xb08] sm:$0xff]
    %v1446 = vld [vmem:[#allocation7 + $0xb10] sm:$0xff]
    %v1447 = vld [vmem:[#allocation7 + $0xb18] sm:$0xff]
    %v1448 = vld [vmem:[#allocation7 + $0xb20] sm:$0xff]
    %v1449 = vld [vmem:[#allocation7 + $0xb28] sm:$0xff]
    %v1450 = vld [vmem:[#allocation7 + $0xb30] sm:$0xff]
    %v1451 = vld [vmem:[#allocation7 + $0xb38] sm:$0xff]
    %v1452 = vld [vmem:[#allocation7 + $0xb40] sm:$0xff]
    %v1453 = vld [vmem:[#allocation7 + $0xb48] sm:$0xff]
    %v1454 = vld [vmem:[#allocation7 + $0xb50] sm:$0xff]
    %v1455 = vld [vmem:[#allocation7 + $0xb58] sm:$0xff]
    %v1456 = vld [vmem:[#allocation7 + $0xb60] sm:$0xff]
    %v1457 = vld [vmem:[#allocation7 + $0xb68] sm:$0xff]
    %v1458 = vld [vmem:[#allocation7 + $0xb70] sm:$0xff]
    %v1459 = vld [vmem:[#allocation7 + $0xb78] sm:$0xff]
    %v1460 = vld [vmem:[#allocation7 + $0xb80] sm:$0xff]
    %v1461 = vld [vmem:[#allocation7 + $0xb88] sm:$0xff]
    %v1462 = vld [vmem:[#allocation7 + $0xb90] sm:$0xff]
    %v1463 = vld [vmem:[#allocation7 + $0xb98] sm:$0xff]
    %v1464 = vld [vmem:[#allocation7 + $0xba0] sm:$0xff]
    %v1465 = vld [vmem:[#allocation7 + $0xba8] sm:$0xff]
    %v1466 = vld [vmem:[#allocation7 + $0xbb0] sm:$0xff]
    %v1467 = vld [vmem:[#allocation7 + $0xbb8] sm:$0xff]
    %v1468 = vld [vmem:[#allocation7 + $0xbc0] sm:$0xff]
    %v1469 = vld [vmem:[#allocation7 + $0xbc8] sm:$0xff]
    %v1470 = vld [vmem:[#allocation7 + $0xbd0] sm:$0xff]
    %v1471 = vld [vmem:[#allocation7 + $0xbd8] sm:$0xff]
    %v1472 = vld [vmem:[#allocation7 + $0xbe0] sm:$0xff]
    %v1473 = vld [vmem:[#allocation7 + $0xbe8] sm:$0xff]
    %v1474 = vld [vmem:[#allocation7 + $0xbf0] sm:$0xff]
    %v1475 = vld [vmem:[#allocation7 + $0xbf8] sm:$0xff]
    %v1476 = vld [vmem:[#allocation7 + $0xc00] sm:$0xff]
    %v1477 = vld [vmem:[#allocation7 + $0xc08] sm:$0xff]
    %v1478 = vld [vmem:[#allocation7 + $0xc10] sm:$0xff]
    %v1479 = vld [vmem:[#allocation7 + $0xc18] sm:$0xff]
    %v1480 = vld [vmem:[#allocation7 + $0xc20] sm:$0xff]
    %v1481 = vld [vmem:[#allocation7 + $0xc28] sm:$0xff]
    %v1482 = vld [vmem:[#allocation7 + $0xc30] sm:$0xff]
    %v1483 = vld [vmem:[#allocation7 + $0xc38] sm:$0xff]
    %v1484 = vld [vmem:[#allocation7 + $0xc40] sm:$0xff]
    %v1485 = vld [vmem:[#allocation7 + $0xc48] sm:$0xff]
    %v1486 = vld [vmem:[#allocation7 + $0xc50] sm:$0xff]
    %v1487 = vld [vmem:[#allocation7 + $0xc58] sm:$0xff]
    %v1488 = vld [vmem:[#allocation7 + $0xc60] sm:$0xff]
    %v1489 = vld [vmem:[#allocation7 + $0xc68] sm:$0xff]
    %v1490 = vld [vmem:[#allocation7 + $0xc70] sm:$0xff]
    %v1491 = vld [vmem:[#allocation7 + $0xc78] sm:$0xff]
    %v1492 = vld [vmem:[#allocation7 + $0xc80] sm:$0xff]
    %v1493 = vld [vmem:[#allocation7 + $0xc88] sm:$0xff]
    %v1494 = vld [vmem:[#allocation7 + $0xc90] sm:$0xff]
    %v1495 = vld [vmem:[#allocation7 + $0xc98] sm:$0xff]
    %v1496 = vld [vmem:[#allocation7 + $0xca0] sm:$0xff]
    %v1497 = vld [vmem:[#allocation7 + $0xca8] sm:$0xff]
    %v1498 = vld [vmem:[#allocation7 + $0xcb0] sm:$0xff]
    %v1499 = vld [vmem:[#allocation7 + $0xcb8] sm:$0xff]
    %v1500 = vld [vmem:[#allocation7 + $0xcc0] sm:$0xff]
    %v1501 = vld [vmem:[#allocation7 + $0xcc8] sm:$0xff]
    %v1502 = vld [vmem:[#allocation7 + $0xcd0] sm:$0xff]
    %v1503 = vld [vmem:[#allocation7 + $0xcd8] sm:$0xff]
    %v1504 = vld [vmem:[#allocation7 + $0xce0] sm:$0xff]
    %v1505 = vld [vmem:[#allocation7 + $0xce8] sm:$0xff]
    %v1506 = vld [vmem:[#allocation7 + $0xcf0] sm:$0xff]
    %v1507 = vld [vmem:[#allocation7 + $0xcf8] sm:$0xff]
    %v1508 = vld [vmem:[#allocation7 + $0xd00] sm:$0xff]
    %v1509 = vld [vmem:[#allocation7 + $0xd08] sm:$0xff]
    %v1510 = vld [vmem:[#allocation7 + $0xd10] sm:$0xff]
    %v1511 = vld [vmem:[#allocation7 + $0xd18] sm:$0xff]
    %v1512 = vld [vmem:[#allocation7 + $0xd20] sm:$0xff]
    %v1513 = vld [vmem:[#allocation7 + $0xd28] sm:$0xff]
    %v1514 = vld [vmem:[#allocation7 + $0xd30] sm:$0xff]
    %v1515 = vld [vmem:[#allocation7 + $0xd38] sm:$0xff]
    %v1516 = vld [vmem:[#allocation7 + $0xd40] sm:$0xff]
    %v1517 = vld [vmem:[#allocation7 + $0xd48] sm:$0xff]
    %v1518 = vld [vmem:[#allocation7 + $0xd50] sm:$0xff]
    %v1519 = vld [vmem:[#allocation7 + $0xd58] sm:$0xff]
    %v1520 = vld [vmem:[#allocation7 + $0xd60] sm:$0xff]
    %v1521 = vld [vmem:[#allocation7 + $0xd68] sm:$0xff]
    %v1522 = vld [vmem:[#allocation7 + $0xd70] sm:$0xff]
    %v1523 = vld [vmem:[#allocation7 + $0xd78] sm:$0xff]
    %v1524 = vld [vmem:[#allocation7 + $0xd80] sm:$0xff]
    %v1525 = vld [vmem:[#allocation7 + $0xd88] sm:$0xff]
    %v1526 = vld [vmem:[#allocation7 + $0xd90] sm:$0xff]
    %v1527 = vld [vmem:[#allocation7 + $0xd98] sm:$0xff]
    %v1528 = vld [vmem:[#allocation7 + $0xda0] sm:$0xff]
    %v1529 = vld [vmem:[#allocation7 + $0xda8] sm:$0xff]
    %v1530 = vld [vmem:[#allocation7 + $0xdb0] sm:$0xff]
    %v1531 = vld [vmem:[#allocation7 + $0xdb8] sm:$0xff]
    %v1532 = vld [vmem:[#allocation7 + $0xdc0] sm:$0xff]
    %v1533 = vld [vmem:[#allocation7 + $0xdc8] sm:$0xff]
    %v1534 = vld [vmem:[#allocation7 + $0xdd0] sm:$0xff]
    %v1535 = vld [vmem:[#allocation7 + $0xdd8] sm:$0xff]
    %v1536 = vld [vmem:[#allocation7 + $0xde0] sm:$0xff]
    %v1537 = vld [vmem:[#allocation7 + $0xde8] sm:$0xff]
    %v1538 = vld [vmem:[#allocation7 + $0xdf0] sm:$0xff]
    %v1539 = vld [vmem:[#allocation7 + $0xdf8] sm:$0xff]
    %v1540 = vld [vmem:[#allocation7 + $0xe00] sm:$0xff]
    %v1541 = vld [vmem:[#allocation7 + $0xe08] sm:$0xff]
    %v1542 = vld [vmem:[#allocation7 + $0xe10] sm:$0xff]
    %v1543 = vld [vmem:[#allocation7 + $0xe18] sm:$0xff]
    %v1544 = vld [vmem:[#allocation7 + $0xe20] sm:$0xff]
    %v1545 = vld [vmem:[#allocation7 + $0xe28] sm:$0xff]
    %v1546 = vld [vmem:[#allocation7 + $0xe30] sm:$0xff]
    %v1547 = vld [vmem:[#allocation7 + $0xe38] sm:$0xff]
    %v1548 = vld [vmem:[#allocation7 + $0xe40] sm:$0xff]
    %v1549 = vld [vmem:[#allocation7 + $0xe48] sm:$0xff]
    %v1550 = vld [vmem:[#allocation7 + $0xe50] sm:$0xff]
    %v1551 = vld [vmem:[#allocation7 + $0xe58] sm:$0xff]
    %v1552 = vld [vmem:[#allocation7 + $0xe60] sm:$0xff]
    %v1553 = vld [vmem:[#allocation7 + $0xe68] sm:$0xff]
    %v1554 = vld [vmem:[#allocation7 + $0xe70] sm:$0xff]
    %v1555 = vld [vmem:[#allocation7 + $0xe78] sm:$0xff]
    %v1556 = vld [vmem:[#allocation7 + $0xe80] sm:$0xff]
    %v1557 = vld [vmem:[#allocation7 + $0xe88] sm:$0xff]
    %v1558 = vld [vmem:[#allocation7 + $0xe90] sm:$0xff]
    %v1559 = vld [vmem:[#allocation7 + $0xe98] sm:$0xff]
    %v1560 = vld [vmem:[#allocation7 + $0xea0] sm:$0xff]
    %v1561 = vld [vmem:[#allocation7 + $0xea8] sm:$0xff]
    %v1562 = vld [vmem:[#allocation7 + $0xeb0] sm:$0xff]
    %v1563 = vld [vmem:[#allocation7 + $0xeb8] sm:$0xff]
    %v1564 = vld [vmem:[#allocation7 + $0xec0] sm:$0xff]
    %v1565 = vld [vmem:[#allocation7 + $0xec8] sm:$0xff]
    %v1566 = vld [vmem:[#allocation7 + $0xed0] sm:$0xff]
    %v1567 = vld [vmem:[#allocation7 + $0xed8] sm:$0xff]
    %v1568 = vld [vmem:[#allocation7 + $0xee0] sm:$0xff]
    %v1569 = vld [vmem:[#allocation7 + $0xee8] sm:$0xff]
    %v1570 = vld [vmem:[#allocation7 + $0xef0] sm:$0xff]
    %v1571 = vld [vmem:[#allocation7 + $0xef8] sm:$0xff]
    %v1572 = vld [vmem:[#allocation7 + $0xf00] sm:$0xff]
    %v1573 = vld [vmem:[#allocation7 + $0xf08] sm:$0xff]
    %v1574 = vld [vmem:[#allocation7 + $0xf10] sm:$0xff]
    %v1575 = vld [vmem:[#allocation7 + $0xf18] sm:$0xff]
    %v1576 = vld [vmem:[#allocation7 + $0xf20] sm:$0xff]
    %v1577 = vld [vmem:[#allocation7 + $0xf28] sm:$0xff]
    %v1578 = vld [vmem:[#allocation7 + $0xf30] sm:$0xff]
    %v1579 = vld [vmem:[#allocation7 + $0xf38] sm:$0xff]
    %v1580 = vld [vmem:[#allocation7 + $0xf40] sm:$0xff]
    %v1581 = vld [vmem:[#allocation7 + $0xf48] sm:$0xff]
    %v1582 = vld [vmem:[#allocation7 + $0xf50] sm:$0xff]
    %v1583 = vld [vmem:[#allocation7 + $0xf58] sm:$0xff]
    %v1584 = vld [vmem:[#allocation7 + $0xf60] sm:$0xff]
    %v1585 = vld [vmem:[#allocation7 + $0xf68] sm:$0xff]
    %v1586 = vld [vmem:[#allocation7 + $0xf70] sm:$0xff]
    %v1587 = vld [vmem:[#allocation7 + $0xf78] sm:$0xff]
    %v1588 = vld [vmem:[#allocation7 + $0xf80] sm:$0xff]
    %v1589 = vld [vmem:[#allocation7 + $0xf88] sm:$0xff]
    %v1590 = vld [vmem:[#allocation7 + $0xf90] sm:$0xff]
    %v1591 = vld [vmem:[#allocation7 + $0xf98] sm:$0xff]
    %v1592 = vld [vmem:[#allocation7 + $0xfa0] sm:$0xff]
    %v1593 = vld [vmem:[#allocation7 + $0xfa8] sm:$0xff]
    %v1594 = vld [vmem:[#allocation7 + $0xfb0] sm:$0xff]
    %v1595 = vld [vmem:[#allocation7 + $0xfb8] sm:$0xff]
    %v1596 = vld [vmem:[#allocation7 + $0xfc0] sm:$0xff]
    %v1597 = vld [vmem:[#allocation7 + $0xfc8] sm:$0xff]
    %v1598 = vld [vmem:[#allocation7 + $0xfd0] sm:$0xff]
    %v1599 = vld [vmem:[#allocation7 + $0xfd8] sm:$0xff]
    %v1600 = vld [vmem:[#allocation7 + $0xfe0] sm:$0xff]
    %v1601 = vld [vmem:[#allocation7 + $0xfe8] sm:$0xff]
    %v1602 = vld [vmem:[#allocation7 + $0xff0] sm:$0xff]
    %v1603 = vld [vmem:[#allocation7 + $0xff8] sm:$0xff]
    %v1604 = vld [vmem:[#allocation7 + $0x1000] sm:$0xff]
    %v1605 = vld [vmem:[#allocation7 + $0x1008] sm:$0xff]
    %v1606 = vld [vmem:[#allocation7 + $0x1010] sm:$0xff]
    %v1607 = vld [vmem:[#allocation7 + $0x1018] sm:$0xff]
    %v1608 = vld [vmem:[#allocation7 + $0x1020] sm:$0xff]
    %v1609 = vld [vmem:[#allocation7 + $0x1028] sm:$0xff]
    %v1610 = vld [vmem:[#allocation7 + $0x1030] sm:$0xff]
    %v1611 = vld [vmem:[#allocation7 + $0x1038] sm:$0xff]
    %v1612 = vld [vmem:[#allocation7 + $0x1040] sm:$0xff]
    %v1613 = vld [vmem:[#allocation7 + $0x1048] sm:$0xff]
    %v1614 = vld [vmem:[#allocation7 + $0x1050] sm:$0xff]
    %v1615 = vld [vmem:[#allocation7 + $0x1058] sm:$0xff]
    %v1616 = vld [vmem:[#allocation7 + $0x1060] sm:$0xff]
    %v1617 = vld [vmem:[#allocation7 + $0x1068] sm:$0xff]
    %v1618 = vld [vmem:[#allocation7 + $0x1070] sm:$0xff]
    %v1619 = vld [vmem:[#allocation7 + $0x1078] sm:$0xff]
    %v1620 = vld [vmem:[#allocation7 + $0x1080] sm:$0xff]
    %v1621 = vld [vmem:[#allocation7 + $0x1088] sm:$0xff]
    %v1622 = vld [vmem:[#allocation7 + $0x1090] sm:$0xff]
    %v1623 = vld [vmem:[#allocation7 + $0x1098] sm:$0xff]
    %v1624 = vld [vmem:[#allocation7 + $0x10a0] sm:$0xff]
    %v1625 = vld [vmem:[#allocation7 + $0x10a8] sm:$0xff]
    %v1626 = vld [vmem:[#allocation7 + $0x10b0] sm:$0xff]
    %v1627 = vld [vmem:[#allocation7 + $0x10b8] sm:$0xff]
    %v1628 = vld [vmem:[#allocation7 + $0x10c0] sm:$0xff]
    %v1629 = vld [vmem:[#allocation7 + $0x10c8] sm:$0xff]
    %v1630 = vld [vmem:[#allocation7 + $0x10d0] sm:$0xff]
    %v1631 = vld [vmem:[#allocation7 + $0x10d8] sm:$0xff]
    %v1632 = vld [vmem:[#allocation7 + $0x10e0] sm:$0xff]
    %v1633 = vld [vmem:[#allocation7 + $0x10e8] sm:$0xff]
    %v1634 = vld [vmem:[#allocation7 + $0x10f0] sm:$0xff]
    %v1635 = vld [vmem:[#allocation7 + $0x10f8] sm:$0xff]
    %v1636 = vld [vmem:[#allocation7 + $0x1100] sm:$0xff]
    %v1637 = vld [vmem:[#allocation7 + $0x1108] sm:$0xff]
    %v1638 = vld [vmem:[#allocation7 + $0x1110] sm:$0xff]
    %v1639 = vld [vmem:[#allocation7 + $0x1118] sm:$0xff]
    %v1640 = vld [vmem:[#allocation7 + $0x1120] sm:$0xff]
    %v1641 = vld [vmem:[#allocation7 + $0x1128] sm:$0xff]
    %v1642 = vld [vmem:[#allocation7 + $0x1130] sm:$0xff]
    %v1643 = vld [vmem:[#allocation7 + $0x1138] sm:$0xff]
    %v1644 = vld [vmem:[#allocation7 + $0x1140] sm:$0xff]
    %v1645 = vld [vmem:[#allocation7 + $0x1148] sm:$0xff]
    %v1646 = vld [vmem:[#allocation7 + $0x1150] sm:$0xff]
    %v1647 = vld [vmem:[#allocation7 + $0x1158] sm:$0xff]
    %v1648 = vld [vmem:[#allocation7 + $0x1160] sm:$0xff]
    %v1649 = vld [vmem:[#allocation7 + $0x1168] sm:$0xff]
    %v1650 = vld [vmem:[#allocation7 + $0x1170] sm:$0xff]
    %v1651 = vld [vmem:[#allocation7 + $0x1178] sm:$0xff]
    %v1652 = vld [vmem:[#allocation7 + $0x1180] sm:$0xff]
    %v1653 = vld [vmem:[#allocation7 + $0x1188] sm:$0xff]
    %v1654 = vld [vmem:[#allocation7 + $0x1190] sm:$0xff]
    %v1655 = vld [vmem:[#allocation7 + $0x1198] sm:$0xff]
    %v1656 = vld [vmem:[#allocation7 + $0x11a0] sm:$0xff]
    %v1657 = vld [vmem:[#allocation7 + $0x11a8] sm:$0xff]
    %v1658 = vld [vmem:[#allocation7 + $0x11b0] sm:$0xff]
    %v1659 = vld [vmem:[#allocation7 + $0x11b8] sm:$0xff]
    %v1660 = vld [vmem:[#allocation7 + $0x11c0] sm:$0xff]
    %v1661 = vld [vmem:[#allocation7 + $0x11c8] sm:$0xff]
    %v1662 = vld [vmem:[#allocation7 + $0x11d0] sm:$0xff]
    %v1663 = vld [vmem:[#allocation7 + $0x11d8] sm:$0xff]
    %v1664 = vld [vmem:[#allocation7 + $0x11e0] sm:$0xff]
    %v1665 = vld [vmem:[#allocation7 + $0x11e8] sm:$0xff]
    %v1666 = vld [vmem:[#allocation7 + $0x11f0] sm:$0xff]
    %v1667 = vld [vmem:[#allocation7 + $0x11f8] sm:$0xff]
    %v1668 = vld [vmem:[#allocation7 + $0x1200] sm:$0xff]
    %v1669 = vld [vmem:[#allocation7 + $0x1208] sm:$0xff]
    %v1670 = vld [vmem:[#allocation7 + $0x1210] sm:$0xff]
    %v1671 = vld [vmem:[#allocation7 + $0x1218] sm:$0xff]
    %v1672 = vld [vmem:[#allocation7 + $0x1220] sm:$0xff]
    %v1673 = vld [vmem:[#allocation7 + $0x1228] sm:$0xff]
    %v1674 = vld [vmem:[#allocation7 + $0x1230] sm:$0xff]
    %v1675 = vld [vmem:[#allocation7 + $0x1238] sm:$0xff]
    %v1676 = vld [vmem:[#allocation7 + $0x1240] sm:$0xff]
    %v1677 = vld [vmem:[#allocation7 + $0x1248] sm:$0xff]
    %v1678 = vld [vmem:[#allocation7 + $0x1250] sm:$0xff]
    %v1679 = vld [vmem:[#allocation7 + $0x1258] sm:$0xff]
    %v1680 = vld [vmem:[#allocation7 + $0x1260] sm:$0xff]
    %v1681 = vld [vmem:[#allocation7 + $0x1268] sm:$0xff]
    %v1682 = vld [vmem:[#allocation7 + $0x1270] sm:$0xff]
    %v1683 = vld [vmem:[#allocation7 + $0x1278] sm:$0xff]
    %v1684 = vld [vmem:[#allocation7 + $0x1280] sm:$0xff]
    %v1685 = vld [vmem:[#allocation7 + $0x1288] sm:$0xff]
    %v1686 = vld [vmem:[#allocation7 + $0x1290] sm:$0xff]
    %v1687 = vld [vmem:[#allocation7 + $0x1298] sm:$0xff]
    %v1688 = vld [vmem:[#allocation7 + $0x12a0] sm:$0xff]
    %v1689 = vld [vmem:[#allocation7 + $0x12a8] sm:$0xff]
    %v1690 = vld [vmem:[#allocation7 + $0x12b0] sm:$0xff]
    %v1691 = vld [vmem:[#allocation7 + $0x12b8] sm:$0xff]
    %v1692 = vld [vmem:[#allocation7 + $0x12c0] sm:$0xff]
    %v1693 = vld [vmem:[#allocation7 + $0x12c8] sm:$0xff]
    %v1694 = vld [vmem:[#allocation7 + $0x12d0] sm:$0xff]
    %v1695 = vld [vmem:[#allocation7 + $0x12d8] sm:$0xff]
    %v1696 = vld [vmem:[#allocation7 + $0x12e0] sm:$0xff]
    %v1697 = vld [vmem:[#allocation7 + $0x12e8] sm:$0xff]
    %v1698 = vld [vmem:[#allocation7 + $0x12f0] sm:$0xff]
    %v1699 = vld [vmem:[#allocation7 + $0x12f8] sm:$0xff]
    %v1700 = vld [vmem:[#allocation7 + $0x1300] sm:$0xff]
    %v1701 = vld [vmem:[#allocation7 + $0x1308] sm:$0xff]
    %v1702 = vld [vmem:[#allocation7 + $0x1310] sm:$0xff]
    %v1703 = vld [vmem:[#allocation7 + $0x1318] sm:$0xff]
    %v1704 = vld [vmem:[#allocation7 + $0x1320] sm:$0xff]
    %v1705 = vld [vmem:[#allocation7 + $0x1328] sm:$0xff]
    %v1706 = vld [vmem:[#allocation7 + $0x1330] sm:$0xff]
    %v1707 = vld [vmem:[#allocation7 + $0x1338] sm:$0xff]
    %v1708 = vld [vmem:[#allocation7 + $0x1340] sm:$0xff]
    %v1709 = vld [vmem:[#allocation7 + $0x1348] sm:$0xff]
    %v1710 = vld [vmem:[#allocation7 + $0x1350] sm:$0xff]
    %v1711 = vld [vmem:[#allocation7 + $0x1358] sm:$0xff]
    %v1712 = vld [vmem:[#allocation7 + $0x1360] sm:$0xff]
    %v1713 = vld [vmem:[#allocation7 + $0x1368] sm:$0xff]
    %v1714 = vld [vmem:[#allocation7 + $0x1370] sm:$0xff]
    %v1715 = vld [vmem:[#allocation7 + $0x1378] sm:$0xff]
    %v1716 = vld [vmem:[#allocation7 + $0x1380] sm:$0xff]
    %v1717 = vld [vmem:[#allocation7 + $0x1388] sm:$0xff]
    %v1718 = vld [vmem:[#allocation7 + $0x1390] sm:$0xff]
    %v1719 = vld [vmem:[#allocation7 + $0x1398] sm:$0xff]
    %v1720 = vld [vmem:[#allocation7 + $0x13a0] sm:$0xff]
    %v1721 = vld [vmem:[#allocation7 + $0x13a8] sm:$0xff]
    %v1722 = vld [vmem:[#allocation7 + $0x13b0] sm:$0xff]
    %v1723 = vld [vmem:[#allocation7 + $0x13b8] sm:$0xff]
    %v1724 = vld [vmem:[#allocation7 + $0x13c0] sm:$0xff]
    %v1725 = vld [vmem:[#allocation7 + $0x13c8] sm:$0xff]
    %v1726 = vld [vmem:[#allocation7 + $0x13d0] sm:$0xff]
    %v1727 = vld [vmem:[#allocation7 + $0x13d8] sm:$0xff]
    %v1728 = vld [vmem:[#allocation7 + $0x13e0] sm:$0xff]
    %v1729 = vld [vmem:[#allocation7 + $0x13e8] sm:$0xff]
    %v1730 = vld [vmem:[#allocation7 + $0x13f0] sm:$0xff]
    %v1731 = vld [vmem:[#allocation7 + $0x13f8] sm:$0xff]
    %v1732 = vld [vmem:[#allocation7 + $0x1400] sm:$0xff]
    %v1733 = vld [vmem:[#allocation7 + $0x1408] sm:$0xff]
    %v1734 = vld [vmem:[#allocation7 + $0x1410] sm:$0xff]
    %v1735 = vld [vmem:[#allocation7 + $0x1418] sm:$0xff]
    %v1736 = vld [vmem:[#allocation7 + $0x1420] sm:$0xff]
    %v1737 = vld [vmem:[#allocation7 + $0x1428] sm:$0xff]
    %v1738 = vld [vmem:[#allocation7 + $0x1430] sm:$0xff]
    %v1739 = vld [vmem:[#allocation7 + $0x1438] sm:$0xff]
    %v1740 = vld [vmem:[#allocation7 + $0x1440] sm:$0xff]
    %v1741 = vld [vmem:[#allocation7 + $0x1448] sm:$0xff]
    %v1742 = vld [vmem:[#allocation7 + $0x1450] sm:$0xff]
    %v1743 = vld [vmem:[#allocation7 + $0x1458] sm:$0xff]
    %v1744 = vld [vmem:[#allocation7 + $0x1460] sm:$0xff]
    %v1745 = vld [vmem:[#allocation7 + $0x1468] sm:$0xff]
    %v1746 = vld [vmem:[#allocation7 + $0x1470] sm:$0xff]
    %v1747 = vld [vmem:[#allocation7 + $0x1478] sm:$0xff]
    %v1748 = vld [vmem:[#allocation7 + $0x1480] sm:$0xff]
    %v1749 = vld [vmem:[#allocation7 + $0x1488] sm:$0xff]
    %v1750 = vld [vmem:[#allocation7 + $0x1490] sm:$0xff]
    %v1751 = vld [vmem:[#allocation7 + $0x1498] sm:$0xff]
    %v1752 = vld [vmem:[#allocation7 + $0x14a0] sm:$0xff]
    %v1753 = vld [vmem:[#allocation7 + $0x14a8] sm:$0xff]
    %v1754 = vld [vmem:[#allocation7 + $0x14b0] sm:$0xff]
    %v1755 = vld [vmem:[#allocation7 + $0x14b8] sm:$0xff]
    %v1756 = vld [vmem:[#allocation7 + $0x14c0] sm:$0xff]
    %v1757 = vld [vmem:[#allocation7 + $0x14c8] sm:$0xff]
    %v1758 = vld [vmem:[#allocation7 + $0x14d0] sm:$0xff]
    %v1759 = vld [vmem:[#allocation7 + $0x14d8] sm:$0xff]
    %v1760 = vld [vmem:[#allocation7 + $0x14e0] sm:$0xff]
    %v1761 = vld [vmem:[#allocation7 + $0x14e8] sm:$0xff]
    %v1762 = vld [vmem:[#allocation7 + $0x14f0] sm:$0xff]
    %v1763 = vld [vmem:[#allocation7 + $0x14f8] sm:$0xff]
    %v1764 = vld [vmem:[#allocation7 + $0x1500] sm:$0xff]
    %v1765 = vld [vmem:[#allocation7 + $0x1508] sm:$0xff]
    %v1766 = vld [vmem:[#allocation7 + $0x1510] sm:$0xff]
    %v1767 = vld [vmem:[#allocation7 + $0x1518] sm:$0xff]
    %v1768 = vld [vmem:[#allocation7 + $0x1520] sm:$0xff]
    %v1769 = vld [vmem:[#allocation7 + $0x1528] sm:$0xff]
    %v1770 = vld [vmem:[#allocation7 + $0x1530] sm:$0xff]
    %v1771 = vld [vmem:[#allocation7 + $0x1538] sm:$0xff]
    %v1772 = vld [vmem:[#allocation7 + $0x1540] sm:$0xff]
    %v1773 = vld [vmem:[#allocation7 + $0x1548] sm:$0xff]
    %v1774 = vld [vmem:[#allocation7 + $0x1550] sm:$0xff]
    %v1775 = vld [vmem:[#allocation7 + $0x1558] sm:$0xff]
    %v1776 = vld [vmem:[#allocation7 + $0x1560] sm:$0xff]
    %v1777 = vld [vmem:[#allocation7 + $0x1568] sm:$0xff]
    %v1778 = vld [vmem:[#allocation7 + $0x1570] sm:$0xff]
    %v1779 = vld [vmem:[#allocation7 + $0x1578] sm:$0xff]
    %v1780 = vld [vmem:[#allocation7 + $0x1580] sm:$0xff]
    %v1781 = vld [vmem:[#allocation7 + $0x1588] sm:$0xff]
    %v1782 = vld [vmem:[#allocation7 + $0x1590] sm:$0xff]
    %v1783 = vld [vmem:[#allocation7 + $0x1598] sm:$0xff]
    %v1784 = vld [vmem:[#allocation7 + $0x15a0] sm:$0xff]
    %v1785 = vld [vmem:[#allocation7 + $0x15a8] sm:$0xff]
    %v1786 = vld [vmem:[#allocation7 + $0x15b0] sm:$0xff]
    %v1787 = vld [vmem:[#allocation7 + $0x15b8] sm:$0xff]
    %v1788 = vld [vmem:[#allocation7 + $0x15c0] sm:$0xff]
    %v1789 = vld [vmem:[#allocation7 + $0x15c8] sm:$0xff]
    %v1790 = vld [vmem:[#allocation7 + $0x15d0] sm:$0xff]
    %v1791 = vld [vmem:[#allocation7 + $0x15d8] sm:$0xff]
    %v1792 = vld [vmem:[#allocation7 + $0x15e0] sm:$0xff]
    %v1793 = vld [vmem:[#allocation7 + $0x15e8] sm:$0xff]
    %v1794 = vld [vmem:[#allocation7 + $0x15f0] sm:$0xff]
    %v1795 = vld [vmem:[#allocation7 + $0x15f8] sm:$0xff]
    %v1796 = vld [vmem:[#allocation7 + $0x1600] sm:$0xff]
    %v1797 = vld [vmem:[#allocation7 + $0x1608] sm:$0xff]
    %v1798 = vld [vmem:[#allocation7 + $0x1610] sm:$0xff]
    %v1799 = vld [vmem:[#allocation7 + $0x1618] sm:$0xff]
    %v1800 = vld [vmem:[#allocation7 + $0x1620] sm:$0xff]
    %v1801 = vld [vmem:[#allocation7 + $0x1628] sm:$0xff]
    %v1802 = vld [vmem:[#allocation7 + $0x1630] sm:$0xff]
    %v1803 = vld [vmem:[#allocation7 + $0x1638] sm:$0xff]
    %v1804 = vld [vmem:[#allocation7 + $0x1640] sm:$0xff]
    %v1805 = vld [vmem:[#allocation7 + $0x1648] sm:$0xff]
    %v1806 = vld [vmem:[#allocation7 + $0x1650] sm:$0xff]
    %v1807 = vld [vmem:[#allocation7 + $0x1658] sm:$0xff]
    %v1808 = vld [vmem:[#allocation7 + $0x1660] sm:$0xff]
    %v1809 = vld [vmem:[#allocation7 + $0x1668] sm:$0xff]
    %v1810 = vld [vmem:[#allocation7 + $0x1670] sm:$0xff]
    %v1811 = vld [vmem:[#allocation7 + $0x1678] sm:$0xff]
    %v1812 = vld [vmem:[#allocation7 + $0x1680] sm:$0xff]
    %v1813 = vld [vmem:[#allocation7 + $0x1688] sm:$0xff]
    %v1814 = vld [vmem:[#allocation7 + $0x1690] sm:$0xff]
    %v1815 = vld [vmem:[#allocation7 + $0x1698] sm:$0xff]
    %v1816 = vld [vmem:[#allocation7 + $0x16a0] sm:$0xff]
    %v1817 = vld [vmem:[#allocation7 + $0x16a8] sm:$0xff]
    %v1818 = vld [vmem:[#allocation7 + $0x16b0] sm:$0xff]
    %v1819 = vld [vmem:[#allocation7 + $0x16b8] sm:$0xff]
    %v1820 = vld [vmem:[#allocation7 + $0x16c0] sm:$0xff]
    %v1821 = vld [vmem:[#allocation7 + $0x16c8] sm:$0xff]
    %v1822 = vld [vmem:[#allocation7 + $0x16d0] sm:$0xff]
    %v1823 = vld [vmem:[#allocation7 + $0x16d8] sm:$0xff]
    %v1824 = vld [vmem:[#allocation7 + $0x16e0] sm:$0xff]
    %v1825 = vld [vmem:[#allocation7 + $0x16e8] sm:$0xff]
    %v1826 = vld [vmem:[#allocation7 + $0x16f0] sm:$0xff]
    %v1827 = vld [vmem:[#allocation7 + $0x16f8] sm:$0xff]
    %v1828 = vld [vmem:[#allocation7 + $0x1700] sm:$0xff]
    %v1829 = vld [vmem:[#allocation7 + $0x1708] sm:$0xff]
    %v1830 = vld [vmem:[#allocation7 + $0x1710] sm:$0xff]
    %v1831 = vld [vmem:[#allocation7 + $0x1718] sm:$0xff]
    %v1832 = vld [vmem:[#allocation7 + $0x1720] sm:$0xff]
    %v1833 = vld [vmem:[#allocation7 + $0x1728] sm:$0xff]
    %v1834 = vld [vmem:[#allocation7 + $0x1730] sm:$0xff]
    %v1835 = vld [vmem:[#allocation7 + $0x1738] sm:$0xff]
    %v1836 = vld [vmem:[#allocation7 + $0x1740] sm:$0xff]
    %v1837 = vld [vmem:[#allocation7 + $0x1748] sm:$0xff]
    %v1838 = vld [vmem:[#allocation7 + $0x1750] sm:$0xff]
    %v1839 = vld [vmem:[#allocation7 + $0x1758] sm:$0xff]
    %v1840 = vld [vmem:[#allocation7 + $0x1760] sm:$0xff]
    %v1841 = vld [vmem:[#allocation7 + $0x1768] sm:$0xff]
    %v1842 = vld [vmem:[#allocation7 + $0x1770] sm:$0xff]
    %v1843 = vld [vmem:[#allocation7 + $0x1778] sm:$0xff]
    %v1844 = vld [vmem:[#allocation7 + $0x1780] sm:$0xff]
    %v1845 = vld [vmem:[#allocation7 + $0x1788] sm:$0xff]
    %v1846 = vld [vmem:[#allocation7 + $0x1790] sm:$0xff]
    %v1847 = vld [vmem:[#allocation7 + $0x1798] sm:$0xff]
    %v1848 = vld [vmem:[#allocation7 + $0x17a0] sm:$0xff]
    %v1849 = vld [vmem:[#allocation7 + $0x17a8] sm:$0xff]
    %v1850 = vld [vmem:[#allocation7 + $0x17b0] sm:$0xff]
    %v1851 = vld [vmem:[#allocation7 + $0x17b8] sm:$0xff]
    %v1852 = vld [vmem:[#allocation7 + $0x17c0] sm:$0xff]
    %v1853 = vld [vmem:[#allocation7 + $0x17c8] sm:$0xff]
    %v1854 = vld [vmem:[#allocation7 + $0x17d0] sm:$0xff]
    %v1855 = vld [vmem:[#allocation7 + $0x17d8] sm:$0xff]
    %v1856 = vld [vmem:[#allocation7 + $0x17e0] sm:$0xff]
    %v1857 = vld [vmem:[#allocation7 + $0x17e8] sm:$0xff]
    %v1858 = vld [vmem:[#allocation7 + $0x17f0] sm:$0xff]
    %v1859 = vld [vmem:[#allocation7 + $0x17f8] sm:$0xff]
    %v1860 = vld [vmem:[#allocation7 + $0x1800] sm:$0xff]
    %v1861 = vld [vmem:[#allocation7 + $0x1808] sm:$0xff]
    %v1862 = vld [vmem:[#allocation7 + $0x1810] sm:$0xff]
    %v1863 = vld [vmem:[#allocation7 + $0x1818] sm:$0xff]
    %v1864 = vld [vmem:[#allocation7 + $0x1820] sm:$0xff]
    %v1865 = vld [vmem:[#allocation7 + $0x1828] sm:$0xff]
    %v1866 = vld [vmem:[#allocation7 + $0x1830] sm:$0xff]
    %v1867 = vld [vmem:[#allocation7 + $0x1838] sm:$0xff]
    %v1868 = vld [vmem:[#allocation7 + $0x1840] sm:$0xff]
    %v1869 = vld [vmem:[#allocation7 + $0x1848] sm:$0xff]
    %v1870 = vld [vmem:[#allocation7 + $0x1850] sm:$0xff]
    %v1871 = vld [vmem:[#allocation7 + $0x1858] sm:$0xff]
    %v1872 = vld [vmem:[#allocation7 + $0x1860] sm:$0xff]
    %v1873 = vld [vmem:[#allocation7 + $0x1868] sm:$0xff]
    %v1874 = vld [vmem:[#allocation7 + $0x1870] sm:$0xff]
    %v1875 = vld [vmem:[#allocation7 + $0x1878] sm:$0xff]
    %v1876 = vld [vmem:[#allocation7 + $0x1880] sm:$0xff]
    %v1877 = vld [vmem:[#allocation7 + $0x1888] sm:$0xff]
    %v1878 = vld [vmem:[#allocation7 + $0x1890] sm:$0xff]
    %v1879 = vld [vmem:[#allocation7 + $0x1898] sm:$0xff]
    %v1880 = vld [vmem:[#allocation7 + $0x18a0] sm:$0xff]
    %v1881 = vld [vmem:[#allocation7 + $0x18a8] sm:$0xff]
    %v1882 = vld [vmem:[#allocation7 + $0x18b0] sm:$0xff]
    %v1883 = vld [vmem:[#allocation7 + $0x18b8] sm:$0xff]
    %v1884 = vld [vmem:[#allocation7 + $0x18c0] sm:$0xff]
    %v1885 = vld [vmem:[#allocation7 + $0x18c8] sm:$0xff]
    %v1886 = vld [vmem:[#allocation7 + $0x18d0] sm:$0xff]
    %v1887 = vld [vmem:[#allocation7 + $0x18d8] sm:$0xff]
    %v1888 = vld [vmem:[#allocation7 + $0x18e0] sm:$0xff]
    %v1889 = vld [vmem:[#allocation7 + $0x18e8] sm:$0xff]
    %v1890 = vld [vmem:[#allocation7 + $0x18f0] sm:$0xff]
    %v1891 = vld [vmem:[#allocation7 + $0x18f8] sm:$0xff]
    %v1892 = vld [vmem:[#allocation7 + $0x1900] sm:$0xff]
    %v1893 = vld [vmem:[#allocation7 + $0x1908] sm:$0xff]
    %v1894 = vld [vmem:[#allocation7 + $0x1910] sm:$0xff]
    %v1895 = vld [vmem:[#allocation7 + $0x1918] sm:$0xff]
    %v1896 = vld [vmem:[#allocation7 + $0x1920] sm:$0xff]
    %v1897 = vld [vmem:[#allocation7 + $0x1928] sm:$0xff]
    %v1898 = vld [vmem:[#allocation7 + $0x1930] sm:$0xff]
    %v1899 = vld [vmem:[#allocation7 + $0x1938] sm:$0xff]
    %v1900 = vld [vmem:[#allocation7 + $0x1940] sm:$0xff]
    %v1901 = vld [vmem:[#allocation7 + $0x1948] sm:$0xff]
    %v1902 = vld [vmem:[#allocation7 + $0x1950] sm:$0xff]
    %v1903 = vld [vmem:[#allocation7 + $0x1958] sm:$0xff]
    %v1904 = vld [vmem:[#allocation7 + $0x1960] sm:$0xff]
    %v1905 = vld [vmem:[#allocation7 + $0x1968] sm:$0xff]
    %v1906 = vld [vmem:[#allocation7 + $0x1970] sm:$0xff]
    %v1907 = vld [vmem:[#allocation7 + $0x1978] sm:$0xff]
    %v1908 = vld [vmem:[#allocation7 + $0x1980] sm:$0xff]
    %v1909 = vld [vmem:[#allocation7 + $0x1988] sm:$0xff]
    %v1910 = vld [vmem:[#allocation7 + $0x1990] sm:$0xff]
    %v1911 = vld [vmem:[#allocation7 + $0x1998] sm:$0xff]
    %v1912 = vld [vmem:[#allocation7 + $0x19a0] sm:$0xff]
    %v1913 = vld [vmem:[#allocation7 + $0x19a8] sm:$0xff]
    %v1914 = vld [vmem:[#allocation7 + $0x19b0] sm:$0xff]
    %v1915 = vld [vmem:[#allocation7 + $0x19b8] sm:$0xff]
    %v1916 = vld [vmem:[#allocation7 + $0x19c0] sm:$0xff]
    %v1917 = vld [vmem:[#allocation7 + $0x19c8] sm:$0xff]
    %v1918 = vld [vmem:[#allocation7 + $0x19d0] sm:$0xff]
    %v1919 = vld [vmem:[#allocation7 + $0x19d8] sm:$0xff]
    %v1920 = vld [vmem:[#allocation7 + $0x19e0] sm:$0xff]
    %v1921 = vld [vmem:[#allocation7 + $0x19e8] sm:$0xff]
    %v1922 = vld [vmem:[#allocation7 + $0x19f0] sm:$0xff]
    %v1923 = vld [vmem:[#allocation7 + $0x19f8] sm:$0xff]
    %v1924 = vld [vmem:[#allocation7 + $0x1a00] sm:$0xff]
    %v1925 = vld [vmem:[#allocation7 + $0x1a08] sm:$0xff]
    %v1926 = vld [vmem:[#allocation7 + $0x1a10] sm:$0xff]
    %v1927 = vld [vmem:[#allocation7 + $0x1a18] sm:$0xff]
    %v1928 = vld [vmem:[#allocation7 + $0x1a20] sm:$0xff]
    %v1929 = vld [vmem:[#allocation7 + $0x1a28] sm:$0xff]
    %v1930 = vld [vmem:[#allocation7 + $0x1a30] sm:$0xff]
    %v1931 = vld [vmem:[#allocation7 + $0x1a38] sm:$0xff]
    %v1932 = vld [vmem:[#allocation7 + $0x1a40] sm:$0xff]
    %v1933 = vld [vmem:[#allocation7 + $0x1a48] sm:$0xff]
    %v1934 = vld [vmem:[#allocation7 + $0x1a50] sm:$0xff]
    %v1935 = vld [vmem:[#allocation7 + $0x1a58] sm:$0xff]
    %v1936 = vld [vmem:[#allocation7 + $0x1a60] sm:$0xff]
    %v1937 = vld [vmem:[#allocation7 + $0x1a68] sm:$0xff]
    %v1938 = vld [vmem:[#allocation7 + $0x1a70] sm:$0xff]
    %v1939 = vld [vmem:[#allocation7 + $0x1a78] sm:$0xff]
    %v1940 = vld [vmem:[#allocation7 + $0x1a80] sm:$0xff]
    %v1941 = vld [vmem:[#allocation7 + $0x1a88] sm:$0xff]
    %v1942 = vld [vmem:[#allocation7 + $0x1a90] sm:$0xff]
    %v1943 = vld [vmem:[#allocation7 + $0x1a98] sm:$0xff]
    %v1944 = vld [vmem:[#allocation7 + $0x1aa0] sm:$0xff]
    %v1945 = vld [vmem:[#allocation7 + $0x1aa8] sm:$0xff]
    %v1946 = vld [vmem:[#allocation7 + $0x1ab0] sm:$0xff]
    %v1947 = vld [vmem:[#allocation7 + $0x1ab8] sm:$0xff]
    %v1948 = vld [vmem:[#allocation7 + $0x1ac0] sm:$0xff]
    %v1949 = vld [vmem:[#allocation7 + $0x1ac8] sm:$0xff]
    %v1950 = vld [vmem:[#allocation7 + $0x1ad0] sm:$0xff]
    %v1951 = vld [vmem:[#allocation7 + $0x1ad8] sm:$0xff]
    %v1952 = vld [vmem:[#allocation7 + $0x1ae0] sm:$0xff]
    %v1953 = vld [vmem:[#allocation7 + $0x1ae8] sm:$0xff]
    %v1954 = vld [vmem:[#allocation7 + $0x1af0] sm:$0xff]
    %v1955 = vld [vmem:[#allocation7 + $0x1af8] sm:$0xff]
    %v1956 = vld [vmem:[#allocation7 + $0x1b00] sm:$0xff]
    %v1957 = vld [vmem:[#allocation7 + $0x1b08] sm:$0xff]
    %v1958 = vld [vmem:[#allocation7 + $0x1b10] sm:$0xff]
    %v1959 = vld [vmem:[#allocation7 + $0x1b18] sm:$0xff]
    %v1960 = vld [vmem:[#allocation7 + $0x1b20] sm:$0xff]
    %v1961 = vld [vmem:[#allocation7 + $0x1b28] sm:$0xff]
    %v1962 = vld [vmem:[#allocation7 + $0x1b30] sm:$0xff]
    %v1963 = vld [vmem:[#allocation7 + $0x1b38] sm:$0xff]
    %v1964 = vld [vmem:[#allocation7 + $0x1b40] sm:$0xff]
    %v1965 = vld [vmem:[#allocation7 + $0x1b48] sm:$0xff]
    %v1966 = vld [vmem:[#allocation7 + $0x1b50] sm:$0xff]
    %v1967 = vld [vmem:[#allocation7 + $0x1b58] sm:$0xff]
    %v1968 = vld [vmem:[#allocation7 + $0x1b60] sm:$0xff]
    %v1969 = vld [vmem:[#allocation7 + $0x1b68] sm:$0xff]
    %v1970 = vld [vmem:[#allocation7 + $0x1b70] sm:$0xff]
    %v1971 = vld [vmem:[#allocation7 + $0x1b78] sm:$0xff]
    %v1972 = vld [vmem:[#allocation7 + $0x1b80] sm:$0xff]
    %v1973 = vld [vmem:[#allocation7 + $0x1b88] sm:$0xff]
    %v1974 = vld [vmem:[#allocation7 + $0x1b90] sm:$0xff]
    %v1975 = vld [vmem:[#allocation7 + $0x1b98] sm:$0xff]
    %v1976 = vld [vmem:[#allocation7 + $0x1ba0] sm:$0xff]
    %v1977 = vld [vmem:[#allocation7 + $0x1ba8] sm:$0xff]
    %v1978 = vld [vmem:[#allocation7 + $0x1bb0] sm:$0xff]
    %v1979 = vld [vmem:[#allocation7 + $0x1bb8] sm:$0xff]
    %v1980 = vld [vmem:[#allocation7 + $0x1bc0] sm:$0xff]
    %v1981 = vld [vmem:[#allocation7 + $0x1bc8] sm:$0xff]
    %v1982 = vld [vmem:[#allocation7 + $0x1bd0] sm:$0xff]
    %v1983 = vld [vmem:[#allocation7 + $0x1bd8] sm:$0xff]
    %v1984 = vld [vmem:[#allocation7 + $0x1be0] sm:$0xff]
    %v1985 = vld [vmem:[#allocation7 + $0x1be8] sm:$0xff]
    %v1986 = vld [vmem:[#allocation7 + $0x1bf0] sm:$0xff]
    %v1987 = vld [vmem:[#allocation7 + $0x1bf8] sm:$0xff]
    %v1988 = vld [vmem:[#allocation7 + $0x1c00] sm:$0xff]
    %v1989 = vld [vmem:[#allocation7 + $0x1c08] sm:$0xff]
    %v1990 = vld [vmem:[#allocation7 + $0x1c10] sm:$0xff]
    %v1991 = vld [vmem:[#allocation7 + $0x1c18] sm:$0xff]
    %v1992 = vld [vmem:[#allocation7 + $0x1c20] sm:$0xff]
    %v1993 = vld [vmem:[#allocation7 + $0x1c28] sm:$0xff]
    %v1994 = vld [vmem:[#allocation7 + $0x1c30] sm:$0xff]
    %v1995 = vld [vmem:[#allocation7 + $0x1c38] sm:$0xff]
    %v1996 = vld [vmem:[#allocation7 + $0x1c40] sm:$0xff]
    %v1997 = vld [vmem:[#allocation7 + $0x1c48] sm:$0xff]
    %v1998 = vld [vmem:[#allocation7 + $0x1c50] sm:$0xff]
    %v1999 = vld [vmem:[#allocation7 + $0x1c58] sm:$0xff]
    %v2000 = vld [vmem:[#allocation7 + $0x1c60] sm:$0xff]
    %v2001 = vld [vmem:[#allocation7 + $0x1c68] sm:$0xff]
    %v2002 = vld [vmem:[#allocation7 + $0x1c70] sm:$0xff]
    %v2003 = vld [vmem:[#allocation7 + $0x1c78] sm:$0xff]
    %v2004 = vld [vmem:[#allocation7 + $0x1c80] sm:$0xff]
    %v2005 = vld [vmem:[#allocation7 + $0x1c88] sm:$0xff]
    %v2006 = vld [vmem:[#allocation7 + $0x1c90] sm:$0xff]
    %v2007 = vld [vmem:[#allocation7 + $0x1c98] sm:$0xff]
    %v2008 = vld [vmem:[#allocation7 + $0x1ca0] sm:$0xff]
    %v2009 = vld [vmem:[#allocation7 + $0x1ca8] sm:$0xff]
    %v2010 = vld [vmem:[#allocation7 + $0x1cb0] sm:$0xff]
    %v2011 = vld [vmem:[#allocation7 + $0x1cb8] sm:$0xff]
    %v2012 = vld [vmem:[#allocation7 + $0x1cc0] sm:$0xff]
    %v2013 = vld [vmem:[#allocation7 + $0x1cc8] sm:$0xff]
    %v2014 = vld [vmem:[#allocation7 + $0x1cd0] sm:$0xff]
    %v2015 = vld [vmem:[#allocation7 + $0x1cd8] sm:$0xff]
    %v2016 = vld [vmem:[#allocation7 + $0x1ce0] sm:$0xff]
    %v2017 = vld [vmem:[#allocation7 + $0x1ce8] sm:$0xff]
    %v2018 = vld [vmem:[#allocation7 + $0x1cf0] sm:$0xff]
    %v2019 = vld [vmem:[#allocation7 + $0x1cf8] sm:$0xff]
    %v2020 = vld [vmem:[#allocation7 + $0x1d00] sm:$0xff]
    %v2021 = vld [vmem:[#allocation7 + $0x1d08] sm:$0xff]
    %v2022 = vld [vmem:[#allocation7 + $0x1d10] sm:$0xff]
    %v2023 = vld [vmem:[#allocation7 + $0x1d18] sm:$0xff]
    %v2024 = vld [vmem:[#allocation7 + $0x1d20] sm:$0xff]
    %v2025 = vld [vmem:[#allocation7 + $0x1d28] sm:$0xff]
    %v2026 = vld [vmem:[#allocation7 + $0x1d30] sm:$0xff]
    %v2027 = vld [vmem:[#allocation7 + $0x1d38] sm:$0xff]
    %v2028 = vld [vmem:[#allocation7 + $0x1d40] sm:$0xff]
    %v2029 = vld [vmem:[#allocation7 + $0x1d48] sm:$0xff]
    %v2030 = vld [vmem:[#allocation7 + $0x1d50] sm:$0xff]
    %v2031 = vld [vmem:[#allocation7 + $0x1d58] sm:$0xff]
    %v2032 = vld [vmem:[#allocation7 + $0x1d60] sm:$0xff]
    %v2033 = vld [vmem:[#allocation7 + $0x1d68] sm:$0xff]
    %v2034 = vld [vmem:[#allocation7 + $0x1d70] sm:$0xff]
    %v2035 = vld [vmem:[#allocation7 + $0x1d78] sm:$0xff]
    %v2036 = vld [vmem:[#allocation7 + $0x1d80] sm:$0xff]
    %v2037 = vld [vmem:[#allocation7 + $0x1d88] sm:$0xff]
    %v2038 = vld [vmem:[#allocation7 + $0x1d90] sm:$0xff]
    %v2039 = vld [vmem:[#allocation7 + $0x1d98] sm:$0xff]
    %v2040 = vld [vmem:[#allocation7 + $0x1da0] sm:$0xff]
    %v2041 = vld [vmem:[#allocation7 + $0x1da8] sm:$0xff]
    %v2042 = vld [vmem:[#allocation7 + $0x1db0] sm:$0xff]
    %v2043 = vld [vmem:[#allocation7 + $0x1db8] sm:$0xff]
    %v2044 = vld [vmem:[#allocation7 + $0x1dc0] sm:$0xff]
    %v2045 = vld [vmem:[#allocation7 + $0x1dc8] sm:$0xff]
    %v2046 = vld [vmem:[#allocation7 + $0x1dd0] sm:$0xff]
    %v2047 = vld [vmem:[#allocation7 + $0x1dd8] sm:$0xff]
    %v2048 = vld [vmem:[#allocation7 + $0x1de0] sm:$0xff]
    %v2049 = vld [vmem:[#allocation7 + $0x1de8] sm:$0xff]
    %v2050 = vld [vmem:[#allocation7 + $0x1df0] sm:$0xff]
    %v2051 = vld [vmem:[#allocation7 + $0x1df8] sm:$0xff]
    %v2052 = vld [vmem:[#allocation7 + $0x1e00] sm:$0xff]
    %v2053 = vld [vmem:[#allocation7 + $0x1e08] sm:$0xff]
    %v2054 = vld [vmem:[#allocation7 + $0x1e10] sm:$0xff]
    %v2055 = vld [vmem:[#allocation7 + $0x1e18] sm:$0xff]
    %v2056 = vld [vmem:[#allocation7 + $0x1e20] sm:$0xff]
    %v2057 = vld [vmem:[#allocation7 + $0x1e28] sm:$0xff]
    %v2058 = vld [vmem:[#allocation7 + $0x1e30] sm:$0xff]
    %v2059 = vld [vmem:[#allocation7 + $0x1e38] sm:$0xff]
    %v2060 = vld [vmem:[#allocation7 + $0x1e40] sm:$0xff]
    %v2061 = vld [vmem:[#allocation7 + $0x1e48] sm:$0xff]
    %v2062 = vld [vmem:[#allocation7 + $0x1e50] sm:$0xff]
    %v2063 = vld [vmem:[#allocation7 + $0x1e58] sm:$0xff]
    %v2064 = vld [vmem:[#allocation7 + $0x1e60] sm:$0xff]
    %v2065 = vld [vmem:[#allocation7 + $0x1e68] sm:$0xff]
    %v2066 = vld [vmem:[#allocation7 + $0x1e70] sm:$0xff]
    %v2067 = vld [vmem:[#allocation7 + $0x1e78] sm:$0xff]
    %v2068 = vld [vmem:[#allocation7 + $0x1e80] sm:$0xff]
    %v2069 = vld [vmem:[#allocation7 + $0x1e88] sm:$0xff]
    %v2070 = vld [vmem:[#allocation7 + $0x1e90] sm:$0xff]
    %v2071 = vld [vmem:[#allocation7 + $0x1e98] sm:$0xff]
    %v2072 = vld [vmem:[#allocation7 + $0x1ea0] sm:$0xff]
    %v2073 = vld [vmem:[#allocation7 + $0x1ea8] sm:$0xff]
    %v2074 = vld [vmem:[#allocation7 + $0x1eb0] sm:$0xff]
    %v2075 = vld [vmem:[#allocation7 + $0x1eb8] sm:$0xff]
    %v2076 = vld [vmem:[#allocation7 + $0x1ec0] sm:$0xff]
    %v2077 = vld [vmem:[#allocation7 + $0x1ec8] sm:$0xff]
    %v2078 = vld [vmem:[#allocation7 + $0x1ed0] sm:$0xff]
    %v2079 = vld [vmem:[#allocation7 + $0x1ed8] sm:$0xff]
    %v2080 = vld [vmem:[#allocation7 + $0x1ee0] sm:$0xff]
    %v2081 = vld [vmem:[#allocation7 + $0x1ee8] sm:$0xff]
    %v2082 = vld [vmem:[#allocation7 + $0x1ef0] sm:$0xff]
    %v2083 = vld [vmem:[#allocation7 + $0x1ef8] sm:$0xff]
    %v2084 = vld [vmem:[#allocation7 + $0x1f00] sm:$0xff]
    %v2085 = vld [vmem:[#allocation7 + $0x1f08] sm:$0xff]
    %v2086 = vld [vmem:[#allocation7 + $0x1f10] sm:$0xff]
    %v2087 = vld [vmem:[#allocation7 + $0x1f18] sm:$0xff]
    %v2088 = vld [vmem:[#allocation7 + $0x1f20] sm:$0xff]
    %v2089 = vld [vmem:[#allocation7 + $0x1f28] sm:$0xff]
    %v2090 = vld [vmem:[#allocation7 + $0x1f30] sm:$0xff]
    %v2091 = vld [vmem:[#allocation7 + $0x1f38] sm:$0xff]
    %v2092 = vld [vmem:[#allocation7 + $0x1f40] sm:$0xff]
    %v2093 = vld [vmem:[#allocation7 + $0x1f48] sm:$0xff]
    %v2094 = vld [vmem:[#allocation7 + $0x1f50] sm:$0xff]
    %v2095 = vld [vmem:[#allocation7 + $0x1f58] sm:$0xff]
    %v2096 = vld [vmem:[#allocation7 + $0x1f60] sm:$0xff]
    %v2097 = vld [vmem:[#allocation7 + $0x1f68] sm:$0xff]
    %v2098 = vld [vmem:[#allocation7 + $0x1f70] sm:$0xff]
    %v2099 = vld [vmem:[#allocation7 + $0x1f78] sm:$0xff]
    %v2100 = vld [vmem:[#allocation7 + $0x1f80] sm:$0xff]
    %v2101 = vld [vmem:[#allocation7 + $0x1f88] sm:$0xff]
    %v2102 = vld [vmem:[#allocation7 + $0x1f90] sm:$0xff]
    %v2103 = vld [vmem:[#allocation7 + $0x1f98] sm:$0xff]
    %v2104 = vld [vmem:[#allocation7 + $0x1fa0] sm:$0xff]
    %v2105 = vld [vmem:[#allocation7 + $0x1fa8] sm:$0xff]
    %v2106 = vld [vmem:[#allocation7 + $0x1fb0] sm:$0xff]
    %v2107 = vld [vmem:[#allocation7 + $0x1fb8] sm:$0xff]
    %v2108 = vld [vmem:[#allocation7 + $0x1fc0] sm:$0xff]
    %v2109 = vld [vmem:[#allocation7 + $0x1fc8] sm:$0xff]
    %v2110 = vld [vmem:[#allocation7 + $0x1fd0] sm:$0xff]
    %v2111 = vld [vmem:[#allocation7 + $0x1fd8] sm:$0xff]
    %v2112 = vld [vmem:[#allocation7 + $0x1fe0] sm:$0xff]
    %v2113 = vld [vmem:[#allocation7 + $0x1fe8] sm:$0xff]
    %v2114 = vld [vmem:[#allocation7 + $0x1ff0] sm:$0xff]
    %v2115 = vld [vmem:[#allocation7 + $0x1ff8] sm:$0xff]
    %v2116 = vld [vmem:[#allocation7 + $0x2000] sm:$0xff]
    %v2117 = vld [vmem:[#allocation7 + $0x2008] sm:$0xff]
    %v2118 = vld [vmem:[#allocation7 + $0x2010] sm:$0xff]
    %v2119 = vld [vmem:[#allocation7 + $0x2018] sm:$0xff]
    %v2120 = vld [vmem:[#allocation7 + $0x2020] sm:$0xff]
    %v2121 = vld [vmem:[#allocation7 + $0x2028] sm:$0xff]
    %v2122 = vld [vmem:[#allocation7 + $0x2030] sm:$0xff]
    %v2123 = vld [vmem:[#allocation7 + $0x2038] sm:$0xff]
    %v2124 = vld [vmem:[#allocation7 + $0x2040] sm:$0xff]
    %v2125 = vld [vmem:[#allocation7 + $0x2048] sm:$0xff]
    %v2126 = vld [vmem:[#allocation7 + $0x2050] sm:$0xff]
    %v2127 = vld [vmem:[#allocation7 + $0x2058] sm:$0xff]
    %v2128 = vld [vmem:[#allocation7 + $0x2060] sm:$0xff]
    %v2129 = vld [vmem:[#allocation7 + $0x2068] sm:$0xff]
    %v2130 = vld [vmem:[#allocation7 + $0x2070] sm:$0xff]
    %v2131 = vld [vmem:[#allocation7 + $0x2078] sm:$0xff]
    %v2132 = vld [vmem:[#allocation7 + $0x2080] sm:$0xff]
    %v2133 = vld [vmem:[#allocation7 + $0x2088] sm:$0xff]
    %v2134 = vld [vmem:[#allocation7 + $0x2090] sm:$0xff]
    %v2135 = vld [vmem:[#allocation7 + $0x2098] sm:$0xff]
    %v2136 = vld [vmem:[#allocation7 + $0x20a0] sm:$0xff]
    %v2137 = vld [vmem:[#allocation7 + $0x20a8] sm:$0xff]
    %v2138 = vld [vmem:[#allocation7 + $0x20b0] sm:$0xff]
    %v2139 = vld [vmem:[#allocation7 + $0x20b8] sm:$0xff]
    %v2140 = vld [vmem:[#allocation7 + $0x20c0] sm:$0xff]
    %v2141 = vld [vmem:[#allocation7 + $0x20c8] sm:$0xff]
    %v2142 = vld [vmem:[#allocation7 + $0x20d0] sm:$0xff]
    %v2143 = vld [vmem:[#allocation7 + $0x20d8] sm:$0xff]
    %v2144 = vld [vmem:[#allocation7 + $0x20e0] sm:$0xff]
    %v2145 = vld [vmem:[#allocation7 + $0x20e8] sm:$0xff]
    %v2146 = vld [vmem:[#allocation7 + $0x20f0] sm:$0xff]
    %v2147 = vld [vmem:[#allocation7 + $0x20f8] sm:$0xff]
    %v2148 = vld [vmem:[#allocation7 + $0x2100] sm:$0xff]
    %v2149 = vld [vmem:[#allocation7 + $0x2108] sm:$0xff]
    %v2150 = vld [vmem:[#allocation7 + $0x2110] sm:$0xff]
    %v2151 = vld [vmem:[#allocation7 + $0x2118] sm:$0xff]
    %v2152 = vld [vmem:[#allocation7 + $0x2120] sm:$0xff]
    %v2153 = vld [vmem:[#allocation7 + $0x2128] sm:$0xff]
    %v2154 = vld [vmem:[#allocation7 + $0x2130] sm:$0xff]
    %v2155 = vld [vmem:[#allocation7 + $0x2138] sm:$0xff]
    %v2156 = vld [vmem:[#allocation7 + $0x2140] sm:$0xff]
    %v2157 = vld [vmem:[#allocation7 + $0x2148] sm:$0xff]
    %v2158 = vld [vmem:[#allocation7 + $0x2150] sm:$0xff]
    %v2159 = vld [vmem:[#allocation7 + $0x2158] sm:$0xff]
    %v2160 = vld [vmem:[#allocation7 + $0x2160] sm:$0xff]
    %v2161 = vld [vmem:[#allocation7 + $0x2168] sm:$0xff]
    %v2162 = vld [vmem:[#allocation7 + $0x2170] sm:$0xff]
    %v2163 = vld [vmem:[#allocation7 + $0x2178] sm:$0xff]
    %v2164 = vld [vmem:[#allocation7 + $0x2180] sm:$0xff]
    %v2165 = vld [vmem:[#allocation7 + $0x2188] sm:$0xff]
    %v2166 = vld [vmem:[#allocation7 + $0x2190] sm:$0xff]
    %v2167 = vld [vmem:[#allocation7 + $0x2198] sm:$0xff]
    %v2168 = vld [vmem:[#allocation7 + $0x21a0] sm:$0xff]
    %v2169 = vld [vmem:[#allocation7 + $0x21a8] sm:$0xff]
    %v2170 = vld [vmem:[#allocation7 + $0x21b0] sm:$0xff]
    %v2171 = vld [vmem:[#allocation7 + $0x21b8] sm:$0xff]
    %v2172 = vld [vmem:[#allocation7 + $0x21c0] sm:$0xff]
    %v2173 = vld [vmem:[#allocation7 + $0x21c8] sm:$0xff]
    %v2174 = vld [vmem:[#allocation7 + $0x21d0] sm:$0xff]
    %v2175 = vld [vmem:[#allocation7 + $0x21d8] sm:$0xff]
    %v2176 = vld [vmem:[#allocation7 + $0x21e0] sm:$0xff]
    %v2177 = vld [vmem:[#allocation7 + $0x21e8] sm:$0xff]
    %v2178 = vld [vmem:[#allocation7 + $0x21f0] sm:$0xff]
    %v2179 = vld [vmem:[#allocation7 + $0x21f8] sm:$0xff]
    %v2180 = vld [vmem:[#allocation7 + $0x2200] sm:$0xff]
    %v2181 = vld [vmem:[#allocation7 + $0x2208] sm:$0xff]
    %v2182 = vld [vmem:[#allocation7 + $0x2210] sm:$0xff]
    %v2183 = vld [vmem:[#allocation7 + $0x2218] sm:$0xff]
    %v2184 = vld [vmem:[#allocation7 + $0x2220] sm:$0xff]
    %v2185 = vld [vmem:[#allocation7 + $0x2228] sm:$0xff]
    %v2186 = vld [vmem:[#allocation7 + $0x2230] sm:$0xff]
    %v2187 = vld [vmem:[#allocation7 + $0x2238] sm:$0xff]
    %v2188 = vld [vmem:[#allocation7 + $0x2240] sm:$0xff]
    %v2189 = vld [vmem:[#allocation7 + $0x2248] sm:$0xff]
    %v2190 = vld [vmem:[#allocation7 + $0x2250] sm:$0xff]
    %v2191 = vld [vmem:[#allocation7 + $0x2258] sm:$0xff]
    %v2192 = vld [vmem:[#allocation7 + $0x2260] sm:$0xff]
    %v2193 = vld [vmem:[#allocation7 + $0x2268] sm:$0xff]
    %v2194 = vld [vmem:[#allocation7 + $0x2270] sm:$0xff]
    %v2195 = vld [vmem:[#allocation7 + $0x2278] sm:$0xff]
    %v2196 = vld [vmem:[#allocation7 + $0x2280] sm:$0xff]
    %v2197 = vld [vmem:[#allocation7 + $0x2288] sm:$0xff]
    %v2198 = vld [vmem:[#allocation7 + $0x2290] sm:$0xff]
    %v2199 = vld [vmem:[#allocation7 + $0x2298] sm:$0xff]
    %v2200 = vld [vmem:[#allocation7 + $0x22a0] sm:$0xff]
    %v2201 = vld [vmem:[#allocation7 + $0x22a8] sm:$0xff]
    %v2202 = vld [vmem:[#allocation7 + $0x22b0] sm:$0xff]
    %v2203 = vld [vmem:[#allocation7 + $0x22b8] sm:$0xff]
    %v2204 = vld [vmem:[#allocation7 + $0x22c0] sm:$0xff]
    %v2205 = vld [vmem:[#allocation7 + $0x22c8] sm:$0xff]
    %v2206 = vld [vmem:[#allocation7 + $0x22d0] sm:$0xff]
    %v2207 = vld [vmem:[#allocation7 + $0x22d8] sm:$0xff]
    %v2208 = vld [vmem:[#allocation7 + $0x22e0] sm:$0xff]
    %v2209 = vld [vmem:[#allocation7 + $0x22e8] sm:$0xff]
    %v2210 = vld [vmem:[#allocation7 + $0x22f0] sm:$0xff]
    %v2211 = vld [vmem:[#allocation7 + $0x22f8] sm:$0xff]
    %v2212 = vld [vmem:[#allocation7 + $0x2300] sm:$0xff]
    %v2213 = vld [vmem:[#allocation7 + $0x2308] sm:$0xff]
    %v2214 = vld [vmem:[#allocation7 + $0x2310] sm:$0xff]
    %v2215 = vld [vmem:[#allocation7 + $0x2318] sm:$0xff]
    %v2216 = vld [vmem:[#allocation7 + $0x2320] sm:$0xff]
    %v2217 = vld [vmem:[#allocation7 + $0x2328] sm:$0xff]
    %v2218 = vld [vmem:[#allocation7 + $0x2330] sm:$0xff]
    %v2219 = vld [vmem:[#allocation7 + $0x2338] sm:$0xff]
    %v2220 = vld [vmem:[#allocation7 + $0x2340] sm:$0xff]
    %v2221 = vld [vmem:[#allocation7 + $0x2348] sm:$0xff]
    %v2222 = vld [vmem:[#allocation7 + $0x2350] sm:$0xff]
    %v2223 = vld [vmem:[#allocation7 + $0x2358] sm:$0xff]
    %v2224 = vld [vmem:[#allocation7 + $0x2360] sm:$0xff]
    %v2225 = vld [vmem:[#allocation7 + $0x2368] sm:$0xff]
    %v2226 = vld [vmem:[#allocation7 + $0x2370] sm:$0xff]
    %v2227 = vld [vmem:[#allocation7 + $0x2378] sm:$0xff]
    %v2228 = vld [vmem:[#allocation7 + $0x2380] sm:$0xff]
    %v2229 = vld [vmem:[#allocation7 + $0x2388] sm:$0xff]
    %v2230 = vld [vmem:[#allocation7 + $0x2390] sm:$0xff]
    %v2231 = vld [vmem:[#allocation7 + $0x2398] sm:$0xff]
    %v2232 = vld [vmem:[#allocation7 + $0x23a0] sm:$0xff]
    %v2233 = vld [vmem:[#allocation7 + $0x23a8] sm:$0xff]
    %v2234 = vld [vmem:[#allocation7 + $0x23b0] sm:$0xff]
    %v2235 = vld [vmem:[#allocation7 + $0x23b8] sm:$0xff]
    %v2236 = vld [vmem:[#allocation7 + $0x23c0] sm:$0xff]
    %v2237 = vld [vmem:[#allocation7 + $0x23c8] sm:$0xff]
    %v2238 = vld [vmem:[#allocation7 + $0x23d0] sm:$0xff]
    %v2239 = vld [vmem:[#allocation7 + $0x23d8] sm:$0xff]
    %v2240 = vld [vmem:[#allocation7 + $0x23e0] sm:$0xff]
    %v2241 = vld [vmem:[#allocation7 + $0x23e8] sm:$0xff]
    %v2242 = vld [vmem:[#allocation7 + $0x23f0] sm:$0xff]
    %v2243 = vld [vmem:[#allocation7 + $0x23f8] sm:$0xff]
    %v2244 = vld [vmem:[#allocation7 + $0x2400] sm:$0xff]
    %v2245 = vld [vmem:[#allocation7 + $0x2408] sm:$0xff]
    %v2246 = vld [vmem:[#allocation7 + $0x2410] sm:$0xff]
    %v2247 = vld [vmem:[#allocation7 + $0x2418] sm:$0xff]
    %v2248 = vld [vmem:[#allocation7 + $0x2420] sm:$0xff]
    %v2249 = vld [vmem:[#allocation7 + $0x2428] sm:$0xff]
    %v2250 = vld [vmem:[#allocation7 + $0x2430] sm:$0xff]
    %v2251 = vld [vmem:[#allocation7 + $0x2438] sm:$0xff]
    %v2252 = vld [vmem:[#allocation7 + $0x2440] sm:$0xff]
    %v2253 = vld [vmem:[#allocation7 + $0x2448] sm:$0xff]
    %v2254 = vld [vmem:[#allocation7 + $0x2450] sm:$0xff]
    %v2255 = vld [vmem:[#allocation7 + $0x2458] sm:$0xff]
    %v2256 = vld [vmem:[#allocation7 + $0x2460] sm:$0xff]
    %v2257 = vld [vmem:[#allocation7 + $0x2468] sm:$0xff]
    %v2258 = vld [vmem:[#allocation7 + $0x2470] sm:$0xff]
    %v2259 = vld [vmem:[#allocation7 + $0x2478] sm:$0xff]
    %v2260 = vld [vmem:[#allocation7 + $0x2480] sm:$0xff]
    %v2261 = vld [vmem:[#allocation7 + $0x2488] sm:$0xff]
    %v2262 = vld [vmem:[#allocation7 + $0x2490] sm:$0xff]
    %v2263 = vld [vmem:[#allocation7 + $0x2498] sm:$0xff]
    %v2264 = vld [vmem:[#allocation7 + $0x24a0] sm:$0xff]
    %v2265 = vld [vmem:[#allocation7 + $0x24a8] sm:$0xff]
    %v2266 = vld [vmem:[#allocation7 + $0x24b0] sm:$0xff]
    %v2267 = vld [vmem:[#allocation7 + $0x24b8] sm:$0xff]
    %v2268 = vld [vmem:[#allocation7 + $0x24c0] sm:$0xff]
    %v2269 = vld [vmem:[#allocation7 + $0x24c8] sm:$0xff]
    %v2270 = vld [vmem:[#allocation7 + $0x24d0] sm:$0xff]
    %v2271 = vld [vmem:[#allocation7 + $0x24d8] sm:$0xff]
    %v2272 = vld [vmem:[#allocation7 + $0x24e0] sm:$0xff]
    %v2273 = vld [vmem:[#allocation7 + $0x24e8] sm:$0xff]
    %v2274 = vld [vmem:[#allocation7 + $0x24f0] sm:$0xff]
    %v2275 = vld [vmem:[#allocation7 + $0x24f8] sm:$0xff]
    %v2276 = vld [vmem:[#allocation7 + $0x2500] sm:$0xff]
    %v2277 = vld [vmem:[#allocation7 + $0x2508] sm:$0xff]
    %v2278 = vld [vmem:[#allocation7 + $0x2510] sm:$0xff]
    %v2279 = vld [vmem:[#allocation7 + $0x2518] sm:$0xff]
    %v2280 = vld [vmem:[#allocation7 + $0x2520] sm:$0xff]
    %v2281 = vld [vmem:[#allocation7 + $0x2528] sm:$0xff]
    %v2282 = vld [vmem:[#allocation7 + $0x2530] sm:$0xff]
    %v2283 = vld [vmem:[#allocation7 + $0x2538] sm:$0xff]
    %v2284 = vld [vmem:[#allocation7 + $0x2540] sm:$0xff]
    %v2285 = vld [vmem:[#allocation7 + $0x2548] sm:$0xff]
    %v2286 = vld [vmem:[#allocation7 + $0x2550] sm:$0xff]
    %v2287 = vld [vmem:[#allocation7 + $0x2558] sm:$0xff]
    %v2288 = vld [vmem:[#allocation7 + $0x2560] sm:$0xff]
    %v2289 = vld [vmem:[#allocation7 + $0x2568] sm:$0xff]
    %v2290 = vld [vmem:[#allocation7 + $0x2570] sm:$0xff]
    %v2291 = vld [vmem:[#allocation7 + $0x2578] sm:$0xff]
    %v2292 = vld [vmem:[#allocation7 + $0x2580] sm:$0xff]
    %v2293 = vld [vmem:[#allocation7 + $0x2588] sm:$0xff]
    %v2294 = vld [vmem:[#allocation7 + $0x2590] sm:$0xff]
    %v2295 = vld [vmem:[#allocation7 + $0x2598] sm:$0xff]
    %v2296 = vld [vmem:[#allocation7 + $0x25a0] sm:$0xff]
    %v2297 = vld [vmem:[#allocation7 + $0x25a8] sm:$0xff]
    %v2298 = vld [vmem:[#allocation7 + $0x25b0] sm:$0xff]
    %v2299 = vld [vmem:[#allocation7 + $0x25b8] sm:$0xff]
    %v2300 = vld [vmem:[#allocation7 + $0x25c0] sm:$0xff]
    %v2301 = vld [vmem:[#allocation7 + $0x25c8] sm:$0xff]
    %v2302 = vld [vmem:[#allocation7 + $0x25d0] sm:$0xff]
    %v2303 = vld [vmem:[#allocation7 + $0x25d8] sm:$0xff]
    %v2304 = vld [vmem:[#allocation7 + $0x25e0] sm:$0xff]
    %v2305 = vld [vmem:[#allocation7 + $0x25e8] sm:$0xff]
    %v2306 = vld [vmem:[#allocation7 + $0x25f0] sm:$0xff]
    %v2307 = vld [vmem:[#allocation7 + $0x25f8] sm:$0xff]
    %v2308 = vld [vmem:[#allocation7 + $0x2600] sm:$0xff]
    %v2309 = vld [vmem:[#allocation7 + $0x2608] sm:$0xff]
    %v2310 = vld [vmem:[#allocation7 + $0x2610] sm:$0xff]
    %v2311 = vld [vmem:[#allocation7 + $0x2618] sm:$0xff]
    %v2312 = vld [vmem:[#allocation7 + $0x2620] sm:$0xff]
    %v2313 = vld [vmem:[#allocation7 + $0x2628] sm:$0xff]
    %v2314 = vld [vmem:[#allocation7 + $0x2630] sm:$0xff]
    %v2315 = vld [vmem:[#allocation7 + $0x2638] sm:$0xff]
    %v2316 = vld [vmem:[#allocation7 + $0x2640] sm:$0xff]
    %v2317 = vld [vmem:[#allocation7 + $0x2648] sm:$0xff]
    %v2318 = vld [vmem:[#allocation7 + $0x2650] sm:$0xff]
    %v2319 = vld [vmem:[#allocation7 + $0x2658] sm:$0xff]
    %v2320 = vld [vmem:[#allocation7 + $0x2660] sm:$0xff]
    %v2321 = vld [vmem:[#allocation7 + $0x2668] sm:$0xff]
    %v2322 = vld [vmem:[#allocation7 + $0x2670] sm:$0xff]
    %v2323 = vld [vmem:[#allocation7 + $0x2678] sm:$0xff]
    %v2324 = vld [vmem:[#allocation7 + $0x2680] sm:$0xff]
    %v2325 = vld [vmem:[#allocation7 + $0x2688] sm:$0xff]
    %v2326 = vld [vmem:[#allocation7 + $0x2690] sm:$0xff]
    %v2327 = vld [vmem:[#allocation7 + $0x2698] sm:$0xff]
    %v2328 = vld [vmem:[#allocation7 + $0x26a0] sm:$0xff]
    %v2329 = vld [vmem:[#allocation7 + $0x26a8] sm:$0xff]
    %v2330 = vld [vmem:[#allocation7 + $0x26b0] sm:$0xff]
    %v2331 = vld [vmem:[#allocation7 + $0x26b8] sm:$0xff]
    %v2332 = vld [vmem:[#allocation7 + $0x26c0] sm:$0xff]
    %v2333 = vld [vmem:[#allocation7 + $0x26c8] sm:$0xff]
    %v2334 = vld [vmem:[#allocation7 + $0x26d0] sm:$0xff]
    %v2335 = vld [vmem:[#allocation7 + $0x26d8] sm:$0xff]
    %v2336 = vld [vmem:[#allocation7 + $0x26e0] sm:$0xff]
    %v2337 = vld [vmem:[#allocation7 + $0x26e8] sm:$0xff]
    %v2338 = vld [vmem:[#allocation7 + $0x26f0] sm:$0xff]
    %v2339 = vld [vmem:[#allocation7 + $0x26f8] sm:$0xff]
    %v2340 = vld [vmem:[#allocation7 + $0x2700] sm:$0xff]
    %v2341 = vld [vmem:[#allocation7 + $0x2708] sm:$0xff]
    %v2342 = vld [vmem:[#allocation7 + $0x2710] sm:$0xff]
    %v2343 = vld [vmem:[#allocation7 + $0x2718] sm:$0xff]
    %v2344 = vld [vmem:[#allocation7 + $0x2720] sm:$0xff]
    %v2345 = vld [vmem:[#allocation7 + $0x2728] sm:$0xff]
    %v2346 = vld [vmem:[#allocation7 + $0x2730] sm:$0xff]
    %v2347 = vld [vmem:[#allocation7 + $0x2738] sm:$0xff]
    %v2348 = vld [vmem:[#allocation7 + $0x2740] sm:$0xff]
    %v2349 = vld [vmem:[#allocation7 + $0x2748] sm:$0xff]
    %v2350 = vld [vmem:[#allocation7 + $0x2750] sm:$0xff]
    %v2351 = vld [vmem:[#allocation7 + $0x2758] sm:$0xff]
    %v2352 = vld [vmem:[#allocation7 + $0x2760] sm:$0xff]
    %v2353 = vld [vmem:[#allocation7 + $0x2768] sm:$0xff]
    %v2354 = vld [vmem:[#allocation7 + $0x2770] sm:$0xff]
    %v2355 = vld [vmem:[#allocation7 + $0x2778] sm:$0xff]
    %v2356 = vld [vmem:[#allocation7 + $0x2780] sm:$0xff]
    %v2357 = vld [vmem:[#allocation7 + $0x2788] sm:$0xff]
    %v2358 = vld [vmem:[#allocation7 + $0x2790] sm:$0xff]
    %v2359 = vld [vmem:[#allocation7 + $0x2798] sm:$0xff]
    %v2360 = vld [vmem:[#allocation7 + $0x27a0] sm:$0xff]
    %v2361 = vld [vmem:[#allocation7 + $0x27a8] sm:$0xff]
    %v2362 = vld [vmem:[#allocation7 + $0x27b0] sm:$0xff]
    %v2363 = vld [vmem:[#allocation7 + $0x27b8] sm:$0xff]
    %v2364 = vld [vmem:[#allocation7 + $0x27c0] sm:$0xff]
    %v2365 = vld [vmem:[#allocation7 + $0x27c8] sm:$0xff]
    %v2366 = vld [vmem:[#allocation7 + $0x27d0] sm:$0xff]
    %v2367 = vld [vmem:[#allocation7 + $0x27d8] sm:$0xff]
    %v2368 = vld [vmem:[#allocation7 + $0x27e0] sm:$0xff]
    %v2369 = vld [vmem:[#allocation7 + $0x27e8] sm:$0xff]
    %v2370 = vld [vmem:[#allocation7 + $0x27f0] sm:$0xff]
    %v2371 = vld [vmem:[#allocation7 + $0x27f8] sm:$0xff]
    %v2372 = vld [vmem:[#allocation7 + $0x2800] sm:$0xff]
    %v2373 = vld [vmem:[#allocation7 + $0x2808] sm:$0xff]
    %v2374 = vld [vmem:[#allocation7 + $0x2810] sm:$0xff]
    %v2375 = vld [vmem:[#allocation7 + $0x2818] sm:$0xff]
    %v2376 = vld [vmem:[#allocation7 + $0x2820] sm:$0xff]
    %v2377 = vld [vmem:[#allocation7 + $0x2828] sm:$0xff]
    %v2378 = vld [vmem:[#allocation7 + $0x2830] sm:$0xff]
    %v2379 = vld [vmem:[#allocation7 + $0x2838] sm:$0xff]
    %v2380 = vld [vmem:[#allocation7 + $0x2840] sm:$0xff]
    %v2381 = vld [vmem:[#allocation7 + $0x2848] sm:$0xff]
    %v2382 = vld [vmem:[#allocation7 + $0x2850] sm:$0xff]
    %v2383 = vld [vmem:[#allocation7 + $0x2858] sm:$0xff]
    %v2384 = vld [vmem:[#allocation7 + $0x2860] sm:$0xff]
    %v2385 = vld [vmem:[#allocation7 + $0x2868] sm:$0xff]
    %v2386 = vld [vmem:[#allocation7 + $0x2870] sm:$0xff]
    %v2387 = vld [vmem:[#allocation7 + $0x2878] sm:$0xff]
    %v2388 = vld [vmem:[#allocation7 + $0x2880] sm:$0xff]
    %v2389 = vld [vmem:[#allocation7 + $0x2888] sm:$0xff]
    %v2390 = vld [vmem:[#allocation7 + $0x2890] sm:$0xff]
    %v2391 = vld [vmem:[#allocation7 + $0x2898] sm:$0xff]
    %v2392 = vld [vmem:[#allocation7 + $0x28a0] sm:$0xff]
    %v2393 = vld [vmem:[#allocation7 + $0x28a8] sm:$0xff]
    %v2394 = vld [vmem:[#allocation7 + $0x28b0] sm:$0xff]
    %v2395 = vld [vmem:[#allocation7 + $0x28b8] sm:$0xff]
    %v2396 = vld [vmem:[#allocation7 + $0x28c0] sm:$0xff]
    %v2397 = vld [vmem:[#allocation7 + $0x28c8] sm:$0xff]
    %v2398 = vld [vmem:[#allocation7 + $0x28d0] sm:$0xff]
    %v2399 = vld [vmem:[#allocation7 + $0x28d8] sm:$0xff]
    %v2400 = vld [vmem:[#allocation7 + $0x28e0] sm:$0xff]
    %v2401 = vld [vmem:[#allocation7 + $0x28e8] sm:$0xff]
    %v2402 = vld [vmem:[#allocation7 + $0x28f0] sm:$0xff]
    %v2403 = vld [vmem:[#allocation7 + $0x28f8] sm:$0xff]
    %v2404 = vld [vmem:[#allocation7 + $0x2900] sm:$0xff]
    %v2405 = vld [vmem:[#allocation7 + $0x2908] sm:$0xff]
    %v2406 = vld [vmem:[#allocation7 + $0x2910] sm:$0xff]
    %v2407 = vld [vmem:[#allocation7 + $0x2918] sm:$0xff]
    %v2408 = vld [vmem:[#allocation7 + $0x2920] sm:$0xff]
    %v2409 = vld [vmem:[#allocation7 + $0x2928] sm:$0xff]
    %v2410 = vld [vmem:[#allocation7 + $0x2930] sm:$0xff]
    %v2411 = vld [vmem:[#allocation7 + $0x2938] sm:$0xff]
    %v2412 = vld [vmem:[#allocation7 + $0x2940] sm:$0xff]
    %v2413 = vld [vmem:[#allocation7 + $0x2948] sm:$0xff]
    %v2414 = vld [vmem:[#allocation7 + $0x2950] sm:$0xff]
    %v2415 = vld [vmem:[#allocation7 + $0x2958] sm:$0xff]
    %v2416 = vld [vmem:[#allocation7 + $0x2960] sm:$0xff]
    %v2417 = vld [vmem:[#allocation7 + $0x2968] sm:$0xff]
    %v2418 = vld [vmem:[#allocation7 + $0x2970] sm:$0xff]
    %v2419 = vld [vmem:[#allocation7 + $0x2978] sm:$0xff]
    %v2420 = vld [vmem:[#allocation7 + $0x2980] sm:$0xff]
    %v2421 = vld [vmem:[#allocation7 + $0x2988] sm:$0xff]
    %v2422 = vld [vmem:[#allocation7 + $0x2990] sm:$0xff]
    %v2423 = vld [vmem:[#allocation7 + $0x2998] sm:$0xff]
    %v2424 = vld [vmem:[#allocation7 + $0x29a0] sm:$0xff]
    %v2425 = vld [vmem:[#allocation7 + $0x29a8] sm:$0xff]
    %v2426 = vld [vmem:[#allocation7 + $0x29b0] sm:$0xff]
    %v2427 = vld [vmem:[#allocation7 + $0x29b8] sm:$0xff]
    %v2428 = vld [vmem:[#allocation7 + $0x29c0] sm:$0xff]
    %v2429 = vld [vmem:[#allocation7 + $0x29c8] sm:$0xff]
    %v2430 = vld [vmem:[#allocation7 + $0x29d0] sm:$0xff]
    %v2431 = vld [vmem:[#allocation7 + $0x29d8] sm:$0xff]
    %v2432 = vld [vmem:[#allocation7 + $0x29e0] sm:$0xff]
    %v2433 = vld [vmem:[#allocation7 + $0x29e8] sm:$0xff]
    %v2434 = vld [vmem:[#allocation7 + $0x29f0] sm:$0xff]
    %v2435 = vld [vmem:[#allocation7 + $0x29f8] sm:$0xff]
    %v2436 = vld [vmem:[#allocation7 + $0x2a00] sm:$0xff]
    %v2437 = vld [vmem:[#allocation7 + $0x2a08] sm:$0xff]
    %v2438 = vld [vmem:[#allocation7 + $0x2a10] sm:$0xff]
    %v2439 = vld [vmem:[#allocation7 + $0x2a18] sm:$0xff]
    %v2440 = vld [vmem:[#allocation7 + $0x2a20] sm:$0xff]
    %v2441 = vld [vmem:[#allocation7 + $0x2a28] sm:$0xff]
    %v2442 = vld [vmem:[#allocation7 + $0x2a30] sm:$0xff]
    %v2443 = vld [vmem:[#allocation7 + $0x2a38] sm:$0xff]
    %v2444 = vld [vmem:[#allocation7 + $0x2a40] sm:$0xff]
    %v2445 = vld [vmem:[#allocation7 + $0x2a48] sm:$0xff]
    %v2446 = vld [vmem:[#allocation7 + $0x2a50] sm:$0xff]
    %v2447 = vld [vmem:[#allocation7 + $0x2a58] sm:$0xff]
    %v2448 = vld [vmem:[#allocation7 + $0x2a60] sm:$0xff]
    %v2449 = vld [vmem:[#allocation7 + $0x2a68] sm:$0xff]
    %v2450 = vld [vmem:[#allocation7 + $0x2a70] sm:$0xff]
    %v2451 = vld [vmem:[#allocation7 + $0x2a78] sm:$0xff]
    %v2452 = vld [vmem:[#allocation7 + $0x2a80] sm:$0xff]
    %v2453 = vld [vmem:[#allocation7 + $0x2a88] sm:$0xff]
    %v2454 = vld [vmem:[#allocation7 + $0x2a90] sm:$0xff]
    %v2455 = vld [vmem:[#allocation7 + $0x2a98] sm:$0xff]
    %v2456 = vld [vmem:[#allocation7 + $0x2aa0] sm:$0xff]
    %v2457 = vld [vmem:[#allocation7 + $0x2aa8] sm:$0xff]
    %v2458 = vld [vmem:[#allocation7 + $0x2ab0] sm:$0xff]
    %v2459 = vld [vmem:[#allocation7 + $0x2ab8] sm:$0xff]
    %v2460 = vld [vmem:[#allocation7 + $0x2ac0] sm:$0xff]
    %v2461 = vld [vmem:[#allocation7 + $0x2ac8] sm:$0xff]
    %v2462 = vld [vmem:[#allocation7 + $0x2ad0] sm:$0xff]
    %v2463 = vld [vmem:[#allocation7 + $0x2ad8] sm:$0xff]
    %v2464 = vld [vmem:[#allocation7 + $0x2ae0] sm:$0xff]
    %v2465 = vld [vmem:[#allocation7 + $0x2ae8] sm:$0xff]
    %v2466 = vld [vmem:[#allocation7 + $0x2af0] sm:$0xff]
    %v2467 = vld [vmem:[#allocation7 + $0x2af8] sm:$0xff]
    %v2468 = vld [vmem:[#allocation7 + $0x2b00] sm:$0xff]
    %v2469 = vld [vmem:[#allocation7 + $0x2b08] sm:$0xff]
    %v2470 = vld [vmem:[#allocation7 + $0x2b10] sm:$0xff]
    %v2471 = vld [vmem:[#allocation7 + $0x2b18] sm:$0xff]
    %v2472 = vld [vmem:[#allocation7 + $0x2b20] sm:$0xff]
    %v2473 = vld [vmem:[#allocation7 + $0x2b28] sm:$0xff]
    %v2474 = vld [vmem:[#allocation7 + $0x2b30] sm:$0xff]
    %v2475 = vld [vmem:[#allocation7 + $0x2b38] sm:$0xff]
    %v2476 = vld [vmem:[#allocation7 + $0x2b40] sm:$0xff]
    %v2477 = vld [vmem:[#allocation7 + $0x2b48] sm:$0xff]
    %v2478 = vld [vmem:[#allocation7 + $0x2b50] sm:$0xff]
    %v2479 = vld [vmem:[#allocation7 + $0x2b58] sm:$0xff]
    %v2480 = vld [vmem:[#allocation7 + $0x2b60] sm:$0xff]
    %v2481 = vld [vmem:[#allocation7 + $0x2b68] sm:$0xff]
    %v2482 = vld [vmem:[#allocation7 + $0x2b70] sm:$0xff]
    %v2483 = vld [vmem:[#allocation7 + $0x2b78] sm:$0xff]
    %v2484 = vld [vmem:[#allocation7 + $0x2b80] sm:$0xff]
    %v2485 = vld [vmem:[#allocation7 + $0x2b88] sm:$0xff]
    %v2486 = vld [vmem:[#allocation7 + $0x2b90] sm:$0xff]
    %v2487 = vld [vmem:[#allocation7 + $0x2b98] sm:$0xff]
    %v2488 = vld [vmem:[#allocation7 + $0x2ba0] sm:$0xff]
    %v2489 = vld [vmem:[#allocation7 + $0x2ba8] sm:$0xff]
    %v2490 = vld [vmem:[#allocation7 + $0x2bb0] sm:$0xff]
    %v2491 = vld [vmem:[#allocation7 + $0x2bb8] sm:$0xff]
    %v2492 = vld [vmem:[#allocation7 + $0x2bc0] sm:$0xff]
    %v2493 = vld [vmem:[#allocation7 + $0x2bc8] sm:$0xff]
    %v2494 = vld [vmem:[#allocation7 + $0x2bd0] sm:$0xff]
    %v2495 = vld [vmem:[#allocation7 + $0x2bd8] sm:$0xff]
    %v2496 = vld [vmem:[#allocation7 + $0x2be0] sm:$0xff]
    %v2497 = vld [vmem:[#allocation7 + $0x2be8] sm:$0xff]
    %v2498 = vld [vmem:[#allocation7 + $0x2bf0] sm:$0xff]
    %v2499 = vld [vmem:[#allocation7 + $0x2bf8] sm:$0xff]
    %v2500 = vld [vmem:[#allocation7 + $0x2c00] sm:$0xff]
    %v2501 = vld [vmem:[#allocation7 + $0x2c08] sm:$0xff]
    %v2502 = vld [vmem:[#allocation7 + $0x2c10] sm:$0xff]
    %v2503 = vld [vmem:[#allocation7 + $0x2c18] sm:$0xff]
    %v2504 = vld [vmem:[#allocation7 + $0x2c20] sm:$0xff]
    %v2505 = vld [vmem:[#allocation7 + $0x2c28] sm:$0xff]
    %v2506 = vld [vmem:[#allocation7 + $0x2c30] sm:$0xff]
    %v2507 = vld [vmem:[#allocation7 + $0x2c38] sm:$0xff]
    %v2508 = vld [vmem:[#allocation7 + $0x2c40] sm:$0xff]
    %v2509 = vld [vmem:[#allocation7 + $0x2c48] sm:$0xff]
    %v2510 = vld [vmem:[#allocation7 + $0x2c50] sm:$0xff]
    %v2511 = vld [vmem:[#allocation7 + $0x2c58] sm:$0xff]
    %v2512 = vld [vmem:[#allocation7 + $0x2c60] sm:$0xff]
    %v2513 = vld [vmem:[#allocation7 + $0x2c68] sm:$0xff]
    %v2514 = vld [vmem:[#allocation7 + $0x2c70] sm:$0xff]
    %v2515 = vld [vmem:[#allocation7 + $0x2c78] sm:$0xff]
    %v2516 = vld [vmem:[#allocation7 + $0x2c80] sm:$0xff]
    %v2517 = vld [vmem:[#allocation7 + $0x2c88] sm:$0xff]
    %v2518 = vld [vmem:[#allocation7 + $0x2c90] sm:$0xff]
    %v2519 = vld [vmem:[#allocation7 + $0x2c98] sm:$0xff]
    %v2520 = vld [vmem:[#allocation7 + $0x2ca0] sm:$0xff]
    %v2521 = vld [vmem:[#allocation7 + $0x2ca8] sm:$0xff]
    %v2522 = vld [vmem:[#allocation7 + $0x2cb0] sm:$0xff]
    %v2523 = vld [vmem:[#allocation7 + $0x2cb8] sm:$0xff]
    %v2524 = vld [vmem:[#allocation7 + $0x2cc0] sm:$0xff]
    %v2525 = vld [vmem:[#allocation7 + $0x2cc8] sm:$0xff]
    %v2526 = vld [vmem:[#allocation7 + $0x2cd0] sm:$0xff]
    %v2527 = vld [vmem:[#allocation7 + $0x2cd8] sm:$0xff]
    %v2528 = vld [vmem:[#allocation7 + $0x2ce0] sm:$0xff]
    %v2529 = vld [vmem:[#allocation7 + $0x2ce8] sm:$0xff]
    %v2530 = vld [vmem:[#allocation7 + $0x2cf0] sm:$0xff]
    %v2531 = vld [vmem:[#allocation7 + $0x2cf8] sm:$0xff]
    %v2532 = vld [vmem:[#allocation7 + $0x2d00] sm:$0xff]
    %v2533 = vld [vmem:[#allocation7 + $0x2d08] sm:$0xff]
    %v2534 = vld [vmem:[#allocation7 + $0x2d10] sm:$0xff]
    %v2535 = vld [vmem:[#allocation7 + $0x2d18] sm:$0xff]
    %v2536 = vld [vmem:[#allocation7 + $0x2d20] sm:$0xff]
    %v2537 = vld [vmem:[#allocation7 + $0x2d28] sm:$0xff]
    %v2538 = vld [vmem:[#allocation7 + $0x2d30] sm:$0xff]
    %v2539 = vld [vmem:[#allocation7 + $0x2d38] sm:$0xff]
    %v2540 = vld [vmem:[#allocation7 + $0x2d40] sm:$0xff]
    %v2541 = vld [vmem:[#allocation7 + $0x2d48] sm:$0xff]
    %v2542 = vld [vmem:[#allocation7 + $0x2d50] sm:$0xff]
    %v2543 = vld [vmem:[#allocation7 + $0x2d58] sm:$0xff]
    %v2544 = vld [vmem:[#allocation7 + $0x2d60] sm:$0xff]
    %v2545 = vld [vmem:[#allocation7 + $0x2d68] sm:$0xff]
    %v2546 = vld [vmem:[#allocation7 + $0x2d70] sm:$0xff]
    %v2547 = vld [vmem:[#allocation7 + $0x2d78] sm:$0xff]
    %v2548 = vld [vmem:[#allocation7 + $0x2d80] sm:$0xff]
    %v2549 = vld [vmem:[#allocation7 + $0x2d88] sm:$0xff]
    %v2550 = vld [vmem:[#allocation7 + $0x2d90] sm:$0xff]
    %v2551 = vld [vmem:[#allocation7 + $0x2d98] sm:$0xff]
    %v2552 = vld [vmem:[#allocation7 + $0x2da0] sm:$0xff]
    %v2553 = vld [vmem:[#allocation7 + $0x2da8] sm:$0xff]
    %v2554 = vld [vmem:[#allocation7 + $0x2db0] sm:$0xff]
    %v2555 = vld [vmem:[#allocation7 + $0x2db8] sm:$0xff]
    %v2556 = vld [vmem:[#allocation7 + $0x2dc0] sm:$0xff]
    %v2557 = vld [vmem:[#allocation7 + $0x2dc8] sm:$0xff]
    %v2558 = vld [vmem:[#allocation7 + $0x2dd0] sm:$0xff]
    %v2559 = vld [vmem:[#allocation7 + $0x2dd8] sm:$0xff]
    %v2560 = vld [vmem:[#allocation7 + $0x2de0] sm:$0xff]
    %v2561 = vld [vmem:[#allocation7 + $0x2de8] sm:$0xff]
    %v2562 = vld [vmem:[#allocation7 + $0x2df0] sm:$0xff]
    %v2563 = vld [vmem:[#allocation7 + $0x2df8] sm:$0xff]
    %v2564 = vld [vmem:[#allocation7 + $0x2e00] sm:$0xff]
    %v2565 = vld [vmem:[#allocation7 + $0x2e08] sm:$0xff]
    %v2566 = vld [vmem:[#allocation7 + $0x2e10] sm:$0xff]
    %v2567 = vld [vmem:[#allocation7 + $0x2e18] sm:$0xff]
    %v2568 = vld [vmem:[#allocation7 + $0x2e20] sm:$0xff]
    %v2569 = vld [vmem:[#allocation7 + $0x2e28] sm:$0xff]
    %v2570 = vld [vmem:[#allocation7 + $0x2e30] sm:$0xff]
    %v2571 = vld [vmem:[#allocation7 + $0x2e38] sm:$0xff]
    %v2572 = vld [vmem:[#allocation7 + $0x2e40] sm:$0xff]
    %v2573 = vld [vmem:[#allocation7 + $0x2e48] sm:$0xff]
    %v2574 = vld [vmem:[#allocation7 + $0x2e50] sm:$0xff]
    %v2575 = vld [vmem:[#allocation7 + $0x2e58] sm:$0xff]
    %v2576 = vld [vmem:[#allocation7 + $0x2e60] sm:$0xff]
    %v2577 = vld [vmem:[#allocation7 + $0x2e68] sm:$0xff]
    %v2578 = vld [vmem:[#allocation7 + $0x2e70] sm:$0xff]
    %v2579 = vld [vmem:[#allocation7 + $0x2e78] sm:$0xff]
    %v2580 = vld [vmem:[#allocation7 + $0x2e80] sm:$0xff]
    %v2581 = vld [vmem:[#allocation7 + $0x2e88] sm:$0xff]
    %v2582 = vld [vmem:[#allocation7 + $0x2e90] sm:$0xff]
    %v2583 = vld [vmem:[#allocation7 + $0x2e98] sm:$0xff]
    %v2584 = vld [vmem:[#allocation7 + $0x2ea0] sm:$0xff]
    %v2585 = vld [vmem:[#allocation7 + $0x2ea8] sm:$0xff]
    %v2586 = vld [vmem:[#allocation7 + $0x2eb0] sm:$0xff]
    %v2587 = vld [vmem:[#allocation7 + $0x2eb8] sm:$0xff]
    %v2588 = vld [vmem:[#allocation7 + $0x2ec0] sm:$0xff]
    %v2589 = vld [vmem:[#allocation7 + $0x2ec8] sm:$0xff]
    %v2590 = vld [vmem:[#allocation7 + $0x2ed0] sm:$0xff]
    %v2591 = vld [vmem:[#allocation7 + $0x2ed8] sm:$0xff]
    %v2592 = vld [vmem:[#allocation7 + $0x2ee0] sm:$0xff]
    %v2593 = vld [vmem:[#allocation7 + $0x2ee8] sm:$0xff]
    %v2594 = vld [vmem:[#allocation7 + $0x2ef0] sm:$0xff]
    %v2595 = vld [vmem:[#allocation7 + $0x2ef8] sm:$0xff]
    %v2596 = vld [vmem:[#allocation7 + $0x2f00] sm:$0xff]
    %v2597 = vld [vmem:[#allocation7 + $0x2f08] sm:$0xff]
    %v2598 = vld [vmem:[#allocation7 + $0x2f10] sm:$0xff]
    %v2599 = vld [vmem:[#allocation7 + $0x2f18] sm:$0xff]
    %v2600 = vld [vmem:[#allocation7 + $0x2f20] sm:$0xff]
    %v2601 = vld [vmem:[#allocation7 + $0x2f28] sm:$0xff]
    %v2602 = vld [vmem:[#allocation7 + $0x2f30] sm:$0xff]
    %v2603 = vld [vmem:[#allocation7 + $0x2f38] sm:$0xff]
    %v2604 = vld [vmem:[#allocation7 + $0x2f40] sm:$0xff]
    %v2605 = vld [vmem:[#allocation7 + $0x2f48] sm:$0xff]
    %v2606 = vld [vmem:[#allocation7 + $0x2f50] sm:$0xff]
    %v2607 = vld [vmem:[#allocation7 + $0x2f58] sm:$0xff]
    %v2608 = vld [vmem:[#allocation7 + $0x2f60] sm:$0xff]
    %v2609 = vld [vmem:[#allocation7 + $0x2f68] sm:$0xff]
    %v2610 = vld [vmem:[#allocation7 + $0x2f70] sm:$0xff]
    %v2611 = vld [vmem:[#allocation7 + $0x2f78] sm:$0xff]
    %v2612 = vld [vmem:[#allocation7 + $0x2f80] sm:$0xff]
    %v2613 = vld [vmem:[#allocation7 + $0x2f88] sm:$0xff]
    %v2614 = vld [vmem:[#allocation7 + $0x2f90] sm:$0xff]
    %v2615 = vld [vmem:[#allocation7 + $0x2f98] sm:$0xff]
    %v2616 = vld [vmem:[#allocation7 + $0x2fa0] sm:$0xff]
    %v2617 = vld [vmem:[#allocation7 + $0x2fa8] sm:$0xff]
    %v2618 = vld [vmem:[#allocation7 + $0x2fb0] sm:$0xff]
    %v2619 = vld [vmem:[#allocation7 + $0x2fb8] sm:$0xff]
    %v2620 = vld [vmem:[#allocation7 + $0x2fc0] sm:$0xff]
    %v2621 = vld [vmem:[#allocation7 + $0x2fc8] sm:$0xff]
    %v2622 = vld [vmem:[#allocation7 + $0x2fd0] sm:$0xff]
    %v2623 = vld [vmem:[#allocation7 + $0x2fd8] sm:$0xff]
    %v2624 = vld [vmem:[#allocation7 + $0x2fe0] sm:$0xff]
    %v2625 = vld [vmem:[#allocation7 + $0x2fe8] sm:$0xff]
    %v2626 = vld [vmem:[#allocation7 + $0x2ff0] sm:$0xff]
    %v2627 = vld [vmem:[#allocation7 + $0x2ff8] sm:$0xff]
    %v2628 = vld [vmem:[#allocation7 + $0x3000] sm:$0xff]
    %v2629 = vld [vmem:[#allocation7 + $0x3008] sm:$0xff]
    %v2630 = vld [vmem:[#allocation7 + $0x3010] sm:$0xff]
    %v2631 = vld [vmem:[#allocation7 + $0x3018] sm:$0xff]
    %v2632 = vld [vmem:[#allocation7 + $0x3020] sm:$0xff]
    %v2633 = vld [vmem:[#allocation7 + $0x3028] sm:$0xff]
    %v2634 = vld [vmem:[#allocation7 + $0x3030] sm:$0xff]
    %v2635 = vld [vmem:[#allocation7 + $0x3038] sm:$0xff]
    %v2636 = vld [vmem:[#allocation7 + $0x3040] sm:$0xff]
    %v2637 = vld [vmem:[#allocation7 + $0x3048] sm:$0xff]
    %v2638 = vld [vmem:[#allocation7 + $0x3050] sm:$0xff]
    %v2639 = vld [vmem:[#allocation7 + $0x3058] sm:$0xff]
    %v2640 = vld [vmem:[#allocation7 + $0x3060] sm:$0xff]
    %v2641 = vld [vmem:[#allocation7 + $0x3068] sm:$0xff]
    %v2642 = vld [vmem:[#allocation7 + $0x3070] sm:$0xff]
    %v2643 = vld [vmem:[#allocation7 + $0x3078] sm:$0xff]
    %v2644 = vld [vmem:[#allocation7 + $0x3080] sm:$0xff]
    %v2645 = vld [vmem:[#allocation7 + $0x3088] sm:$0xff]
    %v2646 = vld [vmem:[#allocation7 + $0x3090] sm:$0xff]
    %v2647 = vld [vmem:[#allocation7 + $0x3098] sm:$0xff]
    %v2648 = vld [vmem:[#allocation7 + $0x30a0] sm:$0xff]
    %v2649 = vld [vmem:[#allocation7 + $0x30a8] sm:$0xff]
    %v2650 = vld [vmem:[#allocation7 + $0x30b0] sm:$0xff]
    %v2651 = vld [vmem:[#allocation7 + $0x30b8] sm:$0xff]
    %v2652 = vld [vmem:[#allocation7 + $0x30c0] sm:$0xff]
    %v2653 = vld [vmem:[#allocation7 + $0x30c8] sm:$0xff]
    %v2654 = vld [vmem:[#allocation7 + $0x30d0] sm:$0xff]
    %v2655 = vld [vmem:[#allocation7 + $0x30d8] sm:$0xff]
    %v2656 = vld [vmem:[#allocation7 + $0x30e0] sm:$0xff]
    %v2657 = vld [vmem:[#allocation7 + $0x30e8] sm:$0xff]
    %v2658 = vld [vmem:[#allocation7 + $0x30f0] sm:$0xff]
    %v2659 = vld [vmem:[#allocation7 + $0x30f8] sm:$0xff]
    %v2660 = vld [vmem:[#allocation7 + $0x3100] sm:$0xff]
    %v2661 = vld [vmem:[#allocation7 + $0x3108] sm:$0xff]
    %v2662 = vld [vmem:[#allocation7 + $0x3110] sm:$0xff]
    %v2663 = vld [vmem:[#allocation7 + $0x3118] sm:$0xff]
    %v2664 = vld [vmem:[#allocation7 + $0x3120] sm:$0xff]
    %v2665 = vld [vmem:[#allocation7 + $0x3128] sm:$0xff]
    %v2666 = vld [vmem:[#allocation7 + $0x3130] sm:$0xff]
    %v2667 = vld [vmem:[#allocation7 + $0x3138] sm:$0xff]
    %v2668 = vld [vmem:[#allocation7 + $0x3140] sm:$0xff]
    %v2669 = vld [vmem:[#allocation7 + $0x3148] sm:$0xff]
    %v2670 = vld [vmem:[#allocation7 + $0x3150] sm:$0xff]
    %v2671 = vld [vmem:[#allocation7 + $0x3158] sm:$0xff]
    %v2672 = vld [vmem:[#allocation7 + $0x3160] sm:$0xff]
    %v2673 = vld [vmem:[#allocation7 + $0x3168] sm:$0xff]
    %v2674 = vld [vmem:[#allocation7 + $0x3170] sm:$0xff]
    %v2675 = vld [vmem:[#allocation7 + $0x3178] sm:$0xff]
    %v2676 = vld [vmem:[#allocation7 + $0x3180] sm:$0xff]
    %v2677 = vld [vmem:[#allocation7 + $0x3188] sm:$0xff]
    %v2678 = vld [vmem:[#allocation7 + $0x3190] sm:$0xff]
    %v2679 = vld [vmem:[#allocation7 + $0x3198] sm:$0xff]
    %v2680 = vld [vmem:[#allocation7 + $0x31a0] sm:$0xff]
    %v2681 = vld [vmem:[#allocation7 + $0x31a8] sm:$0xff]
    %v2682 = vld [vmem:[#allocation7 + $0x31b0] sm:$0xff]
    %v2683 = vld [vmem:[#allocation7 + $0x31b8] sm:$0xff]
    %v2684 = vld [vmem:[#allocation7 + $0x31c0] sm:$0xff]
    %v2685 = vld [vmem:[#allocation7 + $0x31c8] sm:$0xff]
    %v2686 = vld [vmem:[#allocation7 + $0x31d0] sm:$0xff]
    %v2687 = vld [vmem:[#allocation7 + $0x31d8] sm:$0xff]
    %v2688 = vld [vmem:[#allocation7 + $0x31e0] sm:$0xff]
    %v2689 = vld [vmem:[#allocation7 + $0x31e8] sm:$0xff]
    %v2690 = vld [vmem:[#allocation7 + $0x31f0] sm:$0xff]
    %v2691 = vld [vmem:[#allocation7 + $0x31f8] sm:$0xff]
    %v2692 = vld [vmem:[#allocation7 + $0x3200] sm:$0xff]
    %v2693 = vld [vmem:[#allocation7 + $0x3208] sm:$0xff]
    %v2694 = vld [vmem:[#allocation7 + $0x3210] sm:$0xff]
    %v2695 = vld [vmem:[#allocation7 + $0x3218] sm:$0xff]
    %v2696 = vld [vmem:[#allocation7 + $0x3220] sm:$0xff]
    %v2697 = vld [vmem:[#allocation7 + $0x3228] sm:$0xff]
    %v2698 = vld [vmem:[#allocation7 + $0x3230] sm:$0xff]
    %v2699 = vld [vmem:[#allocation7 + $0x3238] sm:$0xff]
    %v2700 = vld [vmem:[#allocation7 + $0x3240] sm:$0xff]
    %v2701 = vld [vmem:[#allocation7 + $0x3248] sm:$0xff]
    %v2702 = vld [vmem:[#allocation7 + $0x3250] sm:$0xff]
    %v2703 = vld [vmem:[#allocation7 + $0x3258] sm:$0xff]
    %v2704 = vld [vmem:[#allocation7 + $0x3260] sm:$0xff]
    %v2705 = vld [vmem:[#allocation7 + $0x3268] sm:$0xff]
    %v2706 = vld [vmem:[#allocation7 + $0x3270] sm:$0xff]
    %v2707 = vld [vmem:[#allocation7 + $0x3278] sm:$0xff]
    %v2708 = vld [vmem:[#allocation7 + $0x3280] sm:$0xff]
    %v2709 = vld [vmem:[#allocation7 + $0x3288] sm:$0xff]
    %v2710 = vld [vmem:[#allocation7 + $0x3290] sm:$0xff]
    %v2711 = vld [vmem:[#allocation7 + $0x3298] sm:$0xff]
    %v2712 = vld [vmem:[#allocation7 + $0x32a0] sm:$0xff]
    %v2713 = vld [vmem:[#allocation7 + $0x32a8] sm:$0xff]
    %v2714 = vld [vmem:[#allocation7 + $0x32b0] sm:$0xff]
    %v2715 = vld [vmem:[#allocation7 + $0x32b8] sm:$0xff]
    %v2716 = vld [vmem:[#allocation7 + $0x32c0] sm:$0xff]
    %v2717 = vld [vmem:[#allocation7 + $0x32c8] sm:$0xff]
    %v2718 = vld [vmem:[#allocation7 + $0x32d0] sm:$0xff]
    %v2719 = vld [vmem:[#allocation7 + $0x32d8] sm:$0xff]
    %v2720 = vld [vmem:[#allocation7 + $0x32e0] sm:$0xff]
    %v2721 = vld [vmem:[#allocation7 + $0x32e8] sm:$0xff]
    %v2722 = vld [vmem:[#allocation7 + $0x32f0] sm:$0xff]
    %v2723 = vld [vmem:[#allocation7 + $0x32f8] sm:$0xff]
    %v2724 = vld [vmem:[#allocation7 + $0x3300] sm:$0xff]
    %v2725 = vld [vmem:[#allocation7 + $0x3308] sm:$0xff]
    %v2726 = vld [vmem:[#allocation7 + $0x3310] sm:$0xff]
    %v2727 = vld [vmem:[#allocation7 + $0x3318] sm:$0xff]
    %v2728 = vld [vmem:[#allocation7 + $0x3320] sm:$0xff]
    %v2729 = vld [vmem:[#allocation7 + $0x3328] sm:$0xff]
    %v2730 = vld [vmem:[#allocation7 + $0x3330] sm:$0xff]
    %v2731 = vld [vmem:[#allocation7 + $0x3338] sm:$0xff]
    %v2732 = vld [vmem:[#allocation7 + $0x3340] sm:$0xff]
    %v2733 = vld [vmem:[#allocation7 + $0x3348] sm:$0xff]
    %v2734 = vld [vmem:[#allocation7 + $0x3350] sm:$0xff]
    %v2735 = vld [vmem:[#allocation7 + $0x3358] sm:$0xff]
    %v2736 = vld [vmem:[#allocation7 + $0x3360] sm:$0xff]
    %v2737 = vld [vmem:[#allocation7 + $0x3368] sm:$0xff]
    %v2738 = vld [vmem:[#allocation7 + $0x3370] sm:$0xff]
    %v2739 = vld [vmem:[#allocation7 + $0x3378] sm:$0xff]
    %v2740 = vld [vmem:[#allocation7 + $0x3380] sm:$0xff]
    %v2741 = vld [vmem:[#allocation7 + $0x3388] sm:$0xff]
    %v2742 = vld [vmem:[#allocation7 + $0x3390] sm:$0xff]
    %v2743 = vld [vmem:[#allocation7 + $0x3398] sm:$0xff]
    %v2744 = vld [vmem:[#allocation7 + $0x33a0] sm:$0xff]
    %v2745 = vld [vmem:[#allocation7 + $0x33a8] sm:$0xff]
    %v2746 = vld [vmem:[#allocation7 + $0x33b0] sm:$0xff]
    %v2747 = vld [vmem:[#allocation7 + $0x33b8] sm:$0xff]
    %v2748 = vld [vmem:[#allocation7 + $0x33c0] sm:$0xff]
    %v2749 = vld [vmem:[#allocation7 + $0x33c8] sm:$0xff]
    %v2750 = vld [vmem:[#allocation7 + $0x33d0] sm:$0xff]
    %v2751 = vld [vmem:[#allocation7 + $0x33d8] sm:$0xff]
    %v2752 = vld [vmem:[#allocation7 + $0x33e0] sm:$0xff]
    %v2753 = vld [vmem:[#allocation7 + $0x33e8] sm:$0xff]
    %v2754 = vld [vmem:[#allocation7 + $0x33f0] sm:$0xff]
    %v2755 = vld [vmem:[#allocation7 + $0x33f8] sm:$0xff]
    %v2756 = vld [vmem:[#allocation7 + $0x3400] sm:$0xff]
    %v2757 = vld [vmem:[#allocation7 + $0x3408] sm:$0xff]
    %v2758 = vld [vmem:[#allocation7 + $0x3410] sm:$0xff]
    %v2759 = vld [vmem:[#allocation7 + $0x3418] sm:$0xff]
    %v2760 = vld [vmem:[#allocation7 + $0x3420] sm:$0xff]
    %v2761 = vld [vmem:[#allocation7 + $0x3428] sm:$0xff]
    %v2762 = vld [vmem:[#allocation7 + $0x3430] sm:$0xff]
    %v2763 = vld [vmem:[#allocation7 + $0x3438] sm:$0xff]
    %v2764 = vld [vmem:[#allocation7 + $0x3440] sm:$0xff]
    %v2765 = vld [vmem:[#allocation7 + $0x3448] sm:$0xff]
    %v2766 = vld [vmem:[#allocation7 + $0x3450] sm:$0xff]
    %v2767 = vld [vmem:[#allocation7 + $0x3458] sm:$0xff]
    %v2768 = vld [vmem:[#allocation7 + $0x3460] sm:$0xff]
    %v2769 = vld [vmem:[#allocation7 + $0x3468] sm:$0xff]
    %v2770 = vld [vmem:[#allocation7 + $0x3470] sm:$0xff]
    %v2771 = vld [vmem:[#allocation7 + $0x3478] sm:$0xff]
    %v2772 = vld [vmem:[#allocation7 + $0x3480] sm:$0xff]
    %v2773 = vld [vmem:[#allocation7 + $0x3488] sm:$0xff]
    %v2774 = vld [vmem:[#allocation7 + $0x3490] sm:$0xff]
    %v2775 = vld [vmem:[#allocation7 + $0x3498] sm:$0xff]
    %v2776 = vld [vmem:[#allocation7 + $0x34a0] sm:$0xff]
    %v2777 = vld [vmem:[#allocation7 + $0x34a8] sm:$0xff]
    %v2778 = vld [vmem:[#allocation7 + $0x34b0] sm:$0xff]
    %v2779 = vld [vmem:[#allocation7 + $0x34b8] sm:$0xff]
    %v2780 = vld [vmem:[#allocation7 + $0x34c0] sm:$0xff]
    %v2781 = vld [vmem:[#allocation7 + $0x34c8] sm:$0xff]
    %v2782 = vld [vmem:[#allocation7 + $0x34d0] sm:$0xff]
    %v2783 = vld [vmem:[#allocation7 + $0x34d8] sm:$0xff]
    %v2784 = vld [vmem:[#allocation7 + $0x34e0] sm:$0xff]
    %v2785 = vld [vmem:[#allocation7 + $0x34e8] sm:$0xff]
    %v2786 = vld [vmem:[#allocation7 + $0x34f0] sm:$0xff]
    %v2787 = vld [vmem:[#allocation7 + $0x34f8] sm:$0xff]
    %v2788 = vld [vmem:[#allocation7 + $0x3500] sm:$0xff]
    %v2789 = vld [vmem:[#allocation7 + $0x3508] sm:$0xff]
    %v2790 = vld [vmem:[#allocation7 + $0x3510] sm:$0xff]
    %v2791 = vld [vmem:[#allocation7 + $0x3518] sm:$0xff]
    %v2792 = vld [vmem:[#allocation7 + $0x3520] sm:$0xff]
    %v2793 = vld [vmem:[#allocation7 + $0x3528] sm:$0xff]
    %v2794 = vld [vmem:[#allocation7 + $0x3530] sm:$0xff]
    %v2795 = vld [vmem:[#allocation7 + $0x3538] sm:$0xff]
    %v2796 = vld [vmem:[#allocation7 + $0x3540] sm:$0xff]
    %v2797 = vld [vmem:[#allocation7 + $0x3548] sm:$0xff]
    %v2798 = vld [vmem:[#allocation7 + $0x3550] sm:$0xff]
    %v2799 = vld [vmem:[#allocation7 + $0x3558] sm:$0xff]
    %v2800 = vld [vmem:[#allocation7 + $0x3560] sm:$0xff]
    %v2801 = vld [vmem:[#allocation7 + $0x3568] sm:$0xff]
    %v2802 = vld [vmem:[#allocation7 + $0x3570] sm:$0xff]
    %v2803 = vld [vmem:[#allocation7 + $0x3578] sm:$0xff]
    %v2804 = vld [vmem:[#allocation7 + $0x3580] sm:$0xff]
    %v2805 = vld [vmem:[#allocation7 + $0x3588] sm:$0xff]
    %v2806 = vld [vmem:[#allocation7 + $0x3590] sm:$0xff]
    %v2807 = vld [vmem:[#allocation7 + $0x3598] sm:$0xff]
    %v2808 = vld [vmem:[#allocation7 + $0x35a0] sm:$0xff]
    %v2809 = vld [vmem:[#allocation7 + $0x35a8] sm:$0xff]
    %v2810 = vld [vmem:[#allocation7 + $0x35b0] sm:$0xff]
    %v2811 = vld [vmem:[#allocation7 + $0x35b8] sm:$0xff]
    %v2812 = vld [vmem:[#allocation7 + $0x35c0] sm:$0xff]
    %v2813 = vld [vmem:[#allocation7 + $0x35c8] sm:$0xff]
    %v2814 = vld [vmem:[#allocation7 + $0x35d0] sm:$0xff]
    %v2815 = vld [vmem:[#allocation7 + $0x35d8] sm:$0xff]
    %v2816 = vld [vmem:[#allocation7 + $0x35e0] sm:$0xff]
    %v2817 = vld [vmem:[#allocation7 + $0x35e8] sm:$0xff]
    %v2818 = vld [vmem:[#allocation7 + $0x35f0] sm:$0xff]
    %v2819 = vld [vmem:[#allocation7 + $0x35f8] sm:$0xff]
    %v2820 = vld [vmem:[#allocation7 + $0x3600] sm:$0xff]
    %v2821 = vld [vmem:[#allocation7 + $0x3608] sm:$0xff]
    %v2822 = vld [vmem:[#allocation7 + $0x3610] sm:$0xff]
    %v2823 = vld [vmem:[#allocation7 + $0x3618] sm:$0xff]
    %v2824 = vld [vmem:[#allocation7 + $0x3620] sm:$0xff]
    %v2825 = vld [vmem:[#allocation7 + $0x3628] sm:$0xff]
    %v2826 = vld [vmem:[#allocation7 + $0x3630] sm:$0xff]
    %v2827 = vld [vmem:[#allocation7 + $0x3638] sm:$0xff]
    %v2828 = vld [vmem:[#allocation7 + $0x3640] sm:$0xff]
    %v2829 = vld [vmem:[#allocation7 + $0x3648] sm:$0xff]
    %v2830 = vld [vmem:[#allocation7 + $0x3650] sm:$0xff]
    %v2831 = vld [vmem:[#allocation7 + $0x3658] sm:$0xff]
    %v2832 = vld [vmem:[#allocation7 + $0x3660] sm:$0xff]
    %v2833 = vld [vmem:[#allocation7 + $0x3668] sm:$0xff]
    %v2834 = vld [vmem:[#allocation7 + $0x3670] sm:$0xff]
    %v2835 = vld [vmem:[#allocation7 + $0x3678] sm:$0xff]
    %v2836 = vld [vmem:[#allocation7 + $0x3680] sm:$0xff]
    %v2837 = vld [vmem:[#allocation7 + $0x3688] sm:$0xff]
    %v2838 = vld [vmem:[#allocation7 + $0x3690] sm:$0xff]
    %v2839 = vld [vmem:[#allocation7 + $0x3698] sm:$0xff]
    %v2840 = vld [vmem:[#allocation7 + $0x36a0] sm:$0xff]
    %v2841 = vld [vmem:[#allocation7 + $0x36a8] sm:$0xff]
    %v2842 = vld [vmem:[#allocation7 + $0x36b0] sm:$0xff]
    %v2843 = vld [vmem:[#allocation7 + $0x36b8] sm:$0xff]
    %v2844 = vld [vmem:[#allocation7 + $0x36c0] sm:$0xff]
    %v2845 = vld [vmem:[#allocation7 + $0x36c8] sm:$0xff]
    %v2846 = vld [vmem:[#allocation7 + $0x36d0] sm:$0xff]
    %v2847 = vld [vmem:[#allocation7 + $0x36d8] sm:$0xff]
    %v2848 = vld [vmem:[#allocation7 + $0x36e0] sm:$0xff]
    %v2849 = vld [vmem:[#allocation7 + $0x36e8] sm:$0xff]
    %v2850 = vld [vmem:[#allocation7 + $0x36f0] sm:$0xff]
    %v2851 = vld [vmem:[#allocation7 + $0x36f8] sm:$0xff]
    %v2852 = vld [vmem:[#allocation7 + $0x3700] sm:$0xff]
    %v2853 = vld [vmem:[#allocation7 + $0x3708] sm:$0xff]
    %v2854 = vld [vmem:[#allocation7 + $0x3710] sm:$0xff]
    %v2855 = vld [vmem:[#allocation7 + $0x3718] sm:$0xff]
    %v2856 = vld [vmem:[#allocation7 + $0x3720] sm:$0xff]
    %v2857 = vld [vmem:[#allocation7 + $0x3728] sm:$0xff]
    %v2858 = vld [vmem:[#allocation7 + $0x3730] sm:$0xff]
    %v2859 = vld [vmem:[#allocation7 + $0x3738] sm:$0xff]
    %v2860 = vld [vmem:[#allocation7 + $0x3740] sm:$0xff]
    %v2861 = vld [vmem:[#allocation7 + $0x3748] sm:$0xff]
    %v2862 = vld [vmem:[#allocation7 + $0x3750] sm:$0xff]
    %v2863 = vld [vmem:[#allocation7 + $0x3758] sm:$0xff]
    %v2864 = vld [vmem:[#allocation7 + $0x3760] sm:$0xff]
    %v2865 = vld [vmem:[#allocation7 + $0x3768] sm:$0xff]
    %v2866 = vld [vmem:[#allocation7 + $0x3770] sm:$0xff]
    %v2867 = vld [vmem:[#allocation7 + $0x3778] sm:$0xff]
    %v2868 = vld [vmem:[#allocation7 + $0x3780] sm:$0xff]
    %v2869 = vld [vmem:[#allocation7 + $0x3788] sm:$0xff]
    %v2870 = vld [vmem:[#allocation7 + $0x3790] sm:$0xff]
    %v2871 = vld [vmem:[#allocation7 + $0x3798] sm:$0xff]
    %v2872 = vld [vmem:[#allocation7 + $0x37a0] sm:$0xff]
    %v2873 = vld [vmem:[#allocation7 + $0x37a8] sm:$0xff]
    %v2874 = vld [vmem:[#allocation7 + $0x37b0] sm:$0xff]
    %v2875 = vld [vmem:[#allocation7 + $0x37b8] sm:$0xff]
    %v2876 = vld [vmem:[#allocation7 + $0x37c0] sm:$0xff]
    %v2877 = vld [vmem:[#allocation7 + $0x37c8] sm:$0xff]
    %v2878 = vld [vmem:[#allocation7 + $0x37d0] sm:$0xff]
    %v2879 = vld [vmem:[#allocation7 + $0x37d8] sm:$0xff]
    %v2880 = vld [vmem:[#allocation7 + $0x37e0] sm:$0xff]
    %v2881 = vld [vmem:[#allocation7 + $0x37e8] sm:$0xff]
    %v2882 = vld [vmem:[#allocation7 + $0x37f0] sm:$0xff]
    %v2883 = vld [vmem:[#allocation7 + $0x37f8] sm:$0xff]
    %v2884 = vld [vmem:[#allocation7 + $0x3800] sm:$0xff]
    %v2885 = vld [vmem:[#allocation7 + $0x3808] sm:$0xff]
    %v2886 = vld [vmem:[#allocation7 + $0x3810] sm:$0xff]
    %v2887 = vld [vmem:[#allocation7 + $0x3818] sm:$0xff]
    %v2888 = vld [vmem:[#allocation7 + $0x3820] sm:$0xff]
    %v2889 = vld [vmem:[#allocation7 + $0x3828] sm:$0xff]
    %v2890 = vld [vmem:[#allocation7 + $0x3830] sm:$0xff]
    %v2891 = vld [vmem:[#allocation7 + $0x3838] sm:$0xff]
    %v2892 = vld [vmem:[#allocation7 + $0x3840] sm:$0xff]
    %v2893 = vld [vmem:[#allocation7 + $0x3848] sm:$0xff]
    %v2894 = vld [vmem:[#allocation7 + $0x3850] sm:$0xff]
    %v2895 = vld [vmem:[#allocation7 + $0x3858] sm:$0xff]
    %v2896 = vld [vmem:[#allocation7 + $0x3860] sm:$0xff]
    %v2897 = vld [vmem:[#allocation7 + $0x3868] sm:$0xff]
    %v2898 = vld [vmem:[#allocation7 + $0x3870] sm:$0xff]
    %v2899 = vld [vmem:[#allocation7 + $0x3878] sm:$0xff]
    %v2900 = vld [vmem:[#allocation7 + $0x3880] sm:$0xff]
    %v2901 = vld [vmem:[#allocation7 + $0x3888] sm:$0xff]
    %v2902 = vld [vmem:[#allocation7 + $0x3890] sm:$0xff]
    %v2903 = vld [vmem:[#allocation7 + $0x3898] sm:$0xff]
    %v2904 = vld [vmem:[#allocation7 + $0x38a0] sm:$0xff]
    %v2905 = vld [vmem:[#allocation7 + $0x38a8] sm:$0xff]
    %v2906 = vld [vmem:[#allocation7 + $0x38b0] sm:$0xff]
    %v2907 = vld [vmem:[#allocation7 + $0x38b8] sm:$0xff]
    %v2908 = vld [vmem:[#allocation7 + $0x38c0] sm:$0xff]
    %v2909 = vld [vmem:[#allocation7 + $0x38c8] sm:$0xff]
    %v2910 = vld [vmem:[#allocation7 + $0x38d0] sm:$0xff]
    %v2911 = vld [vmem:[#allocation7 + $0x38d8] sm:$0xff]
    %v2912 = vld [vmem:[#allocation7 + $0x38e0] sm:$0xff]
    %v2913 = vld [vmem:[#allocation7 + $0x38e8] sm:$0xff]
    %v2914 = vld [vmem:[#allocation7 + $0x38f0] sm:$0xff]
    %v2915 = vld [vmem:[#allocation7 + $0x38f8] sm:$0xff]
    %v2916 = vld [vmem:[#allocation7 + $0x3900] sm:$0xff]
    %v2917 = vld [vmem:[#allocation7 + $0x3908] sm:$0xff]
    %v2918 = vld [vmem:[#allocation7 + $0x3910] sm:$0xff]
    %v2919 = vld [vmem:[#allocation7 + $0x3918] sm:$0xff]
    %v2920 = vld [vmem:[#allocation7 + $0x3920] sm:$0xff]
    %v2921 = vld [vmem:[#allocation7 + $0x3928] sm:$0xff]
    %v2922 = vld [vmem:[#allocation7 + $0x3930] sm:$0xff]
    %v2923 = vld [vmem:[#allocation7 + $0x3938] sm:$0xff]
    %v2924 = vld [vmem:[#allocation7 + $0x3940] sm:$0xff]
    %v2925 = vld [vmem:[#allocation7 + $0x3948] sm:$0xff]
    %v2926 = vld [vmem:[#allocation7 + $0x3950] sm:$0xff]
    %v2927 = vld [vmem:[#allocation7 + $0x3958] sm:$0xff]
    %v2928 = vld [vmem:[#allocation7 + $0x3960] sm:$0xff]
    %v2929 = vld [vmem:[#allocation7 + $0x3968] sm:$0xff]
    %v2930 = vld [vmem:[#allocation7 + $0x3970] sm:$0xff]
    %v2931 = vld [vmem:[#allocation7 + $0x3978] sm:$0xff]
    %v2932 = vld [vmem:[#allocation7 + $0x3980] sm:$0xff]
    %v2933 = vld [vmem:[#allocation7 + $0x3988] sm:$0xff]
    %v2934 = vld [vmem:[#allocation7 + $0x3990] sm:$0xff]
    %v2935 = vld [vmem:[#allocation7 + $0x3998] sm:$0xff]
    %v2936 = vld [vmem:[#allocation7 + $0x39a0] sm:$0xff]
    %v2937 = vld [vmem:[#allocation7 + $0x39a8] sm:$0xff]
    %v2938 = vld [vmem:[#allocation7 + $0x39b0] sm:$0xff]
    %v2939 = vld [vmem:[#allocation7 + $0x39b8] sm:$0xff]
    %v2940 = vld [vmem:[#allocation7 + $0x39c0] sm:$0xff]
    %v2941 = vld [vmem:[#allocation7 + $0x39c8] sm:$0xff]
    %v2942 = vld [vmem:[#allocation7 + $0x39d0] sm:$0xff]
    %v2943 = vld [vmem:[#allocation7 + $0x39d8] sm:$0xff]
    %v2944 = vld [vmem:[#allocation7 + $0x39e0] sm:$0xff]
    %v2945 = vld [vmem:[#allocation7 + $0x39e8] sm:$0xff]
    %v2946 = vld [vmem:[#allocation7 + $0x39f0] sm:$0xff]
    %v2947 = vld [vmem:[#allocation7 + $0x39f8] sm:$0xff]
    %v2948 = vld [vmem:[#allocation7 + $0x3a00] sm:$0xff]
    %v2949 = vld [vmem:[#allocation7 + $0x3a08] sm:$0xff]
    %v2950 = vld [vmem:[#allocation7 + $0x3a10] sm:$0xff]
    %v2951 = vld [vmem:[#allocation7 + $0x3a18] sm:$0xff]
    %v2952 = vld [vmem:[#allocation7 + $0x3a20] sm:$0xff]
    %v2953 = vld [vmem:[#allocation7 + $0x3a28] sm:$0xff]
    %v2954 = vld [vmem:[#allocation7 + $0x3a30] sm:$0xff]
    %v2955 = vld [vmem:[#allocation7 + $0x3a38] sm:$0xff]
    %v2956 = vld [vmem:[#allocation7 + $0x3a40] sm:$0xff]
    %v2957 = vld [vmem:[#allocation7 + $0x3a48] sm:$0xff]
    %v2958 = vld [vmem:[#allocation7 + $0x3a50] sm:$0xff]
    %v2959 = vld [vmem:[#allocation7 + $0x3a58] sm:$0xff]
    %v2960 = vld [vmem:[#allocation7 + $0x3a60] sm:$0xff]
    %v2961 = vld [vmem:[#allocation7 + $0x3a68] sm:$0xff]
    %v2962 = vld [vmem:[#allocation7 + $0x3a70] sm:$0xff]
    %v2963 = vld [vmem:[#allocation7 + $0x3a78] sm:$0xff]
    %v2964 = vld [vmem:[#allocation7 + $0x3a80] sm:$0xff]
    %v2965 = vld [vmem:[#allocation7 + $0x3a88] sm:$0xff]
    %v2966 = vld [vmem:[#allocation7 + $0x3a90] sm:$0xff]
    %v2967 = vld [vmem:[#allocation7 + $0x3a98] sm:$0xff]
    %v2968 = vld [vmem:[#allocation7 + $0x3aa0] sm:$0xff]
    %v2969 = vld [vmem:[#allocation7 + $0x3aa8] sm:$0xff]
    %v2970 = vld [vmem:[#allocation7 + $0x3ab0] sm:$0xff]
    %v2971 = vld [vmem:[#allocation7 + $0x3ab8] sm:$0xff]
    %v2972 = vld [vmem:[#allocation7 + $0x3ac0] sm:$0xff]
    %v2973 = vld [vmem:[#allocation7 + $0x3ac8] sm:$0xff]
    %v2974 = vld [vmem:[#allocation7 + $0x3ad0] sm:$0xff]
    %v2975 = vld [vmem:[#allocation7 + $0x3ad8] sm:$0xff]
    %v2976 = vld [vmem:[#allocation7 + $0x3ae0] sm:$0xff]
    %v2977 = vld [vmem:[#allocation7 + $0x3ae8] sm:$0xff]
    %v2978 = vld [vmem:[#allocation7 + $0x3af0] sm:$0xff]
    %v2979 = vld [vmem:[#allocation7 + $0x3af8] sm:$0xff]
    %v2980 = vld [vmem:[#allocation7 + $0x3b00] sm:$0xff]
    %v2981 = vld [vmem:[#allocation7 + $0x3b08] sm:$0xff]
    %v2982 = vld [vmem:[#allocation7 + $0x3b10] sm:$0xff]
    %v2983 = vld [vmem:[#allocation7 + $0x3b18] sm:$0xff]
    %v2984 = vld [vmem:[#allocation7 + $0x3b20] sm:$0xff]
    %v2985 = vld [vmem:[#allocation7 + $0x3b28] sm:$0xff]
    %v2986 = vld [vmem:[#allocation7 + $0x3b30] sm:$0xff]
    %v2987 = vld [vmem:[#allocation7 + $0x3b38] sm:$0xff]
    %v2988 = vld [vmem:[#allocation7 + $0x3b40] sm:$0xff]
    %v2989 = vld [vmem:[#allocation7 + $0x3b48] sm:$0xff]
    %v2990 = vld [vmem:[#allocation7 + $0x3b50] sm:$0xff]
    %v2991 = vld [vmem:[#allocation7 + $0x3b58] sm:$0xff]
    %v2992 = vld [vmem:[#allocation7 + $0x3b60] sm:$0xff]
    %v2993 = vld [vmem:[#allocation7 + $0x3b68] sm:$0xff]
    %v2994 = vld [vmem:[#allocation7 + $0x3b70] sm:$0xff]
    %v2995 = vld [vmem:[#allocation7 + $0x3b78] sm:$0xff]
    %v2996 = vld [vmem:[#allocation7 + $0x3b80] sm:$0xff]
    %v2997 = vld [vmem:[#allocation7 + $0x3b88] sm:$0xff]
    %v2998 = vld [vmem:[#allocation7 + $0x3b90] sm:$0xff]
    %v2999 = vld [vmem:[#allocation7 + $0x3b98] sm:$0xff]
    %v3000 = vld [vmem:[#allocation7 + $0x3ba0] sm:$0xff]
    %v3001 = vld [vmem:[#allocation7 + $0x3ba8] sm:$0xff]
    %v3002 = vld [vmem:[#allocation7 + $0x3bb0] sm:$0xff]
    %v3003 = vld [vmem:[#allocation7 + $0x3bb8] sm:$0xff]
    %v3004 = vld [vmem:[#allocation7 + $0x3bc0] sm:$0xff]
    %v3005 = vld [vmem:[#allocation7 + $0x3bc8] sm:$0xff]
    %v3006 = vld [vmem:[#allocation7 + $0x3bd0] sm:$0xff]
    %v3007 = vld [vmem:[#allocation7 + $0x3bd8] sm:$0xff]
    %v3008 = vld [vmem:[#allocation7 + $0x3be0] sm:$0xff]
    %v3009 = vld [vmem:[#allocation7 + $0x3be8] sm:$0xff]
    %v3010 = vld [vmem:[#allocation7 + $0x3bf0] sm:$0xff]
    %v3011 = vld [vmem:[#allocation7 + $0x3bf8] sm:$0xff]
    %v3012 = vld [vmem:[#allocation7 + $0x3c00] sm:$0xff]
    %v3013 = vld [vmem:[#allocation7 + $0x3c08] sm:$0xff]
    %v3014 = vld [vmem:[#allocation7 + $0x3c10] sm:$0xff]
    %v3015 = vld [vmem:[#allocation7 + $0x3c18] sm:$0xff]
    %v3016 = vld [vmem:[#allocation7 + $0x3c20] sm:$0xff]
    %v3017 = vld [vmem:[#allocation7 + $0x3c28] sm:$0xff]
    %v3018 = vld [vmem:[#allocation7 + $0x3c30] sm:$0xff]
    %v3019 = vld [vmem:[#allocation7 + $0x3c38] sm:$0xff]
    %v3020 = vld [vmem:[#allocation7 + $0x3c40] sm:$0xff]
    %v3021 = vld [vmem:[#allocation7 + $0x3c48] sm:$0xff]
    %v3022 = vld [vmem:[#allocation7 + $0x3c50] sm:$0xff]
    %v3023 = vld [vmem:[#allocation7 + $0x3c58] sm:$0xff]
    %v3024 = vld [vmem:[#allocation7 + $0x3c60] sm:$0xff]
    %v3025 = vld [vmem:[#allocation7 + $0x3c68] sm:$0xff]
    %v3026 = vld [vmem:[#allocation7 + $0x3c70] sm:$0xff]
    %v3027 = vld [vmem:[#allocation7 + $0x3c78] sm:$0xff]
    %v3028 = vld [vmem:[#allocation7 + $0x3c80] sm:$0xff]
    %v3029 = vld [vmem:[#allocation7 + $0x3c88] sm:$0xff]
    %v3030 = vld [vmem:[#allocation7 + $0x3c90] sm:$0xff]
    %v3031 = vld [vmem:[#allocation7 + $0x3c98] sm:$0xff]
    %v3032 = vld [vmem:[#allocation7 + $0x3ca0] sm:$0xff]
    %v3033 = vld [vmem:[#allocation7 + $0x3ca8] sm:$0xff]
    %v3034 = vld [vmem:[#allocation7 + $0x3cb0] sm:$0xff]
    %v3035 = vld [vmem:[#allocation7 + $0x3cb8] sm:$0xff]
    %v3036 = vld [vmem:[#allocation7 + $0x3cc0] sm:$0xff]
    %v3037 = vld [vmem:[#allocation7 + $0x3cc8] sm:$0xff]
    %v3038 = vld [vmem:[#allocation7 + $0x3cd0] sm:$0xff]
    %v3039 = vld [vmem:[#allocation7 + $0x3cd8] sm:$0xff]
    %v3040 = vld [vmem:[#allocation7 + $0x3ce0] sm:$0xff]
    %v3041 = vld [vmem:[#allocation7 + $0x3ce8] sm:$0xff]
    %v3042 = vld [vmem:[#allocation7 + $0x3cf0] sm:$0xff]
    %v3043 = vld [vmem:[#allocation7 + $0x3cf8] sm:$0xff]
    %v3044 = vld [vmem:[#allocation7 + $0x3d00] sm:$0xff]
    %v3045 = vld [vmem:[#allocation7 + $0x3d08] sm:$0xff]
    %v3046 = vld [vmem:[#allocation7 + $0x3d10] sm:$0xff]
    %v3047 = vld [vmem:[#allocation7 + $0x3d18] sm:$0xff]
    %v3048 = vld [vmem:[#allocation7 + $0x3d20] sm:$0xff]
    %v3049 = vld [vmem:[#allocation7 + $0x3d28] sm:$0xff]
    %v3050 = vld [vmem:[#allocation7 + $0x3d30] sm:$0xff]
    %v3051 = vld [vmem:[#allocation7 + $0x3d38] sm:$0xff]
    %v3052 = vld [vmem:[#allocation7 + $0x3d40] sm:$0xff]
    %v3053 = vld [vmem:[#allocation7 + $0x3d48] sm:$0xff]
    %v3054 = vld [vmem:[#allocation7 + $0x3d50] sm:$0xff]
    %v3055 = vld [vmem:[#allocation7 + $0x3d58] sm:$0xff]
    %v3056 = vld [vmem:[#allocation7 + $0x3d60] sm:$0xff]
    %v3057 = vld [vmem:[#allocation7 + $0x3d68] sm:$0xff]
    %v3058 = vld [vmem:[#allocation7 + $0x3d70] sm:$0xff]
    %v3059 = vld [vmem:[#allocation7 + $0x3d78] sm:$0xff]
    %v3060 = vld [vmem:[#allocation7 + $0x3d80] sm:$0xff]
    %v3061 = vld [vmem:[#allocation7 + $0x3d88] sm:$0xff]
    %v3062 = vld [vmem:[#allocation7 + $0x3d90] sm:$0xff]
    %v3063 = vld [vmem:[#allocation7 + $0x3d98] sm:$0xff]
    %v3064 = vld [vmem:[#allocation7 + $0x3da0] sm:$0xff]
    %v3065 = vld [vmem:[#allocation7 + $0x3da8] sm:$0xff]
    %v3066 = vld [vmem:[#allocation7 + $0x3db0] sm:$0xff]
    %v3067 = vld [vmem:[#allocation7 + $0x3db8] sm:$0xff]
    %v3068 = vld [vmem:[#allocation7 + $0x3dc0] sm:$0xff]
    %v3069 = vld [vmem:[#allocation7 + $0x3dc8] sm:$0xff]
    %v3070 = vld [vmem:[#allocation7 + $0x3dd0] sm:$0xff]
    %v3071 = vld [vmem:[#allocation7 + $0x3dd8] sm:$0xff]
    %v3072 = vld [vmem:[#allocation7 + $0x3de0] sm:$0xff]
    %v3073 = vld [vmem:[#allocation7 + $0x3de8] sm:$0xff]
    %v3074 = vld [vmem:[#allocation7 + $0x3df0] sm:$0xff]
    %v3075 = vld [vmem:[#allocation7 + $0x3df8] sm:$0xff]
    %v3076 = vld [vmem:[#allocation7 + $0x3e00] sm:$0xff]
    %v3077 = vld [vmem:[#allocation7 + $0x3e08] sm:$0xff]
    %v3078 = vld [vmem:[#allocation7 + $0x3e10] sm:$0xff]
    %v3079 = vld [vmem:[#allocation7 + $0x3e18] sm:$0xff]
    %v3080 = vld [vmem:[#allocation7 + $0x3e20] sm:$0xff]
    %v3081 = vld [vmem:[#allocation7 + $0x3e28] sm:$0xff]
    %v3082 = vld [vmem:[#allocation7 + $0x3e30] sm:$0xff]
    %v3083 = vld [vmem:[#allocation7 + $0x3e38] sm:$0xff]
    %v3084 = vld [vmem:[#allocation7 + $0x3e40] sm:$0xff]
    %v3085 = vld [vmem:[#allocation7 + $0x3e48] sm:$0xff]
    %v3086 = vld [vmem:[#allocation7 + $0x3e50] sm:$0xff]
    %v3087 = vld [vmem:[#allocation7 + $0x3e58] sm:$0xff]
    %v3088 = vld [vmem:[#allocation7 + $0x3e60] sm:$0xff]
    %v3089 = vld [vmem:[#allocation7 + $0x3e68] sm:$0xff]
    %v3090 = vld [vmem:[#allocation7 + $0x3e70] sm:$0xff]
    %v3091 = vld [vmem:[#allocation7 + $0x3e78] sm:$0xff]
    %v3092 = vld [vmem:[#allocation7 + $0x3e80] sm:$0xff]
    %v3093 = vld [vmem:[#allocation7 + $0x3e88] sm:$0xff]
    %v3094 = vld [vmem:[#allocation7 + $0x3e90] sm:$0xff]
    %v3095 = vld [vmem:[#allocation7 + $0x3e98] sm:$0xff]
    %v3096 = vld [vmem:[#allocation7 + $0x3ea0] sm:$0xff]
    %v3097 = vld [vmem:[#allocation7 + $0x3ea8] sm:$0xff]
    %v3098 = vld [vmem:[#allocation7 + $0x3eb0] sm:$0xff]
    %v3099 = vld [vmem:[#allocation7 + $0x3eb8] sm:$0xff]
    %v3100 = vld [vmem:[#allocation7 + $0x3ec0] sm:$0xff]
    %v3101 = vld [vmem:[#allocation7 + $0x3ec8] sm:$0xff]
    %v3102 = vld [vmem:[#allocation7 + $0x3ed0] sm:$0xff]
    %v3103 = vld [vmem:[#allocation7 + $0x3ed8] sm:$0xff]
    %v3104 = vld [vmem:[#allocation7 + $0x3ee0] sm:$0xff]
    %v3105 = vld [vmem:[#allocation7 + $0x3ee8] sm:$0xff]
    %v3106 = vld [vmem:[#allocation7 + $0x3ef0] sm:$0xff]
    %v3107 = vld [vmem:[#allocation7 + $0x3ef8] sm:$0xff]
    %v3108 = vld [vmem:[#allocation7 + $0x3f00] sm:$0xff]
    %v3109 = vld [vmem:[#allocation7 + $0x3f08] sm:$0xff]
    %v3110 = vld [vmem:[#allocation7 + $0x3f10] sm:$0xff]
    %v3111 = vld [vmem:[#allocation7 + $0x3f18] sm:$0xff]
    %v3112 = vld [vmem:[#allocation7 + $0x3f20] sm:$0xff]
    %v3113 = vld [vmem:[#allocation7 + $0x3f28] sm:$0xff]
    %v3114 = vld [vmem:[#allocation7 + $0x3f30] sm:$0xff]
    %v3115 = vld [vmem:[#allocation7 + $0x3f38] sm:$0xff]
    %v3116 = vld [vmem:[#allocation7 + $0x3f40] sm:$0xff]
    %v3117 = vld [vmem:[#allocation7 + $0x3f48] sm:$0xff]
    %v3118 = vld [vmem:[#allocation7 + $0x3f50] sm:$0xff]
    %v3119 = vld [vmem:[#allocation7 + $0x3f58] sm:$0xff]
    %v3120 = vld [vmem:[#allocation7 + $0x3f60] sm:$0xff]
    %v3121 = vld [vmem:[#allocation7 + $0x3f68] sm:$0xff]
    %v3122 = vld [vmem:[#allocation7 + $0x3f70] sm:$0xff]
    %v3123 = vld [vmem:[#allocation7 + $0x3f78] sm:$0xff]
    %v3124 = vld [vmem:[#allocation7 + $0x3f80] sm:$0xff]
    %v3125 = vld [vmem:[#allocation7 + $0x3f88] sm:$0xff]
    %v3126 = vld [vmem:[#allocation7 + $0x3f90] sm:$0xff]
    %v3127 = vld [vmem:[#allocation7 + $0x3f98] sm:$0xff]
    %v3128 = vld [vmem:[#allocation7 + $0x3fa0] sm:$0xff]
    %v3129 = vld [vmem:[#allocation7 + $0x3fa8] sm:$0xff]
    %v3130 = vld [vmem:[#allocation7 + $0x3fb0] sm:$0xff]
    %v3131 = vld [vmem:[#allocation7 + $0x3fb8] sm:$0xff]
    %v3132 = vld [vmem:[#allocation7 + $0x3fc0] sm:$0xff]
    %v3133 = vld [vmem:[#allocation7 + $0x3fc8] sm:$0xff]
    %v3134 = vld [vmem:[#allocation7 + $0x3fd0] sm:$0xff]
    %v3135 = vld [vmem:[#allocation7 + $0x3fd8] sm:$0xff]
    %v3136 = vld [vmem:[#allocation7 + $0x3fe0] sm:$0xff]
    %v3137 = vld [vmem:[#allocation7 + $0x3fe8] sm:$0xff]
    %v3138 = vld [vmem:[#allocation7 + $0x3ff0] sm:$0xff]
    %v3139 = vld [vmem:[#allocation7 + $0x3ff8] sm:$0xff]
    %v3140 = vld [vmem:[#allocation9] sm:$0xff]
    %v3142 = vlaneseq
    %v3143 = vshrl.u32 %v3142, 7
    %v3144 = vsub.s32 0, %v3143
    %v3145 = vrot.slane %v3140, %v3144
    %v3146 = vlaneseq
    %v3147 = vshrl.u32 %v3146, 7
    %v3148 = vsub.s32 1, %v3147
    %v3149 = vrot.slane %v3140, %v3148
    %v3150 = vlaneseq
    %v3151 = vshrl.u32 %v3150, 7
    %v3152 = vsub.s32 2, %v3151
    %v3153 = vrot.slane %v3140, %v3152
    %v3154 = vlaneseq
    %v3155 = vshrl.u32 %v3154, 7
    %v3156 = vsub.s32 3, %v3155
    %v3157 = vrot.slane %v3140, %v3156
    %v3158 = vlaneseq
    %v3159 = vshrl.u32 %v3158, 7
    %v3160 = vsub.s32 4, %v3159
    %v3161 = vrot.slane %v3140, %v3160
    %v3162 = vlaneseq
    %v3163 = vshrl.u32 %v3162, 7
    %v3164 = vsub.s32 5, %v3163
    %v3165 = vrot.slane %v3140, %v3164
    %v3166 = vlaneseq
    %v3167 = vshrl.u32 %v3166, 7
    %v3168 = vsub.s32 6, %v3167
    %v3169 = vrot.slane %v3140, %v3168
    %v3170 = vlaneseq
    %v3171 = vshrl.u32 %v3170, 7
    %v3172 = vsub.s32 7, %v3171
    %v3173 = vrot.slane %v3140, %v3172
    %3182 = vmatprep.subr.mxu0 %v1093
    %3183 = vmatpush1.msra.mxu0 %v1092
    %3184 = vmatprep.subr.mxu0 %v1101
    %3185 = vmatpush1.msra.mxu0 %v1100
    %3186 = vmatprep.subr.mxu0 %v1109
    %3187 = vmatpush1.msra.mxu0 %v1108
    %3188 = vmatprep.subr.mxu0 %v1117
    %3189 = vmatpush1.msra.mxu0 %v1116
    %3190 = vmatprep.subr.mxu0 %v1125
    %3191 = vmatpush1.msra.mxu0 %v1124
    %3192 = vmatprep.subr.mxu0 %v1133
    %3193 = vmatpush1.msra.mxu0 %v1132
    %3194 = vmatprep.subr.mxu0 %v1141
    %3195 = vmatpush1.msra.mxu0 %v1140
    %3196 = vmatprep.subr.mxu0 %v1149
    %3197 = vmatpush1.msra.mxu0 %v1148
    %3198 = vmatprep.subr.mxu0 %v1157
    %3199 = vmatpush1.msra.mxu0 %v1156
    %3200 = vmatprep.subr.mxu0 %v1165
    %3201 = vmatpush1.msra.mxu0 %v1164
    %3202 = vmatprep.subr.mxu0 %v1173
    %3203 = vmatpush1.msra.mxu0 %v1172
    %3204 = vmatprep.subr.mxu0 %v1181
    %3205 = vmatpush1.msra.mxu0 %v1180
    %3206 = vmatprep.subr.mxu0 %v1189
    %3207 = vmatpush1.msra.mxu0 %v1188
    %3208 = vmatprep.subr.mxu0 %v1197
    %3209 = vmatpush1.msra.mxu0 %v1196
    %3210 = vmatprep.subr.mxu0 %v1205
    %3211 = vmatpush1.msra.mxu0 %v1204
    %3212 = vmatprep.subr.mxu0 %v1213
    %3213 = vmatpush1.msra.mxu0 %v1212
    %3214 = vmatprep.subr.mxu0 %v1221
    %3215 = vmatpush1.msra.mxu0 %v1220
    %3216 = vmatprep.subr.mxu0 %v1229
    %3217 = vmatpush1.msra.mxu0 %v1228
    %3218 = vmatprep.subr.mxu0 %v1237
    %3219 = vmatpush1.msra.mxu0 %v1236
    %3220 = vmatprep.subr.mxu0 %v1245
    %3221 = vmatpush1.msra.mxu0 %v1244
    %3222 = vmatprep.subr.mxu0 %v1253
    %3223 = vmatpush1.msra.mxu0 %v1252
    %3224 = vmatprep.subr.mxu0 %v1261
    %3225 = vmatpush1.msra.mxu0 %v1260
    %3226 = vmatprep.subr.mxu0 %v1269
    %3227 = vmatpush1.msra.mxu0 %v1268
    %3228 = vmatprep.subr.mxu0 %v1277
    %3229 = vmatpush1.msra.mxu0 %v1276
    %3230 = vmatprep.subr.mxu0 %v1285
    %3231 = vmatpush1.msra.mxu0 %v1284
    %3232 = vmatprep.subr.mxu0 %v1293
    %3233 = vmatpush1.msra.mxu0 %v1292
    %3234 = vmatprep.subr.mxu0 %v1301
    %3235 = vmatpush1.msra.mxu0 %v1300
    %3236 = vmatprep.subr.mxu0 %v1309
    %3237 = vmatpush1.msra.mxu0 %v1308
    %3238 = vmatprep.subr.mxu0 %v1317
    %3239 = vmatpush1.msra.mxu0 %v1316
    %3240 = vmatprep.subr.mxu0 %v1325
    %3241 = vmatpush1.msra.mxu0 %v1324
    %3242 = vmatprep.subr.mxu0 %v1333
    %3243 = vmatpush1.msra.mxu0 %v1332
    %3244 = vmatprep.subr.mxu0 %v1341
    %3245 = vmatpush1.msra.mxu0 %v1340
    %3246 = vmatprep.mubr.f32.mxu0 %v1077
    %3247 = vmatmul.mubr.f32.gmra.mrb[0].mxu0 %v1076
    %v3248 = vpop.f32.mrb[0].mxu0
    %v3249 = vadd.f32 %v3145, %v3248
    %v3250 = vpop.f32.mrb[0].mxu0
    %v3251 = vadd.f32 %v3149, %v3250
    %3252 = vdwg.mxu0
    %3253 = vmatprep.subr.mxu0 %v1349
    %3254 = vmatpush1.msra.mxu0 %v1348
    %3255 = vmatprep.subr.mxu0 %v1357
    %3256 = vmatpush1.msra.mxu0 %v1356
    %3257 = vmatprep.subr.mxu0 %v1365
    %3258 = vmatpush1.msra.mxu0 %v1364
    %3259 = vmatprep.subr.mxu0 %v1373
    %3260 = vmatpush1.msra.mxu0 %v1372
    %3261 = vmatprep.subr.mxu0 %v1381
    %3262 = vmatpush1.msra.mxu0 %v1380
    %3263 = vmatprep.subr.mxu0 %v1389
    %3264 = vmatpush1.msra.mxu0 %v1388
    %3265 = vmatprep.subr.mxu0 %v1397
    %3266 = vmatpush1.msra.mxu0 %v1396
    %3267 = vmatprep.subr.mxu0 %v1405
    %3268 = vmatpush1.msra.mxu0 %v1404
    %3269 = vmatprep.subr.mxu0 %v1413
    %3270 = vmatpush1.msra.mxu0 %v1412
    %3271 = vmatprep.subr.mxu0 %v1421
    %3272 = vmatpush1.msra.mxu0 %v1420
    %3273 = vmatprep.subr.mxu0 %v1429
    %3274 = vmatpush1.msra.mxu0 %v1428
    %3275 = vmatprep.subr.mxu0 %v1437
    %3276 = vmatpush1.msra.mxu0 %v1436
    %3277 = vmatprep.subr.mxu0 %v1445
    %3278 = vmatpush1.msra.mxu0 %v1444
    %3279 = vmatprep.subr.mxu0 %v1453
    %3280 = vmatpush1.msra.mxu0 %v1452
    %3281 = vmatprep.subr.mxu0 %v1461
    %3282 = vmatpush1.msra.mxu0 %v1460
    %3283 = vmatprep.subr.mxu0 %v1469
    %3284 = vmatpush1.msra.mxu0 %v1468
    %3285 = vmatprep.subr.mxu0 %v1477
    %3286 = vmatpush1.msra.mxu0 %v1476
    %3287 = vmatprep.subr.mxu0 %v1485
    %3288 = vmatpush1.msra.mxu0 %v1484
    %3289 = vmatprep.subr.mxu0 %v1493
    %3290 = vmatpush1.msra.mxu0 %v1492
    %3291 = vmatprep.subr.mxu0 %v1501
    %3292 = vmatpush1.msra.mxu0 %v1500
    %3293 = vmatprep.subr.mxu0 %v1509
    %3294 = vmatpush1.msra.mxu0 %v1508
    %3295 = vmatprep.subr.mxu0 %v1517
    %3296 = vmatpush1.msra.mxu0 %v1516
    %3297 = vmatprep.subr.mxu0 %v1525
    %3298 = vmatpush1.msra.mxu0 %v1524
    %3299 = vmatprep.subr.mxu0 %v1533
    %3300 = vmatpush1.msra.mxu0 %v1532
    %3301 = vmatprep.subr.mxu0 %v1541
    %3302 = vmatpush1.msra.mxu0 %v1540
    %3303 = vmatprep.subr.mxu0 %v1549
    %3304 = vmatpush1.msra.mxu0 %v1548
    %3305 = vmatprep.subr.mxu0 %v1557
    %3306 = vmatpush1.msra.mxu0 %v1556
    %3307 = vmatprep.subr.mxu0 %v1565
    %3308 = vmatpush1.msra.mxu0 %v1564
    %3309 = vmatprep.subr.mxu0 %v1573
    %3310 = vmatpush1.msra.mxu0 %v1572
    %3311 = vmatprep.subr.mxu0 %v1581
    %3312 = vmatpush1.msra.mxu0 %v1580
    %3313 = vmatprep.subr.mxu0 %v1589
    %3314 = vmatpush1.msra.mxu0 %v1588
    %3315 = vmatprep.subr.mxu0 %v1597
    %3316 = vmatpush1.msra.mxu0 %v1596
    %3317 = vmatprep.mubr.f32.mxu0 %v1079
    %3318 = vmatmul.mubr.f32.gmra.mrb[0].mxu0 %v1078
    %v3319 = vpop.f32.mrb[0].mxu0
    %v3320 = vadd.f32 %v3249, %v3319
    %v3321 = vpop.f32.mrb[0].mxu0
    %v3322 = vadd.f32 %v3251, %v3321
    %3323 = vdwg.mxu0
    %3324 = vmatprep.subr.mxu0 %v1605
    %3325 = vmatpush1.msra.mxu0 %v1604
    %3326 = vmatprep.subr.mxu0 %v1613
    %3327 = vmatpush1.msra.mxu0 %v1612
    %3328 = vmatprep.subr.mxu0 %v1621
    %3329 = vmatpush1.msra.mxu0 %v1620
    %3330 = vmatprep.subr.mxu0 %v1629
    %3331 = vmatpush1.msra.mxu0 %v1628
    %3332 = vmatprep.subr.mxu0 %v1637
    %3333 = vmatpush1.msra.mxu0 %v1636
    %3334 = vmatprep.subr.mxu0 %v1645
    %3335 = vmatpush1.msra.mxu0 %v1644
    %3336 = vmatprep.subr.mxu0 %v1653
    %3337 = vmatpush1.msra.mxu0 %v1652
    %3338 = vmatprep.subr.mxu0 %v1661
    %3339 = vmatpush1.msra.mxu0 %v1660
    %3340 = vmatprep.subr.mxu0 %v1669
    %3341 = vmatpush1.msra.mxu0 %v1668
    %3342 = vmatprep.subr.mxu0 %v1677
    %3343 = vmatpush1.msra.mxu0 %v1676
    %3344 = vmatprep.subr.mxu0 %v1685
    %3345 = vmatpush1.msra.mxu0 %v1684
    %3346 = vmatprep.subr.mxu0 %v1693
    %3347 = vmatpush1.msra.mxu0 %v1692
    %3348 = vmatprep.subr.mxu0 %v1701
    %3349 = vmatpush1.msra.mxu0 %v1700
    %3350 = vmatprep.subr.mxu0 %v1709
    %3351 = vmatpush1.msra.mxu0 %v1708
    %3352 = vmatprep.subr.mxu0 %v1717
    %3353 = vmatpush1.msra.mxu0 %v1716
    %3354 = vmatprep.subr.mxu0 %v1725
    %3355 = vmatpush1.msra.mxu0 %v1724
    %3356 = vmatprep.subr.mxu0 %v1733
    %3357 = vmatpush1.msra.mxu0 %v1732
    %3358 = vmatprep.subr.mxu0 %v1741
    %3359 = vmatpush1.msra.mxu0 %v1740
    %3360 = vmatprep.subr.mxu0 %v1749
    %3361 = vmatpush1.msra.mxu0 %v1748
    %3362 = vmatprep.subr.mxu0 %v1757
    %3363 = vmatpush1.msra.mxu0 %v1756
    %3364 = vmatprep.subr.mxu0 %v1765
    %3365 = vmatpush1.msra.mxu0 %v1764
    %3366 = vmatprep.subr.mxu0 %v1773
    %3367 = vmatpush1.msra.mxu0 %v1772
    %3368 = vmatprep.subr.mxu0 %v1781
    %3369 = vmatpush1.msra.mxu0 %v1780
    %3370 = vmatprep.subr.mxu0 %v1789
    %3371 = vmatpush1.msra.mxu0 %v1788
    %3372 = vmatprep.subr.mxu0 %v1797
    %3373 = vmatpush1.msra.mxu0 %v1796
    %3374 = vmatprep.subr.mxu0 %v1805
    %3375 = vmatpush1.msra.mxu0 %v1804
    %3376 = vmatprep.subr.mxu0 %v1813
    %3377 = vmatpush1.msra.mxu0 %v1812
    %3378 = vmatprep.subr.mxu0 %v1821
    %3379 = vmatpush1.msra.mxu0 %v1820
    %3380 = vmatprep.subr.mxu0 %v1829
    %3381 = vmatpush1.msra.mxu0 %v1828
    %3382 = vmatprep.subr.mxu0 %v1837
    %3383 = vmatpush1.msra.mxu0 %v1836
    %3384 = vmatprep.subr.mxu0 %v1845
    %3385 = vmatpush1.msra.mxu0 %v1844
    %3386 = vmatprep.subr.mxu0 %v1853
    %3387 = vmatpush1.msra.mxu0 %v1852
    %3388 = vmatprep.mubr.f32.mxu0 %v1081
    %3389 = vmatmul.mubr.f32.gmra.mrb[0].mxu0 %v1080
    %v3390 = vpop.f32.mrb[0].mxu0
    %v3391 = vadd.f32 %v3320, %v3390
    %v3392 = vpop.f32.mrb[0].mxu0
    %v3393 = vadd.f32 %v3322, %v3392
    %3394 = vdwg.mxu0
    %3395 = vmatprep.subr.mxu0 %v1861
    %3396 = vmatpush1.msra.mxu0 %v1860
    %3397 = vmatprep.subr.mxu0 %v1869
    %3398 = vmatpush1.msra.mxu0 %v1868
    %3399 = vmatprep.subr.mxu0 %v1877
    %3400 = vmatpush1.msra.mxu0 %v1876
    %3401 = vmatprep.subr.mxu0 %v1885
    %3402 = vmatpush1.msra.mxu0 %v1884
    %3403 = vmatprep.subr.mxu0 %v1893
    %3404 = vmatpush1.msra.mxu0 %v1892
    %3405 = vmatprep.subr.mxu0 %v1901
    %3406 = vmatpush1.msra.mxu0 %v1900
    %3407 = vmatprep.subr.mxu0 %v1909
    %3408 = vmatpush1.msra.mxu0 %v1908
    %3409 = vmatprep.subr.mxu0 %v1917
    %3410 = vmatpush1.msra.mxu0 %v1916
    %3411 = vmatprep.subr.mxu0 %v1925
    %3412 = vmatpush1.msra.mxu0 %v1924
    %3413 = vmatprep.subr.mxu0 %v1933
    %3414 = vmatpush1.msra.mxu0 %v1932
    %3415 = vmatprep.subr.mxu0 %v1941
    %3416 = vmatpush1.msra.mxu0 %v1940
    %3417 = vmatprep.subr.mxu0 %v1949
    %3418 = vmatpush1.msra.mxu0 %v1948
    %3419 = vmatprep.subr.mxu0 %v1957
    %3420 = vmatpush1.msra.mxu0 %v1956
    %3421 = vmatprep.subr.mxu0 %v1965
    %3422 = vmatpush1.msra.mxu0 %v1964
    %3423 = vmatprep.subr.mxu0 %v1973
    %3424 = vmatpush1.msra.mxu0 %v1972
    %3425 = vmatprep.subr.mxu0 %v1981
    %3426 = vmatpush1.msra.mxu0 %v1980
    %3427 = vmatprep.subr.mxu0 %v1989
    %3428 = vmatpush1.msra.mxu0 %v1988
    %3429 = vmatprep.subr.mxu0 %v1997
    %3430 = vmatpush1.msra.mxu0 %v1996
    %3431 = vmatprep.subr.mxu0 %v2005
    %3432 = vmatpush1.msra.mxu0 %v2004
    %3433 = vmatprep.subr.mxu0 %v2013
    %3434 = vmatpush1.msra.mxu0 %v2012
    %3435 = vmatprep.subr.mxu0 %v2021
    %3436 = vmatpush1.msra.mxu0 %v2020
    %3437 = vmatprep.subr.mxu0 %v2029
    %3438 = vmatpush1.msra.mxu0 %v2028
    %3439 = vmatprep.subr.mxu0 %v2037
    %3440 = vmatpush1.msra.mxu0 %v2036
    %3441 = vmatprep.subr.mxu0 %v2045
    %3442 = vmatpush1.msra.mxu0 %v2044
    %3443 = vmatprep.subr.mxu0 %v2053
    %3444 = vmatpush1.msra.mxu0 %v2052
    %3445 = vmatprep.subr.mxu0 %v2061
    %3446 = vmatpush1.msra.mxu0 %v2060
    %3447 = vmatprep.subr.mxu0 %v2069
    %3448 = vmatpush1.msra.mxu0 %v2068
    %3449 = vmatprep.subr.mxu0 %v2077
    %3450 = vmatpush1.msra.mxu0 %v2076
    %3451 = vmatprep.subr.mxu0 %v2085
    %3452 = vmatpush1.msra.mxu0 %v2084
    %3453 = vmatprep.subr.mxu0 %v2093
    %3454 = vmatpush1.msra.mxu0 %v2092
    %3455 = vmatprep.subr.mxu0 %v2101
    %3456 = vmatpush1.msra.mxu0 %v2100
    %3457 = vmatprep.subr.mxu0 %v2109
    %3458 = vmatpush1.msra.mxu0 %v2108
    %3459 = vmatprep.mubr.f32.mxu0 %v1083
    %3460 = vmatmul.mubr.f32.gmra.mrb[0].mxu0 %v1082
    %v3461 = vpop.f32.mrb[0].mxu0
    %v3462 = vadd.f32 %v3391, %v3461
    %v3463 = vpop.f32.mrb[0].mxu0
    %v3464 = vadd.f32 %v3393, %v3463
    %3465 = vdwg.mxu0
    %3466 = vmatprep.subr.mxu0 %v2117
    %3467 = vmatpush1.msra.mxu0 %v2116
    %3468 = vmatprep.subr.mxu0 %v2125
    %3469 = vmatpush1.msra.mxu0 %v2124
    %3470 = vmatprep.subr.mxu0 %v2133
    %3471 = vmatpush1.msra.mxu0 %v2132
    %3472 = vmatprep.subr.mxu0 %v2141
    %3473 = vmatpush1.msra.mxu0 %v2140
    %3474 = vmatprep.subr.mxu0 %v2149
    %3475 = vmatpush1.msra.mxu0 %v2148
    %3476 = vmatprep.subr.mxu0 %v2157
    %3477 = vmatpush1.msra.mxu0 %v2156
    %3478 = vmatprep.subr.mxu0 %v2165
    %3479 = vmatpush1.msra.mxu0 %v2164
    %3480 = vmatprep.subr.mxu0 %v2173
    %3481 = vmatpush1.msra.mxu0 %v2172
    %3482 = vmatprep.subr.mxu0 %v2181
    %3483 = vmatpush1.msra.mxu0 %v2180
    %3484 = vmatprep.subr.mxu0 %v2189
    %3485 = vmatpush1.msra.mxu0 %v2188
    %3486 = vmatprep.subr.mxu0 %v2197
    %3487 = vmatpush1.msra.mxu0 %v2196
    %3488 = vmatprep.subr.mxu0 %v2205
    %3489 = vmatpush1.msra.mxu0 %v2204
    %3490 = vmatprep.subr.mxu0 %v2213
    %3491 = vmatpush1.msra.mxu0 %v2212
    %3492 = vmatprep.subr.mxu0 %v2221
    %3493 = vmatpush1.msra.mxu0 %v2220
    %3494 = vmatprep.subr.mxu0 %v2229
    %3495 = vmatpush1.msra.mxu0 %v2228
    %3496 = vmatprep.subr.mxu0 %v2237
    %3497 = vmatpush1.msra.mxu0 %v2236
    %3498 = vmatprep.subr.mxu0 %v2245
    %3499 = vmatpush1.msra.mxu0 %v2244
    %3500 = vmatprep.subr.mxu0 %v2253
    %3501 = vmatpush1.msra.mxu0 %v2252
    %3502 = vmatprep.subr.mxu0 %v2261
    %3503 = vmatpush1.msra.mxu0 %v2260
    %3504 = vmatprep.subr.mxu0 %v2269
    %3505 = vmatpush1.msra.mxu0 %v2268
    %3506 = vmatprep.subr.mxu0 %v2277
    %3507 = vmatpush1.msra.mxu0 %v2276
    %3508 = vmatprep.subr.mxu0 %v2285
    %3509 = vmatpush1.msra.mxu0 %v2284
    %3510 = vmatprep.subr.mxu0 %v2293
    %3511 = vmatpush1.msra.mxu0 %v2292
    %3512 = vmatprep.subr.mxu0 %v2301
    %3513 = vmatpush1.msra.mxu0 %v2300
    %3514 = vmatprep.subr.mxu0 %v2309
    %3515 = vmatpush1.msra.mxu0 %v2308
    %3516 = vmatprep.subr.mxu0 %v2317
    %3517 = vmatpush1.msra.mxu0 %v2316
    %3518 = vmatprep.subr.mxu0 %v2325
    %3519 = vmatpush1.msra.mxu0 %v2324
    %3520 = vmatprep.subr.mxu0 %v2333
    %3521 = vmatpush1.msra.mxu0 %v2332
    %3522 = vmatprep.subr.mxu0 %v2341
    %3523 = vmatpush1.msra.mxu0 %v2340
    %3524 = vmatprep.subr.mxu0 %v2349
    %3525 = vmatpush1.msra.mxu0 %v2348
    %3526 = vmatprep.subr.mxu0 %v2357
    %3527 = vmatpush1.msra.mxu0 %v2356
    %3528 = vmatprep.subr.mxu0 %v2365
    %3529 = vmatpush1.msra.mxu0 %v2364
    %3530 = vmatprep.mubr.f32.mxu0 %v1085
    %3531 = vmatmul.mubr.f32.gmra.mrb[0].mxu0 %v1084
    %v3532 = vpop.f32.mrb[0].mxu0
    %v3533 = vadd.f32 %v3462, %v3532
    %v3534 = vpop.f32.mrb[0].mxu0
    %v3535 = vadd.f32 %v3464, %v3534
    %3536 = vdwg.mxu0
    %3537 = vmatprep.subr.mxu0 %v2373
    %3538 = vmatpush1.msra.mxu0 %v2372
    %3539 = vmatprep.subr.mxu0 %v2381
    %3540 = vmatpush1.msra.mxu0 %v2380
    %3541 = vmatprep.subr.mxu0 %v2389
    %3542 = vmatpush1.msra.mxu0 %v2388
    %3543 = vmatprep.subr.mxu0 %v2397
    %3544 = vmatpush1.msra.mxu0 %v2396
    %3545 = vmatprep.subr.mxu0 %v2405
    %3546 = vmatpush1.msra.mxu0 %v2404
    %3547 = vmatprep.subr.mxu0 %v2413
    %3548 = vmatpush1.msra.mxu0 %v2412
    %3549 = vmatprep.subr.mxu0 %v2421
    %3550 = vmatpush1.msra.mxu0 %v2420
    %3551 = vmatprep.subr.mxu0 %v2429
    %3552 = vmatpush1.msra.mxu0 %v2428
    %3553 = vmatprep.subr.mxu0 %v2437
    %3554 = vmatpush1.msra.mxu0 %v2436
    %3555 = vmatprep.subr.mxu0 %v2445
    %3556 = vmatpush1.msra.mxu0 %v2444
    %3557 = vmatprep.subr.mxu0 %v2453
    %3558 = vmatpush1.msra.mxu0 %v2452
    %3559 = vmatprep.subr.mxu0 %v2461
    %3560 = vmatpush1.msra.mxu0 %v2460
    %3561 = vmatprep.subr.mxu0 %v2469
    %3562 = vmatpush1.msra.mxu0 %v2468
    %3563 = vmatprep.subr.mxu0 %v2477
    %3564 = vmatpush1.msra.mxu0 %v2476
    %3565 = vmatprep.subr.mxu0 %v2485
    %3566 = vmatpush1.msra.mxu0 %v2484
    %3567 = vmatprep.subr.mxu0 %v2493
    %3568 = vmatpush1.msra.mxu0 %v2492
    %3569 = vmatprep.subr.mxu0 %v2501
    %3570 = vmatpush1.msra.mxu0 %v2500
    %3571 = vmatprep.subr.mxu0 %v2509
    %3572 = vmatpush1.msra.mxu0 %v2508
    %3573 = vmatprep.subr.mxu0 %v2517
    %3574 = vmatpush1.msra.mxu0 %v2516
    %3575 = vmatprep.subr.mxu0 %v2525
    %3576 = vmatpush1.msra.mxu0 %v2524
    %3577 = vmatprep.subr.mxu0 %v2533
    %3578 = vmatpush1.msra.mxu0 %v2532
    %3579 = vmatprep.subr.mxu0 %v2541
    %3580 = vmatpush1.msra.mxu0 %v2540
    %3581 = vmatprep.subr.mxu0 %v2549
    %3582 = vmatpush1.msra.mxu0 %v2548
    %3583 = vmatprep.subr.mxu0 %v2557
    %3584 = vmatpush1.msra.mxu0 %v2556
    %3585 = vmatprep.subr.mxu0 %v2565
    %3586 = vmatpush1.msra.mxu0 %v2564
    %3587 = vmatprep.subr.mxu0 %v2573
    %3588 = vmatpush1.msra.mxu0 %v2572
    %3589 = vmatprep.subr.mxu0 %v2581
    %3590 = vmatpush1.msra.mxu0 %v2580
    %3591 = vmatprep.subr.mxu0 %v2589
    %3592 = vmatpush1.msra.mxu0 %v2588
    %3593 = vmatprep.subr.mxu0 %v2597
    %3594 = vmatpush1.msra.mxu0 %v2596
    %3595 = vmatprep.subr.mxu0 %v2605
    %3596 = vmatpush1.msra.mxu0 %v2604
    %3597 = vmatprep.subr.mxu0 %v2613
    %3598 = vmatpush1.msra.mxu0 %v2612
    %3599 = vmatprep.subr.mxu0 %v2621
    %3600 = vmatpush1.msra.mxu0 %v2620
    %3601 = vmatprep.mubr.f32.mxu0 %v1087
    %3602 = vmatmul.mubr.f32.gmra.mrb[0].mxu0 %v1086
    %v3603 = vpop.f32.mrb[0].mxu0
    %v3604 = vadd.f32 %v3533, %v3603
    %v3605 = vpop.f32.mrb[0].mxu0
    %v3606 = vadd.f32 %v3535, %v3605
    %3607 = vdwg.mxu0
    %3608 = vmatprep.subr.mxu0 %v2629
    %3609 = vmatpush1.msra.mxu0 %v2628
    %3610 = vmatprep.subr.mxu0 %v2637
    %3611 = vmatpush1.msra.mxu0 %v2636
    %3612 = vmatprep.subr.mxu0 %v2645
    %3613 = vmatpush1.msra.mxu0 %v2644
    %3614 = vmatprep.subr.mxu0 %v2653
    %3615 = vmatpush1.msra.mxu0 %v2652
    %3616 = vmatprep.subr.mxu0 %v2661
    %3617 = vmatpush1.msra.mxu0 %v2660
    %3618 = vmatprep.subr.mxu0 %v2669
    %3619 = vmatpush1.msra.mxu0 %v2668
    %3620 = vmatprep.subr.mxu0 %v2677
    %3621 = vmatpush1.msra.mxu0 %v2676
    %3622 = vmatprep.subr.mxu0 %v2685
    %3623 = vmatpush1.msra.mxu0 %v2684
    %3624 = vmatprep.subr.mxu0 %v2693
    %3625 = vmatpush1.msra.mxu0 %v2692
    %3626 = vmatprep.subr.mxu0 %v2701
    %3627 = vmatpush1.msra.mxu0 %v2700
    %3628 = vmatprep.subr.mxu0 %v2709
    %3629 = vmatpush1.msra.mxu0 %v2708
    %3630 = vmatprep.subr.mxu0 %v2717
    %3631 = vmatpush1.msra.mxu0 %v2716
    %3632 = vmatprep.subr.mxu0 %v2725
    %3633 = vmatpush1.msra.mxu0 %v2724
    %3634 = vmatprep.subr.mxu0 %v2733
    %3635 = vmatpush1.msra.mxu0 %v2732
    %3636 = vmatprep.subr.mxu0 %v2741
    %3637 = vmatpush1.msra.mxu0 %v2740
    %3638 = vmatprep.subr.mxu0 %v2749
    %3639 = vmatpush1.msra.mxu0 %v2748
    %3640 = vmatprep.subr.mxu0 %v2757
    %3641 = vmatpush1.msra.mxu0 %v2756
    %3642 = vmatprep.subr.mxu0 %v2765
    %3643 = vmatpush1.msra.mxu0 %v2764
    %3644 = vmatprep.subr.mxu0 %v2773
    %3645 = vmatpush1.msra.mxu0 %v2772
    %3646 = vmatprep.subr.mxu0 %v2781
    %3647 = vmatpush1.msra.mxu0 %v2780
    %3648 = vmatprep.subr.mxu0 %v2789
    %3649 = vmatpush1.msra.mxu0 %v2788
    %3650 = vmatprep.subr.mxu0 %v2797
    %3651 = vmatpush1.msra.mxu0 %v2796
    %3652 = vmatprep.subr.mxu0 %v2805
    %3653 = vmatpush1.msra.mxu0 %v2804
    %3654 = vmatprep.subr.mxu0 %v2813
    %3655 = vmatpush1.msra.mxu0 %v2812
    %3656 = vmatprep.subr.mxu0 %v2821
    %3657 = vmatpush1.msra.mxu0 %v2820
    %3658 = vmatprep.subr.mxu0 %v2829
    %3659 = vmatpush1.msra.mxu0 %v2828
    %3660 = vmatprep.subr.mxu0 %v2837
    %3661 = vmatpush1.msra.mxu0 %v2836
    %3662 = vmatprep.subr.mxu0 %v2845
    %3663 = vmatpush1.msra.mxu0 %v2844
    %3664 = vmatprep.subr.mxu0 %v2853
    %3665 = vmatpush1.msra.mxu0 %v2852
    %3666 = vmatprep.subr.mxu0 %v2861
    %3667 = vmatpush1.msra.mxu0 %v2860
    %3668 = vmatprep.subr.mxu0 %v2869
    %3669 = vmatpush1.msra.mxu0 %v2868
    %3670 = vmatprep.subr.mxu0 %v2877
    %3671 = vmatpush1.msra.mxu0 %v2876
    %3672 = vmatprep.mubr.f32.mxu0 %v1089
    %3673 = vmatmul.mubr.f32.gmra.mrb[0].mxu0 %v1088
    %v3674 = vpop.f32.mrb[0].mxu0
    %v3675 = vadd.f32 %v3604, %v3674
    %v3676 = vpop.f32.mrb[0].mxu0
    %v3677 = vadd.f32 %v3606, %v3676
    %3678 = vdwg.mxu0
    %3679 = vmatprep.subr.mxu0 %v2885
    %3680 = vmatpush1.msra.mxu0 %v2884
    %3681 = vmatprep.subr.mxu0 %v2893
    %3682 = vmatpush1.msra.mxu0 %v2892
    %3683 = vmatprep.subr.mxu0 %v2901
    %3684 = vmatpush1.msra.mxu0 %v2900
    %3685 = vmatprep.subr.mxu0 %v2909
    %3686 = vmatpush1.msra.mxu0 %v2908
    %3687 = vmatprep.subr.mxu0 %v2917
    %3688 = vmatpush1.msra.mxu0 %v2916
    %3689 = vmatprep.subr.mxu0 %v2925
    %3690 = vmatpush1.msra.mxu0 %v2924
    %3691 = vmatprep.subr.mxu0 %v2933
    %3692 = vmatpush1.msra.mxu0 %v2932
    %3693 = vmatprep.subr.mxu0 %v2941
    %3694 = vmatpush1.msra.mxu0 %v2940
    %3695 = vmatprep.subr.mxu0 %v2949
    %3696 = vmatpush1.msra.mxu0 %v2948
    %3697 = vmatprep.subr.mxu0 %v2957
    %3698 = vmatpush1.msra.mxu0 %v2956
    %3699 = vmatprep.subr.mxu0 %v2965
    %3700 = vmatpush1.msra.mxu0 %v2964
    %3701 = vmatprep.subr.mxu0 %v2973
    %3702 = vmatpush1.msra.mxu0 %v2972
    %3703 = vmatprep.subr.mxu0 %v2981
    %3704 = vmatpush1.msra.mxu0 %v2980
    %3705 = vmatprep.subr.mxu0 %v2989
    %3706 = vmatpush1.msra.mxu0 %v2988
    %3707 = vmatprep.subr.mxu0 %v2997
    %3708 = vmatpush1.msra.mxu0 %v2996
    %3709 = vmatprep.subr.mxu0 %v3005
    %3710 = vmatpush1.msra.mxu0 %v3004
    %3711 = vmatprep.subr.mxu0 %v3013
    %3712 = vmatpush1.msra.mxu0 %v3012
    %3713 = vmatprep.subr.mxu0 %v3021
    %3714 = vmatpush1.msra.mxu0 %v3020
    %3715 = vmatprep.subr.mxu0 %v3029
    %3716 = vmatpush1.msra.mxu0 %v3028
    %3717 = vmatprep.subr.mxu0 %v3037
    %3718 = vmatpush1.msra.mxu0 %v3036
    %3719 = vmatprep.subr.mxu0 %v3045
    %3720 = vmatpush1.msra.mxu0 %v3044
    %3721 = vmatprep.subr.mxu0 %v3053
    %3722 = vmatpush1.msra.mxu0 %v3052
    %3723 = vmatprep.subr.mxu0 %v3061
    %3724 = vmatpush1.msra.mxu0 %v3060
    %3725 = vmatprep.subr.mxu0 %v3069
    %3726 = vmatpush1.msra.mxu0 %v3068
    %3727 = vmatprep.subr.mxu0 %v3077
    %3728 = vmatpush1.msra.mxu0 %v3076
    %3729 = vmatprep.subr.mxu0 %v3085
    %3730 = vmatpush1.msra.mxu0 %v3084
    %3731 = vmatprep.subr.mxu0 %v3093
    %3732 = vmatpush1.msra.mxu0 %v3092
    %3733 = vmatprep.subr.mxu0 %v3101
    %3734 = vmatpush1.msra.mxu0 %v3100
    %3735 = vmatprep.subr.mxu0 %v3109
    %3736 = vmatpush1.msra.mxu0 %v3108
    %3737 = vmatprep.subr.mxu0 %v3117
    %3738 = vmatpush1.msra.mxu0 %v3116
    %3739 = vmatprep.subr.mxu0 %v3125
    %3740 = vmatpush1.msra.mxu0 %v3124
    %3741 = vmatprep.subr.mxu0 %v3133
    %3742 = vmatpush1.msra.mxu0 %v3132
    %3743 = vmatprep.mubr.f32.mxu0 %v1091
    %3744 = vmatmul.mubr.f32.gmra.mrb[0].mxu0 %v1090
    %v3745 = vpop.f32.mrb[0].mxu0
    %v3746 = vadd.f32 %v3675, %v3745
    %v3747 = vpop.f32.mrb[0].mxu0
    %v3748 = vadd.f32 %v3677, %v3747
    %3749 = vdwg.mxu0
    %3750 = vmatprep.subr.mxu0 %v1095
    %3751 = vmatpush1.msra.mxu0 %v1094
    %3752 = vmatprep.subr.mxu0 %v1103
    %3753 = vmatpush1.msra.mxu0 %v1102
    %3754 = vmatprep.subr.mxu0 %v1111
    %3755 = vmatpush1.msra.mxu0 %v1110
    %3756 = vmatprep.subr.mxu0 %v1119
    %3757 = vmatpush1.msra.mxu0 %v1118
    %3758 = vmatprep.subr.mxu0 %v1127
    %3759 = vmatpush1.msra.mxu0 %v1126
    %3760 = vmatprep.subr.mxu0 %v1135
    %3761 = vmatpush1.msra.mxu0 %v1134
    %3762 = vmatprep.subr.mxu0 %v1143
    %3763 = vmatpush1.msra.mxu0 %v1142
    %3764 = vmatprep.subr.mxu0 %v1151
    %3765 = vmatpush1.msra.mxu0 %v1150
    %3766 = vmatprep.subr.mxu0 %v1159
    %3767 = vmatpush1.msra.mxu0 %v1158
    %3768 = vmatprep.subr.mxu0 %v1167
    %3769 = vmatpush1.msra.mxu0 %v1166
    %3770 = vmatprep.subr.mxu0 %v1175
    %3771 = vmatpush1.msra.mxu0 %v1174
    %3772 = vmatprep.subr.mxu0 %v1183
    %3773 = vmatpush1.msra.mxu0 %v1182
    %3774 = vmatprep.subr.mxu0 %v1191
    %3775 = vmatpush1.msra.mxu0 %v1190
    %3776 = vmatprep.subr.mxu0 %v1199
    %3777 = vmatpush1.msra.mxu0 %v1198
    %3778 = vmatprep.subr.mxu0 %v1207
    %3779 = vmatpush1.msra.mxu0 %v1206
    %3780 = vmatprep.subr.mxu0 %v1215
    %3781 = vmatpush1.msra.mxu0 %v1214
    %3782 = vmatprep.subr.mxu0 %v1223
    %3783 = vmatpush1.msra.mxu0 %v1222
    %3784 = vmatprep.subr.mxu0 %v1231
    %3785 = vmatpush1.msra.mxu0 %v1230
    %3786 = vmatprep.subr.mxu0 %v1239
    %3787 = vmatpush1.msra.mxu0 %v1238
    %3788 = vmatprep.subr.mxu0 %v1247
    %3789 = vmatpush1.msra.mxu0 %v1246
    %3790 = vmatprep.subr.mxu0 %v1255
    %3791 = vmatpush1.msra.mxu0 %v1254
    %3792 = vmatprep.subr.mxu0 %v1263
    %3793 = vmatpush1.msra.mxu0 %v1262
    %3794 = vmatprep.subr.mxu0 %v1271
    %3795 = vmatpush1.msra.mxu0 %v1270
    %3796 = vmatprep.subr.mxu0 %v1279
    %3797 = vmatpush1.msra.mxu0 %v1278
    %3798 = vmatprep.subr.mxu0 %v1287
    %3799 = vmatpush1.msra.mxu0 %v1286
    %3800 = vmatprep.subr.mxu0 %v1295
    %3801 = vmatpush1.msra.mxu0 %v1294
    %3802 = vmatprep.subr.mxu0 %v1303
    %3803 = vmatpush1.msra.mxu0 %v1302
    %3804 = vmatprep.subr.mxu0 %v1311
    %3805 = vmatpush1.msra.mxu0 %v1310
    %3806 = vmatprep.subr.mxu0 %v1319
    %3807 = vmatpush1.msra.mxu0 %v1318
    %3808 = vmatprep.subr.mxu0 %v1327
    %3809 = vmatpush1.msra.mxu0 %v1326
    %3810 = vmatprep.subr.mxu0 %v1335
    %3811 = vmatpush1.msra.mxu0 %v1334
    %3812 = vmatprep.subr.mxu0 %v1343
    %3813 = vmatpush1.msra.mxu0 %v1342
    %3814 = vmatprep.mubr.f32.mxu0 %v1077
    %3815 = vmatmul.mubr.f32.gmra.mrb[0].mxu0 %v1076
    %v3816 = vpop.f32.mrb[0].mxu0
    %v3817 = vadd.f32 %v3153, %v3816
    %v3818 = vpop.f32.mrb[0].mxu0
    %v3819 = vadd.f32 %v3157, %v3818
    %3820 = vdwg.mxu0
    %3821 = vmatprep.subr.mxu0 %v1351
    %3822 = vmatpush1.msra.mxu0 %v1350
    %3823 = vmatprep.subr.mxu0 %v1359
    %3824 = vmatpush1.msra.mxu0 %v1358
    %3825 = vmatprep.subr.mxu0 %v1367
    %3826 = vmatpush1.msra.mxu0 %v1366
    %3827 = vmatprep.subr.mxu0 %v1375
    %3828 = vmatpush1.msra.mxu0 %v1374
    %3829 = vmatprep.subr.mxu0 %v1383
    %3830 = vmatpush1.msra.mxu0 %v1382
    %3831 = vmatprep.subr.mxu0 %v1391
    %3832 = vmatpush1.msra.mxu0 %v1390
    %3833 = vmatprep.subr.mxu0 %v1399
    %3834 = vmatpush1.msra.mxu0 %v1398
    %3835 = vmatprep.subr.mxu0 %v1407
    %3836 = vmatpush1.msra.mxu0 %v1406
    %3837 = vmatprep.subr.mxu0 %v1415
    %3838 = vmatpush1.msra.mxu0 %v1414
    %3839 = vmatprep.subr.mxu0 %v1423
    %3840 = vmatpush1.msra.mxu0 %v1422
    %3841 = vmatprep.subr.mxu0 %v1431
    %3842 = vmatpush1.msra.mxu0 %v1430
    %3843 = vmatprep.subr.mxu0 %v1439
    %3844 = vmatpush1.msra.mxu0 %v1438
    %3845 = vmatprep.subr.mxu0 %v1447
    %3846 = vmatpush1.msra.mxu0 %v1446
    %3847 = vmatprep.subr.mxu0 %v1455
    %3848 = vmatpush1.msra.mxu0 %v1454
    %3849 = vmatprep.subr.mxu0 %v1463
    %3850 = vmatpush1.msra.mxu0 %v1462
    %3851 = vmatprep.subr.mxu0 %v1471
    %3852 = vmatpush1.msra.mxu0 %v1470
    %3853 = vmatprep.subr.mxu0 %v1479
    %3854 = vmatpush1.msra.mxu0 %v1478
    %3855 = vmatprep.subr.mxu0 %v1487
    %3856 = vmatpush1.msra.mxu0 %v1486
    %3857 = vmatprep.subr.mxu0 %v1495
    %3858 = vmatpush1.msra.mxu0 %v1494
    %3859 = vmatprep.subr.mxu0 %v1503
    %3860 = vmatpush1.msra.mxu0 %v1502
    %3861 = vmatprep.subr.mxu0 %v1511
    %3862 = vmatpush1.msra.mxu0 %v1510
    %3863 = vmatprep.subr.mxu0 %v1519
    %3864 = vmatpush1.msra.mxu0 %v1518
    %3865 = vmatprep.subr.mxu0 %v1527
    %3866 = vmatpush1.msra.mxu0 %v1526
    %3867 = vmatprep.subr.mxu0 %v1535
    %3868 = vmatpush1.msra.mxu0 %v1534
    %3869 = vmatprep.subr.mxu0 %v1543
    %3870 = vmatpush1.msra.mxu0 %v1542
    %3871 = vmatprep.subr.mxu0 %v1551
    %3872 = vmatpush1.msra.mxu0 %v1550
    %3873 = vmatprep.subr.mxu0 %v1559
    %3874 = vmatpush1.msra.mxu0 %v1558
    %3875 = vmatprep.subr.mxu0 %v1567
    %3876 = vmatpush1.msra.mxu0 %v1566
    %3877 = vmatprep.subr.mxu0 %v1575
    %3878 = vmatpush1.msra.mxu0 %v1574
    %3879 = vmatprep.subr.mxu0 %v1583
    %3880 = vmatpush1.msra.mxu0 %v1582
    %3881 = vmatprep.subr.mxu0 %v1591
    %3882 = vmatpush1.msra.mxu0 %v1590
    %3883 = vmatprep.subr.mxu0 %v1599
    %3884 = vmatpush1.msra.mxu0 %v1598
    %3885 = vmatprep.mubr.f32.mxu0 %v1079
    %3886 = vmatmul.mubr.f32.gmra.mrb[0].mxu0 %v1078
    %v3887 = vpop.f32.mrb[0].mxu0
    %v3888 = vadd.f32 %v3817, %v3887
    %v3889 = vpop.f32.mrb[0].mxu0
    %v3890 = vadd.f32 %v3819, %v3889
    %3891 = vdwg.mxu0
    %3892 = vmatprep.subr.mxu0 %v1607
    %3893 = vmatpush1.msra.mxu0 %v1606
    %3894 = vmatprep.subr.mxu0 %v1615
    %3895 = vmatpush1.msra.mxu0 %v1614
    %3896 = vmatprep.subr.mxu0 %v1623
    %3897 = vmatpush1.msra.mxu0 %v1622
    %3898 = vmatprep.subr.mxu0 %v1631
    %3899 = vmatpush1.msra.mxu0 %v1630
    %3900 = vmatprep.subr.mxu0 %v1639
    %3901 = vmatpush1.msra.mxu0 %v1638
    %3902 = vmatprep.subr.mxu0 %v1647
    %3903 = vmatpush1.msra.mxu0 %v1646
    %3904 = vmatprep.subr.mxu0 %v1655
    %3905 = vmatpush1.msra.mxu0 %v1654
    %3906 = vmatprep.subr.mxu0 %v1663
    %3907 = vmatpush1.msra.mxu0 %v1662
    %3908 = vmatprep.subr.mxu0 %v1671
    %3909 = vmatpush1.msra.mxu0 %v1670
    %3910 = vmatprep.subr.mxu0 %v1679
    %3911 = vmatpush1.msra.mxu0 %v1678
    %3912 = vmatprep.subr.mxu0 %v1687
    %3913 = vmatpush1.msra.mxu0 %v1686
    %3914 = vmatprep.subr.mxu0 %v1695
    %3915 = vmatpush1.msra.mxu0 %v1694
    %3916 = vmatprep.subr.mxu0 %v1703
    %3917 = vmatpush1.msra.mxu0 %v1702
    %3918 = vmatprep.subr.mxu0 %v1711
    %3919 = vmatpush1.msra.mxu0 %v1710
    %3920 = vmatprep.subr.mxu0 %v1719
    %3921 = vmatpush1.msra.mxu0 %v1718
    %3922 = vmatprep.subr.mxu0 %v1727
    %3923 = vmatpush1.msra.mxu0 %v1726
    %3924 = vmatprep.subr.mxu0 %v1735
    %3925 = vmatpush1.msra.mxu0 %v1734
    %3926 = vmatprep.subr.mxu0 %v1743
    %3927 = vmatpush1.msra.mxu0 %v1742
    %3928 = vmatprep.subr.mxu0 %v1751
    %3929 = vmatpush1.msra.mxu0 %v1750
    %3930 = vmatprep.subr.mxu0 %v1759
    %3931 = vmatpush1.msra.mxu0 %v1758
    %3932 = vmatprep.subr.mxu0 %v1767
    %3933 = vmatpush1.msra.mxu0 %v1766
    %3934 = vmatprep.subr.mxu0 %v1775
    %3935 = vmatpush1.msra.mxu0 %v1774
    %3936 = vmatprep.subr.mxu0 %v1783
    %3937 = vmatpush1.msra.mxu0 %v1782
    %3938 = vmatprep.subr.mxu0 %v1791
    %3939 = vmatpush1.msra.mxu0 %v1790
    %3940 = vmatprep.subr.mxu0 %v1799
    %3941 = vmatpush1.msra.mxu0 %v1798
    %3942 = vmatprep.subr.mxu0 %v1807
    %3943 = vmatpush1.msra.mxu0 %v1806
    %3944 = vmatprep.subr.mxu0 %v1815
    %3945 = vmatpush1.msra.mxu0 %v1814
    %3946 = vmatprep.subr.mxu0 %v1823
    %3947 = vmatpush1.msra.mxu0 %v1822
    %3948 = vmatprep.subr.mxu0 %v1831
    %3949 = vmatpush1.msra.mxu0 %v1830
    %3950 = vmatprep.subr.mxu0 %v1839
    %3951 = vmatpush1.msra.mxu0 %v1838
    %3952 = vmatprep.subr.mxu0 %v1847
    %3953 = vmatpush1.msra.mxu0 %v1846
    %3954 = vmatprep.subr.mxu0 %v1855
    %3955 = vmatpush1.msra.mxu0 %v1854
    %3956 = vmatprep.mubr.f32.mxu0 %v1081
    %3957 = vmatmul.mubr.f32.gmra.mrb[0].mxu0 %v1080
    %v3958 = vpop.f32.mrb[0].mxu0
    %v3959 = vadd.f32 %v3888, %v3958
    %v3960 = vpop.f32.mrb[0].mxu0
    %v3961 = vadd.f32 %v3890, %v3960
    %3962 = vdwg.mxu0
    %3963 = vmatprep.subr.mxu0 %v1863
    %3964 = vmatpush1.msra.mxu0 %v1862
    %3965 = vmatprep.subr.mxu0 %v1871
    %3966 = vmatpush1.msra.mxu0 %v1870
    %3967 = vmatprep.subr.mxu0 %v1879
    %3968 = vmatpush1.msra.mxu0 %v1878
    %3969 = vmatprep.subr.mxu0 %v1887
    %3970 = vmatpush1.msra.mxu0 %v1886
    %3971 = vmatprep.subr.mxu0 %v1895
    %3972 = vmatpush1.msra.mxu0 %v1894
    %3973 = vmatprep.subr.mxu0 %v1903
    %3974 = vmatpush1.msra.mxu0 %v1902
    %3975 = vmatprep.subr.mxu0 %v1911
    %3976 = vmatpush1.msra.mxu0 %v1910
    %3977 = vmatprep.subr.mxu0 %v1919
    %3978 = vmatpush1.msra.mxu0 %v1918
    %3979 = vmatprep.subr.mxu0 %v1927
    %3980 = vmatpush1.msra.mxu0 %v1926
    %3981 = vmatprep.subr.mxu0 %v1935
    %3982 = vmatpush1.msra.mxu0 %v1934
    %3983 = vmatprep.subr.mxu0 %v1943
    %3984 = vmatpush1.msra.mxu0 %v1942
    %3985 = vmatprep.subr.mxu0 %v1951
    %3986 = vmatpush1.msra.mxu0 %v1950
    %3987 = vmatprep.subr.mxu0 %v1959
    %3988 = vmatpush1.msra.mxu0 %v1958
    %3989 = vmatprep.subr.mxu0 %v1967
    %3990 = vmatpush1.msra.mxu0 %v1966
    %3991 = vmatprep.subr.mxu0 %v1975
    %3992 = vmatpush1.msra.mxu0 %v1974
    %3993 = vmatprep.subr.mxu0 %v1983
    %3994 = vmatpush1.msra.mxu0 %v1982
    %3995 = vmatprep.subr.mxu0 %v1991
    %3996 = vmatpush1.msra.mxu0 %v1990
    %3997 = vmatprep.subr.mxu0 %v1999
    %3998 = vmatpush1.msra.mxu0 %v1998
    %3999 = vmatprep.subr.mxu0 %v2007
    %4000 = vmatpush1.msra.mxu0 %v2006
    %4001 = vmatprep.subr.mxu0 %v2015
    %4002 = vmatpush1.msra.mxu0 %v2014
    %4003 = vmatprep.subr.mxu0 %v2023
    %4004 = vmatpush1.msra.mxu0 %v2022
    %4005 = vmatprep.subr.mxu0 %v2031
    %4006 = vmatpush1.msra.mxu0 %v2030
    %4007 = vmatprep.subr.mxu0 %v2039
    %4008 = vmatpush1.msra.mxu0 %v2038
    %4009 = vmatprep.subr.mxu0 %v2047
    %4010 = vmatpush1.msra.mxu0 %v2046
    %4011 = vmatprep.subr.mxu0 %v2055
    %4012 = vmatpush1.msra.mxu0 %v2054
    %4013 = vmatprep.subr.mxu0 %v2063
    %4014 = vmatpush1.msra.mxu0 %v2062
    %4015 = vmatprep.subr.mxu0 %v2071
    %4016 = vmatpush1.msra.mxu0 %v2070
    %4017 = vmatprep.subr.mxu0 %v2079
    %4018 = vmatpush1.msra.mxu0 %v2078
    %4019 = vmatprep.subr.mxu0 %v2087
    %4020 = vmatpush1.msra.mxu0 %v2086
    %4021 = vmatprep.subr.mxu0 %v2095
    %4022 = vmatpush1.msra.mxu0 %v2094
    %4023 = vmatprep.subr.mxu0 %v2103
    %4024 = vmatpush1.msra.mxu0 %v2102
    %4025 = vmatprep.subr.mxu0 %v2111
    %4026 = vmatpush1.msra.mxu0 %v2110
    %4027 = vmatprep.mubr.f32.mxu0 %v1083
    %4028 = vmatmul.mubr.f32.gmra.mrb[0].mxu0 %v1082
    %v4029 = vpop.f32.mrb[0].mxu0
    %v4030 = vadd.f32 %v3959, %v4029
    %v4031 = vpop.f32.mrb[0].mxu0
    %v4032 = vadd.f32 %v3961, %v4031
    %4033 = vdwg.mxu0
    %4034 = vmatprep.subr.mxu0 %v2119
    %4035 = vmatpush1.msra.mxu0 %v2118
    %4036 = vmatprep.subr.mxu0 %v2127
    %4037 = vmatpush1.msra.mxu0 %v2126
    %4038 = vmatprep.subr.mxu0 %v2135
    %4039 = vmatpush1.msra.mxu0 %v2134
    %4040 = vmatprep.subr.mxu0 %v2143
    %4041 = vmatpush1.msra.mxu0 %v2142
    %4042 = vmatprep.subr.mxu0 %v2151
    %4043 = vmatpush1.msra.mxu0 %v2150
    %4044 = vmatprep.subr.mxu0 %v2159
    %4045 = vmatpush1.msra.mxu0 %v2158
    %4046 = vmatprep.subr.mxu0 %v2167
    %4047 = vmatpush1.msra.mxu0 %v2166
    %4048 = vmatprep.subr.mxu0 %v2175
    %4049 = vmatpush1.msra.mxu0 %v2174
    %4050 = vmatprep.subr.mxu0 %v2183
    %4051 = vmatpush1.msra.mxu0 %v2182
    %4052 = vmatprep.subr.mxu0 %v2191
    %4053 = vmatpush1.msra.mxu0 %v2190
    %4054 = vmatprep.subr.mxu0 %v2199
    %4055 = vmatpush1.msra.mxu0 %v2198
    %4056 = vmatprep.subr.mxu0 %v2207
    %4057 = vmatpush1.msra.mxu0 %v2206
    %4058 = vmatprep.subr.mxu0 %v2215
    %4059 = vmatpush1.msra.mxu0 %v2214
    %4060 = vmatprep.subr.mxu0 %v2223
    %4061 = vmatpush1.msra.mxu0 %v2222
    %4062 = vmatprep.subr.mxu0 %v2231
    %4063 = vmatpush1.msra.mxu0 %v2230
    %4064 = vmatprep.subr.mxu0 %v2239
    %4065 = vmatpush1.msra.mxu0 %v2238
    %4066 = vmatprep.subr.mxu0 %v2247
    %4067 = vmatpush1.msra.mxu0 %v2246
    %4068 = vmatprep.subr.mxu0 %v2255
    %4069 = vmatpush1.msra.mxu0 %v2254
    %4070 = vmatprep.subr.mxu0 %v2263
    %4071 = vmatpush1.msra.mxu0 %v2262
    %4072 = vmatprep.subr.mxu0 %v2271
    %4073 = vmatpush1.msra.mxu0 %v2270
    %4074 = vmatprep.subr.mxu0 %v2279
    %4075 = vmatpush1.msra.mxu0 %v2278
    %4076 = vmatprep.subr.mxu0 %v2287
    %4077 = vmatpush1.msra.mxu0 %v2286
    %4078 = vmatprep.subr.mxu0 %v2295
    %4079 = vmatpush1.msra.mxu0 %v2294
    %4080 = vmatprep.subr.mxu0 %v2303
    %4081 = vmatpush1.msra.mxu0 %v2302
    %4082 = vmatprep.subr.mxu0 %v2311
    %4083 = vmatpush1.msra.mxu0 %v2310
    %4084 = vmatprep.subr.mxu0 %v2319
    %4085 = vmatpush1.msra.mxu0 %v2318
    %4086 = vmatprep.subr.mxu0 %v2327
    %4087 = vmatpush1.msra.mxu0 %v2326
    %4088 = vmatprep.subr.mxu0 %v2335
    %4089 = vmatpush1.msra.mxu0 %v2334
    %4090 = vmatprep.subr.mxu0 %v2343
    %4091 = vmatpush1.msra.mxu0 %v2342
    %4092 = vmatprep.subr.mxu0 %v2351
    %4093 = vmatpush1.msra.mxu0 %v2350
    %4094 = vmatprep.subr.mxu0 %v2359
    %4095 = vmatpush1.msra.mxu0 %v2358
    %4096 = vmatprep.subr.mxu0 %v2367
    %4097 = vmatpush1.msra.mxu0 %v2366
    %4098 = vmatprep.mubr.f32.mxu0 %v1085
    %4099 = vmatmul.mubr.f32.gmra.mrb[0].mxu0 %v1084
    %v4100 = vpop.f32.mrb[0].mxu0
    %v4101 = vadd.f32 %v4030, %v4100
    %v4102 = vpop.f32.mrb[0].mxu0
    %v4103 = vadd.f32 %v4032, %v4102
    %4104 = vdwg.mxu0
    %4105 = vmatprep.subr.mxu0 %v2375
    %4106 = vmatpush1.msra.mxu0 %v2374
    %4107 = vmatprep.subr.mxu0 %v2383
    %4108 = vmatpush1.msra.mxu0 %v2382
    %4109 = vmatprep.subr.mxu0 %v2391
    %4110 = vmatpush1.msra.mxu0 %v2390
    %4111 = vmatprep.subr.mxu0 %v2399
    %4112 = vmatpush1.msra.mxu0 %v2398
    %4113 = vmatprep.subr.mxu0 %v2407
    %4114 = vmatpush1.msra.mxu0 %v2406
    %4115 = vmatprep.subr.mxu0 %v2415
    %4116 = vmatpush1.msra.mxu0 %v2414
    %4117 = vmatprep.subr.mxu0 %v2423
    %4118 = vmatpush1.msra.mxu0 %v2422
    %4119 = vmatprep.subr.mxu0 %v2431
    %4120 = vmatpush1.msra.mxu0 %v2430
    %4121 = vmatprep.subr.mxu0 %v2439
    %4122 = vmatpush1.msra.mxu0 %v2438
    %4123 = vmatprep.subr.mxu0 %v2447
    %4124 = vmatpush1.msra.mxu0 %v2446
    %4125 = vmatprep.subr.mxu0 %v2455
    %4126 = vmatpush1.msra.mxu0 %v2454
    %4127 = vmatprep.subr.mxu0 %v2463
    %4128 = vmatpush1.msra.mxu0 %v2462
    %4129 = vmatprep.subr.mxu0 %v2471
    %4130 = vmatpush1.msra.mxu0 %v2470
    %4131 = vmatprep.subr.mxu0 %v2479
    %4132 = vmatpush1.msra.mxu0 %v2478
    %4133 = vmatprep.subr.mxu0 %v2487
    %4134 = vmatpush1.msra.mxu0 %v2486
    %4135 = vmatprep.subr.mxu0 %v2495
    %4136 = vmatpush1.msra.mxu0 %v2494
    %4137 = vmatprep.subr.mxu0 %v2503
    %4138 = vmatpush1.msra.mxu0 %v2502
    %4139 = vmatprep.subr.mxu0 %v2511
    %4140 = vmatpush1.msra.mxu0 %v2510
    %4141 = vmatprep.subr.mxu0 %v2519
    %4142 = vmatpush1.msra.mxu0 %v2518
    %4143 = vmatprep.subr.mxu0 %v2527
    %4144 = vmatpush1.msra.mxu0 %v2526
    %4145 = vmatprep.subr.mxu0 %v2535
    %4146 = vmatpush1.msra.mxu0 %v2534
    %4147 = vmatprep.subr.mxu0 %v2543
    %4148 = vmatpush1.msra.mxu0 %v2542
    %4149 = vmatprep.subr.mxu0 %v2551
    %4150 = vmatpush1.msra.mxu0 %v2550
    %4151 = vmatprep.subr.mxu0 %v2559
    %4152 = vmatpush1.msra.mxu0 %v2558
    %4153 = vmatprep.subr.mxu0 %v2567
    %4154 = vmatpush1.msra.mxu0 %v2566
    %4155 = vmatprep.subr.mxu0 %v2575
    %4156 = vmatpush1.msra.mxu0 %v2574
    %4157 = vmatprep.subr.mxu0 %v2583
    %4158 = vmatpush1.msra.mxu0 %v2582
    %4159 = vmatprep.subr.mxu0 %v2591
    %4160 = vmatpush1.msra.mxu0 %v2590
    %4161 = vmatprep.subr.mxu0 %v2599
    %4162 = vmatpush1.msra.mxu0 %v2598
    %4163 = vmatprep.subr.mxu0 %v2607
    %4164 = vmatpush1.msra.mxu0 %v2606
    %4165 = vmatprep.subr.mxu0 %v2615
    %4166 = vmatpush1.msra.mxu0 %v2614
    %4167 = vmatprep.subr.mxu0 %v2623
    %4168 = vmatpush1.msra.mxu0 %v2622
    %4169 = vmatprep.mubr.f32.mxu0 %v1087
    %4170 = vmatmul.mubr.f32.gmra.mrb[0].mxu0 %v1086
    %v4171 = vpop.f32.mrb[0].mxu0
    %v4172 = vadd.f32 %v4101, %v4171
    %v4173 = vpop.f32.mrb[0].mxu0
    %v4174 = vadd.f32 %v4103, %v4173
    %4175 = vdwg.mxu0
    %4176 = vmatprep.subr.mxu0 %v2631
    %4177 = vmatpush1.msra.mxu0 %v2630
    %4178 = vmatprep.subr.mxu0 %v2639
    %4179 = vmatpush1.msra.mxu0 %v2638
    %4180 = vmatprep.subr.mxu0 %v2647
    %4181 = vmatpush1.msra.mxu0 %v2646
    %4182 = vmatprep.subr.mxu0 %v2655
    %4183 = vmatpush1.msra.mxu0 %v2654
    %4184 = vmatprep.subr.mxu0 %v2663
    %4185 = vmatpush1.msra.mxu0 %v2662
    %4186 = vmatprep.subr.mxu0 %v2671
    %4187 = vmatpush1.msra.mxu0 %v2670
    %4188 = vmatprep.subr.mxu0 %v2679
    %4189 = vmatpush1.msra.mxu0 %v2678
    %4190 = vmatprep.subr.mxu0 %v2687
    %4191 = vmatpush1.msra.mxu0 %v2686
    %4192 = vmatprep.subr.mxu0 %v2695
    %4193 = vmatpush1.msra.mxu0 %v2694
    %4194 = vmatprep.subr.mxu0 %v2703
    %4195 = vmatpush1.msra.mxu0 %v2702
    %4196 = vmatprep.subr.mxu0 %v2711
    %4197 = vmatpush1.msra.mxu0 %v2710
    %4198 = vmatprep.subr.mxu0 %v2719
    %4199 = vmatpush1.msra.mxu0 %v2718
    %4200 = vmatprep.subr.mxu0 %v2727
    %4201 = vmatpush1.msra.mxu0 %v2726
    %4202 = vmatprep.subr.mxu0 %v2735
    %4203 = vmatpush1.msra.mxu0 %v2734
    %4204 = vmatprep.subr.mxu0 %v2743
    %4205 = vmatpush1.msra.mxu0 %v2742
    %4206 = vmatprep.subr.mxu0 %v2751
    %4207 = vmatpush1.msra.mxu0 %v2750
    %4208 = vmatprep.subr.mxu0 %v2759
    %4209 = vmatpush1.msra.mxu0 %v2758
    %4210 = vmatprep.subr.mxu0 %v2767
    %4211 = vmatpush1.msra.mxu0 %v2766
    %4212 = vmatprep.subr.mxu0 %v2775
    %4213 = vmatpush1.msra.mxu0 %v2774
    %4214 = vmatprep.subr.mxu0 %v2783
    %4215 = vmatpush1.msra.mxu0 %v2782
    %4216 = vmatprep.subr.mxu0 %v2791
    %4217 = vmatpush1.msra.mxu0 %v2790
    %4218 = vmatprep.subr.mxu0 %v2799
    %4219 = vmatpush1.msra.mxu0 %v2798
    %4220 = vmatprep.subr.mxu0 %v2807
    %4221 = vmatpush1.msra.mxu0 %v2806
    %4222 = vmatprep.subr.mxu0 %v2815
    %4223 = vmatpush1.msra.mxu0 %v2814
    %4224 = vmatprep.subr.mxu0 %v2823
    %4225 = vmatpush1.msra.mxu0 %v2822
    %4226 = vmatprep.subr.mxu0 %v2831
    %4227 = vmatpush1.msra.mxu0 %v2830
    %4228 = vmatprep.subr.mxu0 %v2839
    %4229 = vmatpush1.msra.mxu0 %v2838
    %4230 = vmatprep.subr.mxu0 %v2847
    %4231 = vmatpush1.msra.mxu0 %v2846
    %4232 = vmatprep.subr.mxu0 %v2855
    %4233 = vmatpush1.msra.mxu0 %v2854
    %4234 = vmatprep.subr.mxu0 %v2863
    %4235 = vmatpush1.msra.mxu0 %v2862
    %4236 = vmatprep.subr.mxu0 %v2871
    %4237 = vmatpush1.msra.mxu0 %v2870
    %4238 = vmatprep.subr.mxu0 %v2879
    %4239 = vmatpush1.msra.mxu0 %v2878
    %4240 = vmatprep.mubr.f32.mxu0 %v1089
    %4241 = vmatmul.mubr.f32.gmra.mrb[0].mxu0 %v1088
    %v4242 = vpop.f32.mrb[0].mxu0
    %v4243 = vadd.f32 %v4172, %v4242
    %v4244 = vpop.f32.mrb[0].mxu0
    %v4245 = vadd.f32 %v4174, %v4244
    %4246 = vdwg.mxu0
    %4247 = vmatprep.subr.mxu0 %v2887
    %4248 = vmatpush1.msra.mxu0 %v2886
    %4249 = vmatprep.subr.mxu0 %v2895
    %4250 = vmatpush1.msra.mxu0 %v2894
    %4251 = vmatprep.subr.mxu0 %v2903
    %4252 = vmatpush1.msra.mxu0 %v2902
    %4253 = vmatprep.subr.mxu0 %v2911
    %4254 = vmatpush1.msra.mxu0 %v2910
    %4255 = vmatprep.subr.mxu0 %v2919
    %4256 = vmatpush1.msra.mxu0 %v2918
    %4257 = vmatprep.subr.mxu0 %v2927
    %4258 = vmatpush1.msra.mxu0 %v2926
    %4259 = vmatprep.subr.mxu0 %v2935
    %4260 = vmatpush1.msra.mxu0 %v2934
    %4261 = vmatprep.subr.mxu0 %v2943
    %4262 = vmatpush1.msra.mxu0 %v2942
    %4263 = vmatprep.subr.mxu0 %v2951
    %4264 = vmatpush1.msra.mxu0 %v2950
    %4265 = vmatprep.subr.mxu0 %v2959
    %4266 = vmatpush1.msra.mxu0 %v2958
    %4267 = vmatprep.subr.mxu0 %v2967
    %4268 = vmatpush1.msra.mxu0 %v2966
    %4269 = vmatprep.subr.mxu0 %v2975
    %4270 = vmatpush1.msra.mxu0 %v2974
    %4271 = vmatprep.subr.mxu0 %v2983
    %4272 = vmatpush1.msra.mxu0 %v2982
    %4273 = vmatprep.subr.mxu0 %v2991
    %4274 = vmatpush1.msra.mxu0 %v2990
    %4275 = vmatprep.subr.mxu0 %v2999
    %4276 = vmatpush1.msra.mxu0 %v2998
    %4277 = vmatprep.subr.mxu0 %v3007
    %4278 = vmatpush1.msra.mxu0 %v3006
    %4279 = vmatprep.subr.mxu0 %v3015
    %4280 = vmatpush1.msra.mxu0 %v3014
    %4281 = vmatprep.subr.mxu0 %v3023
    %4282 = vmatpush1.msra.mxu0 %v3022
    %4283 = vmatprep.subr.mxu0 %v3031
    %4284 = vmatpush1.msra.mxu0 %v3030
    %4285 = vmatprep.subr.mxu0 %v3039
    %4286 = vmatpush1.msra.mxu0 %v3038
    %4287 = vmatprep.subr.mxu0 %v3047
    %4288 = vmatpush1.msra.mxu0 %v3046
    %4289 = vmatprep.subr.mxu0 %v3055
    %4290 = vmatpush1.msra.mxu0 %v3054
    %4291 = vmatprep.subr.mxu0 %v3063
    %4292 = vmatpush1.msra.mxu0 %v3062
    %4293 = vmatprep.subr.mxu0 %v3071
    %4294 = vmatpush1.msra.mxu0 %v3070
    %4295 = vmatprep.subr.mxu0 %v3079
    %4296 = vmatpush1.msra.mxu0 %v3078
    %4297 = vmatprep.subr.mxu0 %v3087
    %4298 = vmatpush1.msra.mxu0 %v3086
    %4299 = vmatprep.subr.mxu0 %v3095
    %4300 = vmatpush1.msra.mxu0 %v3094
    %4301 = vmatprep.subr.mxu0 %v3103
    %4302 = vmatpush1.msra.mxu0 %v3102
    %4303 = vmatprep.subr.mxu0 %v3111
    %4304 = vmatpush1.msra.mxu0 %v3110
    %4305 = vmatprep.subr.mxu0 %v3119
    %4306 = vmatpush1.msra.mxu0 %v3118
    %4307 = vmatprep.subr.mxu0 %v3127
    %4308 = vmatpush1.msra.mxu0 %v3126
    %4309 = vmatprep.subr.mxu0 %v3135
    %4310 = vmatpush1.msra.mxu0 %v3134
    %4311 = vmatprep.mubr.f32.mxu0 %v1091
    %4312 = vmatmul.mubr.f32.gmra.mrb[0].mxu0 %v1090
    %v4313 = vpop.f32.mrb[0].mxu0
    %v4314 = vadd.f32 %v4243, %v4313
    %v4315 = vpop.f32.mrb[0].mxu0
    %v4316 = vadd.f32 %v4245, %v4315
    %4317 = vdwg.mxu0
    %4318 = vmatprep.subr.mxu0 %v1097
    %4319 = vmatpush1.msra.mxu0 %v1096
    %4320 = vmatprep.subr.mxu0 %v1105
    %4321 = vmatpush1.msra.mxu0 %v1104
    %4322 = vmatprep.subr.mxu0 %v1113
    %4323 = vmatpush1.msra.mxu0 %v1112
    %4324 = vmatprep.subr.mxu0 %v1121
    %4325 = vmatpush1.msra.mxu0 %v1120
    %4326 = vmatprep.subr.mxu0 %v1129
    %4327 = vmatpush1.msra.mxu0 %v1128
    %4328 = vmatprep.subr.mxu0 %v1137
    %4329 = vmatpush1.msra.mxu0 %v1136
    %4330 = vmatprep.subr.mxu0 %v1145
    %4331 = vmatpush1.msra.mxu0 %v1144
    %4332 = vmatprep.subr.mxu0 %v1153
    %4333 = vmatpush1.msra.mxu0 %v1152
    %4334 = vmatprep.subr.mxu0 %v1161
    %4335 = vmatpush1.msra.mxu0 %v1160
    %4336 = vmatprep.subr.mxu0 %v1169
    %4337 = vmatpush1.msra.mxu0 %v1168
    %4338 = vmatprep.subr.mxu0 %v1177
    %4339 = vmatpush1.msra.mxu0 %v1176
    %4340 = vmatprep.subr.mxu0 %v1185
    %4341 = vmatpush1.msra.mxu0 %v1184
    %4342 = vmatprep.subr.mxu0 %v1193
    %4343 = vmatpush1.msra.mxu0 %v1192
    %4344 = vmatprep.subr.mxu0 %v1201
    %4345 = vmatpush1.msra.mxu0 %v1200
    %4346 = vmatprep.subr.mxu0 %v1209
    %4347 = vmatpush1.msra.mxu0 %v1208
    %4348 = vmatprep.subr.mxu0 %v1217
    %4349 = vmatpush1.msra.mxu0 %v1216
    %4350 = vmatprep.subr.mxu0 %v1225
    %4351 = vmatpush1.msra.mxu0 %v1224
    %4352 = vmatprep.subr.mxu0 %v1233
    %4353 = vmatpush1.msra.mxu0 %v1232
    %4354 = vmatprep.subr.mxu0 %v1241
    %4355 = vmatpush1.msra.mxu0 %v1240
    %4356 = vmatprep.subr.mxu0 %v1249
    %4357 = vmatpush1.msra.mxu0 %v1248
    %4358 = vmatprep.subr.mxu0 %v1257
    %4359 = vmatpush1.msra.mxu0 %v1256
    %4360 = vmatprep.subr.mxu0 %v1265
    %4361 = vmatpush1.msra.mxu0 %v1264
    %4362 = vmatprep.subr.mxu0 %v1273
    %4363 = vmatpush1.msra.mxu0 %v1272
    %4364 = vmatprep.subr.mxu0 %v1281
    %4365 = vmatpush1.msra.mxu0 %v1280
    %4366 = vmatprep.subr.mxu0 %v1289
    %4367 = vmatpush1.msra.mxu0 %v1288
    %4368 = vmatprep.subr.mxu0 %v1297
    %4369 = vmatpush1.msra.mxu0 %v1296
    %4370 = vmatprep.subr.mxu0 %v1305
    %4371 = vmatpush1.msra.mxu0 %v1304
    %4372 = vmatprep.subr.mxu0 %v1313
    %4373 = vmatpush1.msra.mxu0 %v1312
    %4374 = vmatprep.subr.mxu0 %v1321
    %4375 = vmatpush1.msra.mxu0 %v1320
    %4376 = vmatprep.subr.mxu0 %v1329
    %4377 = vmatpush1.msra.mxu0 %v1328
    %4378 = vmatprep.subr.mxu0 %v1337
    %4379 = vmatpush1.msra.mxu0 %v1336
    %4380 = vmatprep.subr.mxu0 %v1345
    %4381 = vmatpush1.msra.mxu0 %v1344
    %4382 = vmatprep.mubr.f32.mxu0 %v1077
    %4383 = vmatmul.mubr.f32.gmra.mrb[0].mxu0 %v1076
    %v4384 = vpop.f32.mrb[0].mxu0
    %v4385 = vadd.f32 %v3161, %v4384
    %v4386 = vpop.f32.mrb[0].mxu0
    %v4387 = vadd.f32 %v3165, %v4386
    %4388 = vdwg.mxu0
    %4389 = vmatprep.subr.mxu0 %v1353
    %4390 = vmatpush1.msra.mxu0 %v1352
    %4391 = vmatprep.subr.mxu0 %v1361
    %4392 = vmatpush1.msra.mxu0 %v1360
    %4393 = vmatprep.subr.mxu0 %v1369
    %4394 = vmatpush1.msra.mxu0 %v1368
    %4395 = vmatprep.subr.mxu0 %v1377
    %4396 = vmatpush1.msra.mxu0 %v1376
    %4397 = vmatprep.subr.mxu0 %v1385
    %4398 = vmatpush1.msra.mxu0 %v1384
    %4399 = vmatprep.subr.mxu0 %v1393
    %4400 = vmatpush1.msra.mxu0 %v1392
    %4401 = vmatprep.subr.mxu0 %v1401
    %4402 = vmatpush1.msra.mxu0 %v1400
    %4403 = vmatprep.subr.mxu0 %v1409
    %4404 = vmatpush1.msra.mxu0 %v1408
    %4405 = vmatprep.subr.mxu0 %v1417
    %4406 = vmatpush1.msra.mxu0 %v1416
    %4407 = vmatprep.subr.mxu0 %v1425
    %4408 = vmatpush1.msra.mxu0 %v1424
    %4409 = vmatprep.subr.mxu0 %v1433
    %4410 = vmatpush1.msra.mxu0 %v1432
    %4411 = vmatprep.subr.mxu0 %v1441
    %4412 = vmatpush1.msra.mxu0 %v1440
    %4413 = vmatprep.subr.mxu0 %v1449
    %4414 = vmatpush1.msra.mxu0 %v1448
    %4415 = vmatprep.subr.mxu0 %v1457
    %4416 = vmatpush1.msra.mxu0 %v1456
    %4417 = vmatprep.subr.mxu0 %v1465
    %4418 = vmatpush1.msra.mxu0 %v1464
    %4419 = vmatprep.subr.mxu0 %v1473
    %4420 = vmatpush1.msra.mxu0 %v1472
    %4421 = vmatprep.subr.mxu0 %v1481
    %4422 = vmatpush1.msra.mxu0 %v1480
    %4423 = vmatprep.subr.mxu0 %v1489
    %4424 = vmatpush1.msra.mxu0 %v1488
    %4425 = vmatprep.subr.mxu0 %v1497
    %4426 = vmatpush1.msra.mxu0 %v1496
    %4427 = vmatprep.subr.mxu0 %v1505
    %4428 = vmatpush1.msra.mxu0 %v1504
    %4429 = vmatprep.subr.mxu0 %v1513
    %4430 = vmatpush1.msra.mxu0 %v1512
    %4431 = vmatprep.subr.mxu0 %v1521
    %4432 = vmatpush1.msra.mxu0 %v1520
    %4433 = vmatprep.subr.mxu0 %v1529
    %4434 = vmatpush1.msra.mxu0 %v1528
    %4435 = vmatprep.subr.mxu0 %v1537
    %4436 = vmatpush1.msra.mxu0 %v1536
    %4437 = vmatprep.subr.mxu0 %v1545
    %4438 = vmatpush1.msra.mxu0 %v1544
    %4439 = vmatprep.subr.mxu0 %v1553
    %4440 = vmatpush1.msra.mxu0 %v1552
    %4441 = vmatprep.subr.mxu0 %v1561
    %4442 = vmatpush1.msra.mxu0 %v1560
    %4443 = vmatprep.subr.mxu0 %v1569
    %4444 = vmatpush1.msra.mxu0 %v1568
    %4445 = vmatprep.subr.mxu0 %v1577
    %4446 = vmatpush1.msra.mxu0 %v1576
    %4447 = vmatprep.subr.mxu0 %v1585
    %4448 = vmatpush1.msra.mxu0 %v1584
    %4449 = vmatprep.subr.mxu0 %v1593
    %4450 = vmatpush1.msra.mxu0 %v1592
    %4451 = vmatprep.subr.mxu0 %v1601
    %4452 = vmatpush1.msra.mxu0 %v1600
    %4453 = vmatprep.mubr.f32.mxu0 %v1079
    %4454 = vmatmul.mubr.f32.gmra.mrb[0].mxu0 %v1078
    %v4455 = vpop.f32.mrb[0].mxu0
    %v4456 = vadd.f32 %v4385, %v4455
    %v4457 = vpop.f32.mrb[0].mxu0
    %v4458 = vadd.f32 %v4387, %v4457
    %4459 = vdwg.mxu0
    %4460 = vmatprep.subr.mxu0 %v1609
    %4461 = vmatpush1.msra.mxu0 %v1608
    %4462 = vmatprep.subr.mxu0 %v1617
    %4463 = vmatpush1.msra.mxu0 %v1616
    %4464 = vmatprep.subr.mxu0 %v1625
    %4465 = vmatpush1.msra.mxu0 %v1624
    %4466 = vmatprep.subr.mxu0 %v1633
    %4467 = vmatpush1.msra.mxu0 %v1632
    %4468 = vmatprep.subr.mxu0 %v1641
    %4469 = vmatpush1.msra.mxu0 %v1640
    %4470 = vmatprep.subr.mxu0 %v1649
    %4471 = vmatpush1.msra.mxu0 %v1648
    %4472 = vmatprep.subr.mxu0 %v1657
    %4473 = vmatpush1.msra.mxu0 %v1656
    %4474 = vmatprep.subr.mxu0 %v1665
    %4475 = vmatpush1.msra.mxu0 %v1664
    %4476 = vmatprep.subr.mxu0 %v1673
    %4477 = vmatpush1.msra.mxu0 %v1672
    %4478 = vmatprep.subr.mxu0 %v1681
    %4479 = vmatpush1.msra.mxu0 %v1680
    %4480 = vmatprep.subr.mxu0 %v1689
    %4481 = vmatpush1.msra.mxu0 %v1688
    %4482 = vmatprep.subr.mxu0 %v1697
    %4483 = vmatpush1.msra.mxu0 %v1696
    %4484 = vmatprep.subr.mxu0 %v1705
    %4485 = vmatpush1.msra.mxu0 %v1704
    %4486 = vmatprep.subr.mxu0 %v1713
    %4487 = vmatpush1.msra.mxu0 %v1712
    %4488 = vmatprep.subr.mxu0 %v1721
    %4489 = vmatpush1.msra.mxu0 %v1720
    %4490 = vmatprep.subr.mxu0 %v1729
    %4491 = vmatpush1.msra.mxu0 %v1728
    %4492 = vmatprep.subr.mxu0 %v1737
    %4493 = vmatpush1.msra.mxu0 %v1736
    %4494 = vmatprep.subr.mxu0 %v1745
    %4495 = vmatpush1.msra.mxu0 %v1744
    %4496 = vmatprep.subr.mxu0 %v1753
    %4497 = vmatpush1.msra.mxu0 %v1752
    %4498 = vmatprep.subr.mxu0 %v1761
    %4499 = vmatpush1.msra.mxu0 %v1760
    %4500 = vmatprep.subr.mxu0 %v1769
    %4501 = vmatpush1.msra.mxu0 %v1768
    %4502 = vmatprep.subr.mxu0 %v1777
    %4503 = vmatpush1.msra.mxu0 %v1776
    %4504 = vmatprep.subr.mxu0 %v1785
    %4505 = vmatpush1.msra.mxu0 %v1784
    %4506 = vmatprep.subr.mxu0 %v1793
    %4507 = vmatpush1.msra.mxu0 %v1792
    %4508 = vmatprep.subr.mxu0 %v1801
    %4509 = vmatpush1.msra.mxu0 %v1800
    %4510 = vmatprep.subr.mxu0 %v1809
    %4511 = vmatpush1.msra.mxu0 %v1808
    %4512 = vmatprep.subr.mxu0 %v1817
    %4513 = vmatpush1.msra.mxu0 %v1816
    %4514 = vmatprep.subr.mxu0 %v1825
    %4515 = vmatpush1.msra.mxu0 %v1824
    %4516 = vmatprep.subr.mxu0 %v1833
    %4517 = vmatpush1.msra.mxu0 %v1832
    %4518 = vmatprep.subr.mxu0 %v1841
    %4519 = vmatpush1.msra.mxu0 %v1840
    %4520 = vmatprep.subr.mxu0 %v1849
    %4521 = vmatpush1.msra.mxu0 %v1848
    %4522 = vmatprep.subr.mxu0 %v1857
    %4523 = vmatpush1.msra.mxu0 %v1856
    %4524 = vmatprep.mubr.f32.mxu0 %v1081
    %4525 = vmatmul.mubr.f32.gmra.mrb[0].mxu0 %v1080
    %v4526 = vpop.f32.mrb[0].mxu0
    %v4527 = vadd.f32 %v4456, %v4526
    %v4528 = vpop.f32.mrb[0].mxu0
    %v4529 = vadd.f32 %v4458, %v4528
    %4530 = vdwg.mxu0
    %4531 = vmatprep.subr.mxu0 %v1865
    %4532 = vmatpush1.msra.mxu0 %v1864
    %4533 = vmatprep.subr.mxu0 %v1873
    %4534 = vmatpush1.msra.mxu0 %v1872
    %4535 = vmatprep.subr.mxu0 %v1881
    %4536 = vmatpush1.msra.mxu0 %v1880
    %4537 = vmatprep.subr.mxu0 %v1889
    %4538 = vmatpush1.msra.mxu0 %v1888
    %4539 = vmatprep.subr.mxu0 %v1897
    %4540 = vmatpush1.msra.mxu0 %v1896
    %4541 = vmatprep.subr.mxu0 %v1905
    %4542 = vmatpush1.msra.mxu0 %v1904
    %4543 = vmatprep.subr.mxu0 %v1913
    %4544 = vmatpush1.msra.mxu0 %v1912
    %4545 = vmatprep.subr.mxu0 %v1921
    %4546 = vmatpush1.msra.mxu0 %v1920
    %4547 = vmatprep.subr.mxu0 %v1929
    %4548 = vmatpush1.msra.mxu0 %v1928
    %4549 = vmatprep.subr.mxu0 %v1937
    %4550 = vmatpush1.msra.mxu0 %v1936
    %4551 = vmatprep.subr.mxu0 %v1945
    %4552 = vmatpush1.msra.mxu0 %v1944
    %4553 = vmatprep.subr.mxu0 %v1953
    %4554 = vmatpush1.msra.mxu0 %v1952
    %4555 = vmatprep.subr.mxu0 %v1961
    %4556 = vmatpush1.msra.mxu0 %v1960
    %4557 = vmatprep.subr.mxu0 %v1969
    %4558 = vmatpush1.msra.mxu0 %v1968
    %4559 = vmatprep.subr.mxu0 %v1977
    %4560 = vmatpush1.msra.mxu0 %v1976
    %4561 = vmatprep.subr.mxu0 %v1985
    %4562 = vmatpush1.msra.mxu0 %v1984
    %4563 = vmatprep.subr.mxu0 %v1993
    %4564 = vmatpush1.msra.mxu0 %v1992
    %4565 = vmatprep.subr.mxu0 %v2001
    %4566 = vmatpush1.msra.mxu0 %v2000
    %4567 = vmatprep.subr.mxu0 %v2009
    %4568 = vmatpush1.msra.mxu0 %v2008
    %4569 = vmatprep.subr.mxu0 %v2017
    %4570 = vmatpush1.msra.mxu0 %v2016
    %4571 = vmatprep.subr.mxu0 %v2025
    %4572 = vmatpush1.msra.mxu0 %v2024
    %4573 = vmatprep.subr.mxu0 %v2033
    %4574 = vmatpush1.msra.mxu0 %v2032
    %4575 = vmatprep.subr.mxu0 %v2041
    %4576 = vmatpush1.msra.mxu0 %v2040
    %4577 = vmatprep.subr.mxu0 %v2049
    %4578 = vmatpush1.msra.mxu0 %v2048
    %4579 = vmatprep.subr.mxu0 %v2057
    %4580 = vmatpush1.msra.mxu0 %v2056
    %4581 = vmatprep.subr.mxu0 %v2065
    %4582 = vmatpush1.msra.mxu0 %v2064
    %4583 = vmatprep.subr.mxu0 %v2073
    %4584 = vmatpush1.msra.mxu0 %v2072
    %4585 = vmatprep.subr.mxu0 %v2081
    %4586 = vmatpush1.msra.mxu0 %v2080
    %4587 = vmatprep.subr.mxu0 %v2089
    %4588 = vmatpush1.msra.mxu0 %v2088
    %4589 = vmatprep.subr.mxu0 %v2097
    %4590 = vmatpush1.msra.mxu0 %v2096
    %4591 = vmatprep.subr.mxu0 %v2105
    %4592 = vmatpush1.msra.mxu0 %v2104
    %4593 = vmatprep.subr.mxu0 %v2113
    %4594 = vmatpush1.msra.mxu0 %v2112
    %4595 = vmatprep.mubr.f32.mxu0 %v1083
    %4596 = vmatmul.mubr.f32.gmra.mrb[0].mxu0 %v1082
    %v4597 = vpop.f32.mrb[0].mxu0
    %v4598 = vadd.f32 %v4527, %v4597
    %v4599 = vpop.f32.mrb[0].mxu0
    %v4600 = vadd.f32 %v4529, %v4599
    %4601 = vdwg.mxu0
    %4602 = vmatprep.subr.mxu0 %v2121
    %4603 = vmatpush1.msra.mxu0 %v2120
    %4604 = vmatprep.subr.mxu0 %v2129
    %4605 = vmatpush1.msra.mxu0 %v2128
    %4606 = vmatprep.subr.mxu0 %v2137
    %4607 = vmatpush1.msra.mxu0 %v2136
    %4608 = vmatprep.subr.mxu0 %v2145
    %4609 = vmatpush1.msra.mxu0 %v2144
    %4610 = vmatprep.subr.mxu0 %v2153
    %4611 = vmatpush1.msra.mxu0 %v2152
    %4612 = vmatprep.subr.mxu0 %v2161
    %4613 = vmatpush1.msra.mxu0 %v2160
    %4614 = vmatprep.subr.mxu0 %v2169
    %4615 = vmatpush1.msra.mxu0 %v2168
    %4616 = vmatprep.subr.mxu0 %v2177
    %4617 = vmatpush1.msra.mxu0 %v2176
    %4618 = vmatprep.subr.mxu0 %v2185
    %4619 = vmatpush1.msra.mxu0 %v2184
    %4620 = vmatprep.subr.mxu0 %v2193
    %4621 = vmatpush1.msra.mxu0 %v2192
    %4622 = vmatprep.subr.mxu0 %v2201
    %4623 = vmatpush1.msra.mxu0 %v2200
    %4624 = vmatprep.subr.mxu0 %v2209
    %4625 = vmatpush1.msra.mxu0 %v2208
    %4626 = vmatprep.subr.mxu0 %v2217
    %4627 = vmatpush1.msra.mxu0 %v2216
    %4628 = vmatprep.subr.mxu0 %v2225
    %4629 = vmatpush1.msra.mxu0 %v2224
    %4630 = vmatprep.subr.mxu0 %v2233
    %4631 = vmatpush1.msra.mxu0 %v2232
    %4632 = vmatprep.subr.mxu0 %v2241
    %4633 = vmatpush1.msra.mxu0 %v2240
    %4634 = vmatprep.subr.mxu0 %v2249
    %4635 = vmatpush1.msra.mxu0 %v2248
    %4636 = vmatprep.subr.mxu0 %v2257
    %4637 = vmatpush1.msra.mxu0 %v2256
    %4638 = vmatprep.subr.mxu0 %v2265
    %4639 = vmatpush1.msra.mxu0 %v2264
    %4640 = vmatprep.subr.mxu0 %v2273
    %4641 = vmatpush1.msra.mxu0 %v2272
    %4642 = vmatprep.subr.mxu0 %v2281
    %4643 = vmatpush1.msra.mxu0 %v2280
    %4644 = vmatprep.subr.mxu0 %v2289
    %4645 = vmatpush1.msra.mxu0 %v2288
    %4646 = vmatprep.subr.mxu0 %v2297
    %4647 = vmatpush1.msra.mxu0 %v2296
    %4648 = vmatprep.subr.mxu0 %v2305
    %4649 = vmatpush1.msra.mxu0 %v2304
    %4650 = vmatprep.subr.mxu0 %v2313
    %4651 = vmatpush1.msra.mxu0 %v2312
    %4652 = vmatprep.subr.mxu0 %v2321
    %4653 = vmatpush1.msra.mxu0 %v2320
    %4654 = vmatprep.subr.mxu0 %v2329
    %4655 = vmatpush1.msra.mxu0 %v2328
    %4656 = vmatprep.subr.mxu0 %v2337
    %4657 = vmatpush1.msra.mxu0 %v2336
    %4658 = vmatprep.subr.mxu0 %v2345
    %4659 = vmatpush1.msra.mxu0 %v2344
    %4660 = vmatprep.subr.mxu0 %v2353
    %4661 = vmatpush1.msra.mxu0 %v2352
    %4662 = vmatprep.subr.mxu0 %v2361
    %4663 = vmatpush1.msra.mxu0 %v2360
    %4664 = vmatprep.subr.mxu0 %v2369
    %4665 = vmatpush1.msra.mxu0 %v2368
    %4666 = vmatprep.mubr.f32.mxu0 %v1085
    %4667 = vmatmul.mubr.f32.gmra.mrb[0].mxu0 %v1084
    %v4668 = vpop.f32.mrb[0].mxu0
    %v4669 = vadd.f32 %v4598, %v4668
    %v4670 = vpop.f32.mrb[0].mxu0
    %v4671 = vadd.f32 %v4600, %v4670
    %4672 = vdwg.mxu0
    %4673 = vmatprep.subr.mxu0 %v2377
    %4674 = vmatpush1.msra.mxu0 %v2376
    %4675 = vmatprep.subr.mxu0 %v2385
    %4676 = vmatpush1.msra.mxu0 %v2384
    %4677 = vmatprep.subr.mxu0 %v2393
    %4678 = vmatpush1.msra.mxu0 %v2392
    %4679 = vmatprep.subr.mxu0 %v2401
    %4680 = vmatpush1.msra.mxu0 %v2400
    %4681 = vmatprep.subr.mxu0 %v2409
    %4682 = vmatpush1.msra.mxu0 %v2408
    %4683 = vmatprep.subr.mxu0 %v2417
    %4684 = vmatpush1.msra.mxu0 %v2416
    %4685 = vmatprep.subr.mxu0 %v2425
    %4686 = vmatpush1.msra.mxu0 %v2424
    %4687 = vmatprep.subr.mxu0 %v2433
    %4688 = vmatpush1.msra.mxu0 %v2432
    %4689 = vmatprep.subr.mxu0 %v2441
    %4690 = vmatpush1.msra.mxu0 %v2440
    %4691 = vmatprep.subr.mxu0 %v2449
    %4692 = vmatpush1.msra.mxu0 %v2448
    %4693 = vmatprep.subr.mxu0 %v2457
    %4694 = vmatpush1.msra.mxu0 %v2456
    %4695 = vmatprep.subr.mxu0 %v2465
    %4696 = vmatpush1.msra.mxu0 %v2464
    %4697 = vmatprep.subr.mxu0 %v2473
    %4698 = vmatpush1.msra.mxu0 %v2472
    %4699 = vmatprep.subr.mxu0 %v2481
    %4700 = vmatpush1.msra.mxu0 %v2480
    %4701 = vmatprep.subr.mxu0 %v2489
    %4702 = vmatpush1.msra.mxu0 %v2488
    %4703 = vmatprep.subr.mxu0 %v2497
    %4704 = vmatpush1.msra.mxu0 %v2496
    %4705 = vmatprep.subr.mxu0 %v2505
    %4706 = vmatpush1.msra.mxu0 %v2504
    %4707 = vmatprep.subr.mxu0 %v2513
    %4708 = vmatpush1.msra.mxu0 %v2512
    %4709 = vmatprep.subr.mxu0 %v2521
    %4710 = vmatpush1.msra.mxu0 %v2520
    %4711 = vmatprep.subr.mxu0 %v2529
    %4712 = vmatpush1.msra.mxu0 %v2528
    %4713 = vmatprep.subr.mxu0 %v2537
    %4714 = vmatpush1.msra.mxu0 %v2536
    %4715 = vmatprep.subr.mxu0 %v2545
    %4716 = vmatpush1.msra.mxu0 %v2544
    %4717 = vmatprep.subr.mxu0 %v2553
    %4718 = vmatpush1.msra.mxu0 %v2552
    %4719 = vmatprep.subr.mxu0 %v2561
    %4720 = vmatpush1.msra.mxu0 %v2560
    %4721 = vmatprep.subr.mxu0 %v2569
    %4722 = vmatpush1.msra.mxu0 %v2568
    %4723 = vmatprep.subr.mxu0 %v2577
    %4724 = vmatpush1.msra.mxu0 %v2576
    %4725 = vmatprep.subr.mxu0 %v2585
    %4726 = vmatpush1.msra.mxu0 %v2584
    %4727 = vmatprep.subr.mxu0 %v2593
    %4728 = vmatpush1.msra.mxu0 %v2592
    %4729 = vmatprep.subr.mxu0 %v2601
    %4730 = vmatpush1.msra.mxu0 %v2600
    %4731 = vmatprep.subr.mxu0 %v2609
    %4732 = vmatpush1.msra.mxu0 %v2608
    %4733 = vmatprep.subr.mxu0 %v2617
    %4734 = vmatpush1.msra.mxu0 %v2616
    %4735 = vmatprep.subr.mxu0 %v2625
    %4736 = vmatpush1.msra.mxu0 %v2624
    %4737 = vmatprep.mubr.f32.mxu0 %v1087
    %4738 = vmatmul.mubr.f32.gmra.mrb[0].mxu0 %v1086
    %v4739 = vpop.f32.mrb[0].mxu0
    %v4740 = vadd.f32 %v4669, %v4739
    %v4741 = vpop.f32.mrb[0].mxu0
    %v4742 = vadd.f32 %v4671, %v4741
    %4743 = vdwg.mxu0
    %4744 = vmatprep.subr.mxu0 %v2633
    %4745 = vmatpush1.msra.mxu0 %v2632
    %4746 = vmatprep.subr.mxu0 %v2641
    %4747 = vmatpush1.msra.mxu0 %v2640
    %4748 = vmatprep.subr.mxu0 %v2649
    %4749 = vmatpush1.msra.mxu0 %v2648
    %4750 = vmatprep.subr.mxu0 %v2657
    %4751 = vmatpush1.msra.mxu0 %v2656
    %4752 = vmatprep.subr.mxu0 %v2665
    %4753 = vmatpush1.msra.mxu0 %v2664
    %4754 = vmatprep.subr.mxu0 %v2673
    %4755 = vmatpush1.msra.mxu0 %v2672
    %4756 = vmatprep.subr.mxu0 %v2681
    %4757 = vmatpush1.msra.mxu0 %v2680
    %4758 = vmatprep.subr.mxu0 %v2689
    %4759 = vmatpush1.msra.mxu0 %v2688
    %4760 = vmatprep.subr.mxu0 %v2697
    %4761 = vmatpush1.msra.mxu0 %v2696
    %4762 = vmatprep.subr.mxu0 %v2705
    %4763 = vmatpush1.msra.mxu0 %v2704
    %4764 = vmatprep.subr.mxu0 %v2713
    %4765 = vmatpush1.msra.mxu0 %v2712
    %4766 = vmatprep.subr.mxu0 %v2721
    %4767 = vmatpush1.msra.mxu0 %v2720
    %4768 = vmatprep.subr.mxu0 %v2729
    %4769 = vmatpush1.msra.mxu0 %v2728
    %4770 = vmatprep.subr.mxu0 %v2737
    %4771 = vmatpush1.msra.mxu0 %v2736
    %4772 = vmatprep.subr.mxu0 %v2745
    %4773 = vmatpush1.msra.mxu0 %v2744
    %4774 = vmatprep.subr.mxu0 %v2753
    %4775 = vmatpush1.msra.mxu0 %v2752
    %4776 = vmatprep.subr.mxu0 %v2761
    %4777 = vmatpush1.msra.mxu0 %v2760
    %4778 = vmatprep.subr.mxu0 %v2769
    %4779 = vmatpush1.msra.mxu0 %v2768
    %4780 = vmatprep.subr.mxu0 %v2777
    %4781 = vmatpush1.msra.mxu0 %v2776
    %4782 = vmatprep.subr.mxu0 %v2785
    %4783 = vmatpush1.msra.mxu0 %v2784
    %4784 = vmatprep.subr.mxu0 %v2793
    %4785 = vmatpush1.msra.mxu0 %v2792
    %4786 = vmatprep.subr.mxu0 %v2801
    %4787 = vmatpush1.msra.mxu0 %v2800
    %4788 = vmatprep.subr.mxu0 %v2809
    %4789 = vmatpush1.msra.mxu0 %v2808
    %4790 = vmatprep.subr.mxu0 %v2817
    %4791 = vmatpush1.msra.mxu0 %v2816
    %4792 = vmatprep.subr.mxu0 %v2825
    %4793 = vmatpush1.msra.mxu0 %v2824
    %4794 = vmatprep.subr.mxu0 %v2833
    %4795 = vmatpush1.msra.mxu0 %v2832
    %4796 = vmatprep.subr.mxu0 %v2841
    %4797 = vmatpush1.msra.mxu0 %v2840
    %4798 = vmatprep.subr.mxu0 %v2849
    %4799 = vmatpush1.msra.mxu0 %v2848
    %4800 = vmatprep.subr.mxu0 %v2857
    %4801 = vmatpush1.msra.mxu0 %v2856
    %4802 = vmatprep.subr.mxu0 %v2865
    %4803 = vmatpush1.msra.mxu0 %v2864
    %4804 = vmatprep.subr.mxu0 %v2873
    %4805 = vmatpush1.msra.mxu0 %v2872
    %4806 = vmatprep.subr.mxu0 %v2881
    %4807 = vmatpush1.msra.mxu0 %v2880
    %4808 = vmatprep.mubr.f32.mxu0 %v1089
    %4809 = vmatmul.mubr.f32.gmra.mrb[0].mxu0 %v1088
    %v4810 = vpop.f32.mrb[0].mxu0
    %v4811 = vadd.f32 %v4740, %v4810
    %v4812 = vpop.f32.mrb[0].mxu0
    %v4813 = vadd.f32 %v4742, %v4812
    %4814 = vdwg.mxu0
    %4815 = vmatprep.subr.mxu0 %v2889
    %4816 = vmatpush1.msra.mxu0 %v2888
    %4817 = vmatprep.subr.mxu0 %v2897
    %4818 = vmatpush1.msra.mxu0 %v2896
    %4819 = vmatprep.subr.mxu0 %v2905
    %4820 = vmatpush1.msra.mxu0 %v2904
    %4821 = vmatprep.subr.mxu0 %v2913
    %4822 = vmatpush1.msra.mxu0 %v2912
    %4823 = vmatprep.subr.mxu0 %v2921
    %4824 = vmatpush1.msra.mxu0 %v2920
    %4825 = vmatprep.subr.mxu0 %v2929
    %4826 = vmatpush1.msra.mxu0 %v2928
    %4827 = vmatprep.subr.mxu0 %v2937
    %4828 = vmatpush1.msra.mxu0 %v2936
    %4829 = vmatprep.subr.mxu0 %v2945
    %4830 = vmatpush1.msra.mxu0 %v2944
    %4831 = vmatprep.subr.mxu0 %v2953
    %4832 = vmatpush1.msra.mxu0 %v2952
    %4833 = vmatprep.subr.mxu0 %v2961
    %4834 = vmatpush1.msra.mxu0 %v2960
    %4835 = vmatprep.subr.mxu0 %v2969
    %4836 = vmatpush1.msra.mxu0 %v2968
    %4837 = vmatprep.subr.mxu0 %v2977
    %4838 = vmatpush1.msra.mxu0 %v2976
    %4839 = vmatprep.subr.mxu0 %v2985
    %4840 = vmatpush1.msra.mxu0 %v2984
    %4841 = vmatprep.subr.mxu0 %v2993
    %4842 = vmatpush1.msra.mxu0 %v2992
    %4843 = vmatprep.subr.mxu0 %v3001
    %4844 = vmatpush1.msra.mxu0 %v3000
    %4845 = vmatprep.subr.mxu0 %v3009
    %4846 = vmatpush1.msra.mxu0 %v3008
    %4847 = vmatprep.subr.mxu0 %v3017
    %4848 = vmatpush1.msra.mxu0 %v3016
    %4849 = vmatprep.subr.mxu0 %v3025
    %4850 = vmatpush1.msra.mxu0 %v3024
    %4851 = vmatprep.subr.mxu0 %v3033
    %4852 = vmatpush1.msra.mxu0 %v3032
    %4853 = vmatprep.subr.mxu0 %v3041
    %4854 = vmatpush1.msra.mxu0 %v3040
    %4855 = vmatprep.subr.mxu0 %v3049
    %4856 = vmatpush1.msra.mxu0 %v3048
    %4857 = vmatprep.subr.mxu0 %v3057
    %4858 = vmatpush1.msra.mxu0 %v3056
    %4859 = vmatprep.subr.mxu0 %v3065
    %4860 = vmatpush1.msra.mxu0 %v3064
    %4861 = vmatprep.subr.mxu0 %v3073
    %4862 = vmatpush1.msra.mxu0 %v3072
    %4863 = vmatprep.subr.mxu0 %v3081
    %4864 = vmatpush1.msra.mxu0 %v3080
    %4865 = vmatprep.subr.mxu0 %v3089
    %4866 = vmatpush1.msra.mxu0 %v3088
    %4867 = vmatprep.subr.mxu0 %v3097
    %4868 = vmatpush1.msra.mxu0 %v3096
    %4869 = vmatprep.subr.mxu0 %v3105
    %4870 = vmatpush1.msra.mxu0 %v3104
    %4871 = vmatprep.subr.mxu0 %v3113
    %4872 = vmatpush1.msra.mxu0 %v3112
    %4873 = vmatprep.subr.mxu0 %v3121
    %4874 = vmatpush1.msra.mxu0 %v3120
    %4875 = vmatprep.subr.mxu0 %v3129
    %4876 = vmatpush1.msra.mxu0 %v3128
    %4877 = vmatprep.subr.mxu0 %v3137
    %4878 = vmatpush1.msra.mxu0 %v3136
    %4879 = vmatprep.mubr.f32.mxu0 %v1091
    %4880 = vmatmul.mubr.f32.gmra.mrb[0].mxu0 %v1090
    %v4881 = vpop.f32.mrb[0].mxu0
    %v4882 = vadd.f32 %v4811, %v4881
    %v4883 = vpop.f32.mrb[0].mxu0
    %v4884 = vadd.f32 %v4813, %v4883
    %4885 = vdwg.mxu0
    %4886 = vmatprep.subr.mxu0 %v1099
    %4887 = vmatpush1.msra.mxu0 %v1098
    %4888 = vmatprep.subr.mxu0 %v1107
    %4889 = vmatpush1.msra.mxu0 %v1106
    %4890 = vmatprep.subr.mxu0 %v1115
    %4891 = vmatpush1.msra.mxu0 %v1114
    %4892 = vmatprep.subr.mxu0 %v1123
    %4893 = vmatpush1.msra.mxu0 %v1122
    %4894 = vmatprep.subr.mxu0 %v1131
    %4895 = vmatpush1.msra.mxu0 %v1130
    %4896 = vmatprep.subr.mxu0 %v1139
    %4897 = vmatpush1.msra.mxu0 %v1138
    %4898 = vmatprep.subr.mxu0 %v1147
    %4899 = vmatpush1.msra.mxu0 %v1146
    %4900 = vmatprep.subr.mxu0 %v1155
    %4901 = vmatpush1.msra.mxu0 %v1154
    %4902 = vmatprep.subr.mxu0 %v1163
    %4903 = vmatpush1.msra.mxu0 %v1162
    %4904 = vmatprep.subr.mxu0 %v1171
    %4905 = vmatpush1.msra.mxu0 %v1170
    %4906 = vmatprep.subr.mxu0 %v1179
    %4907 = vmatpush1.msra.mxu0 %v1178
    %4908 = vmatprep.subr.mxu0 %v1187
    %4909 = vmatpush1.msra.mxu0 %v1186
    %4910 = vmatprep.subr.mxu0 %v1195
    %4911 = vmatpush1.msra.mxu0 %v1194
    %4912 = vmatprep.subr.mxu0 %v1203
    %4913 = vmatpush1.msra.mxu0 %v1202
    %4914 = vmatprep.subr.mxu0 %v1211
    %4915 = vmatpush1.msra.mxu0 %v1210
    %4916 = vmatprep.subr.mxu0 %v1219
    %4917 = vmatpush1.msra.mxu0 %v1218
    %4918 = vmatprep.subr.mxu0 %v1227
    %4919 = vmatpush1.msra.mxu0 %v1226
    %4920 = vmatprep.subr.mxu0 %v1235
    %4921 = vmatpush1.msra.mxu0 %v1234
    %4922 = vmatprep.subr.mxu0 %v1243
    %4923 = vmatpush1.msra.mxu0 %v1242
    %4924 = vmatprep.subr.mxu0 %v1251
    %4925 = vmatpush1.msra.mxu0 %v1250
    %4926 = vmatprep.subr.mxu0 %v1259
    %4927 = vmatpush1.msra.mxu0 %v1258
    %4928 = vmatprep.subr.mxu0 %v1267
    %4929 = vmatpush1.msra.mxu0 %v1266
    %4930 = vmatprep.subr.mxu0 %v1275
    %4931 = vmatpush1.msra.mxu0 %v1274
    %4932 = vmatprep.subr.mxu0 %v1283
    %4933 = vmatpush1.msra.mxu0 %v1282
    %4934 = vmatprep.subr.mxu0 %v1291
    %4935 = vmatpush1.msra.mxu0 %v1290
    %4936 = vmatprep.subr.mxu0 %v1299
    %4937 = vmatpush1.msra.mxu0 %v1298
    %4938 = vmatprep.subr.mxu0 %v1307
    %4939 = vmatpush1.msra.mxu0 %v1306
    %4940 = vmatprep.subr.mxu0 %v1315
    %4941 = vmatpush1.msra.mxu0 %v1314
    %4942 = vmatprep.subr.mxu0 %v1323
    %4943 = vmatpush1.msra.mxu0 %v1322
    %4944 = vmatprep.subr.mxu0 %v1331
    %4945 = vmatpush1.msra.mxu0 %v1330
    %4946 = vmatprep.subr.mxu0 %v1339
    %4947 = vmatpush1.msra.mxu0 %v1338
    %4948 = vmatprep.subr.mxu0 %v1347
    %4949 = vmatpush1.msra.mxu0 %v1346
    %4950 = vmatprep.mubr.f32.mxu0 %v1077
    %4951 = vmatmul.mubr.f32.gmra.mrb[0].mxu0 %v1076
    %v4952 = vpop.f32.mrb[0].mxu0
    %v4953 = vadd.f32 %v3169, %v4952
    %v4954 = vpop.f32.mrb[0].mxu0
    %v4955 = vadd.f32 %v3173, %v4954
    %4956 = vdwg.mxu0
    %4957 = vmatprep.subr.mxu0 %v1355
    %4958 = vmatpush1.msra.mxu0 %v1354
    %4959 = vmatprep.subr.mxu0 %v1363
    %4960 = vmatpush1.msra.mxu0 %v1362
    %4961 = vmatprep.subr.mxu0 %v1371
    %4962 = vmatpush1.msra.mxu0 %v1370
    %4963 = vmatprep.subr.mxu0 %v1379
    %4964 = vmatpush1.msra.mxu0 %v1378
    %4965 = vmatprep.subr.mxu0 %v1387
    %4966 = vmatpush1.msra.mxu0 %v1386
    %4967 = vmatprep.subr.mxu0 %v1395
    %4968 = vmatpush1.msra.mxu0 %v1394
    %4969 = vmatprep.subr.mxu0 %v1403
    %4970 = vmatpush1.msra.mxu0 %v1402
    %4971 = vmatprep.subr.mxu0 %v1411
    %4972 = vmatpush1.msra.mxu0 %v1410
    %4973 = vmatprep.subr.mxu0 %v1419
    %4974 = vmatpush1.msra.mxu0 %v1418
    %4975 = vmatprep.subr.mxu0 %v1427
    %4976 = vmatpush1.msra.mxu0 %v1426
    %4977 = vmatprep.subr.mxu0 %v1435
    %4978 = vmatpush1.msra.mxu0 %v1434
    %4979 = vmatprep.subr.mxu0 %v1443
    %4980 = vmatpush1.msra.mxu0 %v1442
    %4981 = vmatprep.subr.mxu0 %v1451
    %4982 = vmatpush1.msra.mxu0 %v1450
    %4983 = vmatprep.subr.mxu0 %v1459
    %4984 = vmatpush1.msra.mxu0 %v1458
    %4985 = vmatprep.subr.mxu0 %v1467
    %4986 = vmatpush1.msra.mxu0 %v1466
    %4987 = vmatprep.subr.mxu0 %v1475
    %4988 = vmatpush1.msra.mxu0 %v1474
    %4989 = vmatprep.subr.mxu0 %v1483
    %4990 = vmatpush1.msra.mxu0 %v1482
    %4991 = vmatprep.subr.mxu0 %v1491
    %4992 = vmatpush1.msra.mxu0 %v1490
    %4993 = vmatprep.subr.mxu0 %v1499
    %4994 = vmatpush1.msra.mxu0 %v1498
    %4995 = vmatprep.subr.mxu0 %v1507
    %4996 = vmatpush1.msra.mxu0 %v1506
    %4997 = vmatprep.subr.mxu0 %v1515
    %4998 = vmatpush1.msra.mxu0 %v1514
    %4999 = vmatprep.subr.mxu0 %v1523
    %5000 = vmatpush1.msra.mxu0 %v1522
    %5001 = vmatprep.subr.mxu0 %v1531
    %5002 = vmatpush1.msra.mxu0 %v1530
    %5003 = vmatprep.subr.mxu0 %v1539
    %5004 = vmatpush1.msra.mxu0 %v1538
    %5005 = vmatprep.subr.mxu0 %v1547
    %5006 = vmatpush1.msra.mxu0 %v1546
    %5007 = vmatprep.subr.mxu0 %v1555
    %5008 = vmatpush1.msra.mxu0 %v1554
    %5009 = vmatprep.subr.mxu0 %v1563
    %5010 = vmatpush1.msra.mxu0 %v1562
    %5011 = vmatprep.subr.mxu0 %v1571
    %5012 = vmatpush1.msra.mxu0 %v1570
    %5013 = vmatprep.subr.mxu0 %v1579
    %5014 = vmatpush1.msra.mxu0 %v1578
    %5015 = vmatprep.subr.mxu0 %v1587
    %5016 = vmatpush1.msra.mxu0 %v1586
    %5017 = vmatprep.subr.mxu0 %v1595
    %5018 = vmatpush1.msra.mxu0 %v1594
    %5019 = vmatprep.subr.mxu0 %v1603
    %5020 = vmatpush1.msra.mxu0 %v1602
    %5021 = vmatprep.mubr.f32.mxu0 %v1079
    %5022 = vmatmul.mubr.f32.gmra.mrb[0].mxu0 %v1078
    %v5023 = vpop.f32.mrb[0].mxu0
    %v5024 = vadd.f32 %v4953, %v5023
    %v5025 = vpop.f32.mrb[0].mxu0
    %v5026 = vadd.f32 %v4955, %v5025
    %5027 = vdwg.mxu0
    %5028 = vmatprep.subr.mxu0 %v1611
    %5029 = vmatpush1.msra.mxu0 %v1610
    %5030 = vmatprep.subr.mxu0 %v1619
    %5031 = vmatpush1.msra.mxu0 %v1618
    %5032 = vmatprep.subr.mxu0 %v1627
    %5033 = vmatpush1.msra.mxu0 %v1626
    %5034 = vmatprep.subr.mxu0 %v1635
    %5035 = vmatpush1.msra.mxu0 %v1634
    %5036 = vmatprep.subr.mxu0 %v1643
    %5037 = vmatpush1.msra.mxu0 %v1642
    %5038 = vmatprep.subr.mxu0 %v1651
    %5039 = vmatpush1.msra.mxu0 %v1650
    %5040 = vmatprep.subr.mxu0 %v1659
    %5041 = vmatpush1.msra.mxu0 %v1658
    %5042 = vmatprep.subr.mxu0 %v1667
    %5043 = vmatpush1.msra.mxu0 %v1666
    %5044 = vmatprep.subr.mxu0 %v1675
    %5045 = vmatpush1.msra.mxu0 %v1674
    %5046 = vmatprep.subr.mxu0 %v1683
    %5047 = vmatpush1.msra.mxu0 %v1682
    %5048 = vmatprep.subr.mxu0 %v1691
    %5049 = vmatpush1.msra.mxu0 %v1690
    %5050 = vmatprep.subr.mxu0 %v1699
    %5051 = vmatpush1.msra.mxu0 %v1698
    %5052 = vmatprep.subr.mxu0 %v1707
    %5053 = vmatpush1.msra.mxu0 %v1706
    %5054 = vmatprep.subr.mxu0 %v1715
    %5055 = vmatpush1.msra.mxu0 %v1714
    %5056 = vmatprep.subr.mxu0 %v1723
    %5057 = vmatpush1.msra.mxu0 %v1722
    %5058 = vmatprep.subr.mxu0 %v1731
    %5059 = vmatpush1.msra.mxu0 %v1730
    %5060 = vmatprep.subr.mxu0 %v1739
    %5061 = vmatpush1.msra.mxu0 %v1738
    %5062 = vmatprep.subr.mxu0 %v1747
    %5063 = vmatpush1.msra.mxu0 %v1746
    %5064 = vmatprep.subr.mxu0 %v1755
    %5065 = vmatpush1.msra.mxu0 %v1754
    %5066 = vmatprep.subr.mxu0 %v1763
    %5067 = vmatpush1.msra.mxu0 %v1762
    %5068 = vmatprep.subr.mxu0 %v1771
    %5069 = vmatpush1.msra.mxu0 %v1770
    %5070 = vmatprep.subr.mxu0 %v1779
    %5071 = vmatpush1.msra.mxu0 %v1778
    %5072 = vmatprep.subr.mxu0 %v1787
    %5073 = vmatpush1.msra.mxu0 %v1786
    %5074 = vmatprep.subr.mxu0 %v1795
    %5075 = vmatpush1.msra.mxu0 %v1794
    %5076 = vmatprep.subr.mxu0 %v1803
    %5077 = vmatpush1.msra.mxu0 %v1802
    %5078 = vmatprep.subr.mxu0 %v1811
    %5079 = vmatpush1.msra.mxu0 %v1810
    %5080 = vmatprep.subr.mxu0 %v1819
    %5081 = vmatpush1.msra.mxu0 %v1818
    %5082 = vmatprep.subr.mxu0 %v1827
    %5083 = vmatpush1.msra.mxu0 %v1826
    %5084 = vmatprep.subr.mxu0 %v1835
    %5085 = vmatpush1.msra.mxu0 %v1834
    %5086 = vmatprep.subr.mxu0 %v1843
    %5087 = vmatpush1.msra.mxu0 %v1842
    %5088 = vmatprep.subr.mxu0 %v1851
    %5089 = vmatpush1.msra.mxu0 %v1850
    %5090 = vmatprep.subr.mxu0 %v1859
    %5091 = vmatpush1.msra.mxu0 %v1858
    %5092 = vmatprep.mubr.f32.mxu0 %v1081
    %5093 = vmatmul.mubr.f32.gmra.mrb[0].mxu0 %v1080
    %v5094 = vpop.f32.mrb[0].mxu0
    %v5095 = vadd.f32 %v5024, %v5094
    %v5096 = vpop.f32.mrb[0].mxu0
    %v5097 = vadd.f32 %v5026, %v5096
    %5098 = vdwg.mxu0
    %5099 = vmatprep.subr.mxu0 %v1867
    %5100 = vmatpush1.msra.mxu0 %v1866
    %5101 = vmatprep.subr.mxu0 %v1875
    %5102 = vmatpush1.msra.mxu0 %v1874
    %5103 = vmatprep.subr.mxu0 %v1883
    %5104 = vmatpush1.msra.mxu0 %v1882
    %5105 = vmatprep.subr.mxu0 %v1891
    %5106 = vmatpush1.msra.mxu0 %v1890
    %5107 = vmatprep.subr.mxu0 %v1899
    %5108 = vmatpush1.msra.mxu0 %v1898
    %5109 = vmatprep.subr.mxu0 %v1907
    %5110 = vmatpush1.msra.mxu0 %v1906
    %5111 = vmatprep.subr.mxu0 %v1915
    %5112 = vmatpush1.msra.mxu0 %v1914
    %5113 = vmatprep.subr.mxu0 %v1923
    %5114 = vmatpush1.msra.mxu0 %v1922
    %5115 = vmatprep.subr.mxu0 %v1931
    %5116 = vmatpush1.msra.mxu0 %v1930
    %5117 = vmatprep.subr.mxu0 %v1939
    %5118 = vmatpush1.msra.mxu0 %v1938
    %5119 = vmatprep.subr.mxu0 %v1947
    %5120 = vmatpush1.msra.mxu0 %v1946
    %5121 = vmatprep.subr.mxu0 %v1955
    %5122 = vmatpush1.msra.mxu0 %v1954
    %5123 = vmatprep.subr.mxu0 %v1963
    %5124 = vmatpush1.msra.mxu0 %v1962
    %5125 = vmatprep.subr.mxu0 %v1971
    %5126 = vmatpush1.msra.mxu0 %v1970
    %5127 = vmatprep.subr.mxu0 %v1979
    %5128 = vmatpush1.msra.mxu0 %v1978
    %5129 = vmatprep.subr.mxu0 %v1987
    %5130 = vmatpush1.msra.mxu0 %v1986
    %5131 = vmatprep.subr.mxu0 %v1995
    %5132 = vmatpush1.msra.mxu0 %v1994
    %5133 = vmatprep.subr.mxu0 %v2003
    %5134 = vmatpush1.msra.mxu0 %v2002
    %5135 = vmatprep.subr.mxu0 %v2011
    %5136 = vmatpush1.msra.mxu0 %v2010
    %5137 = vmatprep.subr.mxu0 %v2019
    %5138 = vmatpush1.msra.mxu0 %v2018
    %5139 = vmatprep.subr.mxu0 %v2027
    %5140 = vmatpush1.msra.mxu0 %v2026
    %5141 = vmatprep.subr.mxu0 %v2035
    %5142 = vmatpush1.msra.mxu0 %v2034
    %5143 = vmatprep.subr.mxu0 %v2043
    %5144 = vmatpush1.msra.mxu0 %v2042
    %5145 = vmatprep.subr.mxu0 %v2051
    %5146 = vmatpush1.msra.mxu0 %v2050
    %5147 = vmatprep.subr.mxu0 %v2059
    %5148 = vmatpush1.msra.mxu0 %v2058
    %5149 = vmatprep.subr.mxu0 %v2067
    %5150 = vmatpush1.msra.mxu0 %v2066
    %5151 = vmatprep.subr.mxu0 %v2075
    %5152 = vmatpush1.msra.mxu0 %v2074
    %5153 = vmatprep.subr.mxu0 %v2083
    %5154 = vmatpush1.msra.mxu0 %v2082
    %5155 = vmatprep.subr.mxu0 %v2091
    %5156 = vmatpush1.msra.mxu0 %v2090
    %5157 = vmatprep.subr.mxu0 %v2099
    %5158 = vmatpush1.msra.mxu0 %v2098
    %5159 = vmatprep.subr.mxu0 %v2107
    %5160 = vmatpush1.msra.mxu0 %v2106
    %5161 = vmatprep.subr.mxu0 %v2115
    %5162 = vmatpush1.msra.mxu0 %v2114
    %5163 = vmatprep.mubr.f32.mxu0 %v1083
    %5164 = vmatmul.mubr.f32.gmra.mrb[0].mxu0 %v1082
    %v5165 = vpop.f32.mrb[0].mxu0
    %v5166 = vadd.f32 %v5095, %v5165
    %v5167 = vpop.f32.mrb[0].mxu0
    %v5168 = vadd.f32 %v5097, %v5167
    %5169 = vdwg.mxu0
    %5170 = vmatprep.subr.mxu0 %v2123
    %5171 = vmatpush1.msra.mxu0 %v2122
    %5172 = vmatprep.subr.mxu0 %v2131
    %5173 = vmatpush1.msra.mxu0 %v2130
    %5174 = vmatprep.subr.mxu0 %v2139
    %5175 = vmatpush1.msra.mxu0 %v2138
    %5176 = vmatprep.subr.mxu0 %v2147
    %5177 = vmatpush1.msra.mxu0 %v2146
    %5178 = vmatprep.subr.mxu0 %v2155
    %5179 = vmatpush1.msra.mxu0 %v2154
    %5180 = vmatprep.subr.mxu0 %v2163
    %5181 = vmatpush1.msra.mxu0 %v2162
    %5182 = vmatprep.subr.mxu0 %v2171
    %5183 = vmatpush1.msra.mxu0 %v2170
    %5184 = vmatprep.subr.mxu0 %v2179
    %5185 = vmatpush1.msra.mxu0 %v2178
    %5186 = vmatprep.subr.mxu0 %v2187
    %5187 = vmatpush1.msra.mxu0 %v2186
    %5188 = vmatprep.subr.mxu0 %v2195
    %5189 = vmatpush1.msra.mxu0 %v2194
    %5190 = vmatprep.subr.mxu0 %v2203
    %5191 = vmatpush1.msra.mxu0 %v2202
    %5192 = vmatprep.subr.mxu0 %v2211
    %5193 = vmatpush1.msra.mxu0 %v2210
    %5194 = vmatprep.subr.mxu0 %v2219
    %5195 = vmatpush1.msra.mxu0 %v2218
    %5196 = vmatprep.subr.mxu0 %v2227
    %5197 = vmatpush1.msra.mxu0 %v2226
    %5198 = vmatprep.subr.mxu0 %v2235
    %5199 = vmatpush1.msra.mxu0 %v2234
    %5200 = vmatprep.subr.mxu0 %v2243
    %5201 = vmatpush1.msra.mxu0 %v2242
    %5202 = vmatprep.subr.mxu0 %v2251
    %5203 = vmatpush1.msra.mxu0 %v2250
    %5204 = vmatprep.subr.mxu0 %v2259
    %5205 = vmatpush1.msra.mxu0 %v2258
    %5206 = vmatprep.subr.mxu0 %v2267
    %5207 = vmatpush1.msra.mxu0 %v2266
    %5208 = vmatprep.subr.mxu0 %v2275
    %5209 = vmatpush1.msra.mxu0 %v2274
    %5210 = vmatprep.subr.mxu0 %v2283
    %5211 = vmatpush1.msra.mxu0 %v2282
    %5212 = vmatprep.subr.mxu0 %v2291
    %5213 = vmatpush1.msra.mxu0 %v2290
    %5214 = vmatprep.subr.mxu0 %v2299
    %5215 = vmatpush1.msra.mxu0 %v2298
    %5216 = vmatprep.subr.mxu0 %v2307
    %5217 = vmatpush1.msra.mxu0 %v2306
    %5218 = vmatprep.subr.mxu0 %v2315
    %5219 = vmatpush1.msra.mxu0 %v2314
    %5220 = vmatprep.subr.mxu0 %v2323
    %5221 = vmatpush1.msra.mxu0 %v2322
    %5222 = vmatprep.subr.mxu0 %v2331
    %5223 = vmatpush1.msra.mxu0 %v2330
    %5224 = vmatprep.subr.mxu0 %v2339
    %5225 = vmatpush1.msra.mxu0 %v2338
    %5226 = vmatprep.subr.mxu0 %v2347
    %5227 = vmatpush1.msra.mxu0 %v2346
    %5228 = vmatprep.subr.mxu0 %v2355
    %5229 = vmatpush1.msra.mxu0 %v2354
    %5230 = vmatprep.subr.mxu0 %v2363
    %5231 = vmatpush1.msra.mxu0 %v2362
    %5232 = vmatprep.subr.mxu0 %v2371
    %5233 = vmatpush1.msra.mxu0 %v2370
    %5234 = vmatprep.mubr.f32.mxu0 %v1085
    %5235 = vmatmul.mubr.f32.gmra.mrb[0].mxu0 %v1084
    %v5236 = vpop.f32.mrb[0].mxu0
    %v5237 = vadd.f32 %v5166, %v5236
    %v5238 = vpop.f32.mrb[0].mxu0
    %v5239 = vadd.f32 %v5168, %v5238
    %5240 = vdwg.mxu0
    %5241 = vmatprep.subr.mxu0 %v2379
    %5242 = vmatpush1.msra.mxu0 %v2378
    %5243 = vmatprep.subr.mxu0 %v2387
    %5244 = vmatpush1.msra.mxu0 %v2386
    %5245 = vmatprep.subr.mxu0 %v2395
    %5246 = vmatpush1.msra.mxu0 %v2394
    %5247 = vmatprep.subr.mxu0 %v2403
    %5248 = vmatpush1.msra.mxu0 %v2402
    %5249 = vmatprep.subr.mxu0 %v2411
    %5250 = vmatpush1.msra.mxu0 %v2410
    %5251 = vmatprep.subr.mxu0 %v2419
    %5252 = vmatpush1.msra.mxu0 %v2418
    %5253 = vmatprep.subr.mxu0 %v2427
    %5254 = vmatpush1.msra.mxu0 %v2426
    %5255 = vmatprep.subr.mxu0 %v2435
    %5256 = vmatpush1.msra.mxu0 %v2434
    %5257 = vmatprep.subr.mxu0 %v2443
    %5258 = vmatpush1.msra.mxu0 %v2442
    %5259 = vmatprep.subr.mxu0 %v2451
    %5260 = vmatpush1.msra.mxu0 %v2450
    %5261 = vmatprep.subr.mxu0 %v2459
    %5262 = vmatpush1.msra.mxu0 %v2458
    %5263 = vmatprep.subr.mxu0 %v2467
    %5264 = vmatpush1.msra.mxu0 %v2466
    %5265 = vmatprep.subr.mxu0 %v2475
    %5266 = vmatpush1.msra.mxu0 %v2474
    %5267 = vmatprep.subr.mxu0 %v2483
    %5268 = vmatpush1.msra.mxu0 %v2482
    %5269 = vmatprep.subr.mxu0 %v2491
    %5270 = vmatpush1.msra.mxu0 %v2490
    %5271 = vmatprep.subr.mxu0 %v2499
    %5272 = vmatpush1.msra.mxu0 %v2498
    %5273 = vmatprep.subr.mxu0 %v2507
    %5274 = vmatpush1.msra.mxu0 %v2506
    %5275 = vmatprep.subr.mxu0 %v2515
    %5276 = vmatpush1.msra.mxu0 %v2514
    %5277 = vmatprep.subr.mxu0 %v2523
    %5278 = vmatpush1.msra.mxu0 %v2522
    %5279 = vmatprep.subr.mxu0 %v2531
    %5280 = vmatpush1.msra.mxu0 %v2530
    %5281 = vmatprep.subr.mxu0 %v2539
    %5282 = vmatpush1.msra.mxu0 %v2538
    %5283 = vmatprep.subr.mxu0 %v2547
    %5284 = vmatpush1.msra.mxu0 %v2546
    %5285 = vmatprep.subr.mxu0 %v2555
    %5286 = vmatpush1.msra.mxu0 %v2554
    %5287 = vmatprep.subr.mxu0 %v2563
    %5288 = vmatpush1.msra.mxu0 %v2562
    %5289 = vmatprep.subr.mxu0 %v2571
    %5290 = vmatpush1.msra.mxu0 %v2570
    %5291 = vmatprep.subr.mxu0 %v2579
    %5292 = vmatpush1.msra.mxu0 %v2578
    %5293 = vmatprep.subr.mxu0 %v2587
    %5294 = vmatpush1.msra.mxu0 %v2586
    %5295 = vmatprep.subr.mxu0 %v2595
    %5296 = vmatpush1.msra.mxu0 %v2594
    %5297 = vmatprep.subr.mxu0 %v2603
    %5298 = vmatpush1.msra.mxu0 %v2602
    %5299 = vmatprep.subr.mxu0 %v2611
    %5300 = vmatpush1.msra.mxu0 %v2610
    %5301 = vmatprep.subr.mxu0 %v2619
    %5302 = vmatpush1.msra.mxu0 %v2618
    %5303 = vmatprep.subr.mxu0 %v2627
    %5304 = vmatpush1.msra.mxu0 %v2626
    %5305 = vmatprep.mubr.f32.mxu0 %v1087
    %5306 = vmatmul.mubr.f32.gmra.mrb[0].mxu0 %v1086
    %v5307 = vpop.f32.mrb[0].mxu0
    %v5308 = vadd.f32 %v5237, %v5307
    %v5309 = vpop.f32.mrb[0].mxu0
    %v5310 = vadd.f32 %v5239, %v5309
    %5311 = vdwg.mxu0
    %5312 = vmatprep.subr.mxu0 %v2635
    %5313 = vmatpush1.msra.mxu0 %v2634
    %5314 = vmatprep.subr.mxu0 %v2643
    %5315 = vmatpush1.msra.mxu0 %v2642
    %5316 = vmatprep.subr.mxu0 %v2651
    %5317 = vmatpush1.msra.mxu0 %v2650
    %5318 = vmatprep.subr.mxu0 %v2659
    %5319 = vmatpush1.msra.mxu0 %v2658
    %5320 = vmatprep.subr.mxu0 %v2667
    %5321 = vmatpush1.msra.mxu0 %v2666
    %5322 = vmatprep.subr.mxu0 %v2675
    %5323 = vmatpush1.msra.mxu0 %v2674
    %5324 = vmatprep.subr.mxu0 %v2683
    %5325 = vmatpush1.msra.mxu0 %v2682
    %5326 = vmatprep.subr.mxu0 %v2691
    %5327 = vmatpush1.msra.mxu0 %v2690
    %5328 = vmatprep.subr.mxu0 %v2699
    %5329 = vmatpush1.msra.mxu0 %v2698
    %5330 = vmatprep.subr.mxu0 %v2707
    %5331 = vmatpush1.msra.mxu0 %v2706
    %5332 = vmatprep.subr.mxu0 %v2715
    %5333 = vmatpush1.msra.mxu0 %v2714
    %5334 = vmatprep.subr.mxu0 %v2723
    %5335 = vmatpush1.msra.mxu0 %v2722
    %5336 = vmatprep.subr.mxu0 %v2731
    %5337 = vmatpush1.msra.mxu0 %v2730
    %5338 = vmatprep.subr.mxu0 %v2739
    %5339 = vmatpush1.msra.mxu0 %v2738
    %5340 = vmatprep.subr.mxu0 %v2747
    %5341 = vmatpush1.msra.mxu0 %v2746
    %5342 = vmatprep.subr.mxu0 %v2755
    %5343 = vmatpush1.msra.mxu0 %v2754
    %5344 = vmatprep.subr.mxu0 %v2763
    %5345 = vmatpush1.msra.mxu0 %v2762
    %5346 = vmatprep.subr.mxu0 %v2771
    %5347 = vmatpush1.msra.mxu0 %v2770
    %5348 = vmatprep.subr.mxu0 %v2779
    %5349 = vmatpush1.msra.mxu0 %v2778
    %5350 = vmatprep.subr.mxu0 %v2787
    %5351 = vmatpush1.msra.mxu0 %v2786
    %5352 = vmatprep.subr.mxu0 %v2795
    %5353 = vmatpush1.msra.mxu0 %v2794
    %5354 = vmatprep.subr.mxu0 %v2803
    %5355 = vmatpush1.msra.mxu0 %v2802
    %5356 = vmatprep.subr.mxu0 %v2811
    %5357 = vmatpush1.msra.mxu0 %v2810
    %5358 = vmatprep.subr.mxu0 %v2819
    %5359 = vmatpush1.msra.mxu0 %v2818
    %5360 = vmatprep.subr.mxu0 %v2827
    %5361 = vmatpush1.msra.mxu0 %v2826
    %5362 = vmatprep.subr.mxu0 %v2835
    %5363 = vmatpush1.msra.mxu0 %v2834
    %5364 = vmatprep.subr.mxu0 %v2843
    %5365 = vmatpush1.msra.mxu0 %v2842
    %5366 = vmatprep.subr.mxu0 %v2851
    %5367 = vmatpush1.msra.mxu0 %v2850
    %5368 = vmatprep.subr.mxu0 %v2859
    %5369 = vmatpush1.msra.mxu0 %v2858
    %5370 = vmatprep.subr.mxu0 %v2867
    %5371 = vmatpush1.msra.mxu0 %v2866
    %5372 = vmatprep.subr.mxu0 %v2875
    %5373 = vmatpush1.msra.mxu0 %v2874
    %5374 = vmatprep.subr.mxu0 %v2883
    %5375 = vmatpush1.msra.mxu0 %v2882
    %5376 = vmatprep.mubr.f32.mxu0 %v1089
    %5377 = vmatmul.mubr.f32.gmra.mrb[0].mxu0 %v1088
    %v5378 = vpop.f32.mrb[0].mxu0
    %v5379 = vadd.f32 %v5308, %v5378
    %v5380 = vpop.f32.mrb[0].mxu0
    %v5381 = vadd.f32 %v5310, %v5380
    %5382 = vdwg.mxu0
    %5383 = vmatprep.subr.mxu0 %v2891
    %5384 = vmatpush1.msra.mxu0 %v2890
    %5385 = vmatprep.subr.mxu0 %v2899
    %5386 = vmatpush1.msra.mxu0 %v2898
    %5387 = vmatprep.subr.mxu0 %v2907
    %5388 = vmatpush1.msra.mxu0 %v2906
    %5389 = vmatprep.subr.mxu0 %v2915
    %5390 = vmatpush1.msra.mxu0 %v2914
    %5391 = vmatprep.subr.mxu0 %v2923
    %5392 = vmatpush1.msra.mxu0 %v2922
    %5393 = vmatprep.subr.mxu0 %v2931
    %5394 = vmatpush1.msra.mxu0 %v2930
    %5395 = vmatprep.subr.mxu0 %v2939
    %5396 = vmatpush1.msra.mxu0 %v2938
    %5397 = vmatprep.subr.mxu0 %v2947
    %5398 = vmatpush1.msra.mxu0 %v2946
    %5399 = vmatprep.subr.mxu0 %v2955
    %5400 = vmatpush1.msra.mxu0 %v2954
    %5401 = vmatprep.subr.mxu0 %v2963
    %5402 = vmatpush1.msra.mxu0 %v2962
    %5403 = vmatprep.subr.mxu0 %v2971
    %5404 = vmatpush1.msra.mxu0 %v2970
    %5405 = vmatprep.subr.mxu0 %v2979
    %5406 = vmatpush1.msra.mxu0 %v2978
    %5407 = vmatprep.subr.mxu0 %v2987
    %5408 = vmatpush1.msra.mxu0 %v2986
    %5409 = vmatprep.subr.mxu0 %v2995
    %5410 = vmatpush1.msra.mxu0 %v2994
    %5411 = vmatprep.subr.mxu0 %v3003
    %5412 = vmatpush1.msra.mxu0 %v3002
    %5413 = vmatprep.subr.mxu0 %v3011
    %5414 = vmatpush1.msra.mxu0 %v3010
    %5415 = vmatprep.subr.mxu0 %v3019
    %5416 = vmatpush1.msra.mxu0 %v3018
    %5417 = vmatprep.subr.mxu0 %v3027
    %5418 = vmatpush1.msra.mxu0 %v3026
    %5419 = vmatprep.subr.mxu0 %v3035
    %5420 = vmatpush1.msra.mxu0 %v3034
    %5421 = vmatprep.subr.mxu0 %v3043
    %5422 = vmatpush1.msra.mxu0 %v3042
    %5423 = vmatprep.subr.mxu0 %v3051
    %5424 = vmatpush1.msra.mxu0 %v3050
    %5425 = vmatprep.subr.mxu0 %v3059
    %5426 = vmatpush1.msra.mxu0 %v3058
    %5427 = vmatprep.subr.mxu0 %v3067
    %5428 = vmatpush1.msra.mxu0 %v3066
    %5429 = vmatprep.subr.mxu0 %v3075
    %5430 = vmatpush1.msra.mxu0 %v3074
    %5431 = vmatprep.subr.mxu0 %v3083
    %5432 = vmatpush1.msra.mxu0 %v3082
    %5433 = vmatprep.subr.mxu0 %v3091
    %5434 = vmatpush1.msra.mxu0 %v3090
    %5435 = vmatprep.subr.mxu0 %v3099
    %5436 = vmatpush1.msra.mxu0 %v3098
    %5437 = vmatprep.subr.mxu0 %v3107
    %5438 = vmatpush1.msra.mxu0 %v3106
    %5439 = vmatprep.subr.mxu0 %v3115
    %5440 = vmatpush1.msra.mxu0 %v3114
    %5441 = vmatprep.subr.mxu0 %v3123
    %5442 = vmatpush1.msra.mxu0 %v3122
    %5443 = vmatprep.subr.mxu0 %v3131
    %5444 = vmatpush1.msra.mxu0 %v3130
    %5445 = vmatprep.subr.mxu0 %v3139
    %5446 = vmatpush1.msra.mxu0 %v3138
    %5447 = vmatprep.mubr.f32.mxu0 %v1091
    %5448 = vmatmul.mubr.f32.gmra.mrb[0].mxu0 %v1090
    %v5449 = vpop.f32.mrb[0].mxu0
    %v5450 = vadd.f32 %v5379, %v5449
    %v5451 = vpop.f32.mrb[0].mxu0
    %v5452 = vadd.f32 %v5381, %v5451
    %5453 = vdwg.mxu0
    %v5454 = vld [vmem:[%s6] sm:$0xff]
    %v5455 = vld [vmem:[%s6 + $0x8] sm:$0xff]
    %v5456 = vld [vmem:[%s6 + $0x10] sm:$0xff]
    %v5457 = vld [vmem:[%s6 + $0x18] sm:$0xff]
    %v5458 = vld [vmem:[%s6 + $0x20] sm:$0xff]
    %v5459 = vld [vmem:[%s6 + $0x28] sm:$0xff]
    %v5460 = vld [vmem:[%s6 + $0x30] sm:$0xff]
    %v5461 = vld [vmem:[%s6 + $0x38] sm:$0xff]
    %v5462 = vld [vmem:[%s6 + $0x40] sm:$0xff]
    %v5463 = vld [vmem:[%s6 + $0x48] sm:$0xff]
    %v5464 = vld [vmem:[%s6 + $0x50] sm:$0xff]
    %v5465 = vld [vmem:[%s6 + $0x58] sm:$0xff]
    %v5466 = vld [vmem:[%s6 + $0x60] sm:$0xff]
    %v5467 = vld [vmem:[%s6 + $0x68] sm:$0xff]
    %v5468 = vld [vmem:[%s6 + $0x70] sm:$0xff]
    %v5469 = vld [vmem:[%s6 + $0x78] sm:$0xff]
    %v5470 = vld [vmem:[%s6 + $0x80] sm:$0xff]
    %v5471 = vld [vmem:[%s6 + $0x88] sm:$0xff]
    %v5472 = vld [vmem:[%s6 + $0x90] sm:$0xff]
    %v5473 = vld [vmem:[%s6 + $0x98] sm:$0xff]
    %v5474 = vld [vmem:[%s6 + $0xa0] sm:$0xff]
    %v5475 = vld [vmem:[%s6 + $0xa8] sm:$0xff]
    %v5476 = vld [vmem:[%s6 + $0xb0] sm:$0xff]
    %v5477 = vld [vmem:[%s6 + $0xb8] sm:$0xff]
    %v5478 = vld [vmem:[%s6 + $0xc0] sm:$0xff]
    %v5479 = vld [vmem:[%s6 + $0xc8] sm:$0xff]
    %v5480 = vld [vmem:[%s6 + $0xd0] sm:$0xff]
    %v5481 = vld [vmem:[%s6 + $0xd8] sm:$0xff]
    %v5482 = vld [vmem:[%s6 + $0xe0] sm:$0xff]
    %v5483 = vld [vmem:[%s6 + $0xe8] sm:$0xff]
    %v5484 = vld [vmem:[%s6 + $0xf0] sm:$0xff]
    %v5485 = vld [vmem:[%s6 + $0xf8] sm:$0xff]
    %v5486 = vld [vmem:[%s6 + $0x100] sm:$0xff]
    %v5487 = vld [vmem:[%s6 + $0x108] sm:$0xff]
    %v5488 = vld [vmem:[%s6 + $0x110] sm:$0xff]
    %v5489 = vld [vmem:[%s6 + $0x118] sm:$0xff]
    %v5490 = vld [vmem:[%s6 + $0x120] sm:$0xff]
    %v5491 = vld [vmem:[%s6 + $0x128] sm:$0xff]
    %v5492 = vld [vmem:[%s6 + $0x130] sm:$0xff]
    %v5493 = vld [vmem:[%s6 + $0x138] sm:$0xff]
    %v5494 = vld [vmem:[%s6 + $0x140] sm:$0xff]
    %v5495 = vld [vmem:[%s6 + $0x148] sm:$0xff]
    %v5496 = vld [vmem:[%s6 + $0x150] sm:$0xff]
    %v5497 = vld [vmem:[%s6 + $0x158] sm:$0xff]
    %v5498 = vld [vmem:[%s6 + $0x160] sm:$0xff]
    %v5499 = vld [vmem:[%s6 + $0x168] sm:$0xff]
    %v5500 = vld [vmem:[%s6 + $0x170] sm:$0xff]
    %v5501 = vld [vmem:[%s6 + $0x178] sm:$0xff]
    %v5502 = vld [vmem:[%s6 + $0x180] sm:$0xff]
    %v5503 = vld [vmem:[%s6 + $0x188] sm:$0xff]
    %v5504 = vld [vmem:[%s6 + $0x190] sm:$0xff]
    %v5505 = vld [vmem:[%s6 + $0x198] sm:$0xff]
    %v5506 = vld [vmem:[%s6 + $0x1a0] sm:$0xff]
    %v5507 = vld [vmem:[%s6 + $0x1a8] sm:$0xff]
    %v5508 = vld [vmem:[%s6 + $0x1b0] sm:$0xff]
    %v5509 = vld [vmem:[%s6 + $0x1b8] sm:$0xff]
    %v5510 = vld [vmem:[%s6 + $0x1c0] sm:$0xff]
    %v5511 = vld [vmem:[%s6 + $0x1c8] sm:$0xff]
    %v5512 = vld [vmem:[%s6 + $0x1d0] sm:$0xff]
    %v5513 = vld [vmem:[%s6 + $0x1d8] sm:$0xff]
    %v5514 = vld [vmem:[%s6 + $0x1e0] sm:$0xff]
    %v5515 = vld [vmem:[%s6 + $0x1e8] sm:$0xff]
    %v5516 = vld [vmem:[%s6 + $0x1f0] sm:$0xff]
    %v5517 = vld [vmem:[%s6 + $0x1f8] sm:$0xff]
    %v5518 = vld [vmem:[%s6 + $0x200] sm:$0xff]
    %v5519 = vld [vmem:[%s6 + $0x208] sm:$0xff]
    %v5520 = vld [vmem:[%s6 + $0x210] sm:$0xff]
    %v5521 = vld [vmem:[%s6 + $0x218] sm:$0xff]
    %v5522 = vld [vmem:[%s6 + $0x220] sm:$0xff]
    %v5523 = vld [vmem:[%s6 + $0x228] sm:$0xff]
    %v5524 = vld [vmem:[%s6 + $0x230] sm:$0xff]
    %v5525 = vld [vmem:[%s6 + $0x238] sm:$0xff]
    %v5526 = vld [vmem:[%s6 + $0x240] sm:$0xff]
    %v5527 = vld [vmem:[%s6 + $0x248] sm:$0xff]
    %v5528 = vld [vmem:[%s6 + $0x250] sm:$0xff]
    %v5529 = vld [vmem:[%s6 + $0x258] sm:$0xff]
    %v5530 = vld [vmem:[%s6 + $0x260] sm:$0xff]
    %v5531 = vld [vmem:[%s6 + $0x268] sm:$0xff]
    %v5532 = vld [vmem:[%s6 + $0x270] sm:$0xff]
    %v5533 = vld [vmem:[%s6 + $0x278] sm:$0xff]
    %v5534 = vld [vmem:[%s6 + $0x280] sm:$0xff]
    %v5535 = vld [vmem:[%s6 + $0x288] sm:$0xff]
    %v5536 = vld [vmem:[%s6 + $0x290] sm:$0xff]
    %v5537 = vld [vmem:[%s6 + $0x298] sm:$0xff]
    %v5538 = vld [vmem:[%s6 + $0x2a0] sm:$0xff]
    %v5539 = vld [vmem:[%s6 + $0x2a8] sm:$0xff]
    %v5540 = vld [vmem:[%s6 + $0x2b0] sm:$0xff]
    %v5541 = vld [vmem:[%s6 + $0x2b8] sm:$0xff]
    %v5542 = vld [vmem:[%s6 + $0x2c0] sm:$0xff]
    %v5543 = vld [vmem:[%s6 + $0x2c8] sm:$0xff]
    %v5544 = vld [vmem:[%s6 + $0x2d0] sm:$0xff]
    %v5545 = vld [vmem:[%s6 + $0x2d8] sm:$0xff]
    %v5546 = vld [vmem:[%s6 + $0x2e0] sm:$0xff]
    %v5547 = vld [vmem:[%s6 + $0x2e8] sm:$0xff]
    %v5548 = vld [vmem:[%s6 + $0x2f0] sm:$0xff]
    %v5549 = vld [vmem:[%s6 + $0x2f8] sm:$0xff]
    %v5550 = vld [vmem:[%s6 + $0x300] sm:$0xff]
    %v5551 = vld [vmem:[%s6 + $0x308] sm:$0xff]
    %v5552 = vld [vmem:[%s6 + $0x310] sm:$0xff]
    %v5553 = vld [vmem:[%s6 + $0x318] sm:$0xff]
    %v5554 = vld [vmem:[%s6 + $0x320] sm:$0xff]
    %v5555 = vld [vmem:[%s6 + $0x328] sm:$0xff]
    %v5556 = vld [vmem:[%s6 + $0x330] sm:$0xff]
    %v5557 = vld [vmem:[%s6 + $0x338] sm:$0xff]
    %v5558 = vld [vmem:[%s6 + $0x340] sm:$0xff]
    %v5559 = vld [vmem:[%s6 + $0x348] sm:$0xff]
    %v5560 = vld [vmem:[%s6 + $0x350] sm:$0xff]
    %v5561 = vld [vmem:[%s6 + $0x358] sm:$0xff]
    %v5562 = vld [vmem:[%s6 + $0x360] sm:$0xff]
    %v5563 = vld [vmem:[%s6 + $0x368] sm:$0xff]
    %v5564 = vld [vmem:[%s6 + $0x370] sm:$0xff]
    %v5565 = vld [vmem:[%s6 + $0x378] sm:$0xff]
    %v5566 = vld [vmem:[%s6 + $0x380] sm:$0xff]
    %v5567 = vld [vmem:[%s6 + $0x388] sm:$0xff]
    %v5568 = vld [vmem:[%s6 + $0x390] sm:$0xff]
    %v5569 = vld [vmem:[%s6 + $0x398] sm:$0xff]
    %v5570 = vld [vmem:[%s6 + $0x3a0] sm:$0xff]
    %v5571 = vld [vmem:[%s6 + $0x3a8] sm:$0xff]
    %v5572 = vld [vmem:[%s6 + $0x3b0] sm:$0xff]
    %v5573 = vld [vmem:[%s6 + $0x3b8] sm:$0xff]
    %v5574 = vld [vmem:[%s6 + $0x3c0] sm:$0xff]
    %v5575 = vld [vmem:[%s6 + $0x3c8] sm:$0xff]
    %v5576 = vld [vmem:[%s6 + $0x3d0] sm:$0xff]
    %v5577 = vld [vmem:[%s6 + $0x3d8] sm:$0xff]
    %v5578 = vld [vmem:[%s6 + $0x3e0] sm:$0xff]
    %v5579 = vld [vmem:[%s6 + $0x3e8] sm:$0xff]
    %v5580 = vld [vmem:[%s6 + $0x3f0] sm:$0xff]
    %v5581 = vld [vmem:[%s6 + $0x3f8] sm:$0xff]
    %v5582 = vld [vmem:[#allocation10] sm:$0x1]
    %v5584 = vlaneseq
    %v5585 = vshrl.u32 %v5584, 7
    %v5586 = vsub.s32 0, %v5585
    %v5587 = vrot.slane %v5582, %v5586
    %5589 = vmatprep.subr.mxu0 0.0
    %5590 = vmatpush1.msra.mxu0 %v5454
    %5591 = vmatprep.subr.mxu0 0.0
    %5592 = vmatpush1.msra.mxu0 %v5455
    %5593 = vmatprep.subr.mxu0 0.0
    %5594 = vmatpush1.msra.mxu0 %v5456
    %5595 = vmatprep.subr.mxu0 0.0
    %5596 = vmatpush1.msra.mxu0 %v5457
    %5597 = vmatprep.subr.mxu0 0.0
    %5598 = vmatpush1.msra.mxu0 %v5458
    %5599 = vmatprep.subr.mxu0 0.0
    %5600 = vmatpush1.msra.mxu0 %v5459
    %5601 = vmatprep.subr.mxu0 0.0
    %5602 = vmatpush1.msra.mxu0 %v5460
    %5603 = vmatprep.subr.mxu0 0.0
    %5604 = vmatpush1.msra.mxu0 %v5461
    %5605 = vmatprep.subr.mxu0 0.0
    %5606 = vmatpush1.msra.mxu0 %v5462
    %5607 = vmatprep.subr.mxu0 0.0
    %5608 = vmatpush1.msra.mxu0 %v5463
    %5609 = vmatprep.subr.mxu0 0.0
    %5610 = vmatpush1.msra.mxu0 %v5464
    %5611 = vmatprep.subr.mxu0 0.0
    %5612 = vmatpush1.msra.mxu0 %v5465
    %5613 = vmatprep.subr.mxu0 0.0
    %5614 = vmatpush1.msra.mxu0 %v5466
    %5615 = vmatprep.subr.mxu0 0.0
    %5616 = vmatpush1.msra.mxu0 %v5467
    %5617 = vmatprep.subr.mxu0 0.0
    %5618 = vmatpush1.msra.mxu0 %v5468
    %5619 = vmatprep.subr.mxu0 0.0
    %5620 = vmatpush1.msra.mxu0 %v5469
    %5621 = vmatprep.subr.mxu0 0.0
    %5622 = vmatpush1.msra.mxu0 %v5470
    %5623 = vmatprep.subr.mxu0 0.0
    %5624 = vmatpush1.msra.mxu0 %v5471
    %5625 = vmatprep.subr.mxu0 0.0
    %5626 = vmatpush1.msra.mxu0 %v5472
    %5627 = vmatprep.subr.mxu0 0.0
    %5628 = vmatpush1.msra.mxu0 %v5473
    %5629 = vmatprep.subr.mxu0 0.0
    %5630 = vmatpush1.msra.mxu0 %v5474
    %5631 = vmatprep.subr.mxu0 0.0
    %5632 = vmatpush1.msra.mxu0 %v5475
    %5633 = vmatprep.subr.mxu0 0.0
    %5634 = vmatpush1.msra.mxu0 %v5476
    %5635 = vmatprep.subr.mxu0 0.0
    %5636 = vmatpush1.msra.mxu0 %v5477
    %5637 = vmatprep.subr.mxu0 0.0
    %5638 = vmatpush1.msra.mxu0 %v5478
    %5639 = vmatprep.subr.mxu0 0.0
    %5640 = vmatpush1.msra.mxu0 %v5479
    %5641 = vmatprep.subr.mxu0 0.0
    %5642 = vmatpush1.msra.mxu0 %v5480
    %5643 = vmatprep.subr.mxu0 0.0
    %5644 = vmatpush1.msra.mxu0 %v5481
    %5645 = vmatprep.subr.mxu0 0.0
    %5646 = vmatpush1.msra.mxu0 %v5482
    %5647 = vmatprep.subr.mxu0 0.0
    %5648 = vmatpush1.msra.mxu0 %v5483
    %5649 = vmatprep.subr.mxu0 0.0
    %5650 = vmatpush1.msra.mxu0 %v5484
    %5651 = vmatprep.subr.mxu0 0.0
    %5652 = vmatpush1.msra.mxu0 %v5485
    %5653 = vmatprep.mubr.f32.mxu0 %v3748
    %5654 = vmatmul.mubr.f32.gmra.mrb[0].mxu0 %v3746
    %v5655 = vpop.f32.mrb[0].mxu0
    %v5656 = vadd.f32 %v5587, %v5655
    %v5657 = vpop.f32.mrb[0].mxu0
    %5658 = vdwg.mxu0
    %5659 = vmatprep.subr.mxu0 0.0
    %5660 = vmatpush1.msra.mxu0 %v5486
    %5661 = vmatprep.subr.mxu0 0.0
    %5662 = vmatpush1.msra.mxu0 %v5487
    %5663 = vmatprep.subr.mxu0 0.0
    %5664 = vmatpush1.msra.mxu0 %v5488
    %5665 = vmatprep.subr.mxu0 0.0
    %5666 = vmatpush1.msra.mxu0 %v5489
    %5667 = vmatprep.subr.mxu0 0.0
    %5668 = vmatpush1.msra.mxu0 %v5490
    %5669 = vmatprep.subr.mxu0 0.0
    %5670 = vmatpush1.msra.mxu0 %v5491
    %5671 = vmatprep.subr.mxu0 0.0
    %5672 = vmatpush1.msra.mxu0 %v5492
    %5673 = vmatprep.subr.mxu0 0.0
    %5674 = vmatpush1.msra.mxu0 %v5493
    %5675 = vmatprep.subr.mxu0 0.0
    %5676 = vmatpush1.msra.mxu0 %v5494
    %5677 = vmatprep.subr.mxu0 0.0
    %5678 = vmatpush1.msra.mxu0 %v5495
    %5679 = vmatprep.subr.mxu0 0.0
    %5680 = vmatpush1.msra.mxu0 %v5496
    %5681 = vmatprep.subr.mxu0 0.0
    %5682 = vmatpush1.msra.mxu0 %v5497
    %5683 = vmatprep.subr.mxu0 0.0
    %5684 = vmatpush1.msra.mxu0 %v5498
    %5685 = vmatprep.subr.mxu0 0.0
    %5686 = vmatpush1.msra.mxu0 %v5499
    %5687 = vmatprep.subr.mxu0 0.0
    %5688 = vmatpush1.msra.mxu0 %v5500
    %5689 = vmatprep.subr.mxu0 0.0
    %5690 = vmatpush1.msra.mxu0 %v5501
    %5691 = vmatprep.subr.mxu0 0.0
    %5692 = vmatpush1.msra.mxu0 %v5502
    %5693 = vmatprep.subr.mxu0 0.0
    %5694 = vmatpush1.msra.mxu0 %v5503
    %5695 = vmatprep.subr.mxu0 0.0
    %5696 = vmatpush1.msra.mxu0 %v5504
    %5697 = vmatprep.subr.mxu0 0.0
    %5698 = vmatpush1.msra.mxu0 %v5505
    %5699 = vmatprep.subr.mxu0 0.0
    %5700 = vmatpush1.msra.mxu0 %v5506
    %5701 = vmatprep.subr.mxu0 0.0
    %5702 = vmatpush1.msra.mxu0 %v5507
    %5703 = vmatprep.subr.mxu0 0.0
    %5704 = vmatpush1.msra.mxu0 %v5508
    %5705 = vmatprep.subr.mxu0 0.0
    %5706 = vmatpush1.msra.mxu0 %v5509
    %5707 = vmatprep.subr.mxu0 0.0
    %5708 = vmatpush1.msra.mxu0 %v5510
    %5709 = vmatprep.subr.mxu0 0.0
    %5710 = vmatpush1.msra.mxu0 %v5511
    %5711 = vmatprep.subr.mxu0 0.0
    %5712 = vmatpush1.msra.mxu0 %v5512
    %5713 = vmatprep.subr.mxu0 0.0
    %5714 = vmatpush1.msra.mxu0 %v5513
    %5715 = vmatprep.subr.mxu0 0.0
    %5716 = vmatpush1.msra.mxu0 %v5514
    %5717 = vmatprep.subr.mxu0 0.0
    %5718 = vmatpush1.msra.mxu0 %v5515
    %5719 = vmatprep.subr.mxu0 0.0
    %5720 = vmatpush1.msra.mxu0 %v5516
    %5721 = vmatprep.subr.mxu0 0.0
    %5722 = vmatpush1.msra.mxu0 %v5517
    %5723 = vmatprep.mubr.f32.mxu0 %v4316
    %5724 = vmatmul.mubr.f32.gmra.mrb[0].mxu0 %v4314
    %v5725 = vpop.f32.mrb[0].mxu0
    %v5726 = vadd.f32 %v5656, %v5725
    %v5727 = vpop.f32.mrb[0].mxu0
    %5728 = vdwg.mxu0
    %5729 = vmatprep.subr.mxu0 0.0
    %5730 = vmatpush1.msra.mxu0 %v5518
    %5731 = vmatprep.subr.mxu0 0.0
    %5732 = vmatpush1.msra.mxu0 %v5519
    %5733 = vmatprep.subr.mxu0 0.0
    %5734 = vmatpush1.msra.mxu0 %v5520
    %5735 = vmatprep.subr.mxu0 0.0
    %5736 = vmatpush1.msra.mxu0 %v5521
    %5737 = vmatprep.subr.mxu0 0.0
    %5738 = vmatpush1.msra.mxu0 %v5522
    %5739 = vmatprep.subr.mxu0 0.0
    %5740 = vmatpush1.msra.mxu0 %v5523
    %5741 = vmatprep.subr.mxu0 0.0
    %5742 = vmatpush1.msra.mxu0 %v5524
    %5743 = vmatprep.subr.mxu0 0.0
    %5744 = vmatpush1.msra.mxu0 %v5525
    %5745 = vmatprep.subr.mxu0 0.0
    %5746 = vmatpush1.msra.mxu0 %v5526
    %5747 = vmatprep.subr.mxu0 0.0
    %5748 = vmatpush1.msra.mxu0 %v5527
    %5749 = vmatprep.subr.mxu0 0.0
    %5750 = vmatpush1.msra.mxu0 %v5528
    %5751 = vmatprep.subr.mxu0 0.0
    %5752 = vmatpush1.msra.mxu0 %v5529
    %5753 = vmatprep.subr.mxu0 0.0
    %5754 = vmatpush1.msra.mxu0 %v5530
    %5755 = vmatprep.subr.mxu0 0.0
    %5756 = vmatpush1.msra.mxu0 %v5531
    %5757 = vmatprep.subr.mxu0 0.0
    %5758 = vmatpush1.msra.mxu0 %v5532
    %5759 = vmatprep.subr.mxu0 0.0
    %5760 = vmatpush1.msra.mxu0 %v5533
    %5761 = vmatprep.subr.mxu0 0.0
    %5762 = vmatpush1.msra.mxu0 %v5534
    %5763 = vmatprep.subr.mxu0 0.0
    %5764 = vmatpush1.msra.mxu0 %v5535
    %5765 = vmatprep.subr.mxu0 0.0
    %5766 = vmatpush1.msra.mxu0 %v5536
    %5767 = vmatprep.subr.mxu0 0.0
    %5768 = vmatpush1.msra.mxu0 %v5537
    %5769 = vmatprep.subr.mxu0 0.0
    %5770 = vmatpush1.msra.mxu0 %v5538
    %5771 = vmatprep.subr.mxu0 0.0
    %5772 = vmatpush1.msra.mxu0 %v5539
    %5773 = vmatprep.subr.mxu0 0.0
    %5774 = vmatpush1.msra.mxu0 %v5540
    %5775 = vmatprep.subr.mxu0 0.0
    %5776 = vmatpush1.msra.mxu0 %v5541
    %5777 = vmatprep.subr.mxu0 0.0
    %5778 = vmatpush1.msra.mxu0 %v5542
    %5779 = vmatprep.subr.mxu0 0.0
    %5780 = vmatpush1.msra.mxu0 %v5543
    %5781 = vmatprep.subr.mxu0 0.0
    %5782 = vmatpush1.msra.mxu0 %v5544
    %5783 = vmatprep.subr.mxu0 0.0
    %5784 = vmatpush1.msra.mxu0 %v5545
    %5785 = vmatprep.subr.mxu0 0.0
    %5786 = vmatpush1.msra.mxu0 %v5546
    %5787 = vmatprep.subr.mxu0 0.0
    %5788 = vmatpush1.msra.mxu0 %v5547
    %5789 = vmatprep.subr.mxu0 0.0
    %5790 = vmatpush1.msra.mxu0 %v5548
    %5791 = vmatprep.subr.mxu0 0.0
    %5792 = vmatpush1.msra.mxu0 %v5549
    %5793 = vmatprep.mubr.f32.mxu0 %v4884
    %5794 = vmatmul.mubr.f32.gmra.mrb[0].mxu0 %v4882
    %v5795 = vpop.f32.mrb[0].mxu0
    %v5796 = vadd.f32 %v5726, %v5795
    %v5797 = vpop.f32.mrb[0].mxu0
    %5798 = vdwg.mxu0
    %5799 = vmatprep.subr.mxu0 0.0
    %5800 = vmatpush1.msra.mxu0 %v5550
    %5801 = vmatprep.subr.mxu0 0.0
    %5802 = vmatpush1.msra.mxu0 %v5551
    %5803 = vmatprep.subr.mxu0 0.0
    %5804 = vmatpush1.msra.mxu0 %v5552
    %5805 = vmatprep.subr.mxu0 0.0
    %5806 = vmatpush1.msra.mxu0 %v5553
    %5807 = vmatprep.subr.mxu0 0.0
    %5808 = vmatpush1.msra.mxu0 %v5554
    %5809 = vmatprep.subr.mxu0 0.0
    %5810 = vmatpush1.msra.mxu0 %v5555
    %5811 = vmatprep.subr.mxu0 0.0
    %5812 = vmatpush1.msra.mxu0 %v5556
    %5813 = vmatprep.subr.mxu0 0.0
    %5814 = vmatpush1.msra.mxu0 %v5557
    %5815 = vmatprep.subr.mxu0 0.0
    %5816 = vmatpush1.msra.mxu0 %v5558
    %5817 = vmatprep.subr.mxu0 0.0
    %5818 = vmatpush1.msra.mxu0 %v5559
    %5819 = vmatprep.subr.mxu0 0.0
    %5820 = vmatpush1.msra.mxu0 %v5560
    %5821 = vmatprep.subr.mxu0 0.0
    %5822 = vmatpush1.msra.mxu0 %v5561
    %5823 = vmatprep.subr.mxu0 0.0
    %5824 = vmatpush1.msra.mxu0 %v5562
    %5825 = vmatprep.subr.mxu0 0.0
    %5826 = vmatpush1.msra.mxu0 %v5563
    %5827 = vmatprep.subr.mxu0 0.0
    %5828 = vmatpush1.msra.mxu0 %v5564
    %5829 = vmatprep.subr.mxu0 0.0
    %5830 = vmatpush1.msra.mxu0 %v5565
    %5831 = vmatprep.subr.mxu0 0.0
    %5832 = vmatpush1.msra.mxu0 %v5566
    %5833 = vmatprep.subr.mxu0 0.0
    %5834 = vmatpush1.msra.mxu0 %v5567
    %5835 = vmatprep.subr.mxu0 0.0
    %5836 = vmatpush1.msra.mxu0 %v5568
    %5837 = vmatprep.subr.mxu0 0.0
    %5838 = vmatpush1.msra.mxu0 %v5569
    %5839 = vmatprep.subr.mxu0 0.0
    %5840 = vmatpush1.msra.mxu0 %v5570
    %5841 = vmatprep.subr.mxu0 0.0
    %5842 = vmatpush1.msra.mxu0 %v5571
    %5843 = vmatprep.subr.mxu0 0.0
    %5844 = vmatpush1.msra.mxu0 %v5572
    %5845 = vmatprep.subr.mxu0 0.0
    %5846 = vmatpush1.msra.mxu0 %v5573
    %5847 = vmatprep.subr.mxu0 0.0
    %5848 = vmatpush1.msra.mxu0 %v5574
    %5849 = vmatprep.subr.mxu0 0.0
    %5850 = vmatpush1.msra.mxu0 %v5575
    %5851 = vmatprep.subr.mxu0 0.0
    %5852 = vmatpush1.msra.mxu0 %v5576
    %5853 = vmatprep.subr.mxu0 0.0
    %5854 = vmatpush1.msra.mxu0 %v5577
    %5855 = vmatprep.subr.mxu0 0.0
    %5856 = vmatpush1.msra.mxu0 %v5578
    %5857 = vmatprep.subr.mxu0 0.0
    %5858 = vmatpush1.msra.mxu0 %v5579
    %5859 = vmatprep.subr.mxu0 0.0
    %5860 = vmatpush1.msra.mxu0 %v5580
    %5861 = vmatprep.subr.mxu0 0.0
    %5862 = vmatpush1.msra.mxu0 %v5581
    %5863 = vmatprep.mubr.f32.mxu0 %v5452
    %5864 = vmatmul.mubr.f32.gmra.mrb[0].mxu0 %v5450
    %v5865 = vpop.f32.mrb[0].mxu0
    %v5866 = vadd.f32 %v5796, %v5865
    %v5867 = vpop.f32.mrb[0].mxu0
    %5868 = vdwg.mxu0
    %vm5869 = vcmask 58368
    %5870 = vst.msk [vmem:[%s8] sm:$0x3] %vm5869, %v5866
    // Predicated region
    $region58: #{loss_header1_forward.1} parent=1 // pred_check
      _
    $region59: #{loss_header1_forward.1} parent=1 // pred_check_branch
      %5872 = sbr.rel (0) target = $region61
    $region60: #{loss_header1_forward.1} parent=1 // pred_region
      _
    $region61: #{loss_header1_forward.1} parent=1 // pred_fallthru
      _
    // Predicated region
    $region62: #{loss_header1_forward.1} parent=1 // pred_check
      _
    $region63: #{loss_header1_forward.1} parent=1 // pred_check_branch
      %5874 = sbr.rel (0) target = $region65
    $region64: #{loss_header1_forward.1} parent=1 // pred_region
      _
    $region65: #{loss_header1_forward.1} parent=1 // pred_fallthru
      _
    %5875 = vsyncpa [#allocation3], 1
    %5876 = vsyncpa [#allocation5], 1
    %5877 = vsyncpa [#allocation8], 1
    %5878 = vsyncpa [#allocation11], 1

</llo_original>
